<compile_context>
chip_gen: v7x
topology: tpu7x:2x2x1
jax: 0.10.0
libtpu: 0.0.40
codegen_flags: <defaults>
</compile_context>

<pallas_src>
import functools

import jax
import jax.numpy as jnp
from jax.experimental import pallas as pl
from jax.experimental.pallas import tpu as pltpu


def cbam_kernel(x_ref, w1t_ref, w2t_ref, wsa_ref, o_ref, pad_ref, att_ref,
                *, height, width, ksize):
    # x_ref / o_ref : (bt, C, H*W)   lane-dense blocks
    # w1t_ref       : (C, Cr)        VMEM
    # w2t_ref       : (Cr, C)        VMEM
    # wsa_ref       : (2*K*K,)       SMEM scalar taps (OIHW order, flattened)
    # pad_ref       : (bt, H+2p, 2*(W+2p)) VMEM scratch, both pooled channels
    #                 side by side along the lane axis, zero border = conv pad
    # att_ref       : (bt, H*W)      VMEM scratch, flat spatial attention map
    H, W, K = height, width, ksize
    PAD = K // 2
    Wp = W + 2 * PAD
    bt, _, _ = x_ref.shape

    xb = x_ref[...].astype(jnp.float32)                       # (bt, C, HW)

    # ---------------- Channel attention (lane-dense layout) ----------------
    avg_p = jnp.mean(xb, axis=-1)                             # (bt, C) lane reduce
    max_p = jnp.max(xb, axis=-1)                              # (bt, C) lane reduce

    # Fused shared MLP: one matmul pair for both pooled inputs.
    pools = jnp.concatenate([avg_p, max_p], axis=0)           # (2*bt, C)
    hidden = jnp.maximum(
        jnp.dot(pools, w1t_ref[...], preferred_element_type=jnp.float32), 0.0)
    mlp_out = jnp.dot(hidden, w2t_ref[...],
                      preferred_element_type=jnp.float32)     # (2*bt, C)
    scale = jax.nn.sigmoid(mlp_out[:bt] + mlp_out[bt:])       # (bt, C)
    x_ca = xb * scale[:, :, None]                             # (bt, C, HW)

    # ---------------- Spatial attention ----------------
    pooled = (jnp.mean(x_ca, axis=1),                         # (bt, HW) sublane reduce
              jnp.max(x_ca, axis=1))                          # (bt, HW)

    # Stage the two pooled maps into a zero-padded 2-D scratch (replaces the
    # four concatenate-based pads); channel c lives at lane offset c*Wp.
    pad_ref[...] = jnp.zeros_like(pad_ref)
    for c in range(2):
        col0 = c * Wp + PAD
        m = pooled[c]
        for y in range(H):
            pad_ref[:, PAD + y, pl.ds(col0, W)] = m[:, y * W:(y + 1) * W]
    padded = pad_ref[...]                                     # (bt, Hp, 2*Wp)

    # 7x7 stencil: hoist the 2*K lane-shifted column slabs; row (sublane)
    # shifts in the inner loop; 4 independent partial accumulators break the
    # 98-deep serial add chain.  Taps are read from SMEM once, up front.
    taps = [wsa_ref[t] for t in range(2 * K * K)]
    accs = [jnp.zeros((bt, H, W), jnp.float32) for _ in range(4)]
    n = 0
    for c in range(2):
        for j in range(K):
            slab = padded[:, :, c * Wp + j:c * Wp + j + W]    # (bt, Hp, W)
            for i in range(K):
                win = slab[:, i:i + H, :]                     # (bt, H, W)
                accs[n % 4] = accs[n % 4] + taps[c * K * K + i * K + j] * win
                n += 1
    att = jax.nn.sigmoid((accs[0] + accs[1]) + (accs[2] + accs[3]))  # (bt, H, W)

    # Back to the lane-dense flat layout, then gate the channel-attended block.
    for y in range(H):
        att_ref[:, pl.ds(y * W, W)] = att[:, y, :]
    o_ref[...] = (x_ca * att_ref[...][:, None, :]).astype(o_ref.dtype)


def _pick_block_batch(n, max_bt=8):
    """Largest divisor of n that is <= max_bt and keeps >= 2 grid steps."""
    cap = max(1, min(max_bt, n // 2))
    for bt in range(cap, 0, -1):
        if n % bt == 0:
            return bt
    return 1


def cbam_pallas(x, w1, w2, wsa, *, max_block_batch=8):
    """x: (N, C, H, W) f32; w1: (Cr, C); w2: (C, Cr); wsa: (1, 2, K, K)."""
    N, C, H, W = x.shape
    Cr = w1.shape[0]
    K = wsa.shape[-1]
    HW = H * W
    PAD = K // 2
    Wp = W + 2 * PAD
    Hp = H + 2 * PAD

    bt = _pick_block_batch(N, max_block_batch)

    x_flat = x.reshape(N, C, HW)          # free metadata reshape (contiguous NCHW)
    w1t = w1.T                            # (C, Cr)
    w2t = w2.T                            # (Cr, C)
    wsa_flat = wsa.reshape(-1)            # (2*K*K,)

    kernel = functools.partial(cbam_kernel, height=H, width=W, ksize=K)

    grid_spec = pltpu.PrefetchScalarGridSpec(
        num_scalar_prefetch=0,
        grid=(N // bt,),
        in_specs=[
            pl.BlockSpec((bt, C, HW), lambda n: (n, 0, 0)),
            pl.BlockSpec((C, Cr), lambda n: (0, 0)),
            pl.BlockSpec((Cr, C), lambda n: (0, 0)),
            pl.BlockSpec(memory_space=pltpu.MemorySpace.SMEM),
        ],
        out_specs=pl.BlockSpec((bt, C, HW), lambda n: (n, 0, 0)),
        scratch_shapes=[
            pltpu.VMEM((bt, Hp, 2 * Wp), jnp.float32),   # padded pooled maps
            pltpu.VMEM((bt, HW), jnp.float32),           # flat attention map
        ],
    )

    out_flat = pl.pallas_call(
        kernel,
        out_shape=jax.ShapeDtypeStruct((N, C, HW), x.dtype),
        grid_spec=grid_spec,
        compiler_params=pltpu.CompilerParams(
            dimension_semantics=("parallel",)),
    )(x_flat, w1t, w2t, wsa_flat)
    return out_flat.reshape(N, C, H, W)


def cbam_reference(x, w1, w2, wsa):
    """Pure-JAX reference matching the PyTorch module exactly."""
    # Channel attention
    avg = x.mean(axis=(2, 3))
    mx = x.max(axis=(2, 3))

    def mlp(p):
        return jnp.maximum(p @ w1.T, 0.0) @ w2.T

    scale = jax.nn.sigmoid(mlp(avg) + mlp(mx))[:, :, None, None]
    x = x * scale
    # Spatial attention
    avg_m = x.mean(axis=1, keepdims=True)
    max_m = x.max(axis=1, keepdims=True)
    comb = jnp.concatenate([avg_m, max_m], axis=1)  # (N, 2, H, W)
    att = jax.lax.conv_general_dilated(
        comb, wsa, window_strides=(1, 1), padding=[(3, 3), (3, 3)],
        dimension_numbers=("NCHW", "OIHW", "NCHW"))
    return x * jax.nn.sigmoid(att)


if __name__ == "__main__":
    N, C, H, W = 8, 32, 16, 16
    reduction_ratio = 16
    Cr = C // reduction_ratio  # 2

    key = jax.random.PRNGKey(0)
    kx, k1, k2, k3 = jax.random.split(key, 4)

    x = jax.random.normal(kx, (N, C, H, W), dtype=jnp.float32)
    # Deterministic parameter init (shapes from the module's __init__):
    w1 = 0.1 * jax.random.normal(k1, (Cr, C), dtype=jnp.float32)        # conv1 1x1, no bias
    w2 = 0.1 * jax.random.normal(k2, (C, Cr), dtype=jnp.float32)        # conv2 1x1, no bias
    wsa = 0.1 * jax.random.normal(k3, (1, 2, 7, 7), dtype=jnp.float32)  # spatial 7x7, no bias

    out = cbam_pallas(x, w1, w2, wsa)
    out = jax.block_until_ready(out)

    ref = cbam_reference(x, w1, w2, wsa)
    ref = jax.block_until_ready(ref)

    assert out.shape == (N, C, H, W), out.shape
    assert jnp.allclose(out, ref, atol=1e-5, rtol=1e-5), float(
        jnp.max(jnp.abs(out - ref)))

    print("KERNEL_OK")
</pallas_src>

<mosaic_0001>
module attributes {stable_mosaic.version = 11 : i64} {
  func.func @cbam_kernel(%arg0: i32, %arg1: memref<4x32x256xf32, #tpu.memory_space<vmem>>, %arg2: memref<32x2xf32, #tpu.memory_space<vmem>>, %arg3: memref<2x32xf32, #tpu.memory_space<vmem>>, %arg4: memref<98xf32, #tpu.memory_space<smem>>, %arg5: memref<4x32x256xf32, #tpu.memory_space<vmem>>, %arg6: memref<4x22x44xf32, #tpu.memory_space<vmem>>, %arg7: memref<4x256xf32, #tpu.memory_space<vmem>>) attributes {dimension_semantics = [#tpu.dimension_semantics<parallel>], iteration_bounds = array<i64: 2>, scalar_prefetch = 0 : i64, scratch_operands = 2 : i64, tpu.core_type = #tpu.core_type<tc>, window_params = [{transform_indices = @transform_0, window_bounds = array<i64: 4, 32, 256>}, {pipeline_mode = #tpu.pipeline_mode<synchronous>, transform_indices = @transform_1, window_bounds = array<i64: 32, 2>}, {pipeline_mode = #tpu.pipeline_mode<synchronous>, transform_indices = @transform_2, window_bounds = array<i64: 2, 32>}, {transform_indices = @transform_3, window_bounds = array<i64: 98>}, {transform_indices = @transform_4, window_bounds = array<i64: 4, 32, 256>}]} {
    %c0 = arith.constant 0 : index
    %c0_0 = arith.constant 0 : index
    %c0_1 = arith.constant 0 : index
    %0 = vector.load %arg1[%c0, %c0_0, %c0_1] : memref<4x32x256xf32, #tpu.memory_space<vmem>>, vector<4x32x256xf32>
    %cst = arith.constant dense<0.000000e+00> : vector<4x32xf32>
    %1 = vector.multi_reduction <add>, %0, %cst [2] : vector<4x32x256xf32> to vector<4x32xf32>
    %cst_2 = arith.constant 2.560000e+02 : f32
    %2 = vector.broadcast %cst_2 : f32 to vector<4x32xf32>
    %3 = arith.divf %1, %2 : vector<4x32xf32>
    %cst_3 = arith.constant dense<0xFF800000> : vector<4x32xf32>
    %4 = vector.multi_reduction <maximumf>, %0, %cst_3 [2] : vector<4x32x256xf32> to vector<4x32xf32>
    %5 = tpu.concatenate %3, %4 in 0 : vector<4x32xf32>, vector<4x32xf32> -> vector<8x32xf32>
    %c0_4 = arith.constant 0 : index
    %c0_5 = arith.constant 0 : index
    %6 = vector.load %arg2[%c0_4, %c0_5] : memref<32x2xf32, #tpu.memory_space<vmem>>, vector<32x2xf32>
    %cst_6 = arith.constant dense<0.000000e+00> : vector<8x2xf32>
    %7 = tpu.matmul %5, %6, %cst_6 {dimension_numbers = #tpu.dot_dimension_numbers<[1], [0], [0], [1], [0, 0, 1, 1], [], []>} : vector<8x32xf32>, vector<32x2xf32>, vector<8x2xf32> -> vector<8x2xf32>
    %cst_7 = arith.constant 0.000000e+00 : f32
    %8 = vector.broadcast %cst_7 : f32 to vector<8x2xf32>
    %9 = arith.maximumf %7, %8 : vector<8x2xf32>
    %c0_8 = arith.constant 0 : index
    %c0_9 = arith.constant 0 : index
    %10 = vector.load %arg3[%c0_8, %c0_9] : memref<2x32xf32, #tpu.memory_space<vmem>>, vector<2x32xf32>
    %cst_10 = arith.constant dense<0.000000e+00> : vector<8x32xf32>
    %11 = tpu.matmul %9, %10, %cst_10 {dimension_numbers = #tpu.dot_dimension_numbers<[1], [0], [0], [1], [0, 0, 1, 1], [], []>} : vector<8x2xf32>, vector<2x32xf32>, vector<8x32xf32> -> vector<8x32xf32>
    %12 = vector.extract_strided_slice %11 {offsets = [0, 0], sizes = [4, 32], strides = [1, 1]} : vector<8x32xf32> to vector<4x32xf32>
    %13 = vector.extract_strided_slice %11 {offsets = [4, 0], sizes = [4, 32], strides = [1, 1]} : vector<8x32xf32> to vector<4x32xf32>
    %14 = arith.addf %12, %13 : vector<4x32xf32>
    %15 = arith.negf %14 : vector<4x32xf32>
    %16 = math.exp %15 : vector<4x32xf32>
    %cst_11 = arith.constant 1.000000e+00 : f32
    %17 = vector.broadcast %cst_11 : f32 to vector<4x32xf32>
    %18 = arith.addf %17, %16 : vector<4x32xf32>
    %19 = arith.divf %17, %18 : vector<4x32xf32>
    %20 = vector.shape_cast %19 : vector<4x32xf32> to vector<4x32x1xf32>
    %21 = vector.broadcast %20 : vector<4x32x1xf32> to vector<4x32x256xf32>
    %22 = arith.mulf %0, %21 : vector<4x32x256xf32>
    %cst_12 = arith.constant dense<0.000000e+00> : vector<4x256xf32>
    %23 = vector.multi_reduction <add>, %22, %cst_12 [1] : vector<4x32x256xf32> to vector<4x256xf32>
    %cst_13 = arith.constant 3.200000e+01 : f32
    %24 = vector.broadcast %cst_13 : f32 to vector<4x256xf32>
    %25 = arith.divf %23, %24 : vector<4x256xf32>
    %cst_14 = arith.constant dense<0xFF800000> : vector<4x256xf32>
    %26 = vector.multi_reduction <maximumf>, %22, %cst_14 [1] : vector<4x32x256xf32> to vector<4x256xf32>
    %cst_15 = arith.constant 0.000000e+00 : f32
    %27 = vector.broadcast %cst_15 : f32 to vector<4x22x44xf32>
    %c0_16 = arith.constant 0 : index
    %c0_17 = arith.constant 0 : index
    %c0_18 = arith.constant 0 : index
    %28 = vector.load %arg6[%c0_16, %c0_17, %c0_18] : memref<4x22x44xf32, #tpu.memory_space<vmem>>, vector<4x22x44xf32>
    tpu.vector_store %arg6[%c0_16, %c0_17, %c0_18], %27 {strides = array<i32>} : memref<4x22x44xf32, #tpu.memory_space<vmem>>, vector<4x22x44xf32>,
    %29 = vector.extract_strided_slice %25 {offsets = [0, 0], sizes = [4, 16], strides = [1, 1]} : vector<4x256xf32> to vector<4x16xf32>
    %c0_19 = arith.constant 0 : index
    %c3 = arith.constant 3 : index
    %c3_20 = arith.constant 3 : index
    %30 = vector.load %arg6[%c0_19, %c3, %c3_20] : memref<4x22x44xf32, #tpu.memory_space<vmem>>, vector<4x1x16xf32>
    %31 = vector.shape_cast %30 : vector<4x1x16xf32> to vector<4x16xf32>
    %32 = vector.shape_cast %29 : vector<4x16xf32> to vector<4x1x16xf32>
    tpu.vector_store %arg6[%c0_19, %c3, %c3_20], %32 {strides = array<i32>} : memref<4x22x44xf32, #tpu.memory_space<vmem>>, vector<4x1x16xf32>,
    %33 = vector.extract_strided_slice %25 {offsets = [0, 16], sizes = [4, 16], strides = [1, 1]} : vector<4x256xf32> to vector<4x16xf32>
    %c0_21 = arith.constant 0 : index
    %c4 = arith.constant 4 : index
    %c3_22 = arith.constant 3 : index
    %34 = vector.load %arg6[%c0_21, %c4, %c3_22] : memref<4x22x44xf32, #tpu.memory_space<vmem>>, vector<4x1x16xf32>
    %35 = vector.shape_cast %34 : vector<4x1x16xf32> to vector<4x16xf32>
    %36 = vector.shape_cast %33 : vector<4x16xf32> to vector<4x1x16xf32>
    tpu.vector_store %arg6[%c0_21, %c4, %c3_22], %36 {strides = array<i32>} : memref<4x22x44xf32, #tpu.memory_space<vmem>>, vector<4x1x16xf32>,
    %37 = vector.extract_strided_slice %25 {offsets = [0, 32], sizes = [4, 16], strides = [1, 1]} : vector<4x256xf32> to vector<4x16xf32>
    %c0_23 = arith.constant 0 : index
    %c5 = arith.constant 5 : index
    %c3_24 = arith.constant 3 : index
    %38 = vector.load %arg6[%c0_23, %c5, %c3_24] : memref<4x22x44xf32, #tpu.memory_space<vmem>>, vector<4x1x16xf32>
    %39 = vector.shape_cast %38 : vector<4x1x16xf32> to vector<4x16xf32>
    %40 = vector.shape_cast %37 : vector<4x16xf32> to vector<4x1x16xf32>
    tpu.vector_store %arg6[%c0_23, %c5, %c3_24], %40 {strides = array<i32>} : memref<4x22x44xf32, #tpu.memory_space<vmem>>, vector<4x1x16xf32>,
    %41 = vector.extract_strided_slice %25 {offsets = [0, 48], sizes = [4, 16], strides = [1, 1]} : vector<4x256xf32> to vector<4x16xf32>
    %c0_25 = arith.constant 0 : index
    %c6 = arith.constant 6 : index
    %c3_26 = arith.constant 3 : index
    %42 = vector.load %arg6[%c0_25, %c6, %c3_26] : memref<4x22x44xf32, #tpu.memory_space<vmem>>, vector<4x1x16xf32>
    %43 = vector.shape_cast %42 : vector<4x1x16xf32> to vector<4x16xf32>
    %44 = vector.shape_cast %41 : vector<4x16xf32> to vector<4x1x16xf32>
    tpu.vector_store %arg6[%c0_25, %c6, %c3_26], %44 {strides = array<i32>} : memref<4x22x44xf32, #tpu.memory_space<vmem>>, vector<4x1x16xf32>,
    %45 = vector.extract_strided_slice %25 {offsets = [0, 64], sizes = [4, 16], strides = [1, 1]} : vector<4x256xf32> to vector<4x16xf32>
    %c0_27 = arith.constant 0 : index
    %c7 = arith.constant 7 : index
    %c3_28 = arith.constant 3 : index
    %46 = vector.load %arg6[%c0_27, %c7, %c3_28] : memref<4x22x44xf32, #tpu.memory_space<vmem>>, vector<4x1x16xf32>
    %47 = vector.shape_cast %46 : vector<4x1x16xf32> to vector<4x16xf32>
    %48 = vector.shape_cast %45 : vector<4x16xf32> to vector<4x1x16xf32>
    tpu.vector_store %arg6[%c0_27, %c7, %c3_28], %48 {strides = array<i32>} : memref<4x22x44xf32, #tpu.memory_space<vmem>>, vector<4x1x16xf32>,
    %49 = vector.extract_strided_slice %25 {offsets = [0, 80], sizes = [4, 16], strides = [1, 1]} : vector<4x256xf32> to vector<4x16xf32>
    %c0_29 = arith.constant 0 : index
    %c8 = arith.constant 8 : index
    %c3_30 = arith.constant 3 : index
    %50 = vector.load %arg6[%c0_29, %c8, %c3_30] : memref<4x22x44xf32, #tpu.memory_space<vmem>>, vector<4x1x16xf32>
    %51 = vector.shape_cast %50 : vector<4x1x16xf32> to vector<4x16xf32>
    %52 = vector.shape_cast %49 : vector<4x16xf32> to vector<4x1x16xf32>
    tpu.vector_store %arg6[%c0_29, %c8, %c3_30], %52 {strides = array<i32>} : memref<4x22x44xf32, #tpu.memory_space<vmem>>, vector<4x1x16xf32>,
    %53 = vector.extract_strided_slice %25 {offsets = [0, 96], sizes = [4, 16], strides = [1, 1]} : vector<4x256xf32> to vector<4x16xf32>
    %c0_31 = arith.constant 0 : index
    %c9 = arith.constant 9 : index
    %c3_32 = arith.constant 3 : index
    %54 = vector.load %arg6[%c0_31, %c9, %c3_32] : memref<4x22x44xf32, #tpu.memory_space<vmem>>, vector<4x1x16xf32>
    %55 = vector.shape_cast %54 : vector<4x1x16xf32> to vector<4x16xf32>
    %56 = vector.shape_cast %53 : vector<4x16xf32> to vector<4x1x16xf32>
    tpu.vector_store %arg6[%c0_31, %c9, %c3_32], %56 {strides = array<i32>} : memref<4x22x44xf32, #tpu.memory_space<vmem>>, vector<4x1x16xf32>,
    %57 = vector.extract_strided_slice %25 {offsets = [0, 112], sizes = [4, 16], strides = [1, 1]} : vector<4x256xf32> to vector<4x16xf32>
    %c0_33 = arith.constant 0 : index
    %c10 = arith.constant 10 : index
    %c3_34 = arith.constant 3 : index
    %58 = vector.load %arg6[%c0_33, %c10, %c3_34] : memref<4x22x44xf32, #tpu.memory_space<vmem>>, vector<4x1x16xf32>
    %59 = vector.shape_cast %58 : vector<4x1x16xf32> to vector<4x16xf32>
    %60 = vector.shape_cast %57 : vector<4x16xf32> to vector<4x1x16xf32>
    tpu.vector_store %arg6[%c0_33, %c10, %c3_34], %60 {strides = array<i32>} : memref<4x22x44xf32, #tpu.memory_space<vmem>>, vector<4x1x16xf32>,
    %61 = vector.extract_strided_slice %25 {offsets = [0, 128], sizes = [4, 16], strides = [1, 1]} : vector<4x256xf32> to vector<4x16xf32>
    %c0_35 = arith.constant 0 : index
    %c11 = arith.constant 11 : index
    %c3_36 = arith.constant 3 : index
    %62 = vector.load %arg6[%c0_35, %c11, %c3_36] : memref<4x22x44xf32, #tpu.memory_space<vmem>>, vector<4x1x16xf32>
    %63 = vector.shape_cast %62 : vector<4x1x16xf32> to vector<4x16xf32>
    %64 = vector.shape_cast %61 : vector<4x16xf32> to vector<4x1x16xf32>
    tpu.vector_store %arg6[%c0_35, %c11, %c3_36], %64 {strides = array<i32>} : memref<4x22x44xf32, #tpu.memory_space<vmem>>, vector<4x1x16xf32>,
    %65 = vector.extract_strided_slice %25 {offsets = [0, 144], sizes = [4, 16], strides = [1, 1]} : vector<4x256xf32> to vector<4x16xf32>
    %c0_37 = arith.constant 0 : index
    %c12 = arith.constant 12 : index
    %c3_38 = arith.constant 3 : index
    %66 = vector.load %arg6[%c0_37, %c12, %c3_38] : memref<4x22x44xf32, #tpu.memory_space<vmem>>, vector<4x1x16xf32>
    %67 = vector.shape_cast %66 : vector<4x1x16xf32> to vector<4x16xf32>
    %68 = vector.shape_cast %65 : vector<4x16xf32> to vector<4x1x16xf32>
    tpu.vector_store %arg6[%c0_37, %c12, %c3_38], %68 {strides = array<i32>} : memref<4x22x44xf32, #tpu.memory_space<vmem>>, vector<4x1x16xf32>,
    %69 = vector.extract_strided_slice %25 {offsets = [0, 160], sizes = [4, 16], strides = [1, 1]} : vector<4x256xf32> to vector<4x16xf32>
    %c0_39 = arith.constant 0 : index
    %c13 = arith.constant 13 : index
    %c3_40 = arith.constant 3 : index
    %70 = vector.load %arg6[%c0_39, %c13, %c3_40] : memref<4x22x44xf32, #tpu.memory_space<vmem>>, vector<4x1x16xf32>
    %71 = vector.shape_cast %70 : vector<4x1x16xf32> to vector<4x16xf32>
    %72 = vector.shape_cast %69 : vector<4x16xf32> to vector<4x1x16xf32>
    tpu.vector_store %arg6[%c0_39, %c13, %c3_40], %72 {strides = array<i32>} : memref<4x22x44xf32, #tpu.memory_space<vmem>>, vector<4x1x16xf32>,
    %73 = vector.extract_strided_slice %25 {offsets = [0, 176], sizes = [4, 16], strides = [1, 1]} : vector<4x256xf32> to vector<4x16xf32>
    %c0_41 = arith.constant 0 : index
    %c14 = arith.constant 14 : index
    %c3_42 = arith.constant 3 : index
    %74 = vector.load %arg6[%c0_41, %c14, %c3_42] : memref<4x22x44xf32, #tpu.memory_space<vmem>>, vector<4x1x16xf32>
    %75 = vector.shape_cast %74 : vector<4x1x16xf32> to vector<4x16xf32>
    %76 = vector.shape_cast %73 : vector<4x16xf32> to vector<4x1x16xf32>
    tpu.vector_store %arg6[%c0_41, %c14, %c3_42], %76 {strides = array<i32>} : memref<4x22x44xf32, #tpu.memory_space<vmem>>, vector<4x1x16xf32>,
    %77 = vector.extract_strided_slice %25 {offsets = [0, 192], sizes = [4, 16], strides = [1, 1]} : vector<4x256xf32> to vector<4x16xf32>
    %c0_43 = arith.constant 0 : index
    %c15 = arith.constant 15 : index
    %c3_44 = arith.constant 3 : index
    %78 = vector.load %arg6[%c0_43, %c15, %c3_44] : memref<4x22x44xf32, #tpu.memory_space<vmem>>, vector<4x1x16xf32>
    %79 = vector.shape_cast %78 : vector<4x1x16xf32> to vector<4x16xf32>
    %80 = vector.shape_cast %77 : vector<4x16xf32> to vector<4x1x16xf32>
    tpu.vector_store %arg6[%c0_43, %c15, %c3_44], %80 {strides = array<i32>} : memref<4x22x44xf32, #tpu.memory_space<vmem>>, vector<4x1x16xf32>,
    %81 = vector.extract_strided_slice %25 {offsets = [0, 208], sizes = [4, 16], strides = [1, 1]} : vector<4x256xf32> to vector<4x16xf32>
    %c0_45 = arith.constant 0 : index
    %c16 = arith.constant 16 : index
    %c3_46 = arith.constant 3 : index
    %82 = vector.load %arg6[%c0_45, %c16, %c3_46] : memref<4x22x44xf32, #tpu.memory_space<vmem>>, vector<4x1x16xf32>
    %83 = vector.shape_cast %82 : vector<4x1x16xf32> to vector<4x16xf32>
    %84 = vector.shape_cast %81 : vector<4x16xf32> to vector<4x1x16xf32>
    tpu.vector_store %arg6[%c0_45, %c16, %c3_46], %84 {strides = array<i32>} : memref<4x22x44xf32, #tpu.memory_space<vmem>>, vector<4x1x16xf32>,
    %85 = vector.extract_strided_slice %25 {offsets = [0, 224], sizes = [4, 16], strides = [1, 1]} : vector<4x256xf32> to vector<4x16xf32>
    %c0_47 = arith.constant 0 : index
    %c17 = arith.constant 17 : index
    %c3_48 = arith.constant 3 : index
    %86 = vector.load %arg6[%c0_47, %c17, %c3_48] : memref<4x22x44xf32, #tpu.memory_space<vmem>>, vector<4x1x16xf32>
    %87 = vector.shape_cast %86 : vector<4x1x16xf32> to vector<4x16xf32>
    %88 = vector.shape_cast %85 : vector<4x16xf32> to vector<4x1x16xf32>
    tpu.vector_store %arg6[%c0_47, %c17, %c3_48], %88 {strides = array<i32>} : memref<4x22x44xf32, #tpu.memory_space<vmem>>, vector<4x1x16xf32>,
    %89 = vector.extract_strided_slice %25 {offsets = [0, 240], sizes = [4, 16], strides = [1, 1]} : vector<4x256xf32> to vector<4x16xf32>
    %c0_49 = arith.constant 0 : index
    %c18 = arith.constant 18 : index
    %c3_50 = arith.constant 3 : index
    %90 = vector.load %arg6[%c0_49, %c18, %c3_50] : memref<4x22x44xf32, #tpu.memory_space<vmem>>, vector<4x1x16xf32>
    %91 = vector.shape_cast %90 : vector<4x1x16xf32> to vector<4x16xf32>
    %92 = vector.shape_cast %89 : vector<4x16xf32> to vector<4x1x16xf32>
    tpu.vector_store %arg6[%c0_49, %c18, %c3_50], %92 {strides = array<i32>} : memref<4x22x44xf32, #tpu.memory_space<vmem>>, vector<4x1x16xf32>,
    %93 = vector.extract_strided_slice %26 {offsets = [0, 0], sizes = [4, 16], strides = [1, 1]} : vector<4x256xf32> to vector<4x16xf32>
    %c0_51 = arith.constant 0 : index
    %c3_52 = arith.constant 3 : index
    %c25 = arith.constant 25 : index
    %94 = vector.load %arg6[%c0_51, %c3_52, %c25] : memref<4x22x44xf32, #tpu.memory_space<vmem>>, vector<4x1x16xf32>
    %95 = vector.shape_cast %94 : vector<4x1x16xf32> to vector<4x16xf32>
    %96 = vector.shape_cast %93 : vector<4x16xf32> to vector<4x1x16xf32>
    tpu.vector_store %arg6[%c0_51, %c3_52, %c25], %96 {strides = array<i32>} : memref<4x22x44xf32, #tpu.memory_space<vmem>>, vector<4x1x16xf32>,
    %97 = vector.extract_strided_slice %26 {offsets = [0, 16], sizes = [4, 16], strides = [1, 1]} : vector<4x256xf32> to vector<4x16xf32>
    %c0_53 = arith.constant 0 : index
    %c4_54 = arith.constant 4 : index
    %c25_55 = arith.constant 25 : index
    %98 = vector.load %arg6[%c0_53, %c4_54, %c25_55] : memref<4x22x44xf32, #tpu.memory_space<vmem>>, vector<4x1x16xf32>
    %99 = vector.shape_cast %98 : vector<4x1x16xf32> to vector<4x16xf32>
    %100 = vector.shape_cast %97 : vector<4x16xf32> to vector<4x1x16xf32>
    tpu.vector_store %arg6[%c0_53, %c4_54, %c25_55], %100 {strides = array<i32>} : memref<4x22x44xf32, #tpu.memory_space<vmem>>, vector<4x1x16xf32>,
    %101 = vector.extract_strided_slice %26 {offsets = [0, 32], sizes = [4, 16], strides = [1, 1]} : vector<4x256xf32> to vector<4x16xf32>
    %c0_56 = arith.constant 0 : index
    %c5_57 = arith.constant 5 : index
    %c25_58 = arith.constant 25 : index
    %102 = vector.load %arg6[%c0_56, %c5_57, %c25_58] : memref<4x22x44xf32, #tpu.memory_space<vmem>>, vector<4x1x16xf32>
    %103 = vector.shape_cast %102 : vector<4x1x16xf32> to vector<4x16xf32>
    %104 = vector.shape_cast %101 : vector<4x16xf32> to vector<4x1x16xf32>
    tpu.vector_store %arg6[%c0_56, %c5_57, %c25_58], %104 {strides = array<i32>} : memref<4x22x44xf32, #tpu.memory_space<vmem>>, vector<4x1x16xf32>,
    %105 = vector.extract_strided_slice %26 {offsets = [0, 48], sizes = [4, 16], strides = [1, 1]} : vector<4x256xf32> to vector<4x16xf32>
    %c0_59 = arith.constant 0 : index
    %c6_60 = arith.constant 6 : index
    %c25_61 = arith.constant 25 : index
    %106 = vector.load %arg6[%c0_59, %c6_60, %c25_61] : memref<4x22x44xf32, #tpu.memory_space<vmem>>, vector<4x1x16xf32>
    %107 = vector.shape_cast %106 : vector<4x1x16xf32> to vector<4x16xf32>
    %108 = vector.shape_cast %105 : vector<4x16xf32> to vector<4x1x16xf32>
    tpu.vector_store %arg6[%c0_59, %c6_60, %c25_61], %108 {strides = array<i32>} : memref<4x22x44xf32, #tpu.memory_space<vmem>>, vector<4x1x16xf32>,
    %109 = vector.extract_strided_slice %26 {offsets = [0, 64], sizes = [4, 16], strides = [1, 1]} : vector<4x256xf32> to vector<4x16xf32>
    %c0_62 = arith.constant 0 : index
    %c7_63 = arith.constant 7 : index
    %c25_64 = arith.constant 25 : index
    %110 = vector.load %arg6[%c0_62, %c7_63, %c25_64] : memref<4x22x44xf32, #tpu.memory_space<vmem>>, vector<4x1x16xf32>
    %111 = vector.shape_cast %110 : vector<4x1x16xf32> to vector<4x16xf32>
    %112 = vector.shape_cast %109 : vector<4x16xf32> to vector<4x1x16xf32>
    tpu.vector_store %arg6[%c0_62, %c7_63, %c25_64], %112 {strides = array<i32>} : memref<4x22x44xf32, #tpu.memory_space<vmem>>, vector<4x1x16xf32>,
    %113 = vector.extract_strided_slice %26 {offsets = [0, 80], sizes = [4, 16], strides = [1, 1]} : vector<4x256xf32> to vector<4x16xf32>
    %c0_65 = arith.constant 0 : index
    %c8_66 = arith.constant 8 : index
    %c25_67 = arith.constant 25 : index
    %114 = vector.load %arg6[%c0_65, %c8_66, %c25_67] : memref<4x22x44xf32, #tpu.memory_space<vmem>>, vector<4x1x16xf32>
    %115 = vector.shape_cast %114 : vector<4x1x16xf32> to vector<4x16xf32>
    %116 = vector.shape_cast %113 : vector<4x16xf32> to vector<4x1x16xf32>
    tpu.vector_store %arg6[%c0_65, %c8_66, %c25_67], %116 {strides = array<i32>} : memref<4x22x44xf32, #tpu.memory_space<vmem>>, vector<4x1x16xf32>,
    %117 = vector.extract_strided_slice %26 {offsets = [0, 96], sizes = [4, 16], strides = [1, 1]} : vector<4x256xf32> to vector<4x16xf32>
    %c0_68 = arith.constant 0 : index
    %c9_69 = arith.constant 9 : index
    %c25_70 = arith.constant 25 : index
    %118 = vector.load %arg6[%c0_68, %c9_69, %c25_70] : memref<4x22x44xf32, #tpu.memory_space<vmem>>, vector<4x1x16xf32>
    %119 = vector.shape_cast %118 : vector<4x1x16xf32> to vector<4x16xf32>
    %120 = vector.shape_cast %117 : vector<4x16xf32> to vector<4x1x16xf32>
    tpu.vector_store %arg6[%c0_68, %c9_69, %c25_70], %120 {strides = array<i32>} : memref<4x22x44xf32, #tpu.memory_space<vmem>>, vector<4x1x16xf32>,
    %121 = vector.extract_strided_slice %26 {offsets = [0, 112], sizes = [4, 16], strides = [1, 1]} : vector<4x256xf32> to vector<4x16xf32>
    %c0_71 = arith.constant 0 : index
    %c10_72 = arith.constant 10 : index
    %c25_73 = arith.constant 25 : index
    %122 = vector.load %arg6[%c0_71, %c10_72, %c25_73] : memref<4x22x44xf32, #tpu.memory_space<vmem>>, vector<4x1x16xf32>
    %123 = vector.shape_cast %122 : vector<4x1x16xf32> to vector<4x16xf32>
    %124 = vector.shape_cast %121 : vector<4x16xf32> to vector<4x1x16xf32>
    tpu.vector_store %arg6[%c0_71, %c10_72, %c25_73], %124 {strides = array<i32>} : memref<4x22x44xf32, #tpu.memory_space<vmem>>, vector<4x1x16xf32>,
    %125 = vector.extract_strided_slice %26 {offsets = [0, 128], sizes = [4, 16], strides = [1, 1]} : vector<4x256xf32> to vector<4x16xf32>
    %c0_74 = arith.constant 0 : index
    %c11_75 = arith.constant 11 : index
    %c25_76 = arith.constant 25 : index
    %126 = vector.load %arg6[%c0_74, %c11_75, %c25_76] : memref<4x22x44xf32, #tpu.memory_space<vmem>>, vector<4x1x16xf32>
    %127 = vector.shape_cast %126 : vector<4x1x16xf32> to vector<4x16xf32>
    %128 = vector.shape_cast %125 : vector<4x16xf32> to vector<4x1x16xf32>
    tpu.vector_store %arg6[%c0_74, %c11_75, %c25_76], %128 {strides = array<i32>} : memref<4x22x44xf32, #tpu.memory_space<vmem>>, vector<4x1x16xf32>,
    %129 = vector.extract_strided_slice %26 {offsets = [0, 144], sizes = [4, 16], strides = [1, 1]} : vector<4x256xf32> to vector<4x16xf32>
    %c0_77 = arith.constant 0 : index
    %c12_78 = arith.constant 12 : index
    %c25_79 = arith.constant 25 : index
    %130 = vector.load %arg6[%c0_77, %c12_78, %c25_79] : memref<4x22x44xf32, #tpu.memory_space<vmem>>, vector<4x1x16xf32>
    %131 = vector.shape_cast %130 : vector<4x1x16xf32> to vector<4x16xf32>
    %132 = vector.shape_cast %129 : vector<4x16xf32> to vector<4x1x16xf32>
    tpu.vector_store %arg6[%c0_77, %c12_78, %c25_79], %132 {strides = array<i32>} : memref<4x22x44xf32, #tpu.memory_space<vmem>>, vector<4x1x16xf32>,
    %133 = vector.extract_strided_slice %26 {offsets = [0, 160], sizes = [4, 16], strides = [1, 1]} : vector<4x256xf32> to vector<4x16xf32>
    %c0_80 = arith.constant 0 : index
    %c13_81 = arith.constant 13 : index
    %c25_82 = arith.constant 25 : index
    %134 = vector.load %arg6[%c0_80, %c13_81, %c25_82] : memref<4x22x44xf32, #tpu.memory_space<vmem>>, vector<4x1x16xf32>
    %135 = vector.shape_cast %134 : vector<4x1x16xf32> to vector<4x16xf32>
    %136 = vector.shape_cast %133 : vector<4x16xf32> to vector<4x1x16xf32>
    tpu.vector_store %arg6[%c0_80, %c13_81, %c25_82], %136 {strides = array<i32>} : memref<4x22x44xf32, #tpu.memory_space<vmem>>, vector<4x1x16xf32>,
    %137 = vector.extract_strided_slice %26 {offsets = [0, 176], sizes = [4, 16], strides = [1, 1]} : vector<4x256xf32> to vector<4x16xf32>
    %c0_83 = arith.constant 0 : index
    %c14_84 = arith.constant 14 : index
    %c25_85 = arith.constant 25 : index
    %138 = vector.load %arg6[%c0_83, %c14_84, %c25_85] : memref<4x22x44xf32, #tpu.memory_space<vmem>>, vector<4x1x16xf32>
    %139 = vector.shape_cast %138 : vector<4x1x16xf32> to vector<4x16xf32>
    %140 = vector.shape_cast %137 : vector<4x16xf32> to vector<4x1x16xf32>
    tpu.vector_store %arg6[%c0_83, %c14_84, %c25_85], %140 {strides = array<i32>} : memref<4x22x44xf32, #tpu.memory_space<vmem>>, vector<4x1x16xf32>,
    %141 = vector.extract_strided_slice %26 {offsets = [0, 192], sizes = [4, 16], strides = [1, 1]} : vector<4x256xf32> to vector<4x16xf32>
    %c0_86 = arith.constant 0 : index
    %c15_87 = arith.constant 15 : index
    %c25_88 = arith.constant 25 : index
    %142 = vector.load %arg6[%c0_86, %c15_87, %c25_88] : memref<4x22x44xf32, #tpu.memory_space<vmem>>, vector<4x1x16xf32>
    %143 = vector.shape_cast %142 : vector<4x1x16xf32> to vector<4x16xf32>
    %144 = vector.shape_cast %141 : vector<4x16xf32> to vector<4x1x16xf32>
    tpu.vector_store %arg6[%c0_86, %c15_87, %c25_88], %144 {strides = array<i32>} : memref<4x22x44xf32, #tpu.memory_space<vmem>>, vector<4x1x16xf32>,
    %145 = vector.extract_strided_slice %26 {offsets = [0, 208], sizes = [4, 16], strides = [1, 1]} : vector<4x256xf32> to vector<4x16xf32>
    %c0_89 = arith.constant 0 : index
    %c16_90 = arith.constant 16 : index
    %c25_91 = arith.constant 25 : index
    %146 = vector.load %arg6[%c0_89, %c16_90, %c25_91] : memref<4x22x44xf32, #tpu.memory_space<vmem>>, vector<4x1x16xf32>
    %147 = vector.shape_cast %146 : vector<4x1x16xf32> to vector<4x16xf32>
    %148 = vector.shape_cast %145 : vector<4x16xf32> to vector<4x1x16xf32>
    tpu.vector_store %arg6[%c0_89, %c16_90, %c25_91], %148 {strides = array<i32>} : memref<4x22x44xf32, #tpu.memory_space<vmem>>, vector<4x1x16xf32>,
    %149 = vector.extract_strided_slice %26 {offsets = [0, 224], sizes = [4, 16], strides = [1, 1]} : vector<4x256xf32> to vector<4x16xf32>
    %c0_92 = arith.constant 0 : index
    %c17_93 = arith.constant 17 : index
    %c25_94 = arith.constant 25 : index
    %150 = vector.load %arg6[%c0_92, %c17_93, %c25_94] : memref<4x22x44xf32, #tpu.memory_space<vmem>>, vector<4x1x16xf32>
    %151 = vector.shape_cast %150 : vector<4x1x16xf32> to vector<4x16xf32>
    %152 = vector.shape_cast %149 : vector<4x16xf32> to vector<4x1x16xf32>
    tpu.vector_store %arg6[%c0_92, %c17_93, %c25_94], %152 {strides = array<i32>} : memref<4x22x44xf32, #tpu.memory_space<vmem>>, vector<4x1x16xf32>,
    %153 = vector.extract_strided_slice %26 {offsets = [0, 240], sizes = [4, 16], strides = [1, 1]} : vector<4x256xf32> to vector<4x16xf32>
    %c0_95 = arith.constant 0 : index
    %c18_96 = arith.constant 18 : index
    %c25_97 = arith.constant 25 : index
    %154 = vector.load %arg6[%c0_95, %c18_96, %c25_97] : memref<4x22x44xf32, #tpu.memory_space<vmem>>, vector<4x1x16xf32>
    %155 = vector.shape_cast %154 : vector<4x1x16xf32> to vector<4x16xf32>
    %156 = vector.shape_cast %153 : vector<4x16xf32> to vector<4x1x16xf32>
    tpu.vector_store %arg6[%c0_95, %c18_96, %c25_97], %156 {strides = array<i32>} : memref<4x22x44xf32, #tpu.memory_space<vmem>>, vector<4x1x16xf32>,
    %c0_98 = arith.constant 0 : index
    %c0_99 = arith.constant 0 : index
    %c0_100 = arith.constant 0 : index
    %157 = vector.load %arg6[%c0_98, %c0_99, %c0_100] : memref<4x22x44xf32, #tpu.memory_space<vmem>>, vector<4x22x44xf32>
    %c0_101 = arith.constant 0 : index
    %158 = memref.load %arg4[%c0_101] : memref<98xf32, #tpu.memory_space<smem>>
    %c1 = arith.constant 1 : index
    %159 = memref.load %arg4[%c1] : memref<98xf32, #tpu.memory_space<smem>>
    %c2 = arith.constant 2 : index
    %160 = memref.load %arg4[%c2] : memref<98xf32, #tpu.memory_space<smem>>
    %c3_102 = arith.constant 3 : index
    %161 = memref.load %arg4[%c3_102] : memref<98xf32, #tpu.memory_space<smem>>
    %c4_103 = arith.constant 4 : index
    %162 = memref.load %arg4[%c4_103] : memref<98xf32, #tpu.memory_space<smem>>
    %c5_104 = arith.constant 5 : index
    %163 = memref.load %arg4[%c5_104] : memref<98xf32, #tpu.memory_space<smem>>
    %c6_105 = arith.constant 6 : index
    %164 = memref.load %arg4[%c6_105] : memref<98xf32, #tpu.memory_space<smem>>
    %c7_106 = arith.constant 7 : index
    %165 = memref.load %arg4[%c7_106] : memref<98xf32, #tpu.memory_space<smem>>
    %c8_107 = arith.constant 8 : index
    %166 = memref.load %arg4[%c8_107] : memref<98xf32, #tpu.memory_space<smem>>
    %c9_108 = arith.constant 9 : index
    %167 = memref.load %arg4[%c9_108] : memref<98xf32, #tpu.memory_space<smem>>
    %c10_109 = arith.constant 10 : index
    %168 = memref.load %arg4[%c10_109] : memref<98xf32, #tpu.memory_space<smem>>
    %c11_110 = arith.constant 11 : index
    %169 = memref.load %arg4[%c11_110] : memref<98xf32, #tpu.memory_space<smem>>
    %c12_111 = arith.constant 12 : index
    %170 = memref.load %arg4[%c12_111] : memref<98xf32, #tpu.memory_space<smem>>
    %c13_112 = arith.constant 13 : index
    %171 = memref.load %arg4[%c13_112] : memref<98xf32, #tpu.memory_space<smem>>
    %c14_113 = arith.constant 14 : index
    %172 = memref.load %arg4[%c14_113] : memref<98xf32, #tpu.memory_space<smem>>
    %c15_114 = arith.constant 15 : index
    %173 = memref.load %arg4[%c15_114] : memref<98xf32, #tpu.memory_space<smem>>
    %c16_115 = arith.constant 16 : index
    %174 = memref.load %arg4[%c16_115] : memref<98xf32, #tpu.memory_space<smem>>
    %c17_116 = arith.constant 17 : index
    %175 = memref.load %arg4[%c17_116] : memref<98xf32, #tpu.memory_space<smem>>
    %c18_117 = arith.constant 18 : index
    %176 = memref.load %arg4[%c18_117] : memref<98xf32, #tpu.memory_space<smem>>
    %c19 = arith.constant 19 : index
    %177 = memref.load %arg4[%c19] : memref<98xf32, #tpu.memory_space<smem>>
    %c20 = arith.constant 20 : index
    %178 = memref.load %arg4[%c20] : memref<98xf32, #tpu.memory_space<smem>>
    %c21 = arith.constant 21 : index
    %179 = memref.load %arg4[%c21] : memref<98xf32, #tpu.memory_space<smem>>
    %c22 = arith.constant 22 : index
    %180 = memref.load %arg4[%c22] : memref<98xf32, #tpu.memory_space<smem>>
    %c23 = arith.constant 23 : index
    %181 = memref.load %arg4[%c23] : memref<98xf32, #tpu.memory_space<smem>>
    %c24 = arith.constant 24 : index
    %182 = memref.load %arg4[%c24] : memref<98xf32, #tpu.memory_space<smem>>
    %c25_118 = arith.constant 25 : index
    %183 = memref.load %arg4[%c25_118] : memref<98xf32, #tpu.memory_space<smem>>
    %c26 = arith.constant 26 : index
    %184 = memref.load %arg4[%c26] : memref<98xf32, #tpu.memory_space<smem>>
    %c27 = arith.constant 27 : index
    %185 = memref.load %arg4[%c27] : memref<98xf32, #tpu.memory_space<smem>>
    %c28 = arith.constant 28 : index
    %186 = memref.load %arg4[%c28] : memref<98xf32, #tpu.memory_space<smem>>
    %c29 = arith.constant 29 : index
    %187 = memref.load %arg4[%c29] : memref<98xf32, #tpu.memory_space<smem>>
    %c30 = arith.constant 30 : index
    %188 = memref.load %arg4[%c30] : memref<98xf32, #tpu.memory_space<smem>>
    %c31 = arith.constant 31 : index
    %189 = memref.load %arg4[%c31] : memref<98xf32, #tpu.memory_space<smem>>
    %c32 = arith.constant 32 : index
    %190 = memref.load %arg4[%c32] : memref<98xf32, #tpu.memory_space<smem>>
    %c33 = arith.constant 33 : index
    %191 = memref.load %arg4[%c33] : memref<98xf32, #tpu.memory_space<smem>>
    %c34 = arith.constant 34 : index
    %192 = memref.load %arg4[%c34] : memref<98xf32, #tpu.memory_space<smem>>
    %c35 = arith.constant 35 : index
    %193 = memref.load %arg4[%c35] : memref<98xf32, #tpu.memory_space<smem>>
    %c36 = arith.constant 36 : index
    %194 = memref.load %arg4[%c36] : memref<98xf32, #tpu.memory_space<smem>>
    %c37 = arith.constant 37 : index
    %195 = memref.load %arg4[%c37] : memref<98xf32, #tpu.memory_space<smem>>
    %c38 = arith.constant 38 : index
    %196 = memref.load %arg4[%c38] : memref<98xf32, #tpu.memory_space<smem>>
    %c39 = arith.constant 39 : index
    %197 = memref.load %arg4[%c39] : memref<98xf32, #tpu.memory_space<smem>>
    %c40 = arith.constant 40 : index
    %198 = memref.load %arg4[%c40] : memref<98xf32, #tpu.memory_space<smem>>
    %c41 = arith.constant 41 : index
    %199 = memref.load %arg4[%c41] : memref<98xf32, #tpu.memory_space<smem>>
    %c42 = arith.constant 42 : index
    %200 = memref.load %arg4[%c42] : memref<98xf32, #tpu.memory_space<smem>>
    %c43 = arith.constant 43 : index
    %201 = memref.load %arg4[%c43] : memref<98xf32, #tpu.memory_space<smem>>
    %c44 = arith.constant 44 : index
    %202 = memref.load %arg4[%c44] : memref<98xf32, #tpu.memory_space<smem>>
    %c45 = arith.constant 45 : index
    %203 = memref.load %arg4[%c45] : memref<98xf32, #tpu.memory_space<smem>>
    %c46 = arith.constant 46 : index
    %204 = memref.load %arg4[%c46] : memref<98xf32, #tpu.memory_space<smem>>
    %c47 = arith.constant 47 : index
    %205 = memref.load %arg4[%c47] : memref<98xf32, #tpu.memory_space<smem>>
    %c48 = arith.constant 48 : index
    %206 = memref.load %arg4[%c48] : memref<98xf32, #tpu.memory_space<smem>>
    %c49 = arith.constant 49 : index
    %207 = memref.load %arg4[%c49] : memref<98xf32, #tpu.memory_space<smem>>
    %c50 = arith.constant 50 : index
    %208 = memref.load %arg4[%c50] : memref<98xf32, #tpu.memory_space<smem>>
    %c51 = arith.constant 51 : index
    %209 = memref.load %arg4[%c51] : memref<98xf32, #tpu.memory_space<smem>>
    %c52 = arith.constant 52 : index
    %210 = memref.load %arg4[%c52] : memref<98xf32, #tpu.memory_space<smem>>
    %c53 = arith.constant 53 : index
    %211 = memref.load %arg4[%c53] : memref<98xf32, #tpu.memory_space<smem>>
    %c54 = arith.constant 54 : index
    %212 = memref.load %arg4[%c54] : memref<98xf32, #tpu.memory_space<smem>>
    %c55 = arith.constant 55 : index
    %213 = memref.load %arg4[%c55] : memref<98xf32, #tpu.memory_space<smem>>
    %c56 = arith.constant 56 : index
    %214 = memref.load %arg4[%c56] : memref<98xf32, #tpu.memory_space<smem>>
    %c57 = arith.constant 57 : index
    %215 = memref.load %arg4[%c57] : memref<98xf32, #tpu.memory_space<smem>>
    %c58 = arith.constant 58 : index
    %216 = memref.load %arg4[%c58] : memref<98xf32, #tpu.memory_space<smem>>
    %c59 = arith.constant 59 : index
    %217 = memref.load %arg4[%c59] : memref<98xf32, #tpu.memory_space<smem>>
    %c60 = arith.constant 60 : index
    %218 = memref.load %arg4[%c60] : memref<98xf32, #tpu.memory_space<smem>>
    %c61 = arith.constant 61 : index
    %219 = memref.load %arg4[%c61] : memref<98xf32, #tpu.memory_space<smem>>
    %c62 = arith.constant 62 : index
    %220 = memref.load %arg4[%c62] : memref<98xf32, #tpu.memory_space<smem>>
    %c63 = arith.constant 63 : index
    %221 = memref.load %arg4[%c63] : memref<98xf32, #tpu.memory_space<smem>>
    %c64 = arith.constant 64 : index
    %222 = memref.load %arg4[%c64] : memref<98xf32, #tpu.memory_space<smem>>
    %c65 = arith.constant 65 : index
    %223 = memref.load %arg4[%c65] : memref<98xf32, #tpu.memory_space<smem>>
    %c66 = arith.constant 66 : index
    %224 = memref.load %arg4[%c66] : memref<98xf32, #tpu.memory_space<smem>>
    %c67 = arith.constant 67 : index
    %225 = memref.load %arg4[%c67] : memref<98xf32, #tpu.memory_space<smem>>
    %c68 = arith.constant 68 : index
    %226 = memref.load %arg4[%c68] : memref<98xf32, #tpu.memory_space<smem>>
    %c69 = arith.constant 69 : index
    %227 = memref.load %arg4[%c69] : memref<98xf32, #tpu.memory_space<smem>>
    %c70 = arith.constant 70 : index
    %228 = memref.load %arg4[%c70] : memref<98xf32, #tpu.memory_space<smem>>
    %c71 = arith.constant 71 : index
    %229 = memref.load %arg4[%c71] : memref<98xf32, #tpu.memory_space<smem>>
    %c72 = arith.constant 72 : index
    %230 = memref.load %arg4[%c72] : memref<98xf32, #tpu.memory_space<smem>>
    %c73 = arith.constant 73 : index
    %231 = memref.load %arg4[%c73] : memref<98xf32, #tpu.memory_space<smem>>
    %c74 = arith.constant 74 : index
    %232 = memref.load %arg4[%c74] : memref<98xf32, #tpu.memory_space<smem>>
    %c75 = arith.constant 75 : index
    %233 = memref.load %arg4[%c75] : memref<98xf32, #tpu.memory_space<smem>>
    %c76 = arith.constant 76 : index
    %234 = memref.load %arg4[%c76] : memref<98xf32, #tpu.memory_space<smem>>
    %c77 = arith.constant 77 : index
    %235 = memref.load %arg4[%c77] : memref<98xf32, #tpu.memory_space<smem>>
    %c78 = arith.constant 78 : index
    %236 = memref.load %arg4[%c78] : memref<98xf32, #tpu.memory_space<smem>>
    %c79 = arith.constant 79 : index
    %237 = memref.load %arg4[%c79] : memref<98xf32, #tpu.memory_space<smem>>
    %c80 = arith.constant 80 : index
    %238 = memref.load %arg4[%c80] : memref<98xf32, #tpu.memory_space<smem>>
    %c81 = arith.constant 81 : index
    %239 = memref.load %arg4[%c81] : memref<98xf32, #tpu.memory_space<smem>>
    %c82 = arith.constant 82 : index
    %240 = memref.load %arg4[%c82] : memref<98xf32, #tpu.memory_space<smem>>
    %c83 = arith.constant 83 : index
    %241 = memref.load %arg4[%c83] : memref<98xf32, #tpu.memory_space<smem>>
    %c84 = arith.constant 84 : index
    %242 = memref.load %arg4[%c84] : memref<98xf32, #tpu.memory_space<smem>>
    %c85 = arith.constant 85 : index
    %243 = memref.load %arg4[%c85] : memref<98xf32, #tpu.memory_space<smem>>
    %c86 = arith.constant 86 : index
    %244 = memref.load %arg4[%c86] : memref<98xf32, #tpu.memory_space<smem>>
    %c87 = arith.constant 87 : index
    %245 = memref.load %arg4[%c87] : memref<98xf32, #tpu.memory_space<smem>>
    %c88 = arith.constant 88 : index
    %246 = memref.load %arg4[%c88] : memref<98xf32, #tpu.memory_space<smem>>
    %c89 = arith.constant 89 : index
    %247 = memref.load %arg4[%c89] : memref<98xf32, #tpu.memory_space<smem>>
    %c90 = arith.constant 90 : index
    %248 = memref.load %arg4[%c90] : memref<98xf32, #tpu.memory_space<smem>>
    %c91 = arith.constant 91 : index
    %249 = memref.load %arg4[%c91] : memref<98xf32, #tpu.memory_space<smem>>
    %c92 = arith.constant 92 : index
    %250 = memref.load %arg4[%c92] : memref<98xf32, #tpu.memory_space<smem>>
    %c93 = arith.constant 93 : index
    %251 = memref.load %arg4[%c93] : memref<98xf32, #tpu.memory_space<smem>>
    %c94 = arith.constant 94 : index
    %252 = memref.load %arg4[%c94] : memref<98xf32, #tpu.memory_space<smem>>
    %c95 = arith.constant 95 : index
    %253 = memref.load %arg4[%c95] : memref<98xf32, #tpu.memory_space<smem>>
    %c96 = arith.constant 96 : index
    %254 = memref.load %arg4[%c96] : memref<98xf32, #tpu.memory_space<smem>>
    %c97 = arith.constant 97 : index
    %255 = memref.load %arg4[%c97] : memref<98xf32, #tpu.memory_space<smem>>
    %cst_119 = arith.constant 0.000000e+00 : f32
    %256 = vector.broadcast %cst_119 : f32 to vector<4x16x16xf32>
    %cst_120 = arith.constant 0.000000e+00 : f32
    %257 = vector.broadcast %cst_120 : f32 to vector<4x16x16xf32>
    %cst_121 = arith.constant 0.000000e+00 : f32
    %258 = vector.broadcast %cst_121 : f32 to vector<4x16x16xf32>
    %cst_122 = arith.constant 0.000000e+00 : f32
    %259 = vector.broadcast %cst_122 : f32 to vector<4x16x16xf32>
    %260 = vector.extract_strided_slice %157 {offsets = [0, 0, 0], sizes = [4, 22, 16], strides = [1, 1, 1]} : vector<4x22x44xf32> to vector<4x22x16xf32>
    %261 = vector.extract_strided_slice %260 {offsets = [0, 0, 0], sizes = [4, 16, 16], strides = [1, 1, 1]} : vector<4x22x16xf32> to vector<4x16x16xf32>
    %262 = vector.broadcast %158 : f32 to vector<4x16x16xf32>
    %263 = arith.mulf %262, %261 : vector<4x16x16xf32>
    %264 = arith.addf %256, %263 : vector<4x16x16xf32>
    %265 = vector.extract_strided_slice %260 {offsets = [0, 1, 0], sizes = [4, 16, 16], strides = [1, 1, 1]} : vector<4x22x16xf32> to vector<4x16x16xf32>
    %266 = vector.broadcast %165 : f32 to vector<4x16x16xf32>
    %267 = arith.mulf %266, %265 : vector<4x16x16xf32>
    %268 = arith.addf %257, %267 : vector<4x16x16xf32>
    %269 = vector.extract_strided_slice %260 {offsets = [0, 2, 0], sizes = [4, 16, 16], strides = [1, 1, 1]} : vector<4x22x16xf32> to vector<4x16x16xf32>
    %270 = vector.broadcast %172 : f32 to vector<4x16x16xf32>
    %271 = arith.mulf %270, %269 : vector<4x16x16xf32>
    %272 = arith.addf %258, %271 : vector<4x16x16xf32>
    %273 = vector.extract_strided_slice %260 {offsets = [0, 3, 0], sizes = [4, 16, 16], strides = [1, 1, 1]} : vector<4x22x16xf32> to vector<4x16x16xf32>
    %274 = vector.broadcast %179 : f32 to vector<4x16x16xf32>
    %275 = arith.mulf %274, %273 : vector<4x16x16xf32>
    %276 = arith.addf %259, %275 : vector<4x16x16xf32>
    %277 = vector.extract_strided_slice %260 {offsets = [0, 4, 0], sizes = [4, 16, 16], strides = [1, 1, 1]} : vector<4x22x16xf32> to vector<4x16x16xf32>
    %278 = vector.broadcast %186 : f32 to vector<4x16x16xf32>
    %279 = arith.mulf %278, %277 : vector<4x16x16xf32>
    %280 = arith.addf %264, %279 : vector<4x16x16xf32>
    %281 = vector.extract_strided_slice %260 {offsets = [0, 5, 0], sizes = [4, 16, 16], strides = [1, 1, 1]} : vector<4x22x16xf32> to vector<4x16x16xf32>
    %282 = vector.broadcast %193 : f32 to vector<4x16x16xf32>
    %283 = arith.mulf %282, %281 : vector<4x16x16xf32>
    %284 = arith.addf %268, %283 : vector<4x16x16xf32>
    %285 = vector.extract_strided_slice %260 {offsets = [0, 6, 0], sizes = [4, 16, 16], strides = [1, 1, 1]} : vector<4x22x16xf32> to vector<4x16x16xf32>
    %286 = vector.broadcast %200 : f32 to vector<4x16x16xf32>
    %287 = arith.mulf %286, %285 : vector<4x16x16xf32>
    %288 = arith.addf %272, %287 : vector<4x16x16xf32>
    %289 = vector.extract_strided_slice %157 {offsets = [0, 0, 1], sizes = [4, 22, 16], strides = [1, 1, 1]} : vector<4x22x44xf32> to vector<4x22x16xf32>
    %290 = vector.extract_strided_slice %289 {offsets = [0, 0, 0], sizes = [4, 16, 16], strides = [1, 1, 1]} : vector<4x22x16xf32> to vector<4x16x16xf32>
    %291 = vector.broadcast %159 : f32 to vector<4x16x16xf32>
    %292 = arith.mulf %291, %290 : vector<4x16x16xf32>
    %293 = arith.addf %276, %292 : vector<4x16x16xf32>
    %294 = vector.extract_strided_slice %289 {offsets = [0, 1, 0], sizes = [4, 16, 16], strides = [1, 1, 1]} : vector<4x22x16xf32> to vector<4x16x16xf32>
    %295 = vector.broadcast %166 : f32 to vector<4x16x16xf32>
    %296 = arith.mulf %295, %294 : vector<4x16x16xf32>
    %297 = arith.addf %280, %296 : vector<4x16x16xf32>
    %298 = vector.extract_strided_slice %289 {offsets = [0, 2, 0], sizes = [4, 16, 16], strides = [1, 1, 1]} : vector<4x22x16xf32> to vector<4x16x16xf32>
    %299 = vector.broadcast %173 : f32 to vector<4x16x16xf32>
    %300 = arith.mulf %299, %298 : vector<4x16x16xf32>
    %301 = arith.addf %284, %300 : vector<4x16x16xf32>
    %302 = vector.extract_strided_slice %289 {offsets = [0, 3, 0], sizes = [4, 16, 16], strides = [1, 1, 1]} : vector<4x22x16xf32> to vector<4x16x16xf32>
    %303 = vector.broadcast %180 : f32 to vector<4x16x16xf32>
    %304 = arith.mulf %303, %302 : vector<4x16x16xf32>
    %305 = arith.addf %288, %304 : vector<4x16x16xf32>
    %306 = vector.extract_strided_slice %289 {offsets = [0, 4, 0], sizes = [4, 16, 16], strides = [1, 1, 1]} : vector<4x22x16xf32> to vector<4x16x16xf32>
    %307 = vector.broadcast %187 : f32 to vector<4x16x16xf32>
    %308 = arith.mulf %307, %306 : vector<4x16x16xf32>
    %309 = arith.addf %293, %308 : vector<4x16x16xf32>
    %310 = vector.extract_strided_slice %289 {offsets = [0, 5, 0], sizes = [4, 16, 16], strides = [1, 1, 1]} : vector<4x22x16xf32> to vector<4x16x16xf32>
    %311 = vector.broadcast %194 : f32 to vector<4x16x16xf32>
    %312 = arith.mulf %311, %310 : vector<4x16x16xf32>
    %313 = arith.addf %297, %312 : vector<4x16x16xf32>
    %314 = vector.extract_strided_slice %289 {offsets = [0, 6, 0], sizes = [4, 16, 16], strides = [1, 1, 1]} : vector<4x22x16xf32> to vector<4x16x16xf32>
    %315 = vector.broadcast %201 : f32 to vector<4x16x16xf32>
    %316 = arith.mulf %315, %314 : vector<4x16x16xf32>
    %317 = arith.addf %301, %316 : vector<4x16x16xf32>
    %318 = vector.extract_strided_slice %157 {offsets = [0, 0, 2], sizes = [4, 22, 16], strides = [1, 1, 1]} : vector<4x22x44xf32> to vector<4x22x16xf32>
    %319 = vector.extract_strided_slice %318 {offsets = [0, 0, 0], sizes = [4, 16, 16], strides = [1, 1, 1]} : vector<4x22x16xf32> to vector<4x16x16xf32>
    %320 = vector.broadcast %160 : f32 to vector<4x16x16xf32>
    %321 = arith.mulf %320, %319 : vector<4x16x16xf32>
    %322 = arith.addf %305, %321 : vector<4x16x16xf32>
    %323 = vector.extract_strided_slice %318 {offsets = [0, 1, 0], sizes = [4, 16, 16], strides = [1, 1, 1]} : vector<4x22x16xf32> to vector<4x16x16xf32>
    %324 = vector.broadcast %167 : f32 to vector<4x16x16xf32>
    %325 = arith.mulf %324, %323 : vector<4x16x16xf32>
    %326 = arith.addf %309, %325 : vector<4x16x16xf32>
    %327 = vector.extract_strided_slice %318 {offsets = [0, 2, 0], sizes = [4, 16, 16], strides = [1, 1, 1]} : vector<4x22x16xf32> to vector<4x16x16xf32>
    %328 = vector.broadcast %174 : f32 to vector<4x16x16xf32>
    %329 = arith.mulf %328, %327 : vector<4x16x16xf32>
    %330 = arith.addf %313, %329 : vector<4x16x16xf32>
    %331 = vector.extract_strided_slice %318 {offsets = [0, 3, 0], sizes = [4, 16, 16], strides = [1, 1, 1]} : vector<4x22x16xf32> to vector<4x16x16xf32>
    %332 = vector.broadcast %181 : f32 to vector<4x16x16xf32>
    %333 = arith.mulf %332, %331 : vector<4x16x16xf32>
    %334 = arith.addf %317, %333 : vector<4x16x16xf32>
    %335 = vector.extract_strided_slice %318 {offsets = [0, 4, 0], sizes = [4, 16, 16], strides = [1, 1, 1]} : vector<4x22x16xf32> to vector<4x16x16xf32>
    %336 = vector.broadcast %188 : f32 to vector<4x16x16xf32>
    %337 = arith.mulf %336, %335 : vector<4x16x16xf32>
    %338 = arith.addf %322, %337 : vector<4x16x16xf32>
    %339 = vector.extract_strided_slice %318 {offsets = [0, 5, 0], sizes = [4, 16, 16], strides = [1, 1, 1]} : vector<4x22x16xf32> to vector<4x16x16xf32>
    %340 = vector.broadcast %195 : f32 to vector<4x16x16xf32>
    %341 = arith.mulf %340, %339 : vector<4x16x16xf32>
    %342 = arith.addf %326, %341 : vector<4x16x16xf32>
    %343 = vector.extract_strided_slice %318 {offsets = [0, 6, 0], sizes = [4, 16, 16], strides = [1, 1, 1]} : vector<4x22x16xf32> to vector<4x16x16xf32>
    %344 = vector.broadcast %202 : f32 to vector<4x16x16xf32>
    %345 = arith.mulf %344, %343 : vector<4x16x16xf32>
    %346 = arith.addf %330, %345 : vector<4x16x16xf32>
    %347 = vector.extract_strided_slice %157 {offsets = [0, 0, 3], sizes = [4, 22, 16], strides = [1, 1, 1]} : vector<4x22x44xf32> to vector<4x22x16xf32>
    %348 = vector.extract_strided_slice %347 {offsets = [0, 0, 0], sizes = [4, 16, 16], strides = [1, 1, 1]} : vector<4x22x16xf32> to vector<4x16x16xf32>
    %349 = vector.broadcast %161 : f32 to vector<4x16x16xf32>
    %350 = arith.mulf %349, %348 : vector<4x16x16xf32>
    %351 = arith.addf %334, %350 : vector<4x16x16xf32>
    %352 = vector.extract_strided_slice %347 {offsets = [0, 1, 0], sizes = [4, 16, 16], strides = [1, 1, 1]} : vector<4x22x16xf32> to vector<4x16x16xf32>
    %353 = vector.broadcast %168 : f32 to vector<4x16x16xf32>
    %354 = arith.mulf %353, %352 : vector<4x16x16xf32>
    %355 = arith.addf %338, %354 : vector<4x16x16xf32>
    %356 = vector.extract_strided_slice %347 {offsets = [0, 2, 0], sizes = [4, 16, 16], strides = [1, 1, 1]} : vector<4x22x16xf32> to vector<4x16x16xf32>
    %357 = vector.broadcast %175 : f32 to vector<4x16x16xf32>
    %358 = arith.mulf %357, %356 : vector<4x16x16xf32>
    %359 = arith.addf %342, %358 : vector<4x16x16xf32>
    %360 = vector.extract_strided_slice %347 {offsets = [0, 3, 0], sizes = [4, 16, 16], strides = [1, 1, 1]} : vector<4x22x16xf32> to vector<4x16x16xf32>
    %361 = vector.broadcast %182 : f32 to vector<4x16x16xf32>
    %362 = arith.mulf %361, %360 : vector<4x16x16xf32>
    %363 = arith.addf %346, %362 : vector<4x16x16xf32>
    %364 = vector.extract_strided_slice %347 {offsets = [0, 4, 0], sizes = [4, 16, 16], strides = [1, 1, 1]} : vector<4x22x16xf32> to vector<4x16x16xf32>
    %365 = vector.broadcast %189 : f32 to vector<4x16x16xf32>
    %366 = arith.mulf %365, %364 : vector<4x16x16xf32>
    %367 = arith.addf %351, %366 : vector<4x16x16xf32>
    %368 = vector.extract_strided_slice %347 {offsets = [0, 5, 0], sizes = [4, 16, 16], strides = [1, 1, 1]} : vector<4x22x16xf32> to vector<4x16x16xf32>
    %369 = vector.broadcast %196 : f32 to vector<4x16x16xf32>
    %370 = arith.mulf %369, %368 : vector<4x16x16xf32>
    %371 = arith.addf %355, %370 : vector<4x16x16xf32>
    %372 = vector.extract_strided_slice %347 {offsets = [0, 6, 0], sizes = [4, 16, 16], strides = [1, 1, 1]} : vector<4x22x16xf32> to vector<4x16x16xf32>
    %373 = vector.broadcast %203 : f32 to vector<4x16x16xf32>
    %374 = arith.mulf %373, %372 : vector<4x16x16xf32>
    %375 = arith.addf %359, %374 : vector<4x16x16xf32>
    %376 = vector.extract_strided_slice %157 {offsets = [0, 0, 4], sizes = [4, 22, 16], strides = [1, 1, 1]} : vector<4x22x44xf32> to vector<4x22x16xf32>
    %377 = vector.extract_strided_slice %376 {offsets = [0, 0, 0], sizes = [4, 16, 16], strides = [1, 1, 1]} : vector<4x22x16xf32> to vector<4x16x16xf32>
    %378 = vector.broadcast %162 : f32 to vector<4x16x16xf32>
    %379 = arith.mulf %378, %377 : vector<4x16x16xf32>
    %380 = arith.addf %363, %379 : vector<4x16x16xf32>
    %381 = vector.extract_strided_slice %376 {offsets = [0, 1, 0], sizes = [4, 16, 16], strides = [1, 1, 1]} : vector<4x22x16xf32> to vector<4x16x16xf32>
    %382 = vector.broadcast %169 : f32 to vector<4x16x16xf32>
    %383 = arith.mulf %382, %381 : vector<4x16x16xf32>
    %384 = arith.addf %367, %383 : vector<4x16x16xf32>
    %385 = vector.extract_strided_slice %376 {offsets = [0, 2, 0], sizes = [4, 16, 16], strides = [1, 1, 1]} : vector<4x22x16xf32> to vector<4x16x16xf32>
    %386 = vector.broadcast %176 : f32 to vector<4x16x16xf32>
    %387 = arith.mulf %386, %385 : vector<4x16x16xf32>
    %388 = arith.addf %371, %387 : vector<4x16x16xf32>
    %389 = vector.extract_strided_slice %376 {offsets = [0, 3, 0], sizes = [4, 16, 16], strides = [1, 1, 1]} : vector<4x22x16xf32> to vector<4x16x16xf32>
    %390 = vector.broadcast %183 : f32 to vector<4x16x16xf32>
    %391 = arith.mulf %390, %389 : vector<4x16x16xf32>
    %392 = arith.addf %375, %391 : vector<4x16x16xf32>
    %393 = vector.extract_strided_slice %376 {offsets = [0, 4, 0], sizes = [4, 16, 16], strides = [1, 1, 1]} : vector<4x22x16xf32> to vector<4x16x16xf32>
    %394 = vector.broadcast %190 : f32 to vector<4x16x16xf32>
    %395 = arith.mulf %394, %393 : vector<4x16x16xf32>
    %396 = arith.addf %380, %395 : vector<4x16x16xf32>
    %397 = vector.extract_strided_slice %376 {offsets = [0, 5, 0], sizes = [4, 16, 16], strides = [1, 1, 1]} : vector<4x22x16xf32> to vector<4x16x16xf32>
    %398 = vector.broadcast %197 : f32 to vector<4x16x16xf32>
    %399 = arith.mulf %398, %397 : vector<4x16x16xf32>
    %400 = arith.addf %384, %399 : vector<4x16x16xf32>
    %401 = vector.extract_strided_slice %376 {offsets = [0, 6, 0], sizes = [4, 16, 16], strides = [1, 1, 1]} : vector<4x22x16xf32> to vector<4x16x16xf32>
    %402 = vector.broadcast %204 : f32 to vector<4x16x16xf32>
    %403 = arith.mulf %402, %401 : vector<4x16x16xf32>
    %404 = arith.addf %388, %403 : vector<4x16x16xf32>
    %405 = vector.extract_strided_slice %157 {offsets = [0, 0, 5], sizes = [4, 22, 16], strides = [1, 1, 1]} : vector<4x22x44xf32> to vector<4x22x16xf32>
    %406 = vector.extract_strided_slice %405 {offsets = [0, 0, 0], sizes = [4, 16, 16], strides = [1, 1, 1]} : vector<4x22x16xf32> to vector<4x16x16xf32>
    %407 = vector.broadcast %163 : f32 to vector<4x16x16xf32>
    %408 = arith.mulf %407, %406 : vector<4x16x16xf32>
    %409 = arith.addf %392, %408 : vector<4x16x16xf32>
    %410 = vector.extract_strided_slice %405 {offsets = [0, 1, 0], sizes = [4, 16, 16], strides = [1, 1, 1]} : vector<4x22x16xf32> to vector<4x16x16xf32>
    %411 = vector.broadcast %170 : f32 to vector<4x16x16xf32>
    %412 = arith.mulf %411, %410 : vector<4x16x16xf32>
    %413 = arith.addf %396, %412 : vector<4x16x16xf32>
    %414 = vector.extract_strided_slice %405 {offsets = [0, 2, 0], sizes = [4, 16, 16], strides = [1, 1, 1]} : vector<4x22x16xf32> to vector<4x16x16xf32>
    %415 = vector.broadcast %177 : f32 to vector<4x16x16xf32>
    %416 = arith.mulf %415, %414 : vector<4x16x16xf32>
    %417 = arith.addf %400, %416 : vector<4x16x16xf32>
    %418 = vector.extract_strided_slice %405 {offsets = [0, 3, 0], sizes = [4, 16, 16], strides = [1, 1, 1]} : vector<4x22x16xf32> to vector<4x16x16xf32>
    %419 = vector.broadcast %184 : f32 to vector<4x16x16xf32>
    %420 = arith.mulf %419, %418 : vector<4x16x16xf32>
    %421 = arith.addf %404, %420 : vector<4x16x16xf32>
    %422 = vector.extract_strided_slice %405 {offsets = [0, 4, 0], sizes = [4, 16, 16], strides = [1, 1, 1]} : vector<4x22x16xf32> to vector<4x16x16xf32>
    %423 = vector.broadcast %191 : f32 to vector<4x16x16xf32>
    %424 = arith.mulf %423, %422 : vector<4x16x16xf32>
    %425 = arith.addf %409, %424 : vector<4x16x16xf32>
    %426 = vector.extract_strided_slice %405 {offsets = [0, 5, 0], sizes = [4, 16, 16], strides = [1, 1, 1]} : vector<4x22x16xf32> to vector<4x16x16xf32>
    %427 = vector.broadcast %198 : f32 to vector<4x16x16xf32>
    %428 = arith.mulf %427, %426 : vector<4x16x16xf32>
    %429 = arith.addf %413, %428 : vector<4x16x16xf32>
    %430 = vector.extract_strided_slice %405 {offsets = [0, 6, 0], sizes = [4, 16, 16], strides = [1, 1, 1]} : vector<4x22x16xf32> to vector<4x16x16xf32>
    %431 = vector.broadcast %205 : f32 to vector<4x16x16xf32>
    %432 = arith.mulf %431, %430 : vector<4x16x16xf32>
    %433 = arith.addf %417, %432 : vector<4x16x16xf32>
    %434 = vector.extract_strided_slice %157 {offsets = [0, 0, 6], sizes = [4, 22, 16], strides = [1, 1, 1]} : vector<4x22x44xf32> to vector<4x22x16xf32>
    %435 = vector.extract_strided_slice %434 {offsets = [0, 0, 0], sizes = [4, 16, 16], strides = [1, 1, 1]} : vector<4x22x16xf32> to vector<4x16x16xf32>
    %436 = vector.broadcast %164 : f32 to vector<4x16x16xf32>
    %437 = arith.mulf %436, %435 : vector<4x16x16xf32>
    %438 = arith.addf %421, %437 : vector<4x16x16xf32>
    %439 = vector.extract_strided_slice %434 {offsets = [0, 1, 0], sizes = [4, 16, 16], strides = [1, 1, 1]} : vector<4x22x16xf32> to vector<4x16x16xf32>
    %440 = vector.broadcast %171 : f32 to vector<4x16x16xf32>
    %441 = arith.mulf %440, %439 : vector<4x16x16xf32>
    %442 = arith.addf %425, %441 : vector<4x16x16xf32>
    %443 = vector.extract_strided_slice %434 {offsets = [0, 2, 0], sizes = [4, 16, 16], strides = [1, 1, 1]} : vector<4x22x16xf32> to vector<4x16x16xf32>
    %444 = vector.broadcast %178 : f32 to vector<4x16x16xf32>
    %445 = arith.mulf %444, %443 : vector<4x16x16xf32>
    %446 = arith.addf %429, %445 : vector<4x16x16xf32>
    %447 = vector.extract_strided_slice %434 {offsets = [0, 3, 0], sizes = [4, 16, 16], strides = [1, 1, 1]} : vector<4x22x16xf32> to vector<4x16x16xf32>
    %448 = vector.broadcast %185 : f32 to vector<4x16x16xf32>
    %449 = arith.mulf %448, %447 : vector<4x16x16xf32>
    %450 = arith.addf %433, %449 : vector<4x16x16xf32>
    %451 = vector.extract_strided_slice %434 {offsets = [0, 4, 0], sizes = [4, 16, 16], strides = [1, 1, 1]} : vector<4x22x16xf32> to vector<4x16x16xf32>
    %452 = vector.broadcast %192 : f32 to vector<4x16x16xf32>
    %453 = arith.mulf %452, %451 : vector<4x16x16xf32>
    %454 = arith.addf %438, %453 : vector<4x16x16xf32>
    %455 = vector.extract_strided_slice %434 {offsets = [0, 5, 0], sizes = [4, 16, 16], strides = [1, 1, 1]} : vector<4x22x16xf32> to vector<4x16x16xf32>
    %456 = vector.broadcast %199 : f32 to vector<4x16x16xf32>
    %457 = arith.mulf %456, %455 : vector<4x16x16xf32>
    %458 = arith.addf %442, %457 : vector<4x16x16xf32>
    %459 = vector.extract_strided_slice %434 {offsets = [0, 6, 0], sizes = [4, 16, 16], strides = [1, 1, 1]} : vector<4x22x16xf32> to vector<4x16x16xf32>
    %460 = vector.broadcast %206 : f32 to vector<4x16x16xf32>
    %461 = arith.mulf %460, %459 : vector<4x16x16xf32>
    %462 = arith.addf %446, %461 : vector<4x16x16xf32>
    %463 = vector.extract_strided_slice %157 {offsets = [0, 0, 22], sizes = [4, 22, 16], strides = [1, 1, 1]} : vector<4x22x44xf32> to vector<4x22x16xf32>
    %464 = vector.extract_strided_slice %463 {offsets = [0, 0, 0], sizes = [4, 16, 16], strides = [1, 1, 1]} : vector<4x22x16xf32> to vector<4x16x16xf32>
    %465 = vector.broadcast %207 : f32 to vector<4x16x16xf32>
    %466 = arith.mulf %465, %464 : vector<4x16x16xf32>
    %467 = arith.addf %450, %466 : vector<4x16x16xf32>
    %468 = vector.extract_strided_slice %463 {offsets = [0, 1, 0], sizes = [4, 16, 16], strides = [1, 1, 1]} : vector<4x22x16xf32> to vector<4x16x16xf32>
    %469 = vector.broadcast %214 : f32 to vector<4x16x16xf32>
    %470 = arith.mulf %469, %468 : vector<4x16x16xf32>
    %471 = arith.addf %454, %470 : vector<4x16x16xf32>
    %472 = vector.extract_strided_slice %463 {offsets = [0, 2, 0], sizes = [4, 16, 16], strides = [1, 1, 1]} : vector<4x22x16xf32> to vector<4x16x16xf32>
    %473 = vector.broadcast %221 : f32 to vector<4x16x16xf32>
    %474 = arith.mulf %473, %472 : vector<4x16x16xf32>
    %475 = arith.addf %458, %474 : vector<4x16x16xf32>
    %476 = vector.extract_strided_slice %463 {offsets = [0, 3, 0], sizes = [4, 16, 16], strides = [1, 1, 1]} : vector<4x22x16xf32> to vector<4x16x16xf32>
    %477 = vector.broadcast %228 : f32 to vector<4x16x16xf32>
    %478 = arith.mulf %477, %476 : vector<4x16x16xf32>
    %479 = arith.addf %462, %478 : vector<4x16x16xf32>
    %480 = vector.extract_strided_slice %463 {offsets = [0, 4, 0], sizes = [4, 16, 16], strides = [1, 1, 1]} : vector<4x22x16xf32> to vector<4x16x16xf32>
    %481 = vector.broadcast %235 : f32 to vector<4x16x16xf32>
    %482 = arith.mulf %481, %480 : vector<4x16x16xf32>
    %483 = arith.addf %467, %482 : vector<4x16x16xf32>
    %484 = vector.extract_strided_slice %463 {offsets = [0, 5, 0], sizes = [4, 16, 16], strides = [1, 1, 1]} : vector<4x22x16xf32> to vector<4x16x16xf32>
    %485 = vector.broadcast %242 : f32 to vector<4x16x16xf32>
    %486 = arith.mulf %485, %484 : vector<4x16x16xf32>
    %487 = arith.addf %471, %486 : vector<4x16x16xf32>
    %488 = vector.extract_strided_slice %463 {offsets = [0, 6, 0], sizes = [4, 16, 16], strides = [1, 1, 1]} : vector<4x22x16xf32> to vector<4x16x16xf32>
    %489 = vector.broadcast %249 : f32 to vector<4x16x16xf32>
    %490 = arith.mulf %489, %488 : vector<4x16x16xf32>
    %491 = arith.addf %475, %490 : vector<4x16x16xf32>
    %492 = vector.extract_strided_slice %157 {offsets = [0, 0, 23], sizes = [4, 22, 16], strides = [1, 1, 1]} : vector<4x22x44xf32> to vector<4x22x16xf32>
    %493 = vector.extract_strided_slice %492 {offsets = [0, 0, 0], sizes = [4, 16, 16], strides = [1, 1, 1]} : vector<4x22x16xf32> to vector<4x16x16xf32>
    %494 = vector.broadcast %208 : f32 to vector<4x16x16xf32>
    %495 = arith.mulf %494, %493 : vector<4x16x16xf32>
    %496 = arith.addf %479, %495 : vector<4x16x16xf32>
    %497 = vector.extract_strided_slice %492 {offsets = [0, 1, 0], sizes = [4, 16, 16], strides = [1, 1, 1]} : vector<4x22x16xf32> to vector<4x16x16xf32>
    %498 = vector.broadcast %215 : f32 to vector<4x16x16xf32>
    %499 = arith.mulf %498, %497 : vector<4x16x16xf32>
    %500 = arith.addf %483, %499 : vector<4x16x16xf32>
    %501 = vector.extract_strided_slice %492 {offsets = [0, 2, 0], sizes = [4, 16, 16], strides = [1, 1, 1]} : vector<4x22x16xf32> to vector<4x16x16xf32>
    %502 = vector.broadcast %222 : f32 to vector<4x16x16xf32>
    %503 = arith.mulf %502, %501 : vector<4x16x16xf32>
    %504 = arith.addf %487, %503 : vector<4x16x16xf32>
    %505 = vector.extract_strided_slice %492 {offsets = [0, 3, 0], sizes = [4, 16, 16], strides = [1, 1, 1]} : vector<4x22x16xf32> to vector<4x16x16xf32>
    %506 = vector.broadcast %229 : f32 to vector<4x16x16xf32>
    %507 = arith.mulf %506, %505 : vector<4x16x16xf32>
    %508 = arith.addf %491, %507 : vector<4x16x16xf32>
    %509 = vector.extract_strided_slice %492 {offsets = [0, 4, 0], sizes = [4, 16, 16], strides = [1, 1, 1]} : vector<4x22x16xf32> to vector<4x16x16xf32>
    %510 = vector.broadcast %236 : f32 to vector<4x16x16xf32>
    %511 = arith.mulf %510, %509 : vector<4x16x16xf32>
    %512 = arith.addf %496, %511 : vector<4x16x16xf32>
    %513 = vector.extract_strided_slice %492 {offsets = [0, 5, 0], sizes = [4, 16, 16], strides = [1, 1, 1]} : vector<4x22x16xf32> to vector<4x16x16xf32>
    %514 = vector.broadcast %243 : f32 to vector<4x16x16xf32>
    %515 = arith.mulf %514, %513 : vector<4x16x16xf32>
    %516 = arith.addf %500, %515 : vector<4x16x16xf32>
    %517 = vector.extract_strided_slice %492 {offsets = [0, 6, 0], sizes = [4, 16, 16], strides = [1, 1, 1]} : vector<4x22x16xf32> to vector<4x16x16xf32>
    %518 = vector.broadcast %250 : f32 to vector<4x16x16xf32>
    %519 = arith.mulf %518, %517 : vector<4x16x16xf32>
    %520 = arith.addf %504, %519 : vector<4x16x16xf32>
    %521 = vector.extract_strided_slice %157 {offsets = [0, 0, 24], sizes = [4, 22, 16], strides = [1, 1, 1]} : vector<4x22x44xf32> to vector<4x22x16xf32>
    %522 = vector.extract_strided_slice %521 {offsets = [0, 0, 0], sizes = [4, 16, 16], strides = [1, 1, 1]} : vector<4x22x16xf32> to vector<4x16x16xf32>
    %523 = vector.broadcast %209 : f32 to vector<4x16x16xf32>
    %524 = arith.mulf %523, %522 : vector<4x16x16xf32>
    %525 = arith.addf %508, %524 : vector<4x16x16xf32>
    %526 = vector.extract_strided_slice %521 {offsets = [0, 1, 0], sizes = [4, 16, 16], strides = [1, 1, 1]} : vector<4x22x16xf32> to vector<4x16x16xf32>
    %527 = vector.broadcast %216 : f32 to vector<4x16x16xf32>
    %528 = arith.mulf %527, %526 : vector<4x16x16xf32>
    %529 = arith.addf %512, %528 : vector<4x16x16xf32>
    %530 = vector.extract_strided_slice %521 {offsets = [0, 2, 0], sizes = [4, 16, 16], strides = [1, 1, 1]} : vector<4x22x16xf32> to vector<4x16x16xf32>
    %531 = vector.broadcast %223 : f32 to vector<4x16x16xf32>
    %532 = arith.mulf %531, %530 : vector<4x16x16xf32>
    %533 = arith.addf %516, %532 : vector<4x16x16xf32>
    %534 = vector.extract_strided_slice %521 {offsets = [0, 3, 0], sizes = [4, 16, 16], strides = [1, 1, 1]} : vector<4x22x16xf32> to vector<4x16x16xf32>
    %535 = vector.broadcast %230 : f32 to vector<4x16x16xf32>
    %536 = arith.mulf %535, %534 : vector<4x16x16xf32>
    %537 = arith.addf %520, %536 : vector<4x16x16xf32>
    %538 = vector.extract_strided_slice %521 {offsets = [0, 4, 0], sizes = [4, 16, 16], strides = [1, 1, 1]} : vector<4x22x16xf32> to vector<4x16x16xf32>
    %539 = vector.broadcast %237 : f32 to vector<4x16x16xf32>
    %540 = arith.mulf %539, %538 : vector<4x16x16xf32>
    %541 = arith.addf %525, %540 : vector<4x16x16xf32>
    %542 = vector.extract_strided_slice %521 {offsets = [0, 5, 0], sizes = [4, 16, 16], strides = [1, 1, 1]} : vector<4x22x16xf32> to vector<4x16x16xf32>
    %543 = vector.broadcast %244 : f32 to vector<4x16x16xf32>
    %544 = arith.mulf %543, %542 : vector<4x16x16xf32>
    %545 = arith.addf %529, %544 : vector<4x16x16xf32>
    %546 = vector.extract_strided_slice %521 {offsets = [0, 6, 0], sizes = [4, 16, 16], strides = [1, 1, 1]} : vector<4x22x16xf32> to vector<4x16x16xf32>
    %547 = vector.broadcast %251 : f32 to vector<4x16x16xf32>
    %548 = arith.mulf %547, %546 : vector<4x16x16xf32>
    %549 = arith.addf %533, %548 : vector<4x16x16xf32>
    %550 = vector.extract_strided_slice %157 {offsets = [0, 0, 25], sizes = [4, 22, 16], strides = [1, 1, 1]} : vector<4x22x44xf32> to vector<4x22x16xf32>
    %551 = vector.extract_strided_slice %550 {offsets = [0, 0, 0], sizes = [4, 16, 16], strides = [1, 1, 1]} : vector<4x22x16xf32> to vector<4x16x16xf32>
    %552 = vector.broadcast %210 : f32 to vector<4x16x16xf32>
    %553 = arith.mulf %552, %551 : vector<4x16x16xf32>
    %554 = arith.addf %537, %553 : vector<4x16x16xf32>
    %555 = vector.extract_strided_slice %550 {offsets = [0, 1, 0], sizes = [4, 16, 16], strides = [1, 1, 1]} : vector<4x22x16xf32> to vector<4x16x16xf32>
    %556 = vector.broadcast %217 : f32 to vector<4x16x16xf32>
    %557 = arith.mulf %556, %555 : vector<4x16x16xf32>
    %558 = arith.addf %541, %557 : vector<4x16x16xf32>
    %559 = vector.extract_strided_slice %550 {offsets = [0, 2, 0], sizes = [4, 16, 16], strides = [1, 1, 1]} : vector<4x22x16xf32> to vector<4x16x16xf32>
    %560 = vector.broadcast %224 : f32 to vector<4x16x16xf32>
    %561 = arith.mulf %560, %559 : vector<4x16x16xf32>
    %562 = arith.addf %545, %561 : vector<4x16x16xf32>
    %563 = vector.extract_strided_slice %550 {offsets = [0, 3, 0], sizes = [4, 16, 16], strides = [1, 1, 1]} : vector<4x22x16xf32> to vector<4x16x16xf32>
    %564 = vector.broadcast %231 : f32 to vector<4x16x16xf32>
    %565 = arith.mulf %564, %563 : vector<4x16x16xf32>
    %566 = arith.addf %549, %565 : vector<4x16x16xf32>
    %567 = vector.extract_strided_slice %550 {offsets = [0, 4, 0], sizes = [4, 16, 16], strides = [1, 1, 1]} : vector<4x22x16xf32> to vector<4x16x16xf32>
    %568 = vector.broadcast %238 : f32 to vector<4x16x16xf32>
    %569 = arith.mulf %568, %567 : vector<4x16x16xf32>
    %570 = arith.addf %554, %569 : vector<4x16x16xf32>
    %571 = vector.extract_strided_slice %550 {offsets = [0, 5, 0], sizes = [4, 16, 16], strides = [1, 1, 1]} : vector<4x22x16xf32> to vector<4x16x16xf32>
    %572 = vector.broadcast %245 : f32 to vector<4x16x16xf32>
    %573 = arith.mulf %572, %571 : vector<4x16x16xf32>
    %574 = arith.addf %558, %573 : vector<4x16x16xf32>
    %575 = vector.extract_strided_slice %550 {offsets = [0, 6, 0], sizes = [4, 16, 16], strides = [1, 1, 1]} : vector<4x22x16xf32> to vector<4x16x16xf32>
    %576 = vector.broadcast %252 : f32 to vector<4x16x16xf32>
    %577 = arith.mulf %576, %575 : vector<4x16x16xf32>
    %578 = arith.addf %562, %577 : vector<4x16x16xf32>
    %579 = vector.extract_strided_slice %157 {offsets = [0, 0, 26], sizes = [4, 22, 16], strides = [1, 1, 1]} : vector<4x22x44xf32> to vector<4x22x16xf32>
    %580 = vector.extract_strided_slice %579 {offsets = [0, 0, 0], sizes = [4, 16, 16], strides = [1, 1, 1]} : vector<4x22x16xf32> to vector<4x16x16xf32>
    %581 = vector.broadcast %211 : f32 to vector<4x16x16xf32>
    %582 = arith.mulf %581, %580 : vector<4x16x16xf32>
    %583 = arith.addf %566, %582 : vector<4x16x16xf32>
    %584 = vector.extract_strided_slice %579 {offsets = [0, 1, 0], sizes = [4, 16, 16], strides = [1, 1, 1]} : vector<4x22x16xf32> to vector<4x16x16xf32>
    %585 = vector.broadcast %218 : f32 to vector<4x16x16xf32>
    %586 = arith.mulf %585, %584 : vector<4x16x16xf32>
    %587 = arith.addf %570, %586 : vector<4x16x16xf32>
    %588 = vector.extract_strided_slice %579 {offsets = [0, 2, 0], sizes = [4, 16, 16], strides = [1, 1, 1]} : vector<4x22x16xf32> to vector<4x16x16xf32>
    %589 = vector.broadcast %225 : f32 to vector<4x16x16xf32>
    %590 = arith.mulf %589, %588 : vector<4x16x16xf32>
    %591 = arith.addf %574, %590 : vector<4x16x16xf32>
    %592 = vector.extract_strided_slice %579 {offsets = [0, 3, 0], sizes = [4, 16, 16], strides = [1, 1, 1]} : vector<4x22x16xf32> to vector<4x16x16xf32>
    %593 = vector.broadcast %232 : f32 to vector<4x16x16xf32>
    %594 = arith.mulf %593, %592 : vector<4x16x16xf32>
    %595 = arith.addf %578, %594 : vector<4x16x16xf32>
    %596 = vector.extract_strided_slice %579 {offsets = [0, 4, 0], sizes = [4, 16, 16], strides = [1, 1, 1]} : vector<4x22x16xf32> to vector<4x16x16xf32>
    %597 = vector.broadcast %239 : f32 to vector<4x16x16xf32>
    %598 = arith.mulf %597, %596 : vector<4x16x16xf32>
    %599 = arith.addf %583, %598 : vector<4x16x16xf32>
    %600 = vector.extract_strided_slice %579 {offsets = [0, 5, 0], sizes = [4, 16, 16], strides = [1, 1, 1]} : vector<4x22x16xf32> to vector<4x16x16xf32>
    %601 = vector.broadcast %246 : f32 to vector<4x16x16xf32>
    %602 = arith.mulf %601, %600 : vector<4x16x16xf32>
    %603 = arith.addf %587, %602 : vector<4x16x16xf32>
    %604 = vector.extract_strided_slice %579 {offsets = [0, 6, 0], sizes = [4, 16, 16], strides = [1, 1, 1]} : vector<4x22x16xf32> to vector<4x16x16xf32>
    %605 = vector.broadcast %253 : f32 to vector<4x16x16xf32>
    %606 = arith.mulf %605, %604 : vector<4x16x16xf32>
    %607 = arith.addf %591, %606 : vector<4x16x16xf32>
    %608 = vector.extract_strided_slice %157 {offsets = [0, 0, 27], sizes = [4, 22, 16], strides = [1, 1, 1]} : vector<4x22x44xf32> to vector<4x22x16xf32>
    %609 = vector.extract_strided_slice %608 {offsets = [0, 0, 0], sizes = [4, 16, 16], strides = [1, 1, 1]} : vector<4x22x16xf32> to vector<4x16x16xf32>
    %610 = vector.broadcast %212 : f32 to vector<4x16x16xf32>
    %611 = arith.mulf %610, %609 : vector<4x16x16xf32>
    %612 = arith.addf %595, %611 : vector<4x16x16xf32>
    %613 = vector.extract_strided_slice %608 {offsets = [0, 1, 0], sizes = [4, 16, 16], strides = [1, 1, 1]} : vector<4x22x16xf32> to vector<4x16x16xf32>
    %614 = vector.broadcast %219 : f32 to vector<4x16x16xf32>
    %615 = arith.mulf %614, %613 : vector<4x16x16xf32>
    %616 = arith.addf %599, %615 : vector<4x16x16xf32>
    %617 = vector.extract_strided_slice %608 {offsets = [0, 2, 0], sizes = [4, 16, 16], strides = [1, 1, 1]} : vector<4x22x16xf32> to vector<4x16x16xf32>
    %618 = vector.broadcast %226 : f32 to vector<4x16x16xf32>
    %619 = arith.mulf %618, %617 : vector<4x16x16xf32>
    %620 = arith.addf %603, %619 : vector<4x16x16xf32>
    %621 = vector.extract_strided_slice %608 {offsets = [0, 3, 0], sizes = [4, 16, 16], strides = [1, 1, 1]} : vector<4x22x16xf32> to vector<4x16x16xf32>
    %622 = vector.broadcast %233 : f32 to vector<4x16x16xf32>
    %623 = arith.mulf %622, %621 : vector<4x16x16xf32>
    %624 = arith.addf %607, %623 : vector<4x16x16xf32>
    %625 = vector.extract_strided_slice %608 {offsets = [0, 4, 0], sizes = [4, 16, 16], strides = [1, 1, 1]} : vector<4x22x16xf32> to vector<4x16x16xf32>
    %626 = vector.broadcast %240 : f32 to vector<4x16x16xf32>
    %627 = arith.mulf %626, %625 : vector<4x16x16xf32>
    %628 = arith.addf %612, %627 : vector<4x16x16xf32>
    %629 = vector.extract_strided_slice %608 {offsets = [0, 5, 0], sizes = [4, 16, 16], strides = [1, 1, 1]} : vector<4x22x16xf32> to vector<4x16x16xf32>
    %630 = vector.broadcast %247 : f32 to vector<4x16x16xf32>
    %631 = arith.mulf %630, %629 : vector<4x16x16xf32>
    %632 = arith.addf %616, %631 : vector<4x16x16xf32>
    %633 = vector.extract_strided_slice %608 {offsets = [0, 6, 0], sizes = [4, 16, 16], strides = [1, 1, 1]} : vector<4x22x16xf32> to vector<4x16x16xf32>
    %634 = vector.broadcast %254 : f32 to vector<4x16x16xf32>
    %635 = arith.mulf %634, %633 : vector<4x16x16xf32>
    %636 = arith.addf %620, %635 : vector<4x16x16xf32>
    %637 = vector.extract_strided_slice %157 {offsets = [0, 0, 28], sizes = [4, 22, 16], strides = [1, 1, 1]} : vector<4x22x44xf32> to vector<4x22x16xf32>
    %638 = vector.extract_strided_slice %637 {offsets = [0, 0, 0], sizes = [4, 16, 16], strides = [1, 1, 1]} : vector<4x22x16xf32> to vector<4x16x16xf32>
    %639 = vector.broadcast %213 : f32 to vector<4x16x16xf32>
    %640 = arith.mulf %639, %638 : vector<4x16x16xf32>
    %641 = arith.addf %624, %640 : vector<4x16x16xf32>
    %642 = vector.extract_strided_slice %637 {offsets = [0, 1, 0], sizes = [4, 16, 16], strides = [1, 1, 1]} : vector<4x22x16xf32> to vector<4x16x16xf32>
    %643 = vector.broadcast %220 : f32 to vector<4x16x16xf32>
    %644 = arith.mulf %643, %642 : vector<4x16x16xf32>
    %645 = arith.addf %628, %644 : vector<4x16x16xf32>
    %646 = vector.extract_strided_slice %637 {offsets = [0, 2, 0], sizes = [4, 16, 16], strides = [1, 1, 1]} : vector<4x22x16xf32> to vector<4x16x16xf32>
    %647 = vector.broadcast %227 : f32 to vector<4x16x16xf32>
    %648 = arith.mulf %647, %646 : vector<4x16x16xf32>
    %649 = arith.addf %632, %648 : vector<4x16x16xf32>
    %650 = vector.extract_strided_slice %637 {offsets = [0, 3, 0], sizes = [4, 16, 16], strides = [1, 1, 1]} : vector<4x22x16xf32> to vector<4x16x16xf32>
    %651 = vector.broadcast %234 : f32 to vector<4x16x16xf32>
    %652 = arith.mulf %651, %650 : vector<4x16x16xf32>
    %653 = arith.addf %636, %652 : vector<4x16x16xf32>
    %654 = vector.extract_strided_slice %637 {offsets = [0, 4, 0], sizes = [4, 16, 16], strides = [1, 1, 1]} : vector<4x22x16xf32> to vector<4x16x16xf32>
    %655 = vector.broadcast %241 : f32 to vector<4x16x16xf32>
    %656 = arith.mulf %655, %654 : vector<4x16x16xf32>
    %657 = arith.addf %641, %656 : vector<4x16x16xf32>
    %658 = vector.extract_strided_slice %637 {offsets = [0, 5, 0], sizes = [4, 16, 16], strides = [1, 1, 1]} : vector<4x22x16xf32> to vector<4x16x16xf32>
    %659 = vector.broadcast %248 : f32 to vector<4x16x16xf32>
    %660 = arith.mulf %659, %658 : vector<4x16x16xf32>
    %661 = arith.addf %645, %660 : vector<4x16x16xf32>
    %662 = vector.extract_strided_slice %637 {offsets = [0, 6, 0], sizes = [4, 16, 16], strides = [1, 1, 1]} : vector<4x22x16xf32> to vector<4x16x16xf32>
    %663 = vector.broadcast %255 : f32 to vector<4x16x16xf32>
    %664 = arith.mulf %663, %662 : vector<4x16x16xf32>
    %665 = arith.addf %649, %664 : vector<4x16x16xf32>
    %666 = arith.addf %661, %665 : vector<4x16x16xf32>
    %667 = arith.addf %653, %657 : vector<4x16x16xf32>
    %668 = arith.addf %666, %667 : vector<4x16x16xf32>
    %669 = arith.negf %668 : vector<4x16x16xf32>
    %670 = math.exp %669 : vector<4x16x16xf32>
    %cst_123 = arith.constant 1.000000e+00 : f32
    %671 = vector.broadcast %cst_123 : f32 to vector<4x16x16xf32>
    %672 = arith.addf %671, %670 : vector<4x16x16xf32>
    %673 = arith.divf %671, %672 : vector<4x16x16xf32>
    %674 = vector.extract_strided_slice %673 {offsets = [0, 0, 0], sizes = [4, 1, 16], strides = [1, 1, 1]} : vector<4x16x16xf32> to vector<4x1x16xf32>
    %675 = vector.shape_cast %674 : vector<4x1x16xf32> to vector<4x16xf32>
    %c0_124 = arith.constant 0 : index
    %c0_125 = arith.constant 0 : index
    %676 = vector.load %arg7[%c0_124, %c0_125] : memref<4x256xf32, #tpu.memory_space<vmem>>, vector<4x16xf32>
    tpu.vector_store %arg7[%c0_124, %c0_125], %675 {strides = array<i32>} : memref<4x256xf32, #tpu.memory_space<vmem>>, vector<4x16xf32>,
    %677 = vector.extract_strided_slice %673 {offsets = [0, 1, 0], sizes = [4, 1, 16], strides = [1, 1, 1]} : vector<4x16x16xf32> to vector<4x1x16xf32>
    %678 = vector.shape_cast %677 : vector<4x1x16xf32> to vector<4x16xf32>
    %c0_126 = arith.constant 0 : index
    %c16_127 = arith.constant 16 : index
    %679 = vector.load %arg7[%c0_126, %c16_127] : memref<4x256xf32, #tpu.memory_space<vmem>>, vector<4x16xf32>
    tpu.vector_store %arg7[%c0_126, %c16_127], %678 {strides = array<i32>} : memref<4x256xf32, #tpu.memory_space<vmem>>, vector<4x16xf32>,
    %680 = vector.extract_strided_slice %673 {offsets = [0, 2, 0], sizes = [4, 1, 16], strides = [1, 1, 1]} : vector<4x16x16xf32> to vector<4x1x16xf32>
    %681 = vector.shape_cast %680 : vector<4x1x16xf32> to vector<4x16xf32>
    %c0_128 = arith.constant 0 : index
    %c32_129 = arith.constant 32 : index
    %682 = vector.load %arg7[%c0_128, %c32_129] : memref<4x256xf32, #tpu.memory_space<vmem>>, vector<4x16xf32>
    tpu.vector_store %arg7[%c0_128, %c32_129], %681 {strides = array<i32>} : memref<4x256xf32, #tpu.memory_space<vmem>>, vector<4x16xf32>,
    %683 = vector.extract_strided_slice %673 {offsets = [0, 3, 0], sizes = [4, 1, 16], strides = [1, 1, 1]} : vector<4x16x16xf32> to vector<4x1x16xf32>
    %684 = vector.shape_cast %683 : vector<4x1x16xf32> to vector<4x16xf32>
    %c0_130 = arith.constant 0 : index
    %c48_131 = arith.constant 48 : index
    %685 = vector.load %arg7[%c0_130, %c48_131] : memref<4x256xf32, #tpu.memory_space<vmem>>, vector<4x16xf32>
    tpu.vector_store %arg7[%c0_130, %c48_131], %684 {strides = array<i32>} : memref<4x256xf32, #tpu.memory_space<vmem>>, vector<4x16xf32>,
    %686 = vector.extract_strided_slice %673 {offsets = [0, 4, 0], sizes = [4, 1, 16], strides = [1, 1, 1]} : vector<4x16x16xf32> to vector<4x1x16xf32>
    %687 = vector.shape_cast %686 : vector<4x1x16xf32> to vector<4x16xf32>
    %c0_132 = arith.constant 0 : index
    %c64_133 = arith.constant 64 : index
    %688 = vector.load %arg7[%c0_132, %c64_133] : memref<4x256xf32, #tpu.memory_space<vmem>>, vector<4x16xf32>
    tpu.vector_store %arg7[%c0_132, %c64_133], %687 {strides = array<i32>} : memref<4x256xf32, #tpu.memory_space<vmem>>, vector<4x16xf32>,
    %689 = vector.extract_strided_slice %673 {offsets = [0, 5, 0], sizes = [4, 1, 16], strides = [1, 1, 1]} : vector<4x16x16xf32> to vector<4x1x16xf32>
    %690 = vector.shape_cast %689 : vector<4x1x16xf32> to vector<4x16xf32>
    %c0_134 = arith.constant 0 : index
    %c80_135 = arith.constant 80 : index
    %691 = vector.load %arg7[%c0_134, %c80_135] : memref<4x256xf32, #tpu.memory_space<vmem>>, vector<4x16xf32>
    tpu.vector_store %arg7[%c0_134, %c80_135], %690 {strides = array<i32>} : memref<4x256xf32, #tpu.memory_space<vmem>>, vector<4x16xf32>,
    %692 = vector.extract_strided_slice %673 {offsets = [0, 6, 0], sizes = [4, 1, 16], strides = [1, 1, 1]} : vector<4x16x16xf32> to vector<4x1x16xf32>
    %693 = vector.shape_cast %692 : vector<4x1x16xf32> to vector<4x16xf32>
    %c0_136 = arith.constant 0 : index
    %c96_137 = arith.constant 96 : index
    %694 = vector.load %arg7[%c0_136, %c96_137] : memref<4x256xf32, #tpu.memory_space<vmem>>, vector<4x16xf32>
    tpu.vector_store %arg7[%c0_136, %c96_137], %693 {strides = array<i32>} : memref<4x256xf32, #tpu.memory_space<vmem>>, vector<4x16xf32>,
    %695 = vector.extract_strided_slice %673 {offsets = [0, 7, 0], sizes = [4, 1, 16], strides = [1, 1, 1]} : vector<4x16x16xf32> to vector<4x1x16xf32>
    %696 = vector.shape_cast %695 : vector<4x1x16xf32> to vector<4x16xf32>
    %c0_138 = arith.constant 0 : index
    %c112 = arith.constant 112 : index
    %697 = vector.load %arg7[%c0_138, %c112] : memref<4x256xf32, #tpu.memory_space<vmem>>, vector<4x16xf32>
    tpu.vector_store %arg7[%c0_138, %c112], %696 {strides = array<i32>} : memref<4x256xf32, #tpu.memory_space<vmem>>, vector<4x16xf32>,
    %698 = vector.extract_strided_slice %673 {offsets = [0, 8, 0], sizes = [4, 1, 16], strides = [1, 1, 1]} : vector<4x16x16xf32> to vector<4x1x16xf32>
    %699 = vector.shape_cast %698 : vector<4x1x16xf32> to vector<4x16xf32>
    %c0_139 = arith.constant 0 : index
    %c128 = arith.constant 128 : index
    %700 = vector.load %arg7[%c0_139, %c128] : memref<4x256xf32, #tpu.memory_space<vmem>>, vector<4x16xf32>
    tpu.vector_store %arg7[%c0_139, %c128], %699 {strides = array<i32>} : memref<4x256xf32, #tpu.memory_space<vmem>>, vector<4x16xf32>,
    %701 = vector.extract_strided_slice %673 {offsets = [0, 9, 0], sizes = [4, 1, 16], strides = [1, 1, 1]} : vector<4x16x16xf32> to vector<4x1x16xf32>
    %702 = vector.shape_cast %701 : vector<4x1x16xf32> to vector<4x16xf32>
    %c0_140 = arith.constant 0 : index
    %c144 = arith.constant 144 : index
    %703 = vector.load %arg7[%c0_140, %c144] : memref<4x256xf32, #tpu.memory_space<vmem>>, vector<4x16xf32>
    tpu.vector_store %arg7[%c0_140, %c144], %702 {strides = array<i32>} : memref<4x256xf32, #tpu.memory_space<vmem>>, vector<4x16xf32>,
    %704 = vector.extract_strided_slice %673 {offsets = [0, 10, 0], sizes = [4, 1, 16], strides = [1, 1, 1]} : vector<4x16x16xf32> to vector<4x1x16xf32>
    %705 = vector.shape_cast %704 : vector<4x1x16xf32> to vector<4x16xf32>
    %c0_141 = arith.constant 0 : index
    %c160 = arith.constant 160 : index
    %706 = vector.load %arg7[%c0_141, %c160] : memref<4x256xf32, #tpu.memory_space<vmem>>, vector<4x16xf32>
    tpu.vector_store %arg7[%c0_141, %c160], %705 {strides = array<i32>} : memref<4x256xf32, #tpu.memory_space<vmem>>, vector<4x16xf32>,
    %707 = vector.extract_strided_slice %673 {offsets = [0, 11, 0], sizes = [4, 1, 16], strides = [1, 1, 1]} : vector<4x16x16xf32> to vector<4x1x16xf32>
    %708 = vector.shape_cast %707 : vector<4x1x16xf32> to vector<4x16xf32>
    %c0_142 = arith.constant 0 : index
    %c176 = arith.constant 176 : index
    %709 = vector.load %arg7[%c0_142, %c176] : memref<4x256xf32, #tpu.memory_space<vmem>>, vector<4x16xf32>
    tpu.vector_store %arg7[%c0_142, %c176], %708 {strides = array<i32>} : memref<4x256xf32, #tpu.memory_space<vmem>>, vector<4x16xf32>,
    %710 = vector.extract_strided_slice %673 {offsets = [0, 12, 0], sizes = [4, 1, 16], strides = [1, 1, 1]} : vector<4x16x16xf32> to vector<4x1x16xf32>
    %711 = vector.shape_cast %710 : vector<4x1x16xf32> to vector<4x16xf32>
    %c0_143 = arith.constant 0 : index
    %c192 = arith.constant 192 : index
    %712 = vector.load %arg7[%c0_143, %c192] : memref<4x256xf32, #tpu.memory_space<vmem>>, vector<4x16xf32>
    tpu.vector_store %arg7[%c0_143, %c192], %711 {strides = array<i32>} : memref<4x256xf32, #tpu.memory_space<vmem>>, vector<4x16xf32>,
    %713 = vector.extract_strided_slice %673 {offsets = [0, 13, 0], sizes = [4, 1, 16], strides = [1, 1, 1]} : vector<4x16x16xf32> to vector<4x1x16xf32>
    %714 = vector.shape_cast %713 : vector<4x1x16xf32> to vector<4x16xf32>
    %c0_144 = arith.constant 0 : index
    %c208 = arith.constant 208 : index
    %715 = vector.load %arg7[%c0_144, %c208] : memref<4x256xf32, #tpu.memory_space<vmem>>, vector<4x16xf32>
    tpu.vector_store %arg7[%c0_144, %c208], %714 {strides = array<i32>} : memref<4x256xf32, #tpu.memory_space<vmem>>, vector<4x16xf32>,
    %716 = vector.extract_strided_slice %673 {offsets = [0, 14, 0], sizes = [4, 1, 16], strides = [1, 1, 1]} : vector<4x16x16xf32> to vector<4x1x16xf32>
    %717 = vector.shape_cast %716 : vector<4x1x16xf32> to vector<4x16xf32>
    %c0_145 = arith.constant 0 : index
    %c224 = arith.constant 224 : index
    %718 = vector.load %arg7[%c0_145, %c224] : memref<4x256xf32, #tpu.memory_space<vmem>>, vector<4x16xf32>
    tpu.vector_store %arg7[%c0_145, %c224], %717 {strides = array<i32>} : memref<4x256xf32, #tpu.memory_space<vmem>>, vector<4x16xf32>,
    %719 = vector.extract_strided_slice %673 {offsets = [0, 15, 0], sizes = [4, 1, 16], strides = [1, 1, 1]} : vector<4x16x16xf32> to vector<4x1x16xf32>
    %720 = vector.shape_cast %719 : vector<4x1x16xf32> to vector<4x16xf32>
    %c0_146 = arith.constant 0 : index
    %c240 = arith.constant 240 : index
    %721 = vector.load %arg7[%c0_146, %c240] : memref<4x256xf32, #tpu.memory_space<vmem>>, vector<4x16xf32>
    tpu.vector_store %arg7[%c0_146, %c240], %720 {strides = array<i32>} : memref<4x256xf32, #tpu.memory_space<vmem>>, vector<4x16xf32>,
    %c0_147 = arith.constant 0 : index
    %c0_148 = arith.constant 0 : index
    %722 = vector.load %arg7[%c0_147, %c0_148] : memref<4x256xf32, #tpu.memory_space<vmem>>, vector<4x256xf32>
    %723 = vector.shape_cast %722 : vector<4x256xf32> to vector<4x1x256xf32>
    %724 = vector.broadcast %723 : vector<4x1x256xf32> to vector<4x32x256xf32>
    %725 = arith.mulf %22, %724 : vector<4x32x256xf32>
    %c0_149 = arith.constant 0 : index
    %c0_150 = arith.constant 0 : index
    %c0_151 = arith.constant 0 : index
    %726 = vector.load %arg5[%c0_149, %c0_150, %c0_151] : memref<4x32x256xf32, #tpu.memory_space<vmem>>, vector<4x32x256xf32>
    tpu.vector_store %arg5[%c0_149, %c0_150, %c0_151], %725 {strides = array<i32>} : memref<4x32x256xf32, #tpu.memory_space<vmem>>, vector<4x32x256xf32>,
    return
  }
  func.func @transform_0(%arg0: i32) -> (i32, i32, i32) {
    %c0_i32 = arith.constant 0 : i32
    %c0_i32_0 = arith.constant 0 : i32
    %c0_i32_1 = arith.constant 0 : i32
    return %arg0, %c0_i32, %c0_i32_0 : i32, i32, i32
  }
  func.func @transform_1(%arg0: i32) -> (i32, i32) {
    %c0_i32 = arith.constant 0 : i32
    %c0_i32_0 = arith.constant 0 : i32
    %c0_i32_1 = arith.constant 0 : i32
    return %c0_i32, %c0_i32_0 : i32, i32
  }
  func.func @transform_2(%arg0: i32) -> (i32, i32) {
    %c0_i32 = arith.constant 0 : i32
    %c0_i32_0 = arith.constant 0 : i32
    %c0_i32_1 = arith.constant 0 : i32
    return %c0_i32, %c0_i32_0 : i32, i32
  }
  func.func @transform_3(%arg0: i32) -> i32 {
    %c0_i32 = arith.constant 0 : i32
    %c0_i32_0 = arith.constant 0 : i32
    return %c0_i32 : i32
  }
  func.func @transform_4(%arg0: i32) -> (i32, i32, i32) {
    %c0_i32 = arith.constant 0 : i32
    %c0_i32_0 = arith.constant 0 : i32
    %c0_i32_1 = arith.constant 0 : i32
    return %arg0, %c0_i32, %c0_i32_0 : i32, i32, i32
  }
}

</mosaic_0001>

<llo_original>
// kernel: tpu_custom_call.1
$region0: #{tpu_custom_call.1}
  #allocation0 [shape = 'u32[]', space=smem, size = 0x4, offset = 0x4, fixed_abs, tag = 'smem constant byte address 0x4 - core index']
  #allocation1 [shape = 'u32[144,128]{1,0:T(1,128)}', space=vmem, size = 0x12000, scoped, tag = 'internal scratch']
  #allocation2 [shape = 'f32[4,22,44]{2,1,0:T(8,128)}', space=vmem, size = 0xc000, scoped, tag = 'scratch operand']
  #allocation3 [shape = 'f32[4,256]{1,0:T(4,128)}', space=vmem, size = 0x1000, scoped, tag = 'scratch operand']
  %s0 = inlined_call_operand.hbm [shape: f32[8,32,256], index: 0, kind: input, shape index: {}]
  %s1 = inlined_call_operand.vmem [shape: f32[32,2], index: 1, kind: input, shape index: {}]
  %s2 = inlined_call_operand.vmem [shape: f32[2,32], index: 2, kind: input, shape index: {}]
  %s3 = inlined_call_operand.vmem [shape: f32[98], index: 3, kind: input, shape index: {}]
  %s4 = inlined_call_operand.hbm [shape: f32[8,32,256], index: 4, kind: output, shape index: {}]
  %s5 = sld [smem:[#allocation0]]
  $region57: #{tpu_custom_call.1} parent=0
    _
  %s7 = ssub.s32 1, %s5
  %s8 = scalar_select 0, %s7, %s5
  $region1: #{tpu_custom_call.1} parent=0
    #allocation4 [shape = 'u8[262144]{0}', space=vmem, size = 0x40000, scoped, tag = 'input window, operand 0']
    #allocation5 [shape = 's32[2]{0}', space=sflag, size = 0x8, scoped, tag = 'scoped memory for tpu_custom_call.1']
    #allocation6 [shape = 's32[2]{0}', space=sflag, size = 0x8, scoped, tag = 'scoped memory for tpu_custom_call.1']
    #allocation7 [shape = 's32[2]{0}', space=sflag, size = 0x8, scoped, tag = 'scoped memory for tpu_custom_call.1']
    #allocation8 [shape = 'u8[512]{0}', space=smem, size = 0x200, scoped, tag = 'input window, operand 3, single buffered']
    #allocation9 [shape = 'u8[262144]{0}', space=vmem, size = 0x40000, scoped, tag = 'output window, operand 0']
    %9 = vsyncpa [#allocation5], 0
    %s10 = scalar_lea.sflag [#allocation5], 1
    %11 = vsyncpa %s10, 0
    %12 = vsyncpa [#allocation7], 0
    %13 = vsyncpa [#allocation6], 0
    %s14 = scalar_lea.sflag [#allocation6], 1
    %15 = vsyncpa %s14, 0
    loop: start=0, step=1, limit=4
    $region2: #{tpu_custom_call.1} parent=1 // loop_pre_header
      _
    $region3: #{tpu_custom_call.1} parent=1 // loop_header
      %s17 = sphi 0, %s21
      %p18 = scmp.ge.s32.totalorder %s17, 4
      %s27 = sphi 0, %s29
      %s30 = sphi 0, %s27
      %s31 = sphi 0, %s30
      %s47 = sphi 0, %s31
      %s51 = sphi 0, %s51
      %s53 = sphi 0, %s51
      %s54 = sphi 0, %s53
      %s68 = sphi 0, %s54
      %s72 = sphi 0, %s72
      %s74 = sphi 0, %s72
      %s75 = sphi 0, %s74
      %s89 = sphi 0, %s75
      %s93 = sphi 0, %s93
      %s95 = sphi 0, %s93
      %s96 = sphi 0, %s95
      %s110 = sphi 0, %s96
      %s116 = sphi 0, %s118
      %s119 = sphi 0, %s116
      %s120 = sphi 0, %s119
      %s136 = sphi 0, %s120
    $region4: #{tpu_custom_call.1} parent=1 // loop_header_branch
      %20 = sbr.rel (%p18) target = $region8
    $region5: #{tpu_custom_call.1} parent=1 // loop_body
      %s22 = ssub.s32 %s17, 1
      %s23 = ssub.s32 %s17, 2
      %s24 = sadd.s32 %s17, 1
      %s25 = ssub.s32 %s17, %s24
      %p26 = scmp.eq.s32.totalorder %s25, 0
      %s28 = sadd.s32 %s27, 1
      %s29 = scalar_select %p26, %s27, %s28
      %p32 = pneg %p26
      %p33 = scmp.eq.s32.totalorder %s17, 1
      %p34 = por %p32, %p33
      %p35 = scmp.ne.s32.totalorder %s27, %s30
      %p36 = scmp.eq.s32.totalorder %s17, 0
      %p37 = por %p35, %p36
      %p38 = scmp.ne.s32.totalorder %s27, %s30
      %p39 = scmp.eq.s32.totalorder %s22, 1
      %p40 = por %p38, %p39
      %p41 = scmp.ne.s32.totalorder %s30, %s31
      %p42 = scmp.eq.s32.totalorder %s22, 0
      %p43 = por %p41, %p42
      %p44 = scmp.ne.s32.totalorder %s30, %s31
      %p45 = scmp.eq.s32.totalorder %s23, 1
      %p46 = por %p44, %p45
      %p48 = scmp.ne.s32.totalorder %s31, %s47
      %p49 = scmp.eq.s32.totalorder %s23, 0
      %p50 = por %p48, %p49
      %s52 = sadd.s32 %s51, 1
      %p55 = scmp.eq.s32.totalorder %s17, 1
      %p56 = scmp.ne.s32.totalorder %s51, %s53
      %p57 = scmp.eq.s32.totalorder %s17, 0
      %p58 = por %p56, %p57
      %p59 = scmp.ne.s32.totalorder %s51, %s53
      %p60 = scmp.eq.s32.totalorder %s22, 1
      %p61 = por %p59, %p60
      %p62 = scmp.ne.s32.totalorder %s53, %s54
      %p63 = scmp.eq.s32.totalorder %s22, 0
      %p64 = por %p62, %p63
      %p65 = scmp.ne.s32.totalorder %s53, %s54
      %p66 = scmp.eq.s32.totalorder %s23, 1
      %p67 = por %p65, %p66
      %p69 = scmp.ne.s32.totalorder %s54, %s68
      %p70 = scmp.eq.s32.totalorder %s23, 0
      %p71 = por %p69, %p70
      %s73 = sadd.s32 %s72, 1
      %p76 = scmp.eq.s32.totalorder %s17, 1
      %p77 = scmp.ne.s32.totalorder %s72, %s74
      %p78 = scmp.eq.s32.totalorder %s17, 0
      %p79 = por %p77, %p78
      %p80 = scmp.ne.s32.totalorder %s72, %s74
      %p81 = scmp.eq.s32.totalorder %s22, 1
      %p82 = por %p80, %p81
      %p83 = scmp.ne.s32.totalorder %s74, %s75
      %p84 = scmp.eq.s32.totalorder %s22, 0
      %p85 = por %p83, %p84
      %p86 = scmp.ne.s32.totalorder %s74, %s75
      %p87 = scmp.eq.s32.totalorder %s23, 1
      %p88 = por %p86, %p87
      %p90 = scmp.ne.s32.totalorder %s75, %s89
      %p91 = scmp.eq.s32.totalorder %s23, 0
      %p92 = por %p90, %p91
      %s94 = sadd.s32 %s93, 1
      %p97 = scmp.eq.s32.totalorder %s17, 1
      %p98 = scmp.ne.s32.totalorder %s93, %s95
      %p99 = scmp.eq.s32.totalorder %s17, 0
      %p100 = por %p98, %p99
      %p101 = scmp.ne.s32.totalorder %s93, %s95
      %p102 = scmp.eq.s32.totalorder %s22, 1
      %p103 = por %p101, %p102
      %p104 = scmp.ne.s32.totalorder %s95, %s96
      %p105 = scmp.eq.s32.totalorder %s22, 0
      %p106 = por %p104, %p105
      %p107 = scmp.ne.s32.totalorder %s95, %s96
      %p108 = scmp.eq.s32.totalorder %s23, 1
      %p109 = por %p107, %p108
      %p111 = scmp.ne.s32.totalorder %s96, %s110
      %p112 = scmp.eq.s32.totalorder %s23, 0
      %p113 = por %p111, %p112
      %s114 = ssub.s32 %s17, %s24
      %p115 = scmp.eq.s32.totalorder %s114, 0
      %s117 = sadd.s32 %s116, 1
      %s118 = scalar_select %p115, %s116, %s117
      %p121 = pneg %p115
      %p122 = scmp.eq.s32.totalorder %s17, 1
      %p123 = por %p121, %p122
      %p124 = scmp.ne.s32.totalorder %s116, %s119
      %p125 = scmp.eq.s32.totalorder %s17, 0
      %p126 = por %p124, %p125
      %p127 = scmp.ne.s32.totalorder %s116, %s119
      %p128 = scmp.eq.s32.totalorder %s22, 1
      %p129 = por %p127, %p128
      %p130 = scmp.ne.s32.totalorder %s119, %s120
      %p131 = scmp.eq.s32.totalorder %s22, 0
      %p132 = por %p130, %p131
      %p133 = scmp.ne.s32.totalorder %s119, %s120
      %p134 = scmp.eq.s32.totalorder %s23, 1
      %p135 = por %p133, %p134
      %p137 = scmp.ne.s32.totalorder %s120, %s136
      %p138 = scmp.eq.s32.totalorder %s23, 0
      %p139 = por %p137, %p138
      %p140 = scmp.le.s32.totalorder 1, %s17
      %p141 = scmp.lt.s32.totalorder %s17, 3
      %p142 = pnand %p140, %p141
      %p143 = pneg %p142
      // Predicated region
      $region9: #{tpu_custom_call.1} parent=5 // pred_check
        _
      $region10: #{tpu_custom_call.1} parent=5 // pred_check_branch
        %145 = sbr.rel (%p142) target = $region12
      $region11: #{tpu_custom_call.1} parent=5 // pred_region
        %s146 = ssub.s32 %s17, 1
        // Predicated region
        $region13: #{tpu_custom_call.1} parent=11 // pred_check
          %p147 = pneg %p64
        $region14: #{tpu_custom_call.1} parent=11 // pred_check_branch
          %149 = sbr.rel (%p147) target = $region16
        $region15: #{tpu_custom_call.1} parent=11 // pred_region
          _
        $region16: #{tpu_custom_call.1} parent=11 // pred_fallthru
          _
        // Predicated region
        $region17: #{tpu_custom_call.1} parent=11 // pred_check
          %p150 = pneg %p85
        $region18: #{tpu_custom_call.1} parent=11 // pred_check_branch
          %152 = sbr.rel (%p150) target = $region20
        $region19: #{tpu_custom_call.1} parent=11 // pred_region
          _
        $region20: #{tpu_custom_call.1} parent=11 // pred_fallthru
          _
        // Predicated region
        $region21: #{tpu_custom_call.1} parent=11 // pred_check
          %p153 = pneg %p106
        $region22: #{tpu_custom_call.1} parent=11 // pred_check_branch
          %155 = sbr.rel (%p153) target = $region24
        $region23: #{tpu_custom_call.1} parent=11 // pred_region
          %s157 = ssub.s32 16, 16
          %158 = vsyncadd [#allocation7], %s157
          %s160 = sshll.u32 %s3, 4
          %s161 = int_to_ptr.vmem [resolvable:$true] %s160
          %163 = dma.vmem_to_smem %s161, 16, [#allocation8], [#allocation7]
        $region24: #{tpu_custom_call.1} parent=11 // pred_fallthru
          _
      $region12: #{tpu_custom_call.1} parent=5 // pred_fallthru
        _
      %p164 = scmp.lt.s32.totalorder %s17, 2
      // Predicated region
      $region25: #{tpu_custom_call.1} parent=5 // pred_check
        %p165 = pneg %p164
      $region26: #{tpu_custom_call.1} parent=5 // pred_check_branch
        %167 = sbr.rel (%p165) target = $region28
      $region27: #{tpu_custom_call.1} parent=5 // pred_region
        // Predicated region
        $region29: #{tpu_custom_call.1} parent=27 // pred_check
          %p168 = pneg %p37
        $region30: #{tpu_custom_call.1} parent=27 // pred_check_branch
          %170 = sbr.rel (%p168) target = $region32
        $region31: #{tpu_custom_call.1} parent=27 // pred_region
          %s171 = sand.u32 %s27, 1
          %s172 = scalar_lea.sflag [#allocation5], %s171
          %s173 = sand.u32 %s27, 1
          %s174 = smul.addr %s173, 256
          %s175 = scalar_lea.vmem [#allocation4], %s174
          %s176 = smul.u32 4, %s17
          %s178 = ssub.s32 4096, 4096
          %179 = vsyncadd %s172, %s178
          %s180 = smul.addr %s176, 8
          %s181 = smul.addr %s180, 128
          %s182 = scalar_lea.hbm %s0, %s181
          %s183 = sshll.u32 %s175, 4
          %s184 = int_to_ptr.vmem [resolvable:$true] %s183
          %189 = dma.hbm_to_vmem [thread:$0]  %s182, 4096, %s184, %s172, 256, 256, 16
        $region32: #{tpu_custom_call.1} parent=27 // pred_fallthru
          _
      $region28: #{tpu_custom_call.1} parent=5 // pred_fallthru
        _
      %p190 = scmp.le.s32.totalorder 1, %s17
      %p191 = scmp.lt.s32.totalorder %s17, 3
      %p192 = pnand %p190, %p191
      %p193 = pneg %p192
      // Predicated region
      $region33: #{tpu_custom_call.1} parent=5 // pred_check
        _
      $region34: #{tpu_custom_call.1} parent=5 // pred_check_branch
        %195 = sbr.rel (%p192) target = $region36
      $region35: #{tpu_custom_call.1} parent=5 // pred_region
        %s196 = ssub.s32 %s17, 1
        %s197 = sand.u32 %s30, 1
        %s198 = scalar_lea.sflag [#allocation5], %s197
        %s199 = sand.u32 %s30, 1
        %s200 = smul.addr %s199, 256
        %s201 = scalar_lea.vmem [#allocation4], %s200
        // Predicated region
        $region37: #{tpu_custom_call.1} parent=35 // pred_check
          %p202 = pneg %p43
        $region38: #{tpu_custom_call.1} parent=35 // pred_check_branch
          %204 = sbr.rel (%p202) target = $region40
        $region39: #{tpu_custom_call.1} parent=35 // pred_region
          %205 = dma.done %s198, 4096
        $region40: #{tpu_custom_call.1} parent=35 // pred_fallthru
          _
        // Predicated region
        $region41: #{tpu_custom_call.1} parent=35 // pred_check
          %p206 = pneg %p106
        $region42: #{tpu_custom_call.1} parent=35 // pred_check_branch
          %208 = sbr.rel (%p206) target = $region44
        $region43: #{tpu_custom_call.1} parent=35 // pred_region
          %209 = dma.done [#allocation7], 16
        $region44: #{tpu_custom_call.1} parent=35 // pred_fallthru
          _
        %210 = sfence
        %s211 = sand.u32 %s30, 1
        %s212 = scalar_lea.sflag [#allocation5], %s211
        %s213 = sand.u32 %s30, 1
        %s214 = smul.addr %s213, 256
        %s215 = scalar_lea.vmem [#allocation4], %s214
        %p216 = pneg %p43
        %p217 = pneg %p40
        %p218 = pneg %p64
        %p219 = pneg %p61
        %p220 = pneg %p85
        %p221 = pneg %p82
        %p222 = pneg %p106
        %p223 = pneg %p103
        %p224 = pneg %p132
        %p225 = pneg %p129
        %s226 = sand.u32 %s119, 1
        %s227 = scalar_lea.sflag [#allocation6], %s226
        %s228 = sand.u32 %s119, 1
        %s229 = smul.addr %s228, 256
        %s230 = scalar_lea.vmem [#allocation9], %s229
        %s231 = smul.u32 4, %s22
        %s232 = smul.u32 4, %s22
        %v233 = vld [vmem:[%s201] sm:$0xff]
        %v234 = vld [vmem:[%s201 + $0x8] sm:$0xff]
        %v235 = vld [vmem:[%s201 + $0x10] sm:$0xff]
        %v236 = vld [vmem:[%s201 + $0x18] sm:$0xff]
        %v237 = vld [vmem:[%s201 + $0x20] sm:$0xff]
        %v238 = vld [vmem:[%s201 + $0x28] sm:$0xff]
        %v239 = vld [vmem:[%s201 + $0x30] sm:$0xff]
        %v240 = vld [vmem:[%s201 + $0x38] sm:$0xff]
        %v241 = vld [vmem:[%s201 + $0x40] sm:$0xff]
        %v242 = vld [vmem:[%s201 + $0x48] sm:$0xff]
        %v243 = vld [vmem:[%s201 + $0x50] sm:$0xff]
        %v244 = vld [vmem:[%s201 + $0x58] sm:$0xff]
        %v245 = vld [vmem:[%s201 + $0x60] sm:$0xff]
        %v246 = vld [vmem:[%s201 + $0x68] sm:$0xff]
        %v247 = vld [vmem:[%s201 + $0x70] sm:$0xff]
        %v248 = vld [vmem:[%s201 + $0x78] sm:$0xff]
        %v249 = vld [vmem:[%s201 + $0x80] sm:$0xff]
        %v250 = vld [vmem:[%s201 + $0x88] sm:$0xff]
        %v251 = vld [vmem:[%s201 + $0x90] sm:$0xff]
        %v252 = vld [vmem:[%s201 + $0x98] sm:$0xff]
        %v253 = vld [vmem:[%s201 + $0xa0] sm:$0xff]
        %v254 = vld [vmem:[%s201 + $0xa8] sm:$0xff]
        %v255 = vld [vmem:[%s201 + $0xb0] sm:$0xff]
        %v256 = vld [vmem:[%s201 + $0xb8] sm:$0xff]
        %v257 = vld [vmem:[%s201 + $0xc0] sm:$0xff]
        %v258 = vld [vmem:[%s201 + $0xc8] sm:$0xff]
        %v259 = vld [vmem:[%s201 + $0xd0] sm:$0xff]
        %v260 = vld [vmem:[%s201 + $0xd8] sm:$0xff]
        %v261 = vld [vmem:[%s201 + $0xe0] sm:$0xff]
        %v262 = vld [vmem:[%s201 + $0xe8] sm:$0xff]
        %v263 = vld [vmem:[%s201 + $0xf0] sm:$0xff]
        %v264 = vld [vmem:[%s201 + $0xf8] sm:$0xff]
        %v265 = vadd.f32 %v233, %v234
        %266 = vadd.xlane.f32.xlu0 %v265
        %v267 = vpop.xlane.xlu0 %266
        %v268 = vadd.f32 %v235, %v236
        %269 = vadd.xlane.f32.xlu0 %v268
        %v270 = vpop.xlane.xlu0 %269
        %v271 = vadd.f32 %v237, %v238
        %272 = vadd.xlane.f32.xlu0 %v271
        %v273 = vpop.xlane.xlu0 %272
        %v274 = vadd.f32 %v239, %v240
        %275 = vadd.xlane.f32.xlu0 %v274
        %v276 = vpop.xlane.xlu0 %275
        %v277 = vadd.f32 %v241, %v242
        %278 = vadd.xlane.f32.xlu0 %v277
        %v279 = vpop.xlane.xlu0 %278
        %v280 = vadd.f32 %v243, %v244
        %281 = vadd.xlane.f32.xlu0 %v280
        %v282 = vpop.xlane.xlu0 %281
        %v283 = vadd.f32 %v245, %v246
        %284 = vadd.xlane.f32.xlu0 %v283
        %v285 = vpop.xlane.xlu0 %284
        %v286 = vadd.f32 %v247, %v248
        %287 = vadd.xlane.f32.xlu0 %v286
        %v288 = vpop.xlane.xlu0 %287
        %v289 = vadd.f32 %v249, %v250
        %290 = vadd.xlane.f32.xlu0 %v289
        %v291 = vpop.xlane.xlu0 %290
        %v292 = vadd.f32 %v251, %v252
        %293 = vadd.xlane.f32.xlu0 %v292
        %v294 = vpop.xlane.xlu0 %293
        %v295 = vadd.f32 %v253, %v254
        %296 = vadd.xlane.f32.xlu0 %v295
        %v297 = vpop.xlane.xlu0 %296
        %v298 = vadd.f32 %v255, %v256
        %299 = vadd.xlane.f32.xlu0 %v298
        %v300 = vpop.xlane.xlu0 %299
        %v301 = vadd.f32 %v257, %v258
        %302 = vadd.xlane.f32.xlu0 %v301
        %v303 = vpop.xlane.xlu0 %302
        %v304 = vadd.f32 %v259, %v260
        %305 = vadd.xlane.f32.xlu0 %v304
        %v306 = vpop.xlane.xlu0 %305
        %v307 = vadd.f32 %v261, %v262
        %308 = vadd.xlane.f32.xlu0 %v307
        %v309 = vpop.xlane.xlu0 %308
        %v310 = vadd.f32 %v263, %v264
        %311 = vadd.xlane.f32.xlu0 %v310
        %v312 = vpop.xlane.xlu0 %311
        %v313 = vrcp.pop 256.0
        %v314 = vmul.f32 %v267, %v313
        %v315 = vmul.f32 %v270, %v313
        %v316 = vmul.f32 %v273, %v313
        %v317 = vmul.f32 %v276, %v313
        %v318 = vmul.f32 %v279, %v313
        %v319 = vmul.f32 %v282, %v313
        %v320 = vmul.f32 %v285, %v313
        %v321 = vmul.f32 %v288, %v313
        %v322 = vmul.f32 %v291, %v313
        %v323 = vmul.f32 %v294, %v313
        %v324 = vmul.f32 %v297, %v313
        %v325 = vmul.f32 %v300, %v313
        %v326 = vmul.f32 %v303, %v313
        %v327 = vmul.f32 %v306, %v313
        %v328 = vmul.f32 %v309, %v313
        %v329 = vmul.f32 %v312, %v313
        %v330 = vmax.f32 %v233, %v234
        %331 = vmax.xlane.f32.xlu0 %v330
        %v332 = vpop.xlane.xlu0 %331
        %v333 = vmax.f32 %v235, %v236
        %334 = vmax.xlane.f32.xlu0 %v333
        %v335 = vpop.xlane.xlu0 %334
        %v336 = vmax.f32 %v237, %v238
        %337 = vmax.xlane.f32.xlu0 %v336
        %v338 = vpop.xlane.xlu0 %337
        %v339 = vmax.f32 %v239, %v240
        %340 = vmax.xlane.f32.xlu0 %v339
        %v341 = vpop.xlane.xlu0 %340
        %v342 = vmax.f32 %v241, %v242
        %343 = vmax.xlane.f32.xlu0 %v342
        %v344 = vpop.xlane.xlu0 %343
        %v345 = vmax.f32 %v243, %v244
        %346 = vmax.xlane.f32.xlu0 %v345
        %v347 = vpop.xlane.xlu0 %346
        %v348 = vmax.f32 %v245, %v246
        %349 = vmax.xlane.f32.xlu0 %v348
        %v350 = vpop.xlane.xlu0 %349
        %v351 = vmax.f32 %v247, %v248
        %352 = vmax.xlane.f32.xlu0 %v351
        %v353 = vpop.xlane.xlu0 %352
        %v354 = vmax.f32 %v249, %v250
        %355 = vmax.xlane.f32.xlu0 %v354
        %v356 = vpop.xlane.xlu0 %355
        %v357 = vmax.f32 %v251, %v252
        %358 = vmax.xlane.f32.xlu0 %v357
        %v359 = vpop.xlane.xlu0 %358
        %v360 = vmax.f32 %v253, %v254
        %361 = vmax.xlane.f32.xlu0 %v360
        %v362 = vpop.xlane.xlu0 %361
        %v363 = vmax.f32 %v255, %v256
        %364 = vmax.xlane.f32.xlu0 %v363
        %v365 = vpop.xlane.xlu0 %364
        %v366 = vmax.f32 %v257, %v258
        %367 = vmax.xlane.f32.xlu0 %v366
        %v368 = vpop.xlane.xlu0 %367
        %v369 = vmax.f32 %v259, %v260
        %370 = vmax.xlane.f32.xlu0 %v369
        %v371 = vpop.xlane.xlu0 %370
        %v372 = vmax.f32 %v261, %v262
        %373 = vmax.xlane.f32.xlu0 %v372
        %v374 = vpop.xlane.xlu0 %373
        %v375 = vmax.f32 %v263, %v264
        %376 = vmax.xlane.f32.xlu0 %v375
        %v377 = vpop.xlane.xlu0 %376
        %v394 = vlaneseq
        %v395 = vand.u32 %v394, 127
        %v396 = vlaneseq
        %v397 = vshrl.u32 %v396, 7
        %v398 = vsub.s32 %v395, %v397
        %v399 = vrot.slane %v314, %v398
        %v400 = vadd.s32 %v395, 4294967288
        %v401 = vlaneseq
        %v402 = vshrl.u32 %v401, 7
        %v403 = vsub.s32 %v400, %v402
        %v404 = vrot.slane %v315, %v403
        %vm405 = vcmask 130112
        %v406 = vsel %vm405, %v404, %v399
        %v407 = vadd.s32 %v395, 4294967280
        %v408 = vlaneseq
        %v409 = vshrl.u32 %v408, 7
        %v410 = vsub.s32 %v407, %v409
        %v411 = vrot.slane %v316, %v410
        %vm412 = vcmask 195712
        %v413 = vsel %vm412, %v411, %v406
        %v414 = vadd.s32 %v395, 4294967272
        %v415 = vlaneseq
        %v416 = vshrl.u32 %v415, 7
        %v417 = vsub.s32 %v414, %v416
        %v418 = vrot.slane %v317, %v417
        %vm419 = vcmask 261312
        %v420 = vsel %vm419, %v418, %v413
        %v421 = vlaneseq
        %v422 = vshrl.u32 %v421, 7
        %v423 = vsub.s32 %v395, %v422
        %v424 = vrot.slane %v318, %v423
        %v425 = vlaneseq
        %v426 = vshrl.u32 %v425, 7
        %v427 = vsub.s32 %v400, %v426
        %v428 = vrot.slane %v319, %v427
        %v429 = vsel %vm405, %v428, %v424
        %v430 = vlaneseq
        %v431 = vshrl.u32 %v430, 7
        %v432 = vsub.s32 %v407, %v431
        %v433 = vrot.slane %v320, %v432
        %v434 = vsel %vm412, %v433, %v429
        %v435 = vlaneseq
        %v436 = vshrl.u32 %v435, 7
        %v437 = vsub.s32 %v414, %v436
        %v438 = vrot.slane %v321, %v437
        %v439 = vsel %vm419, %v438, %v434
        %v440 = vlaneseq
        %v441 = vshrl.u32 %v440, 7
        %v442 = vsub.s32 %v395, %v441
        %v443 = vrot.slane %v322, %v442
        %v444 = vlaneseq
        %v445 = vshrl.u32 %v444, 7
        %v446 = vsub.s32 %v400, %v445
        %v447 = vrot.slane %v323, %v446
        %v448 = vsel %vm405, %v447, %v443
        %v449 = vlaneseq
        %v450 = vshrl.u32 %v449, 7
        %v451 = vsub.s32 %v407, %v450
        %v452 = vrot.slane %v324, %v451
        %v453 = vsel %vm412, %v452, %v448
        %v454 = vlaneseq
        %v455 = vshrl.u32 %v454, 7
        %v456 = vsub.s32 %v414, %v455
        %v457 = vrot.slane %v325, %v456
        %v458 = vsel %vm419, %v457, %v453
        %v459 = vlaneseq
        %v460 = vshrl.u32 %v459, 7
        %v461 = vsub.s32 %v395, %v460
        %v462 = vrot.slane %v326, %v461
        %v463 = vlaneseq
        %v464 = vshrl.u32 %v463, 7
        %v465 = vsub.s32 %v400, %v464
        %v466 = vrot.slane %v327, %v465
        %v467 = vsel %vm405, %v466, %v462
        %v468 = vlaneseq
        %v469 = vshrl.u32 %v468, 7
        %v470 = vsub.s32 %v407, %v469
        %v471 = vrot.slane %v328, %v470
        %v472 = vsel %vm412, %v471, %v467
        %v473 = vlaneseq
        %v474 = vshrl.u32 %v473, 7
        %v475 = vsub.s32 %v414, %v474
        %v476 = vrot.slane %v329, %v475
        %v477 = vsel %vm419, %v476, %v472
        %vm478 = vcmask 1041409
        %v479 = vsel %vm478, %v439, %v420
        %vm480 = vcmask 1042434
        %v481 = vsel %vm480, %v458, %v479
        %vm482 = vcmask 1043459
        %v483 = vsel %vm482, %v477, %v481
        %v501 = vlaneseq
        %v502 = vshrl.u32 %v501, 7
        %v503 = vsub.s32 %v395, %v502
        %v504 = vrot.slane %v332, %v503
        %v505 = vlaneseq
        %v506 = vshrl.u32 %v505, 7
        %v507 = vsub.s32 %v400, %v506
        %v508 = vrot.slane %v335, %v507
        %v509 = vsel %vm405, %v508, %v504
        %v510 = vlaneseq
        %v511 = vshrl.u32 %v510, 7
        %v512 = vsub.s32 %v407, %v511
        %v513 = vrot.slane %v338, %v512
        %v514 = vsel %vm412, %v513, %v509
        %v515 = vlaneseq
        %v516 = vshrl.u32 %v515, 7
        %v517 = vsub.s32 %v414, %v516
        %v518 = vrot.slane %v341, %v517
        %v519 = vsel %vm419, %v518, %v514
        %v520 = vlaneseq
        %v521 = vshrl.u32 %v520, 7
        %v522 = vsub.s32 %v395, %v521
        %v523 = vrot.slane %v344, %v522
        %v524 = vlaneseq
        %v525 = vshrl.u32 %v524, 7
        %v526 = vsub.s32 %v400, %v525
        %v527 = vrot.slane %v347, %v526
        %v528 = vsel %vm405, %v527, %v523
        %v529 = vlaneseq
        %v530 = vshrl.u32 %v529, 7
        %v531 = vsub.s32 %v407, %v530
        %v532 = vrot.slane %v350, %v531
        %v533 = vsel %vm412, %v532, %v528
        %v534 = vlaneseq
        %v535 = vshrl.u32 %v534, 7
        %v536 = vsub.s32 %v414, %v535
        %v537 = vrot.slane %v353, %v536
        %v538 = vsel %vm419, %v537, %v533
        %v539 = vlaneseq
        %v540 = vshrl.u32 %v539, 7
        %v541 = vsub.s32 %v395, %v540
        %v542 = vrot.slane %v356, %v541
        %v543 = vlaneseq
        %v544 = vshrl.u32 %v543, 7
        %v545 = vsub.s32 %v400, %v544
        %v546 = vrot.slane %v359, %v545
        %v547 = vsel %vm405, %v546, %v542
        %v548 = vlaneseq
        %v549 = vshrl.u32 %v548, 7
        %v550 = vsub.s32 %v407, %v549
        %v551 = vrot.slane %v362, %v550
        %v552 = vsel %vm412, %v551, %v547
        %v553 = vlaneseq
        %v554 = vshrl.u32 %v553, 7
        %v555 = vsub.s32 %v414, %v554
        %v556 = vrot.slane %v365, %v555
        %v557 = vsel %vm419, %v556, %v552
        %v558 = vlaneseq
        %v559 = vshrl.u32 %v558, 7
        %v560 = vsub.s32 %v395, %v559
        %v561 = vrot.slane %v368, %v560
        %v562 = vlaneseq
        %v563 = vshrl.u32 %v562, 7
        %v564 = vsub.s32 %v400, %v563
        %v565 = vrot.slane %v371, %v564
        %v566 = vsel %vm405, %v565, %v561
        %v567 = vlaneseq
        %v568 = vshrl.u32 %v567, 7
        %v569 = vsub.s32 %v407, %v568
        %v570 = vrot.slane %v374, %v569
        %v571 = vsel %vm412, %v570, %v566
        %v572 = vlaneseq
        %v573 = vshrl.u32 %v572, 7
        %v574 = vsub.s32 %v414, %v573
        %v575 = vrot.slane %v377, %v574
        %v576 = vsel %vm419, %v575, %v571
        %vm577 = vcmask 1045509
        %v578 = vsel %vm577, %v538, %v519
        %vm579 = vcmask 1046534
        %v580 = vsel %vm579, %v557, %v578
        %vm581 = vcmask 1047559
        %v582 = vsel %vm581, %v576, %v580
        %vm584 = vcmask 1043456
        %v585 = vsel %vm584, %v483, %v582
        %v586 = vld [vmem:[%s1] sm:$0xff]
        %v587 = vld [vmem:[%s1 + $0x8] sm:$0xff]
        %v588 = vld [vmem:[%s1 + $0x10] sm:$0xff]
        %v589 = vld [vmem:[%s1 + $0x18] sm:$0xff]
        %vm590 = vcmask 261120
        %v592 = vsel %vm590, %v585, 0
        %594 = vmatprep.subr.mxu0 0.0
        %595 = vmatpush1.msra.mxu0 %v586
        %596 = vmatprep.subr.mxu0 0.0
        %597 = vmatpush1.msra.mxu0 %v587
        %598 = vmatprep.subr.mxu0 0.0
        %599 = vmatpush1.msra.mxu0 %v588
        %600 = vmatprep.subr.mxu0 0.0
        %601 = vmatpush1.msra.mxu0 %v589
        %602 = vmatprep.subr.mxu0 0.0
        %603 = vmatpush1.msra.mxu0 0.0
        %604 = vmatprep.subr.mxu0 0.0
        %605 = vmatpush1.msra.mxu0 0.0
        %606 = vmatprep.subr.mxu0 0.0
        %607 = vmatpush1.msra.mxu0 0.0
        %608 = vmatprep.subr.mxu0 0.0
        %609 = vmatpush1.msra.mxu0 0.0
        %610 = vmatprep.subr.mxu0 0.0
        %611 = vmatpush1.msra.mxu0 0.0
        %612 = vmatprep.subr.mxu0 0.0
        %613 = vmatpush1.msra.mxu0 0.0
        %614 = vmatprep.subr.mxu0 0.0
        %615 = vmatpush1.msra.mxu0 0.0
        %616 = vmatprep.subr.mxu0 0.0
        %617 = vmatpush1.msra.mxu0 0.0
        %618 = vmatprep.subr.mxu0 0.0
        %619 = vmatpush1.msra.mxu0 0.0
        %620 = vmatprep.subr.mxu0 0.0
        %621 = vmatpush1.msra.mxu0 0.0
        %622 = vmatprep.subr.mxu0 0.0
        %623 = vmatpush1.msra.mxu0 0.0
        %624 = vmatprep.subr.mxu0 0.0
        %625 = vmatpush1.msra.mxu0 0.0
        %626 = vmatprep.subr.mxu0 0.0
        %627 = vmatpush1.msra.mxu0 0.0
        %628 = vmatprep.subr.mxu0 0.0
        %629 = vmatpush1.msra.mxu0 0.0
        %630 = vmatprep.subr.mxu0 0.0
        %631 = vmatpush1.msra.mxu0 0.0
        %632 = vmatprep.subr.mxu0 0.0
        %633 = vmatpush1.msra.mxu0 0.0
        %634 = vmatprep.subr.mxu0 0.0
        %635 = vmatpush1.msra.mxu0 0.0
        %636 = vmatprep.subr.mxu0 0.0
        %637 = vmatpush1.msra.mxu0 0.0
        %638 = vmatprep.subr.mxu0 0.0
        %639 = vmatpush1.msra.mxu0 0.0
        %640 = vmatprep.subr.mxu0 0.0
        %641 = vmatpush1.msra.mxu0 0.0
        %642 = vmatprep.subr.mxu0 0.0
        %643 = vmatpush1.msra.mxu0 0.0
        %644 = vmatprep.subr.mxu0 0.0
        %645 = vmatpush1.msra.mxu0 0.0
        %646 = vmatprep.subr.mxu0 0.0
        %647 = vmatpush1.msra.mxu0 0.0
        %648 = vmatprep.subr.mxu0 0.0
        %649 = vmatpush1.msra.mxu0 0.0
        %650 = vmatprep.subr.mxu0 0.0
        %651 = vmatpush1.msra.mxu0 0.0
        %652 = vmatprep.subr.mxu0 0.0
        %653 = vmatpush1.msra.mxu0 0.0
        %654 = vmatprep.subr.mxu0 0.0
        %655 = vmatpush1.msra.mxu0 0.0
        %656 = vmatprep.subr.mxu0 0.0
        %657 = vmatpush1.msra.mxu0 0.0
        %658 = vmatprep.mubr.f32.mxu0 0.0
        %659 = vmatmul.mubr.f32.gmra.mrb[0].mxu0 %v592
        %v660 = vpop.f32.mrb[0].mxu0
        %v661 = vadd.f32 0.0, %v660
        %v662 = vpop.f32.mrb[0].mxu0
        %663 = vdwg.mxu0
        %v664 = vmax.f32 %v661, 0.0
        %v665 = vld [vmem:[%s2] sm:$0x3]
        %vm666 = vcmask 15360
        %v668 = vsel %vm666, %v664, 0
        %vm670 = vcmask 1041408
        %v672 = vsel %vm670, %v665, 0
        %674 = vmatprep.subr.mxu0 0.0
        %675 = vmatpush1.msra.mxu0 %v672
        %676 = vmatprep.subr.mxu0 0.0
        %677 = vmatpush1.msra.mxu0 0.0
        %678 = vmatprep.subr.mxu0 0.0
        %679 = vmatpush1.msra.mxu0 0.0
        %680 = vmatprep.subr.mxu0 0.0
        %681 = vmatpush1.msra.mxu0 0.0
        %682 = vmatprep.subr.mxu0 0.0
        %683 = vmatpush1.msra.mxu0 0.0
        %684 = vmatprep.subr.mxu0 0.0
        %685 = vmatpush1.msra.mxu0 0.0
        %686 = vmatprep.subr.mxu0 0.0
        %687 = vmatpush1.msra.mxu0 0.0
        %688 = vmatprep.subr.mxu0 0.0
        %689 = vmatpush1.msra.mxu0 0.0
        %690 = vmatprep.subr.mxu0 0.0
        %691 = vmatpush1.msra.mxu0 0.0
        %692 = vmatprep.subr.mxu0 0.0
        %693 = vmatpush1.msra.mxu0 0.0
        %694 = vmatprep.subr.mxu0 0.0
        %695 = vmatpush1.msra.mxu0 0.0
        %696 = vmatprep.subr.mxu0 0.0
        %697 = vmatpush1.msra.mxu0 0.0
        %698 = vmatprep.subr.mxu0 0.0
        %699 = vmatpush1.msra.mxu0 0.0
        %700 = vmatprep.subr.mxu0 0.0
        %701 = vmatpush1.msra.mxu0 0.0
        %702 = vmatprep.subr.mxu0 0.0
        %703 = vmatpush1.msra.mxu0 0.0
        %704 = vmatprep.subr.mxu0 0.0
        %705 = vmatpush1.msra.mxu0 0.0
        %706 = vmatprep.subr.mxu0 0.0
        %707 = vmatpush1.msra.mxu0 0.0
        %708 = vmatprep.subr.mxu0 0.0
        %709 = vmatpush1.msra.mxu0 0.0
        %710 = vmatprep.subr.mxu0 0.0
        %711 = vmatpush1.msra.mxu0 0.0
        %712 = vmatprep.subr.mxu0 0.0
        %713 = vmatpush1.msra.mxu0 0.0
        %714 = vmatprep.subr.mxu0 0.0
        %715 = vmatpush1.msra.mxu0 0.0
        %716 = vmatprep.subr.mxu0 0.0
        %717 = vmatpush1.msra.mxu0 0.0
        %718 = vmatprep.subr.mxu0 0.0
        %719 = vmatpush1.msra.mxu0 0.0
        %720 = vmatprep.subr.mxu0 0.0
        %721 = vmatpush1.msra.mxu0 0.0
        %722 = vmatprep.subr.mxu0 0.0
        %723 = vmatpush1.msra.mxu0 0.0
        %724 = vmatprep.subr.mxu0 0.0
        %725 = vmatpush1.msra.mxu0 0.0
        %726 = vmatprep.subr.mxu0 0.0
        %727 = vmatpush1.msra.mxu0 0.0
        %728 = vmatprep.subr.mxu0 0.0
        %729 = vmatpush1.msra.mxu0 0.0
        %730 = vmatprep.subr.mxu0 0.0
        %731 = vmatpush1.msra.mxu0 0.0
        %732 = vmatprep.subr.mxu0 0.0
        %733 = vmatpush1.msra.mxu0 0.0
        %734 = vmatprep.subr.mxu0 0.0
        %735 = vmatpush1.msra.mxu0 0.0
        %736 = vmatprep.subr.mxu0 0.0
        %737 = vmatpush1.msra.mxu0 0.0
        %738 = vmatprep.mubr.f32.mxu0 0.0
        %739 = vmatmul.mubr.f32.gmra.mrb[0].mxu0 %v668
        %v740 = vpop.f32.mrb[0].mxu0
        %v741 = vadd.f32 0.0, %v740
        %v742 = vpop.f32.mrb[0].mxu0
        %743 = vdwg.mxu0
        %v745 = vrot.slane %v741, 4
        %v747 = vadd.f32 %v741, %v745
        %v748 = vxor.u32 %v747, 2147483648
        %v749 = vmul.f32 %v748, 1.442695
        %v750 = vpow.pop %v749
        %v751 = vadd.f32 %v750, 1.0
        %v752 = vrcp.pop %v751
        %v753 = vmul.f32 1.0, %v752
        %v754 = vlaneseq
        %v755 = vshrl.u32 %v754, 7
        %v756 = vsub.s32 0, %v755
        %v757 = vrot.slane %v753, %v756
        %759 = vbcast.lane.b32.xlu0 %v757, 256
        %v760 = vpop.permute.xlu0 %759
        %s762 = sor.u32 256, 8
        %763 = vbcast.lane.b32.xlu0 %v757, %s762
        %v764 = vpop.permute.xlu0 %763
        %s766 = sor.u32 256, 16
        %767 = vbcast.lane.b32.xlu0 %v757, %s766
        %v768 = vpop.permute.xlu0 %767
        %s770 = sor.u32 256, 24
        %771 = vbcast.lane.b32.xlu0 %v757, %s770
        %v772 = vpop.permute.xlu0 %771
        %v773 = vlaneseq
        %v774 = vshrl.u32 %v773, 7
        %v775 = vsub.s32 1, %v774
        %v776 = vrot.slane %v753, %v775
        %778 = vbcast.lane.b32.xlu0 %v776, 256
        %v779 = vpop.permute.xlu0 %778
        %s781 = sor.u32 256, 8
        %782 = vbcast.lane.b32.xlu0 %v776, %s781
        %v783 = vpop.permute.xlu0 %782
        %s785 = sor.u32 256, 16
        %786 = vbcast.lane.b32.xlu0 %v776, %s785
        %v787 = vpop.permute.xlu0 %786
        %s789 = sor.u32 256, 24
        %790 = vbcast.lane.b32.xlu0 %v776, %s789
        %v791 = vpop.permute.xlu0 %790
        %v792 = vlaneseq
        %v793 = vshrl.u32 %v792, 7
        %v794 = vsub.s32 2, %v793
        %v795 = vrot.slane %v753, %v794
        %797 = vbcast.lane.b32.xlu0 %v795, 256
        %v798 = vpop.permute.xlu0 %797
        %s800 = sor.u32 256, 8
        %801 = vbcast.lane.b32.xlu0 %v795, %s800
        %v802 = vpop.permute.xlu0 %801
        %s804 = sor.u32 256, 16
        %805 = vbcast.lane.b32.xlu0 %v795, %s804
        %v806 = vpop.permute.xlu0 %805
        %s808 = sor.u32 256, 24
        %809 = vbcast.lane.b32.xlu0 %v795, %s808
        %v810 = vpop.permute.xlu0 %809
        %v811 = vlaneseq
        %v812 = vshrl.u32 %v811, 7
        %v813 = vsub.s32 3, %v812
        %v814 = vrot.slane %v753, %v813
        %816 = vbcast.lane.b32.xlu0 %v814, 256
        %v817 = vpop.permute.xlu0 %816
        %s819 = sor.u32 256, 8
        %820 = vbcast.lane.b32.xlu0 %v814, %s819
        %v821 = vpop.permute.xlu0 %820
        %s823 = sor.u32 256, 16
        %824 = vbcast.lane.b32.xlu0 %v814, %s823
        %v825 = vpop.permute.xlu0 %824
        %s827 = sor.u32 256, 24
        %828 = vbcast.lane.b32.xlu0 %v814, %s827
        %v829 = vpop.permute.xlu0 %828
        %v830 = vmul.f32 %v233, %v760
        %v831 = vmul.f32 %v234, %v760
        %v832 = vmul.f32 %v235, %v764
        %v833 = vmul.f32 %v236, %v764
        %v834 = vmul.f32 %v237, %v768
        %v835 = vmul.f32 %v238, %v768
        %v836 = vmul.f32 %v239, %v772
        %v837 = vmul.f32 %v240, %v772
        %v838 = vmul.f32 %v241, %v779
        %v839 = vmul.f32 %v242, %v779
        %v840 = vmul.f32 %v243, %v783
        %v841 = vmul.f32 %v244, %v783
        %v842 = vmul.f32 %v245, %v787
        %v843 = vmul.f32 %v246, %v787
        %v844 = vmul.f32 %v247, %v791
        %v845 = vmul.f32 %v248, %v791
        %v846 = vmul.f32 %v249, %v798
        %v847 = vmul.f32 %v250, %v798
        %v848 = vmul.f32 %v251, %v802
        %v849 = vmul.f32 %v252, %v802
        %v850 = vmul.f32 %v253, %v806
        %v851 = vmul.f32 %v254, %v806
        %v852 = vmul.f32 %v255, %v810
        %v853 = vmul.f32 %v256, %v810
        %v854 = vmul.f32 %v257, %v817
        %v855 = vmul.f32 %v258, %v817
        %v856 = vmul.f32 %v259, %v821
        %v857 = vmul.f32 %v260, %v821
        %v858 = vmul.f32 %v261, %v825
        %v859 = vmul.f32 %v262, %v825
        %v860 = vmul.f32 %v263, %v829
        %v861 = vmul.f32 %v264, %v829
        %v862 = vadd.f32 %v830, %v832
        %v863 = vadd.f32 %v862, %v834
        %v864 = vadd.f32 %v863, %v836
        %v865 = vrot.slane %v864, 4
        %v866 = vadd.f32 %v864, %v865
        %v867 = vrot.slane %v866, 2
        %v868 = vadd.f32 %v866, %v867
        %v869 = vrot.slane %v868, 1
        %v870 = vadd.f32 %v868, %v869
        %v871 = vadd.f32 %v831, %v833
        %v872 = vadd.f32 %v871, %v835
        %v873 = vadd.f32 %v872, %v837
        %v874 = vrot.slane %v873, 4
        %v875 = vadd.f32 %v873, %v874
        %v876 = vrot.slane %v875, 2
        %v877 = vadd.f32 %v875, %v876
        %v878 = vrot.slane %v877, 1
        %v879 = vadd.f32 %v877, %v878
        %v880 = vadd.f32 %v838, %v840
        %v881 = vadd.f32 %v880, %v842
        %v882 = vadd.f32 %v881, %v844
        %v883 = vrot.slane %v882, 4
        %v884 = vadd.f32 %v882, %v883
        %v885 = vrot.slane %v884, 2
        %v886 = vadd.f32 %v884, %v885
        %v887 = vrot.slane %v886, 1
        %v888 = vadd.f32 %v886, %v887
        %v889 = vadd.f32 %v839, %v841
        %v890 = vadd.f32 %v889, %v843
        %v891 = vadd.f32 %v890, %v845
        %v892 = vrot.slane %v891, 4
        %v893 = vadd.f32 %v891, %v892
        %v894 = vrot.slane %v893, 2
        %v895 = vadd.f32 %v893, %v894
        %v896 = vrot.slane %v895, 1
        %v897 = vadd.f32 %v895, %v896
        %v898 = vadd.f32 %v846, %v848
        %v899 = vadd.f32 %v898, %v850
        %v900 = vadd.f32 %v899, %v852
        %v901 = vrot.slane %v900, 4
        %v902 = vadd.f32 %v900, %v901
        %v903 = vrot.slane %v902, 2
        %v904 = vadd.f32 %v902, %v903
        %v905 = vrot.slane %v904, 1
        %v906 = vadd.f32 %v904, %v905
        %v907 = vadd.f32 %v847, %v849
        %v908 = vadd.f32 %v907, %v851
        %v909 = vadd.f32 %v908, %v853
        %v910 = vrot.slane %v909, 4
        %v911 = vadd.f32 %v909, %v910
        %v912 = vrot.slane %v911, 2
        %v913 = vadd.f32 %v911, %v912
        %v914 = vrot.slane %v913, 1
        %v915 = vadd.f32 %v913, %v914
        %v916 = vadd.f32 %v854, %v856
        %v917 = vadd.f32 %v916, %v858
        %v918 = vadd.f32 %v917, %v860
        %v919 = vrot.slane %v918, 4
        %v920 = vadd.f32 %v918, %v919
        %v921 = vrot.slane %v920, 2
        %v922 = vadd.f32 %v920, %v921
        %v923 = vrot.slane %v922, 1
        %v924 = vadd.f32 %v922, %v923
        %v925 = vadd.f32 %v855, %v857
        %v926 = vadd.f32 %v925, %v859
        %v927 = vadd.f32 %v926, %v861
        %v928 = vrot.slane %v927, 4
        %v929 = vadd.f32 %v927, %v928
        %v930 = vrot.slane %v929, 2
        %v931 = vadd.f32 %v929, %v930
        %v932 = vrot.slane %v931, 1
        %v933 = vadd.f32 %v931, %v932
        %v934 = vrcp.pop 32.0
        %v935 = vmul.f32 %v870, %v934
        %v936 = vmul.f32 %v879, %v934
        %v937 = vmul.f32 %v888, %v934
        %v938 = vmul.f32 %v897, %v934
        %v939 = vmul.f32 %v906, %v934
        %v940 = vmul.f32 %v915, %v934
        %v941 = vmul.f32 %v924, %v934
        %v942 = vmul.f32 %v933, %v934
        %v943 = vmax.f32 %v830, %v832
        %v944 = vmax.f32 %v943, %v834
        %v945 = vmax.f32 %v944, %v836
        %v946 = vrot.slane %v945, 4
        %v947 = vmax.f32 %v945, %v946
        %v948 = vrot.slane %v947, 2
        %v949 = vmax.f32 %v947, %v948
        %v950 = vrot.slane %v949, 1
        %v951 = vmax.f32 %v949, %v950
        %v952 = vmax.f32 %v831, %v833
        %v953 = vmax.f32 %v952, %v835
        %v954 = vmax.f32 %v953, %v837
        %v955 = vrot.slane %v954, 4
        %v956 = vmax.f32 %v954, %v955
        %v957 = vrot.slane %v956, 2
        %v958 = vmax.f32 %v956, %v957
        %v959 = vrot.slane %v958, 1
        %v960 = vmax.f32 %v958, %v959
        %v961 = vmax.f32 %v838, %v840
        %v962 = vmax.f32 %v961, %v842
        %v963 = vmax.f32 %v962, %v844
        %v964 = vrot.slane %v963, 4
        %v965 = vmax.f32 %v963, %v964
        %v966 = vrot.slane %v965, 2
        %v967 = vmax.f32 %v965, %v966
        %v968 = vrot.slane %v967, 1
        %v969 = vmax.f32 %v967, %v968
        %v970 = vmax.f32 %v839, %v841
        %v971 = vmax.f32 %v970, %v843
        %v972 = vmax.f32 %v971, %v845
        %v973 = vrot.slane %v972, 4
        %v974 = vmax.f32 %v972, %v973
        %v975 = vrot.slane %v974, 2
        %v976 = vmax.f32 %v974, %v975
        %v977 = vrot.slane %v976, 1
        %v978 = vmax.f32 %v976, %v977
        %v979 = vmax.f32 %v846, %v848
        %v980 = vmax.f32 %v979, %v850
        %v981 = vmax.f32 %v980, %v852
        %v982 = vrot.slane %v981, 4
        %v983 = vmax.f32 %v981, %v982
        %v984 = vrot.slane %v983, 2
        %v985 = vmax.f32 %v983, %v984
        %v986 = vrot.slane %v985, 1
        %v987 = vmax.f32 %v985, %v986
        %v988 = vmax.f32 %v847, %v849
        %v989 = vmax.f32 %v988, %v851
        %v990 = vmax.f32 %v989, %v853
        %v991 = vrot.slane %v990, 4
        %v992 = vmax.f32 %v990, %v991
        %v993 = vrot.slane %v992, 2
        %v994 = vmax.f32 %v992, %v993
        %v995 = vrot.slane %v994, 1
        %v996 = vmax.f32 %v994, %v995
        %v997 = vmax.f32 %v854, %v856
        %v998 = vmax.f32 %v997, %v858
        %v999 = vmax.f32 %v998, %v860
        %v1000 = vrot.slane %v999, 4
        %v1001 = vmax.f32 %v999, %v1000
        %v1002 = vrot.slane %v1001, 2
        %v1003 = vmax.f32 %v1001, %v1002
        %v1004 = vrot.slane %v1003, 1
        %v1005 = vmax.f32 %v1003, %v1004
        %v1006 = vmax.f32 %v855, %v857
        %v1007 = vmax.f32 %v1006, %v859
        %v1008 = vmax.f32 %v1007, %v861
        %v1009 = vrot.slane %v1008, 4
        %v1010 = vmax.f32 %v1008, %v1009
        %v1011 = vrot.slane %v1010, 2
        %v1012 = vmax.f32 %v1010, %v1011
        %v1013 = vrot.slane %v1012, 1
        %v1014 = vmax.f32 %v1012, %v1013
        %vm1015 = vcmask 359424
        %1016 = vst.msk [vmem:[#allocation2] sm:$0xff] %vm1015, 0.0
        %1017 = vst.msk [vmem:[#allocation2 + $0x8] sm:$0xff] %vm1015, 0.0
        %vm1018 = vcmask 357376
        %1019 = vst.msk [vmem:[#allocation2 + $0x10] sm:$0x3f] %vm1018, 0.0
        %1020 = vst.msk [vmem:[#allocation2 + $0x18] sm:$0xff] %vm1015, 0.0
        %1021 = vst.msk [vmem:[#allocation2 + $0x20] sm:$0xff] %vm1015, 0.0
        %1022 = vst.msk [vmem:[#allocation2 + $0x28] sm:$0x3f] %vm1018, 0.0
        %1023 = vst.msk [vmem:[#allocation2 + $0x30] sm:$0xff] %vm1015, 0.0
        %1024 = vst.msk [vmem:[#allocation2 + $0x38] sm:$0xff] %vm1015, 0.0
        %1025 = vst.msk [vmem:[#allocation2 + $0x40] sm:$0x3f] %vm1018, 0.0
        %1026 = vst.msk [vmem:[#allocation2 + $0x48] sm:$0xff] %vm1015, 0.0
        %1027 = vst.msk [vmem:[#allocation2 + $0x50] sm:$0xff] %vm1015, 0.0
        %1028 = vst.msk [vmem:[#allocation2 + $0x58] sm:$0x3f] %vm1018, 0.0
        %1033 = vrot.lane.b32.xlu0 %v935, 3
        %v1034 = vpop.permute.xlu0 %1033
        %1035 = vrot.lane.b32.xlu0 %v937, 3
        %v1036 = vpop.permute.xlu0 %1035
        %1037 = vrot.lane.b32.xlu0 %v939, 3
        %v1038 = vpop.permute.xlu0 %1037
        %1039 = vrot.lane.b32.xlu0 %v941, 3
        %v1040 = vpop.permute.xlu0 %1039
        %vm1045 = vcmask 147480
        %1046 = vst.msk [vmem:[#allocation2 + $0x3] sm:$0x1] %vm1045, %v1034
        %1047 = vst.msk [vmem:[#allocation2 + $0x1b] sm:$0x1] %vm1045, %v1036
        %1048 = vst.msk [vmem:[#allocation2 + $0x33] sm:$0x1] %vm1045, %v1038
        %1049 = vst.msk [vmem:[#allocation2 + $0x4b] sm:$0x1] %vm1045, %v1040
        %1050 = vrot.lane.b32.xlu0 %v935, 115
        %v1051 = vpop.permute.xlu0 %1050
        %1052 = vrot.lane.b32.xlu0 %v937, 115
        %v1053 = vpop.permute.xlu0 %1052
        %1054 = vrot.lane.b32.xlu0 %v939, 115
        %v1055 = vpop.permute.xlu0 %1054
        %1056 = vrot.lane.b32.xlu0 %v941, 115
        %v1057 = vpop.permute.xlu0 %1056
        %1062 = vst.msk [vmem:[#allocation2 + $0x4] sm:$0x1] %vm1045, %v1051
        %1063 = vst.msk [vmem:[#allocation2 + $0x1c] sm:$0x1] %vm1045, %v1053
        %1064 = vst.msk [vmem:[#allocation2 + $0x34] sm:$0x1] %vm1045, %v1055
        %1065 = vst.msk [vmem:[#allocation2 + $0x4c] sm:$0x1] %vm1045, %v1057
        %1066 = vrot.lane.b32.xlu0 %v935, 99
        %v1067 = vpop.permute.xlu0 %1066
        %1068 = vrot.lane.b32.xlu0 %v937, 99
        %v1069 = vpop.permute.xlu0 %1068
        %1070 = vrot.lane.b32.xlu0 %v939, 99
        %v1071 = vpop.permute.xlu0 %1070
        %1072 = vrot.lane.b32.xlu0 %v941, 99
        %v1073 = vpop.permute.xlu0 %1072
        %1078 = vst.msk [vmem:[#allocation2 + $0x5] sm:$0x1] %vm1045, %v1067
        %1079 = vst.msk [vmem:[#allocation2 + $0x1d] sm:$0x1] %vm1045, %v1069
        %1080 = vst.msk [vmem:[#allocation2 + $0x35] sm:$0x1] %vm1045, %v1071
        %1081 = vst.msk [vmem:[#allocation2 + $0x4d] sm:$0x1] %vm1045, %v1073
        %1082 = vrot.lane.b32.xlu0 %v935, 83
        %v1083 = vpop.permute.xlu0 %1082
        %1084 = vrot.lane.b32.xlu0 %v937, 83
        %v1085 = vpop.permute.xlu0 %1084
        %1086 = vrot.lane.b32.xlu0 %v939, 83
        %v1087 = vpop.permute.xlu0 %1086
        %1088 = vrot.lane.b32.xlu0 %v941, 83
        %v1089 = vpop.permute.xlu0 %1088
        %1094 = vst.msk [vmem:[#allocation2 + $0x6] sm:$0x1] %vm1045, %v1083
        %1095 = vst.msk [vmem:[#allocation2 + $0x1e] sm:$0x1] %vm1045, %v1085
        %1096 = vst.msk [vmem:[#allocation2 + $0x36] sm:$0x1] %vm1045, %v1087
        %1097 = vst.msk [vmem:[#allocation2 + $0x4e] sm:$0x1] %vm1045, %v1089
        %1098 = vrot.lane.b32.xlu0 %v935, 67
        %v1099 = vpop.permute.xlu0 %1098
        %1100 = vrot.lane.b32.xlu0 %v937, 67
        %v1101 = vpop.permute.xlu0 %1100
        %1102 = vrot.lane.b32.xlu0 %v939, 67
        %v1103 = vpop.permute.xlu0 %1102
        %1104 = vrot.lane.b32.xlu0 %v941, 67
        %v1105 = vpop.permute.xlu0 %1104
        %1110 = vst.msk [vmem:[#allocation2 + $0x7] sm:$0x1] %vm1045, %v1099
        %1111 = vst.msk [vmem:[#allocation2 + $0x1f] sm:$0x1] %vm1045, %v1101
        %1112 = vst.msk [vmem:[#allocation2 + $0x37] sm:$0x1] %vm1045, %v1103
        %1113 = vst.msk [vmem:[#allocation2 + $0x4f] sm:$0x1] %vm1045, %v1105
        %1114 = vrot.lane.b32.xlu0 %v935, 51
        %v1115 = vpop.permute.xlu0 %1114
        %1116 = vrot.lane.b32.xlu0 %v937, 51
        %v1117 = vpop.permute.xlu0 %1116
        %1118 = vrot.lane.b32.xlu0 %v939, 51
        %v1119 = vpop.permute.xlu0 %1118
        %1120 = vrot.lane.b32.xlu0 %v941, 51
        %v1121 = vpop.permute.xlu0 %1120
        %1126 = vst.msk [vmem:[#allocation2 + $0x8] sm:$0x1] %vm1045, %v1115
        %1127 = vst.msk [vmem:[#allocation2 + $0x20] sm:$0x1] %vm1045, %v1117
        %1128 = vst.msk [vmem:[#allocation2 + $0x38] sm:$0x1] %vm1045, %v1119
        %1129 = vst.msk [vmem:[#allocation2 + $0x50] sm:$0x1] %vm1045, %v1121
        %1130 = vrot.lane.b32.xlu0 %v935, 35
        %v1131 = vpop.permute.xlu0 %1130
        %1132 = vrot.lane.b32.xlu0 %v937, 35
        %v1133 = vpop.permute.xlu0 %1132
        %1134 = vrot.lane.b32.xlu0 %v939, 35
        %v1135 = vpop.permute.xlu0 %1134
        %1136 = vrot.lane.b32.xlu0 %v941, 35
        %v1137 = vpop.permute.xlu0 %1136
        %1142 = vst.msk [vmem:[#allocation2 + $0x9] sm:$0x1] %vm1045, %v1131
        %1143 = vst.msk [vmem:[#allocation2 + $0x21] sm:$0x1] %vm1045, %v1133
        %1144 = vst.msk [vmem:[#allocation2 + $0x39] sm:$0x1] %vm1045, %v1135
        %1145 = vst.msk [vmem:[#allocation2 + $0x51] sm:$0x1] %vm1045, %v1137
        %1146 = vrot.lane.b32.xlu0 %v935, 19
        %v1147 = vpop.permute.xlu0 %1146
        %1148 = vrot.lane.b32.xlu0 %v937, 19
        %v1149 = vpop.permute.xlu0 %1148
        %1150 = vrot.lane.b32.xlu0 %v939, 19
        %v1151 = vpop.permute.xlu0 %1150
        %1152 = vrot.lane.b32.xlu0 %v941, 19
        %v1153 = vpop.permute.xlu0 %1152
        %1158 = vst.msk [vmem:[#allocation2 + $0xa] sm:$0x1] %vm1045, %v1147
        %1159 = vst.msk [vmem:[#allocation2 + $0x22] sm:$0x1] %vm1045, %v1149
        %1160 = vst.msk [vmem:[#allocation2 + $0x3a] sm:$0x1] %vm1045, %v1151
        %1161 = vst.msk [vmem:[#allocation2 + $0x52] sm:$0x1] %vm1045, %v1153
        %1166 = vrot.lane.b32.xlu0 %v936, 3
        %v1167 = vpop.permute.xlu0 %1166
        %1168 = vrot.lane.b32.xlu0 %v938, 3
        %v1169 = vpop.permute.xlu0 %1168
        %1170 = vrot.lane.b32.xlu0 %v940, 3
        %v1171 = vpop.permute.xlu0 %1170
        %1172 = vrot.lane.b32.xlu0 %v942, 3
        %v1173 = vpop.permute.xlu0 %1172
        %1178 = vst.msk [vmem:[#allocation2 + $0xb] sm:$0x1] %vm1045, %v1167
        %1179 = vst.msk [vmem:[#allocation2 + $0x23] sm:$0x1] %vm1045, %v1169
        %1180 = vst.msk [vmem:[#allocation2 + $0x3b] sm:$0x1] %vm1045, %v1171
        %1181 = vst.msk [vmem:[#allocation2 + $0x53] sm:$0x1] %vm1045, %v1173
        %1182 = vrot.lane.b32.xlu0 %v936, 115
        %v1183 = vpop.permute.xlu0 %1182
        %1184 = vrot.lane.b32.xlu0 %v938, 115
        %v1185 = vpop.permute.xlu0 %1184
        %1186 = vrot.lane.b32.xlu0 %v940, 115
        %v1187 = vpop.permute.xlu0 %1186
        %1188 = vrot.lane.b32.xlu0 %v942, 115
        %v1189 = vpop.permute.xlu0 %1188
        %1194 = vst.msk [vmem:[#allocation2 + $0xc] sm:$0x1] %vm1045, %v1183
        %1195 = vst.msk [vmem:[#allocation2 + $0x24] sm:$0x1] %vm1045, %v1185
        %1196 = vst.msk [vmem:[#allocation2 + $0x3c] sm:$0x1] %vm1045, %v1187
        %1197 = vst.msk [vmem:[#allocation2 + $0x54] sm:$0x1] %vm1045, %v1189
        %1198 = vrot.lane.b32.xlu0 %v936, 99
        %v1199 = vpop.permute.xlu0 %1198
        %1200 = vrot.lane.b32.xlu0 %v938, 99
        %v1201 = vpop.permute.xlu0 %1200
        %1202 = vrot.lane.b32.xlu0 %v940, 99
        %v1203 = vpop.permute.xlu0 %1202
        %1204 = vrot.lane.b32.xlu0 %v942, 99
        %v1205 = vpop.permute.xlu0 %1204
        %1210 = vst.msk [vmem:[#allocation2 + $0xd] sm:$0x1] %vm1045, %v1199
        %1211 = vst.msk [vmem:[#allocation2 + $0x25] sm:$0x1] %vm1045, %v1201
        %1212 = vst.msk [vmem:[#allocation2 + $0x3d] sm:$0x1] %vm1045, %v1203
        %1213 = vst.msk [vmem:[#allocation2 + $0x55] sm:$0x1] %vm1045, %v1205
        %1214 = vrot.lane.b32.xlu0 %v936, 83
        %v1215 = vpop.permute.xlu0 %1214
        %1216 = vrot.lane.b32.xlu0 %v938, 83
        %v1217 = vpop.permute.xlu0 %1216
        %1218 = vrot.lane.b32.xlu0 %v940, 83
        %v1219 = vpop.permute.xlu0 %1218
        %1220 = vrot.lane.b32.xlu0 %v942, 83
        %v1221 = vpop.permute.xlu0 %1220
        %1226 = vst.msk [vmem:[#allocation2 + $0xe] sm:$0x1] %vm1045, %v1215
        %1227 = vst.msk [vmem:[#allocation2 + $0x26] sm:$0x1] %vm1045, %v1217
        %1228 = vst.msk [vmem:[#allocation2 + $0x3e] sm:$0x1] %vm1045, %v1219
        %1229 = vst.msk [vmem:[#allocation2 + $0x56] sm:$0x1] %vm1045, %v1221
        %1230 = vrot.lane.b32.xlu0 %v936, 67
        %v1231 = vpop.permute.xlu0 %1230
        %1232 = vrot.lane.b32.xlu0 %v938, 67
        %v1233 = vpop.permute.xlu0 %1232
        %1234 = vrot.lane.b32.xlu0 %v940, 67
        %v1235 = vpop.permute.xlu0 %1234
        %1236 = vrot.lane.b32.xlu0 %v942, 67
        %v1237 = vpop.permute.xlu0 %1236
        %1242 = vst.msk [vmem:[#allocation2 + $0xf] sm:$0x1] %vm1045, %v1231
        %1243 = vst.msk [vmem:[#allocation2 + $0x27] sm:$0x1] %vm1045, %v1233
        %1244 = vst.msk [vmem:[#allocation2 + $0x3f] sm:$0x1] %vm1045, %v1235
        %1245 = vst.msk [vmem:[#allocation2 + $0x57] sm:$0x1] %vm1045, %v1237
        %1246 = vrot.lane.b32.xlu0 %v936, 51
        %v1247 = vpop.permute.xlu0 %1246
        %1248 = vrot.lane.b32.xlu0 %v938, 51
        %v1249 = vpop.permute.xlu0 %1248
        %1250 = vrot.lane.b32.xlu0 %v940, 51
        %v1251 = vpop.permute.xlu0 %1250
        %1252 = vrot.lane.b32.xlu0 %v942, 51
        %v1253 = vpop.permute.xlu0 %1252
        %1258 = vst.msk [vmem:[#allocation2 + $0x10] sm:$0x1] %vm1045, %v1247
        %1259 = vst.msk [vmem:[#allocation2 + $0x28] sm:$0x1] %vm1045, %v1249
        %1260 = vst.msk [vmem:[#allocation2 + $0x40] sm:$0x1] %vm1045, %v1251
        %1261 = vst.msk [vmem:[#allocation2 + $0x58] sm:$0x1] %vm1045, %v1253
        %1262 = vrot.lane.b32.xlu0 %v936, 35
        %v1263 = vpop.permute.xlu0 %1262
        %1264 = vrot.lane.b32.xlu0 %v938, 35
        %v1265 = vpop.permute.xlu0 %1264
        %1266 = vrot.lane.b32.xlu0 %v940, 35
        %v1267 = vpop.permute.xlu0 %1266
        %1268 = vrot.lane.b32.xlu0 %v942, 35
        %v1269 = vpop.permute.xlu0 %1268
        %1274 = vst.msk [vmem:[#allocation2 + $0x11] sm:$0x1] %vm1045, %v1263
        %1275 = vst.msk [vmem:[#allocation2 + $0x29] sm:$0x1] %vm1045, %v1265
        %1276 = vst.msk [vmem:[#allocation2 + $0x41] sm:$0x1] %vm1045, %v1267
        %1277 = vst.msk [vmem:[#allocation2 + $0x59] sm:$0x1] %vm1045, %v1269
        %1278 = vrot.lane.b32.xlu0 %v936, 19
        %v1279 = vpop.permute.xlu0 %1278
        %1280 = vrot.lane.b32.xlu0 %v938, 19
        %v1281 = vpop.permute.xlu0 %1280
        %1282 = vrot.lane.b32.xlu0 %v940, 19
        %v1283 = vpop.permute.xlu0 %1282
        %1284 = vrot.lane.b32.xlu0 %v942, 19
        %v1285 = vpop.permute.xlu0 %1284
        %1290 = vst.msk [vmem:[#allocation2 + $0x12] sm:$0x1] %vm1045, %v1279
        %1291 = vst.msk [vmem:[#allocation2 + $0x2a] sm:$0x1] %vm1045, %v1281
        %1292 = vst.msk [vmem:[#allocation2 + $0x42] sm:$0x1] %vm1045, %v1283
        %1293 = vst.msk [vmem:[#allocation2 + $0x5a] sm:$0x1] %vm1045, %v1285
        %1298 = vrot.lane.b32.xlu0 %v951, 25
        %v1299 = vpop.permute.xlu0 %1298
        %1300 = vrot.lane.b32.xlu0 %v969, 25
        %v1301 = vpop.permute.xlu0 %1300
        %1302 = vrot.lane.b32.xlu0 %v987, 25
        %v1303 = vpop.permute.xlu0 %1302
        %1304 = vrot.lane.b32.xlu0 %v1005, 25
        %v1305 = vpop.permute.xlu0 %1304
        %vm1310 = vcmask 327880
        %1311 = vst.msk [vmem:[#allocation2 + $0x3] sm:$0x1] %vm1310, %v1299
        %1312 = vst.msk [vmem:[#allocation2 + $0x1b] sm:$0x1] %vm1310, %v1301
        %1313 = vst.msk [vmem:[#allocation2 + $0x33] sm:$0x1] %vm1310, %v1303
        %1314 = vst.msk [vmem:[#allocation2 + $0x4b] sm:$0x1] %vm1310, %v1305
        %1315 = vrot.lane.b32.xlu0 %v951, 9
        %v1316 = vpop.permute.xlu0 %1315
        %1317 = vrot.lane.b32.xlu0 %v969, 9
        %v1318 = vpop.permute.xlu0 %1317
        %1319 = vrot.lane.b32.xlu0 %v987, 9
        %v1320 = vpop.permute.xlu0 %1319
        %1321 = vrot.lane.b32.xlu0 %v1005, 9
        %v1322 = vpop.permute.xlu0 %1321
        %1327 = vst.msk [vmem:[#allocation2 + $0x4] sm:$0x1] %vm1310, %v1316
        %1328 = vst.msk [vmem:[#allocation2 + $0x1c] sm:$0x1] %vm1310, %v1318
        %1329 = vst.msk [vmem:[#allocation2 + $0x34] sm:$0x1] %vm1310, %v1320
        %1330 = vst.msk [vmem:[#allocation2 + $0x4c] sm:$0x1] %vm1310, %v1322
        %1331 = vrot.lane.b32.xlu0 %v951, 121
        %v1332 = vpop.permute.xlu0 %1331
        %1333 = vrot.lane.b32.xlu0 %v969, 121
        %v1334 = vpop.permute.xlu0 %1333
        %1335 = vrot.lane.b32.xlu0 %v987, 121
        %v1336 = vpop.permute.xlu0 %1335
        %1337 = vrot.lane.b32.xlu0 %v1005, 121
        %v1338 = vpop.permute.xlu0 %1337
        %1343 = vst.msk [vmem:[#allocation2 + $0x5] sm:$0x1] %vm1310, %v1332
        %1344 = vst.msk [vmem:[#allocation2 + $0x1d] sm:$0x1] %vm1310, %v1334
        %1345 = vst.msk [vmem:[#allocation2 + $0x35] sm:$0x1] %vm1310, %v1336
        %1346 = vst.msk [vmem:[#allocation2 + $0x4d] sm:$0x1] %vm1310, %v1338
        %1347 = vrot.lane.b32.xlu0 %v951, 105
        %v1348 = vpop.permute.xlu0 %1347
        %1349 = vrot.lane.b32.xlu0 %v969, 105
        %v1350 = vpop.permute.xlu0 %1349
        %1351 = vrot.lane.b32.xlu0 %v987, 105
        %v1352 = vpop.permute.xlu0 %1351
        %1353 = vrot.lane.b32.xlu0 %v1005, 105
        %v1354 = vpop.permute.xlu0 %1353
        %1359 = vst.msk [vmem:[#allocation2 + $0x6] sm:$0x1] %vm1310, %v1348
        %1360 = vst.msk [vmem:[#allocation2 + $0x1e] sm:$0x1] %vm1310, %v1350
        %1361 = vst.msk [vmem:[#allocation2 + $0x36] sm:$0x1] %vm1310, %v1352
        %1362 = vst.msk [vmem:[#allocation2 + $0x4e] sm:$0x1] %vm1310, %v1354
        %1363 = vrot.lane.b32.xlu0 %v951, 89
        %v1364 = vpop.permute.xlu0 %1363
        %1365 = vrot.lane.b32.xlu0 %v969, 89
        %v1366 = vpop.permute.xlu0 %1365
        %1367 = vrot.lane.b32.xlu0 %v987, 89
        %v1368 = vpop.permute.xlu0 %1367
        %1369 = vrot.lane.b32.xlu0 %v1005, 89
        %v1370 = vpop.permute.xlu0 %1369
        %1375 = vst.msk [vmem:[#allocation2 + $0x7] sm:$0x1] %vm1310, %v1364
        %1376 = vst.msk [vmem:[#allocation2 + $0x1f] sm:$0x1] %vm1310, %v1366
        %1377 = vst.msk [vmem:[#allocation2 + $0x37] sm:$0x1] %vm1310, %v1368
        %1378 = vst.msk [vmem:[#allocation2 + $0x4f] sm:$0x1] %vm1310, %v1370
        %1379 = vrot.lane.b32.xlu0 %v951, 73
        %v1380 = vpop.permute.xlu0 %1379
        %1381 = vrot.lane.b32.xlu0 %v969, 73
        %v1382 = vpop.permute.xlu0 %1381
        %1383 = vrot.lane.b32.xlu0 %v987, 73
        %v1384 = vpop.permute.xlu0 %1383
        %1385 = vrot.lane.b32.xlu0 %v1005, 73
        %v1386 = vpop.permute.xlu0 %1385
        %1391 = vst.msk [vmem:[#allocation2 + $0x8] sm:$0x1] %vm1310, %v1380
        %1392 = vst.msk [vmem:[#allocation2 + $0x20] sm:$0x1] %vm1310, %v1382
        %1393 = vst.msk [vmem:[#allocation2 + $0x38] sm:$0x1] %vm1310, %v1384
        %1394 = vst.msk [vmem:[#allocation2 + $0x50] sm:$0x1] %vm1310, %v1386
        %1395 = vrot.lane.b32.xlu0 %v951, 57
        %v1396 = vpop.permute.xlu0 %1395
        %1397 = vrot.lane.b32.xlu0 %v969, 57
        %v1398 = vpop.permute.xlu0 %1397
        %1399 = vrot.lane.b32.xlu0 %v987, 57
        %v1400 = vpop.permute.xlu0 %1399
        %1401 = vrot.lane.b32.xlu0 %v1005, 57
        %v1402 = vpop.permute.xlu0 %1401
        %1407 = vst.msk [vmem:[#allocation2 + $0x9] sm:$0x1] %vm1310, %v1396
        %1408 = vst.msk [vmem:[#allocation2 + $0x21] sm:$0x1] %vm1310, %v1398
        %1409 = vst.msk [vmem:[#allocation2 + $0x39] sm:$0x1] %vm1310, %v1400
        %1410 = vst.msk [vmem:[#allocation2 + $0x51] sm:$0x1] %vm1310, %v1402
        %1411 = vrot.lane.b32.xlu0 %v951, 41
        %v1412 = vpop.permute.xlu0 %1411
        %1413 = vrot.lane.b32.xlu0 %v969, 41
        %v1414 = vpop.permute.xlu0 %1413
        %1415 = vrot.lane.b32.xlu0 %v987, 41
        %v1416 = vpop.permute.xlu0 %1415
        %1417 = vrot.lane.b32.xlu0 %v1005, 41
        %v1418 = vpop.permute.xlu0 %1417
        %1423 = vst.msk [vmem:[#allocation2 + $0xa] sm:$0x1] %vm1310, %v1412
        %1424 = vst.msk [vmem:[#allocation2 + $0x22] sm:$0x1] %vm1310, %v1414
        %1425 = vst.msk [vmem:[#allocation2 + $0x3a] sm:$0x1] %vm1310, %v1416
        %1426 = vst.msk [vmem:[#allocation2 + $0x52] sm:$0x1] %vm1310, %v1418
        %1431 = vrot.lane.b32.xlu0 %v960, 25
        %v1432 = vpop.permute.xlu0 %1431
        %1433 = vrot.lane.b32.xlu0 %v978, 25
        %v1434 = vpop.permute.xlu0 %1433
        %1435 = vrot.lane.b32.xlu0 %v996, 25
        %v1436 = vpop.permute.xlu0 %1435
        %1437 = vrot.lane.b32.xlu0 %v1014, 25
        %v1438 = vpop.permute.xlu0 %1437
        %1443 = vst.msk [vmem:[#allocation2 + $0xb] sm:$0x1] %vm1310, %v1432
        %1444 = vst.msk [vmem:[#allocation2 + $0x23] sm:$0x1] %vm1310, %v1434
        %1445 = vst.msk [vmem:[#allocation2 + $0x3b] sm:$0x1] %vm1310, %v1436
        %1446 = vst.msk [vmem:[#allocation2 + $0x53] sm:$0x1] %vm1310, %v1438
        %1447 = vrot.lane.b32.xlu0 %v960, 9
        %v1448 = vpop.permute.xlu0 %1447
        %1449 = vrot.lane.b32.xlu0 %v978, 9
        %v1450 = vpop.permute.xlu0 %1449
        %1451 = vrot.lane.b32.xlu0 %v996, 9
        %v1452 = vpop.permute.xlu0 %1451
        %1453 = vrot.lane.b32.xlu0 %v1014, 9
        %v1454 = vpop.permute.xlu0 %1453
        %1459 = vst.msk [vmem:[#allocation2 + $0xc] sm:$0x1] %vm1310, %v1448
        %1460 = vst.msk [vmem:[#allocation2 + $0x24] sm:$0x1] %vm1310, %v1450
        %1461 = vst.msk [vmem:[#allocation2 + $0x3c] sm:$0x1] %vm1310, %v1452
        %1462 = vst.msk [vmem:[#allocation2 + $0x54] sm:$0x1] %vm1310, %v1454
        %1463 = vrot.lane.b32.xlu0 %v960, 121
        %v1464 = vpop.permute.xlu0 %1463
        %1465 = vrot.lane.b32.xlu0 %v978, 121
        %v1466 = vpop.permute.xlu0 %1465
        %1467 = vrot.lane.b32.xlu0 %v996, 121
        %v1468 = vpop.permute.xlu0 %1467
        %1469 = vrot.lane.b32.xlu0 %v1014, 121
        %v1470 = vpop.permute.xlu0 %1469
        %1475 = vst.msk [vmem:[#allocation2 + $0xd] sm:$0x1] %vm1310, %v1464
        %1476 = vst.msk [vmem:[#allocation2 + $0x25] sm:$0x1] %vm1310, %v1466
        %1477 = vst.msk [vmem:[#allocation2 + $0x3d] sm:$0x1] %vm1310, %v1468
        %1478 = vst.msk [vmem:[#allocation2 + $0x55] sm:$0x1] %vm1310, %v1470
        %1479 = vrot.lane.b32.xlu0 %v960, 105
        %v1480 = vpop.permute.xlu0 %1479
        %1481 = vrot.lane.b32.xlu0 %v978, 105
        %v1482 = vpop.permute.xlu0 %1481
        %1483 = vrot.lane.b32.xlu0 %v996, 105
        %v1484 = vpop.permute.xlu0 %1483
        %1485 = vrot.lane.b32.xlu0 %v1014, 105
        %v1486 = vpop.permute.xlu0 %1485
        %1491 = vst.msk [vmem:[#allocation2 + $0xe] sm:$0x1] %vm1310, %v1480
        %1492 = vst.msk [vmem:[#allocation2 + $0x26] sm:$0x1] %vm1310, %v1482
        %1493 = vst.msk [vmem:[#allocation2 + $0x3e] sm:$0x1] %vm1310, %v1484
        %1494 = vst.msk [vmem:[#allocation2 + $0x56] sm:$0x1] %vm1310, %v1486
        %1495 = vrot.lane.b32.xlu0 %v960, 89
        %v1496 = vpop.permute.xlu0 %1495
        %1497 = vrot.lane.b32.xlu0 %v978, 89
        %v1498 = vpop.permute.xlu0 %1497
        %1499 = vrot.lane.b32.xlu0 %v996, 89
        %v1500 = vpop.permute.xlu0 %1499
        %1501 = vrot.lane.b32.xlu0 %v1014, 89
        %v1502 = vpop.permute.xlu0 %1501
        %1507 = vst.msk [vmem:[#allocation2 + $0xf] sm:$0x1] %vm1310, %v1496
        %1508 = vst.msk [vmem:[#allocation2 + $0x27] sm:$0x1] %vm1310, %v1498
        %1509 = vst.msk [vmem:[#allocation2 + $0x3f] sm:$0x1] %vm1310, %v1500
        %1510 = vst.msk [vmem:[#allocation2 + $0x57] sm:$0x1] %vm1310, %v1502
        %1511 = vrot.lane.b32.xlu0 %v960, 73
        %v1512 = vpop.permute.xlu0 %1511
        %1513 = vrot.lane.b32.xlu0 %v978, 73
        %v1514 = vpop.permute.xlu0 %1513
        %1515 = vrot.lane.b32.xlu0 %v996, 73
        %v1516 = vpop.permute.xlu0 %1515
        %1517 = vrot.lane.b32.xlu0 %v1014, 73
        %v1518 = vpop.permute.xlu0 %1517
        %1523 = vst.msk [vmem:[#allocation2 + $0x10] sm:$0x1] %vm1310, %v1512
        %1524 = vst.msk [vmem:[#allocation2 + $0x28] sm:$0x1] %vm1310, %v1514
        %1525 = vst.msk [vmem:[#allocation2 + $0x40] sm:$0x1] %vm1310, %v1516
        %1526 = vst.msk [vmem:[#allocation2 + $0x58] sm:$0x1] %vm1310, %v1518
        %1527 = vrot.lane.b32.xlu0 %v960, 57
        %v1528 = vpop.permute.xlu0 %1527
        %1529 = vrot.lane.b32.xlu0 %v978, 57
        %v1530 = vpop.permute.xlu0 %1529
        %1531 = vrot.lane.b32.xlu0 %v996, 57
        %v1532 = vpop.permute.xlu0 %1531
        %1533 = vrot.lane.b32.xlu0 %v1014, 57
        %v1534 = vpop.permute.xlu0 %1533
        %1539 = vst.msk [vmem:[#allocation2 + $0x11] sm:$0x1] %vm1310, %v1528
        %1540 = vst.msk [vmem:[#allocation2 + $0x29] sm:$0x1] %vm1310, %v1530
        %1541 = vst.msk [vmem:[#allocation2 + $0x41] sm:$0x1] %vm1310, %v1532
        %1542 = vst.msk [vmem:[#allocation2 + $0x59] sm:$0x1] %vm1310, %v1534
        %1543 = vrot.lane.b32.xlu0 %v960, 41
        %v1544 = vpop.permute.xlu0 %1543
        %1545 = vrot.lane.b32.xlu0 %v978, 41
        %v1546 = vpop.permute.xlu0 %1545
        %1547 = vrot.lane.b32.xlu0 %v996, 41
        %v1548 = vpop.permute.xlu0 %1547
        %1549 = vrot.lane.b32.xlu0 %v1014, 41
        %v1550 = vpop.permute.xlu0 %1549
        %1555 = vst.msk [vmem:[#allocation2 + $0x12] sm:$0x1] %vm1310, %v1544
        %1556 = vst.msk [vmem:[#allocation2 + $0x2a] sm:$0x1] %vm1310, %v1546
        %1557 = vst.msk [vmem:[#allocation2 + $0x42] sm:$0x1] %vm1310, %v1548
        %1558 = vst.msk [vmem:[#allocation2 + $0x5a] sm:$0x1] %vm1310, %v1550
        %v1559 = vld [vmem:[#allocation2] sm:$0xff]
        %v1560 = vld [vmem:[#allocation2 + $0x8] sm:$0xff]
        %v1561 = vld [vmem:[#allocation2 + $0x10] sm:$0x3f]
        %v1562 = vld [vmem:[#allocation2 + $0x18] sm:$0xff]
        %v1563 = vld [vmem:[#allocation2 + $0x20] sm:$0xff]
        %v1564 = vld [vmem:[#allocation2 + $0x28] sm:$0x3f]
        %v1565 = vld [vmem:[#allocation2 + $0x30] sm:$0xff]
        %v1566 = vld [vmem:[#allocation2 + $0x38] sm:$0xff]
        %v1567 = vld [vmem:[#allocation2 + $0x40] sm:$0x3f]
        %v1568 = vld [vmem:[#allocation2 + $0x48] sm:$0xff]
        %v1569 = vld [vmem:[#allocation2 + $0x50] sm:$0xff]
        %v1570 = vld [vmem:[#allocation2 + $0x58] sm:$0x3f]
        %s1571 = sld [smem:[#allocation8]]
        %s1572 = sld [smem:[#allocation8 + $0x1]]
        %s1573 = sld [smem:[#allocation8 + $0x2]]
        %s1574 = sld [smem:[#allocation8 + $0x3]]
        %s1575 = sld [smem:[#allocation8 + $0x4]]
        %s1576 = sld [smem:[#allocation8 + $0x5]]
        %s1577 = sld [smem:[#allocation8 + $0x6]]
        %s1578 = sld [smem:[#allocation8 + $0x7]]
        %s1579 = sld [smem:[#allocation8 + $0x8]]
        %s1580 = sld [smem:[#allocation8 + $0x9]]
        %s1581 = sld [smem:[#allocation8 + $0xa]]
        %s1582 = sld [smem:[#allocation8 + $0xb]]
        %s1583 = sld [smem:[#allocation8 + $0xc]]
        %s1584 = sld [smem:[#allocation8 + $0xd]]
        %s1585 = sld [smem:[#allocation8 + $0xe]]
        %s1586 = sld [smem:[#allocation8 + $0xf]]
        %s1587 = sld [smem:[#allocation8 + $0x10]]
        %s1588 = sld [smem:[#allocation8 + $0x11]]
        %s1589 = sld [smem:[#allocation8 + $0x12]]
        %s1590 = sld [smem:[#allocation8 + $0x13]]
        %s1591 = sld [smem:[#allocation8 + $0x14]]
        %s1592 = sld [smem:[#allocation8 + $0x15]]
        %s1593 = sld [smem:[#allocation8 + $0x16]]
        %s1594 = sld [smem:[#allocation8 + $0x17]]
        %s1595 = sld [smem:[#allocation8 + $0x18]]
        %s1596 = sld [smem:[#allocation8 + $0x19]]
        %s1597 = sld [smem:[#allocation8 + $0x1a]]
        %s1598 = sld [smem:[#allocation8 + $0x1b]]
        %s1599 = sld [smem:[#allocation8 + $0x1c]]
        %s1600 = sld [smem:[#allocation8 + $0x1d]]
        %s1601 = sld [smem:[#allocation8 + $0x1e]]
        %s1602 = sld [smem:[#allocation8 + $0x1f]]
        %s1603 = sld [smem:[#allocation8 + $0x20]]
        %s1604 = sld [smem:[#allocation8 + $0x21]]
        %s1605 = sld [smem:[#allocation8 + $0x22]]
        %s1606 = sld [smem:[#allocation8 + $0x23]]
        %s1607 = sld [smem:[#allocation8 + $0x24]]
        %s1608 = sld [smem:[#allocation8 + $0x25]]
        %s1609 = sld [smem:[#allocation8 + $0x26]]
        %s1610 = sld [smem:[#allocation8 + $0x27]]
        %s1611 = sld [smem:[#allocation8 + $0x28]]
        %s1612 = sld [smem:[#allocation8 + $0x29]]
        %s1613 = sld [smem:[#allocation8 + $0x2a]]
        %s1614 = sld [smem:[#allocation8 + $0x2b]]
        %s1615 = sld [smem:[#allocation8 + $0x2c]]
        %s1616 = sld [smem:[#allocation8 + $0x2d]]
        %s1617 = sld [smem:[#allocation8 + $0x2e]]
        %s1618 = sld [smem:[#allocation8 + $0x2f]]
        %s1619 = sld [smem:[#allocation8 + $0x30]]
        %s1620 = sld [smem:[#allocation8 + $0x31]]
        %s1621 = sld [smem:[#allocation8 + $0x32]]
        %s1622 = sld [smem:[#allocation8 + $0x33]]
        %s1623 = sld [smem:[#allocation8 + $0x34]]
        %s1624 = sld [smem:[#allocation8 + $0x35]]
        %s1625 = sld [smem:[#allocation8 + $0x36]]
        %s1626 = sld [smem:[#allocation8 + $0x37]]
        %s1627 = sld [smem:[#allocation8 + $0x38]]
        %s1628 = sld [smem:[#allocation8 + $0x39]]
        %s1629 = sld [smem:[#allocation8 + $0x3a]]
        %s1630 = sld [smem:[#allocation8 + $0x3b]]
        %s1631 = sld [smem:[#allocation8 + $0x3c]]
        %s1632 = sld [smem:[#allocation8 + $0x3d]]
        %s1633 = sld [smem:[#allocation8 + $0x3e]]
        %s1634 = sld [smem:[#allocation8 + $0x3f]]
        %s1635 = sld [smem:[#allocation8 + $0x40]]
        %s1636 = sld [smem:[#allocation8 + $0x41]]
        %s1637 = sld [smem:[#allocation8 + $0x42]]
        %s1638 = sld [smem:[#allocation8 + $0x43]]
        %s1639 = sld [smem:[#allocation8 + $0x44]]
        %s1640 = sld [smem:[#allocation8 + $0x45]]
        %s1641 = sld [smem:[#allocation8 + $0x46]]
        %s1642 = sld [smem:[#allocation8 + $0x47]]
        %s1643 = sld [smem:[#allocation8 + $0x48]]
        %s1644 = sld [smem:[#allocation8 + $0x49]]
        %s1645 = sld [smem:[#allocation8 + $0x4a]]
        %s1646 = sld [smem:[#allocation8 + $0x4b]]
        %s1647 = sld [smem:[#allocation8 + $0x4c]]
        %s1648 = sld [smem:[#allocation8 + $0x4d]]
        %s1649 = sld [smem:[#allocation8 + $0x4e]]
        %s1650 = sld [smem:[#allocation8 + $0x4f]]
        %s1651 = sld [smem:[#allocation8 + $0x50]]
        %s1652 = sld [smem:[#allocation8 + $0x51]]
        %s1653 = sld [smem:[#allocation8 + $0x52]]
        %s1654 = sld [smem:[#allocation8 + $0x53]]
        %s1655 = sld [smem:[#allocation8 + $0x54]]
        %s1656 = sld [smem:[#allocation8 + $0x55]]
        %s1657 = sld [smem:[#allocation8 + $0x56]]
        %s1658 = sld [smem:[#allocation8 + $0x57]]
        %s1659 = sld [smem:[#allocation8 + $0x58]]
        %s1660 = sld [smem:[#allocation8 + $0x59]]
        %s1661 = sld [smem:[#allocation8 + $0x5a]]
        %s1662 = sld [smem:[#allocation8 + $0x5b]]
        %s1663 = sld [smem:[#allocation8 + $0x5c]]
        %s1664 = sld [smem:[#allocation8 + $0x5d]]
        %s1665 = sld [smem:[#allocation8 + $0x5e]]
        %s1666 = sld [smem:[#allocation8 + $0x5f]]
        %s1667 = sld [smem:[#allocation8 + $0x60]]
        %s1668 = sld [smem:[#allocation8 + $0x61]]
        %v1669 = vstv %s1571
        %v1670 = vmul.f32 %v1669, %v1559
        %v1671 = vmul.f32 %v1669, %v1560
        %v1672 = vmul.f32 %v1669, %v1562
        %v1673 = vmul.f32 %v1669, %v1563
        %v1674 = vmul.f32 %v1669, %v1565
        %v1675 = vmul.f32 %v1669, %v1566
        %v1676 = vmul.f32 %v1669, %v1568
        %v1677 = vmul.f32 %v1669, %v1569
        %v1678 = vadd.f32 %v1670, 0.0
        %v1679 = vadd.f32 %v1671, 0.0
        %v1680 = vadd.f32 %v1672, 0.0
        %v1681 = vadd.f32 %v1673, 0.0
        %v1682 = vadd.f32 %v1674, 0.0
        %v1683 = vadd.f32 %v1675, 0.0
        %v1684 = vadd.f32 %v1676, 0.0
        %v1685 = vadd.f32 %v1677, 0.0
        %v1686 = vstv %s1578
        %v1687 = vmul.f32 %v1686, %v1559
        %v1688 = vmul.f32 %v1686, %v1560
        %v1689 = vmul.f32 %v1686, %v1561
        %v1690 = vmul.f32 %v1686, %v1562
        %v1691 = vmul.f32 %v1686, %v1563
        %v1692 = vmul.f32 %v1686, %v1564
        %v1693 = vmul.f32 %v1686, %v1565
        %v1694 = vmul.f32 %v1686, %v1566
        %v1695 = vmul.f32 %v1686, %v1567
        %v1696 = vmul.f32 %v1686, %v1568
        %v1697 = vmul.f32 %v1686, %v1569
        %v1698 = vmul.f32 %v1686, %v1570
        %v1699 = vadd.f32 %v1687, 0.0
        %v1700 = vadd.f32 %v1688, 0.0
        %v1701 = vadd.f32 %v1689, 0.0
        %v1702 = vadd.f32 %v1690, 0.0
        %v1703 = vadd.f32 %v1691, 0.0
        %v1704 = vadd.f32 %v1692, 0.0
        %v1705 = vadd.f32 %v1693, 0.0
        %v1706 = vadd.f32 %v1694, 0.0
        %v1707 = vadd.f32 %v1695, 0.0
        %v1708 = vadd.f32 %v1696, 0.0
        %v1709 = vadd.f32 %v1697, 0.0
        %v1710 = vadd.f32 %v1698, 0.0
        %v1711 = vstv %s1585
        %v1712 = vmul.f32 %v1711, %v1559
        %v1713 = vmul.f32 %v1711, %v1560
        %v1714 = vmul.f32 %v1711, %v1561
        %v1715 = vmul.f32 %v1711, %v1562
        %v1716 = vmul.f32 %v1711, %v1563
        %v1717 = vmul.f32 %v1711, %v1564
        %v1718 = vmul.f32 %v1711, %v1565
        %v1719 = vmul.f32 %v1711, %v1566
        %v1720 = vmul.f32 %v1711, %v1567
        %v1721 = vmul.f32 %v1711, %v1568
        %v1722 = vmul.f32 %v1711, %v1569
        %v1723 = vmul.f32 %v1711, %v1570
        %v1724 = vadd.f32 %v1712, 0.0
        %v1725 = vadd.f32 %v1713, 0.0
        %v1726 = vadd.f32 %v1714, 0.0
        %v1727 = vadd.f32 %v1715, 0.0
        %v1728 = vadd.f32 %v1716, 0.0
        %v1729 = vadd.f32 %v1717, 0.0
        %v1730 = vadd.f32 %v1718, 0.0
        %v1731 = vadd.f32 %v1719, 0.0
        %v1732 = vadd.f32 %v1720, 0.0
        %v1733 = vadd.f32 %v1721, 0.0
        %v1734 = vadd.f32 %v1722, 0.0
        %v1735 = vadd.f32 %v1723, 0.0
        %v1736 = vstv %s1592
        %v1737 = vmul.f32 %v1736, %v1559
        %v1738 = vmul.f32 %v1736, %v1560
        %v1739 = vmul.f32 %v1736, %v1561
        %v1740 = vmul.f32 %v1736, %v1562
        %v1741 = vmul.f32 %v1736, %v1563
        %v1742 = vmul.f32 %v1736, %v1564
        %v1743 = vmul.f32 %v1736, %v1565
        %v1744 = vmul.f32 %v1736, %v1566
        %v1745 = vmul.f32 %v1736, %v1567
        %v1746 = vmul.f32 %v1736, %v1568
        %v1747 = vmul.f32 %v1736, %v1569
        %v1748 = vmul.f32 %v1736, %v1570
        %v1749 = vadd.f32 %v1737, 0.0
        %v1750 = vadd.f32 %v1738, 0.0
        %v1751 = vadd.f32 %v1739, 0.0
        %v1752 = vadd.f32 %v1740, 0.0
        %v1753 = vadd.f32 %v1741, 0.0
        %v1754 = vadd.f32 %v1742, 0.0
        %v1755 = vadd.f32 %v1743, 0.0
        %v1756 = vadd.f32 %v1744, 0.0
        %v1757 = vadd.f32 %v1745, 0.0
        %v1758 = vadd.f32 %v1746, 0.0
        %v1759 = vadd.f32 %v1747, 0.0
        %v1760 = vadd.f32 %v1748, 0.0
        %v1761 = vstv %s1599
        %v1762 = vmul.f32 %v1761, %v1559
        %v1763 = vmul.f32 %v1761, %v1560
        %v1764 = vmul.f32 %v1761, %v1561
        %v1765 = vmul.f32 %v1761, %v1562
        %v1766 = vmul.f32 %v1761, %v1563
        %v1767 = vmul.f32 %v1761, %v1564
        %v1768 = vmul.f32 %v1761, %v1565
        %v1769 = vmul.f32 %v1761, %v1566
        %v1770 = vmul.f32 %v1761, %v1567
        %v1771 = vmul.f32 %v1761, %v1568
        %v1772 = vmul.f32 %v1761, %v1569
        %v1773 = vmul.f32 %v1761, %v1570
        %v1786 = vrot.slane %v1762, 4
        %v1787 = vrot.slane %v1763, 4
        %v1788 = vsel %vm584, %v1786, %v1787
        %v1789 = vrot.slane %v1764, 4
        %v1790 = vsel %vm584, %v1787, %v1789
        %v1791 = vrot.slane %v1765, 4
        %v1792 = vrot.slane %v1766, 4
        %v1793 = vsel %vm584, %v1791, %v1792
        %v1794 = vrot.slane %v1767, 4
        %v1795 = vsel %vm584, %v1792, %v1794
        %v1796 = vrot.slane %v1768, 4
        %v1797 = vrot.slane %v1769, 4
        %v1798 = vsel %vm584, %v1796, %v1797
        %v1799 = vrot.slane %v1770, 4
        %v1800 = vsel %vm584, %v1797, %v1799
        %v1801 = vrot.slane %v1771, 4
        %v1802 = vrot.slane %v1772, 4
        %v1803 = vsel %vm584, %v1801, %v1802
        %v1804 = vrot.slane %v1773, 4
        %v1805 = vsel %vm584, %v1802, %v1804
        %v1814 = vadd.f32 %v1678, %v1788
        %v1815 = vadd.f32 %v1679, %v1790
        %v1816 = vadd.f32 %v1680, %v1793
        %v1817 = vadd.f32 %v1681, %v1795
        %v1818 = vadd.f32 %v1682, %v1798
        %v1819 = vadd.f32 %v1683, %v1800
        %v1820 = vadd.f32 %v1684, %v1803
        %v1821 = vadd.f32 %v1685, %v1805
        %v1822 = vstv %s1606
        %v1823 = vmul.f32 %v1822, %v1559
        %v1824 = vmul.f32 %v1822, %v1560
        %v1825 = vmul.f32 %v1822, %v1561
        %v1826 = vmul.f32 %v1822, %v1562
        %v1827 = vmul.f32 %v1822, %v1563
        %v1828 = vmul.f32 %v1822, %v1564
        %v1829 = vmul.f32 %v1822, %v1565
        %v1830 = vmul.f32 %v1822, %v1566
        %v1831 = vmul.f32 %v1822, %v1567
        %v1832 = vmul.f32 %v1822, %v1568
        %v1833 = vmul.f32 %v1822, %v1569
        %v1834 = vmul.f32 %v1822, %v1570
        %v1847 = vrot.slane %v1823, 4
        %v1848 = vrot.slane %v1824, 4
        %v1849 = vsel %vm584, %v1847, %v1848
        %v1850 = vrot.slane %v1825, 4
        %v1851 = vsel %vm584, %v1848, %v1850
        %v1852 = vrot.slane %v1826, 4
        %v1853 = vrot.slane %v1827, 4
        %v1854 = vsel %vm584, %v1852, %v1853
        %v1855 = vrot.slane %v1828, 4
        %v1856 = vsel %vm584, %v1853, %v1855
        %v1857 = vrot.slane %v1829, 4
        %v1858 = vrot.slane %v1830, 4
        %v1859 = vsel %vm584, %v1857, %v1858
        %v1860 = vrot.slane %v1831, 4
        %v1861 = vsel %vm584, %v1858, %v1860
        %v1862 = vrot.slane %v1832, 4
        %v1863 = vrot.slane %v1833, 4
        %v1864 = vsel %vm584, %v1862, %v1863
        %v1865 = vrot.slane %v1834, 4
        %v1866 = vsel %vm584, %v1863, %v1865
        %v1879 = vadd.f32 %v1699, %v1849
        %v1880 = vadd.f32 %v1700, %v1851
        %v1881 = vadd.f32 %v1701, %v1850
        %v1882 = vadd.f32 %v1702, %v1854
        %v1883 = vadd.f32 %v1703, %v1856
        %v1884 = vadd.f32 %v1704, %v1855
        %v1885 = vadd.f32 %v1705, %v1859
        %v1886 = vadd.f32 %v1706, %v1861
        %v1887 = vadd.f32 %v1707, %v1860
        %v1888 = vadd.f32 %v1708, %v1864
        %v1889 = vadd.f32 %v1709, %v1866
        %v1890 = vadd.f32 %v1710, %v1865
        %v1891 = vstv %s1613
        %v1892 = vmul.f32 %v1891, %v1559
        %v1893 = vmul.f32 %v1891, %v1560
        %v1894 = vmul.f32 %v1891, %v1561
        %v1895 = vmul.f32 %v1891, %v1562
        %v1896 = vmul.f32 %v1891, %v1563
        %v1897 = vmul.f32 %v1891, %v1564
        %v1898 = vmul.f32 %v1891, %v1565
        %v1899 = vmul.f32 %v1891, %v1566
        %v1900 = vmul.f32 %v1891, %v1567
        %v1901 = vmul.f32 %v1891, %v1568
        %v1902 = vmul.f32 %v1891, %v1569
        %v1903 = vmul.f32 %v1891, %v1570
        %v1916 = vrot.slane %v1892, 4
        %v1917 = vrot.slane %v1893, 4
        %v1918 = vsel %vm584, %v1916, %v1917
        %v1919 = vrot.slane %v1894, 4
        %v1920 = vsel %vm584, %v1917, %v1919
        %v1921 = vrot.slane %v1895, 4
        %v1922 = vrot.slane %v1896, 4
        %v1923 = vsel %vm584, %v1921, %v1922
        %v1924 = vrot.slane %v1897, 4
        %v1925 = vsel %vm584, %v1922, %v1924
        %v1926 = vrot.slane %v1898, 4
        %v1927 = vrot.slane %v1899, 4
        %v1928 = vsel %vm584, %v1926, %v1927
        %v1929 = vrot.slane %v1900, 4
        %v1930 = vsel %vm584, %v1927, %v1929
        %v1931 = vrot.slane %v1901, 4
        %v1932 = vrot.slane %v1902, 4
        %v1933 = vsel %vm584, %v1931, %v1932
        %v1934 = vrot.slane %v1903, 4
        %v1935 = vsel %vm584, %v1932, %v1934
        %v1948 = vadd.f32 %v1724, %v1918
        %v1949 = vadd.f32 %v1725, %v1920
        %v1950 = vadd.f32 %v1726, %v1919
        %v1951 = vadd.f32 %v1727, %v1923
        %v1952 = vadd.f32 %v1728, %v1925
        %v1953 = vadd.f32 %v1729, %v1924
        %v1954 = vadd.f32 %v1730, %v1928
        %v1955 = vadd.f32 %v1731, %v1930
        %v1956 = vadd.f32 %v1732, %v1929
        %v1957 = vadd.f32 %v1733, %v1933
        %v1958 = vadd.f32 %v1734, %v1935
        %v1959 = vadd.f32 %v1735, %v1934
        %v1960 = vstv %s1572
        %v1961 = vmul.f32 %v1960, %v1559
        %v1962 = vmul.f32 %v1960, %v1560
        %v1963 = vmul.f32 %v1960, %v1562
        %v1964 = vmul.f32 %v1960, %v1563
        %v1965 = vmul.f32 %v1960, %v1565
        %v1966 = vmul.f32 %v1960, %v1566
        %v1967 = vmul.f32 %v1960, %v1568
        %v1968 = vmul.f32 %v1960, %v1569
        %vm1977 = vcmask 1042432
        %v1978 = vrot.slane %v1961, 5
        %v1979 = vrot.slane %v1962, 5
        %v1980 = vsel %vm1977, %v1978, %v1979
        %v1981 = vrot.slane %v1963, 5
        %v1982 = vrot.slane %v1964, 5
        %v1983 = vsel %vm1977, %v1981, %v1982
        %v1984 = vrot.slane %v1965, 5
        %v1985 = vrot.slane %v1966, 5
        %v1986 = vsel %vm1977, %v1984, %v1985
        %v1987 = vrot.slane %v1967, 5
        %v1988 = vrot.slane %v1968, 5
        %v1989 = vsel %vm1977, %v1987, %v1988
        %1990 = vrot.lane.b32.xlu0 %v1978, 127
        %v1991 = vpop.permute.xlu0 %1990
        %1992 = vrot.lane.b32.xlu0 %v1980, 127
        %v1993 = vpop.permute.xlu0 %1992
        %1994 = vrot.lane.b32.xlu0 %v1979, 127
        %v1995 = vpop.permute.xlu0 %1994
        %1996 = vrot.lane.b32.xlu0 %v1981, 127
        %v1997 = vpop.permute.xlu0 %1996
        %1998 = vrot.lane.b32.xlu0 %v1983, 127
        %v1999 = vpop.permute.xlu0 %1998
        %2000 = vrot.lane.b32.xlu0 %v1982, 127
        %v2001 = vpop.permute.xlu0 %2000
        %2002 = vrot.lane.b32.xlu0 %v1984, 127
        %v2003 = vpop.permute.xlu0 %2002
        %2004 = vrot.lane.b32.xlu0 %v1986, 127
        %v2005 = vpop.permute.xlu0 %2004
        %2006 = vrot.lane.b32.xlu0 %v1985, 127
        %v2007 = vpop.permute.xlu0 %2006
        %2008 = vrot.lane.b32.xlu0 %v1987, 127
        %v2009 = vpop.permute.xlu0 %2008
        %2010 = vrot.lane.b32.xlu0 %v1989, 127
        %v2011 = vpop.permute.xlu0 %2010
        %2012 = vrot.lane.b32.xlu0 %v1988, 127
        %v2013 = vpop.permute.xlu0 %2012
        %v2026 = vadd.f32 %v1749, %v1991
        %v2027 = vadd.f32 %v1750, %v1993
        %v2028 = vadd.f32 %v1751, %v1995
        %v2029 = vadd.f32 %v1752, %v1997
        %v2030 = vadd.f32 %v1753, %v1999
        %v2031 = vadd.f32 %v1754, %v2001
        %v2032 = vadd.f32 %v1755, %v2003
        %v2033 = vadd.f32 %v1756, %v2005
        %v2034 = vadd.f32 %v1757, %v2007
        %v2035 = vadd.f32 %v1758, %v2009
        %v2036 = vadd.f32 %v1759, %v2011
        %v2037 = vadd.f32 %v1760, %v2013
        %v2038 = vstv %s1579
        %v2039 = vmul.f32 %v2038, %v1559
        %v2040 = vmul.f32 %v2038, %v1560
        %v2041 = vmul.f32 %v2038, %v1561
        %v2042 = vmul.f32 %v2038, %v1562
        %v2043 = vmul.f32 %v2038, %v1563
        %v2044 = vmul.f32 %v2038, %v1564
        %v2045 = vmul.f32 %v2038, %v1565
        %v2046 = vmul.f32 %v2038, %v1566
        %v2047 = vmul.f32 %v2038, %v1567
        %v2048 = vmul.f32 %v2038, %v1568
        %v2049 = vmul.f32 %v2038, %v1569
        %v2050 = vmul.f32 %v2038, %v1570
        %vm2063 = vcmask 1046528
        %v2064 = vrot.slane %v2039, 1
        %v2065 = vrot.slane %v2040, 1
        %v2066 = vsel %vm2063, %v2064, %v2065
        %v2067 = vrot.slane %v2041, 1
        %v2068 = vsel %vm2063, %v2065, %v2067
        %v2069 = vrot.slane %v2042, 1
        %v2070 = vrot.slane %v2043, 1
        %v2071 = vsel %vm2063, %v2069, %v2070
        %v2072 = vrot.slane %v2044, 1
        %v2073 = vsel %vm2063, %v2070, %v2072
        %v2074 = vrot.slane %v2045, 1
        %v2075 = vrot.slane %v2046, 1
        %v2076 = vsel %vm2063, %v2074, %v2075
        %v2077 = vrot.slane %v2047, 1
        %v2078 = vsel %vm2063, %v2075, %v2077
        %v2079 = vrot.slane %v2048, 1
        %v2080 = vrot.slane %v2049, 1
        %v2081 = vsel %vm2063, %v2079, %v2080
        %v2082 = vrot.slane %v2050, 1
        %v2083 = vsel %vm2063, %v2080, %v2082
        %2084 = vrot.lane.b32.xlu0 %v2066, 127
        %v2085 = vpop.permute.xlu0 %2084
        %2086 = vrot.lane.b32.xlu0 %v2068, 127
        %v2087 = vpop.permute.xlu0 %2086
        %2088 = vrot.lane.b32.xlu0 %v2071, 127
        %v2089 = vpop.permute.xlu0 %2088
        %2090 = vrot.lane.b32.xlu0 %v2073, 127
        %v2091 = vpop.permute.xlu0 %2090
        %2092 = vrot.lane.b32.xlu0 %v2076, 127
        %v2093 = vpop.permute.xlu0 %2092
        %2094 = vrot.lane.b32.xlu0 %v2078, 127
        %v2095 = vpop.permute.xlu0 %2094
        %2096 = vrot.lane.b32.xlu0 %v2081, 127
        %v2097 = vpop.permute.xlu0 %2096
        %2098 = vrot.lane.b32.xlu0 %v2083, 127
        %v2099 = vpop.permute.xlu0 %2098
        %v2108 = vadd.f32 %v1814, %v2085
        %v2109 = vadd.f32 %v1815, %v2087
        %v2110 = vadd.f32 %v1816, %v2089
        %v2111 = vadd.f32 %v1817, %v2091
        %v2112 = vadd.f32 %v1818, %v2093
        %v2113 = vadd.f32 %v1819, %v2095
        %v2114 = vadd.f32 %v1820, %v2097
        %v2115 = vadd.f32 %v1821, %v2099
        %v2116 = vstv %s1586
        %v2117 = vmul.f32 %v2116, %v1559
        %v2118 = vmul.f32 %v2116, %v1560
        %v2119 = vmul.f32 %v2116, %v1561
        %v2120 = vmul.f32 %v2116, %v1562
        %v2121 = vmul.f32 %v2116, %v1563
        %v2122 = vmul.f32 %v2116, %v1564
        %v2123 = vmul.f32 %v2116, %v1565
        %v2124 = vmul.f32 %v2116, %v1566
        %v2125 = vmul.f32 %v2116, %v1567
        %v2126 = vmul.f32 %v2116, %v1568
        %v2127 = vmul.f32 %v2116, %v1569
        %v2128 = vmul.f32 %v2116, %v1570
        %v2141 = vrot.slane %v2117, 1
        %v2142 = vrot.slane %v2118, 1
        %v2143 = vsel %vm2063, %v2141, %v2142
        %v2144 = vrot.slane %v2119, 1
        %v2145 = vsel %vm2063, %v2142, %v2144
        %v2146 = vrot.slane %v2120, 1
        %v2147 = vrot.slane %v2121, 1
        %v2148 = vsel %vm2063, %v2146, %v2147
        %v2149 = vrot.slane %v2122, 1
        %v2150 = vsel %vm2063, %v2147, %v2149
        %v2151 = vrot.slane %v2123, 1
        %v2152 = vrot.slane %v2124, 1
        %v2153 = vsel %vm2063, %v2151, %v2152
        %v2154 = vrot.slane %v2125, 1
        %v2155 = vsel %vm2063, %v2152, %v2154
        %v2156 = vrot.slane %v2126, 1
        %v2157 = vrot.slane %v2127, 1
        %v2158 = vsel %vm2063, %v2156, %v2157
        %v2159 = vrot.slane %v2128, 1
        %v2160 = vsel %vm2063, %v2157, %v2159
        %2161 = vrot.lane.b32.xlu0 %v2143, 127
        %v2162 = vpop.permute.xlu0 %2161
        %2163 = vrot.lane.b32.xlu0 %v2145, 127
        %v2164 = vpop.permute.xlu0 %2163
        %2165 = vrot.lane.b32.xlu0 %v2144, 127
        %v2166 = vpop.permute.xlu0 %2165
        %2167 = vrot.lane.b32.xlu0 %v2148, 127
        %v2168 = vpop.permute.xlu0 %2167
        %2169 = vrot.lane.b32.xlu0 %v2150, 127
        %v2170 = vpop.permute.xlu0 %2169
        %2171 = vrot.lane.b32.xlu0 %v2149, 127
        %v2172 = vpop.permute.xlu0 %2171
        %2173 = vrot.lane.b32.xlu0 %v2153, 127
        %v2174 = vpop.permute.xlu0 %2173
        %2175 = vrot.lane.b32.xlu0 %v2155, 127
        %v2176 = vpop.permute.xlu0 %2175
        %2177 = vrot.lane.b32.xlu0 %v2154, 127
        %v2178 = vpop.permute.xlu0 %2177
        %2179 = vrot.lane.b32.xlu0 %v2158, 127
        %v2180 = vpop.permute.xlu0 %2179
        %2181 = vrot.lane.b32.xlu0 %v2160, 127
        %v2182 = vpop.permute.xlu0 %2181
        %2183 = vrot.lane.b32.xlu0 %v2159, 127
        %v2184 = vpop.permute.xlu0 %2183
        %v2197 = vadd.f32 %v1879, %v2162
        %v2198 = vadd.f32 %v1880, %v2164
        %v2199 = vadd.f32 %v1881, %v2166
        %v2200 = vadd.f32 %v1882, %v2168
        %v2201 = vadd.f32 %v1883, %v2170
        %v2202 = vadd.f32 %v1884, %v2172
        %v2203 = vadd.f32 %v1885, %v2174
        %v2204 = vadd.f32 %v1886, %v2176
        %v2205 = vadd.f32 %v1887, %v2178
        %v2206 = vadd.f32 %v1888, %v2180
        %v2207 = vadd.f32 %v1889, %v2182
        %v2208 = vadd.f32 %v1890, %v2184
        %v2209 = vstv %s1593
        %v2210 = vmul.f32 %v2209, %v1559
        %v2211 = vmul.f32 %v2209, %v1560
        %v2212 = vmul.f32 %v2209, %v1561
        %v2213 = vmul.f32 %v2209, %v1562
        %v2214 = vmul.f32 %v2209, %v1563
        %v2215 = vmul.f32 %v2209, %v1564
        %v2216 = vmul.f32 %v2209, %v1565
        %v2217 = vmul.f32 %v2209, %v1566
        %v2218 = vmul.f32 %v2209, %v1567
        %v2219 = vmul.f32 %v2209, %v1568
        %v2220 = vmul.f32 %v2209, %v1569
        %v2221 = vmul.f32 %v2209, %v1570
        %v2234 = vrot.slane %v2210, 1
        %v2235 = vrot.slane %v2211, 1
        %v2236 = vsel %vm2063, %v2234, %v2235
        %v2237 = vrot.slane %v2212, 1
        %v2238 = vsel %vm2063, %v2235, %v2237
        %v2239 = vrot.slane %v2213, 1
        %v2240 = vrot.slane %v2214, 1
        %v2241 = vsel %vm2063, %v2239, %v2240
        %v2242 = vrot.slane %v2215, 1
        %v2243 = vsel %vm2063, %v2240, %v2242
        %v2244 = vrot.slane %v2216, 1
        %v2245 = vrot.slane %v2217, 1
        %v2246 = vsel %vm2063, %v2244, %v2245
        %v2247 = vrot.slane %v2218, 1
        %v2248 = vsel %vm2063, %v2245, %v2247
        %v2249 = vrot.slane %v2219, 1
        %v2250 = vrot.slane %v2220, 1
        %v2251 = vsel %vm2063, %v2249, %v2250
        %v2252 = vrot.slane %v2221, 1
        %v2253 = vsel %vm2063, %v2250, %v2252
        %2254 = vrot.lane.b32.xlu0 %v2236, 127
        %v2255 = vpop.permute.xlu0 %2254
        %2256 = vrot.lane.b32.xlu0 %v2238, 127
        %v2257 = vpop.permute.xlu0 %2256
        %2258 = vrot.lane.b32.xlu0 %v2237, 127
        %v2259 = vpop.permute.xlu0 %2258
        %2260 = vrot.lane.b32.xlu0 %v2241, 127
        %v2261 = vpop.permute.xlu0 %2260
        %2262 = vrot.lane.b32.xlu0 %v2243, 127
        %v2263 = vpop.permute.xlu0 %2262
        %2264 = vrot.lane.b32.xlu0 %v2242, 127
        %v2265 = vpop.permute.xlu0 %2264
        %2266 = vrot.lane.b32.xlu0 %v2246, 127
        %v2267 = vpop.permute.xlu0 %2266
        %2268 = vrot.lane.b32.xlu0 %v2248, 127
        %v2269 = vpop.permute.xlu0 %2268
        %2270 = vrot.lane.b32.xlu0 %v2247, 127
        %v2271 = vpop.permute.xlu0 %2270
        %2272 = vrot.lane.b32.xlu0 %v2251, 127
        %v2273 = vpop.permute.xlu0 %2272
        %2274 = vrot.lane.b32.xlu0 %v2253, 127
        %v2275 = vpop.permute.xlu0 %2274
        %2276 = vrot.lane.b32.xlu0 %v2252, 127
        %v2277 = vpop.permute.xlu0 %2276
        %v2290 = vadd.f32 %v1948, %v2255
        %v2291 = vadd.f32 %v1949, %v2257
        %v2292 = vadd.f32 %v1950, %v2259
        %v2293 = vadd.f32 %v1951, %v2261
        %v2294 = vadd.f32 %v1952, %v2263
        %v2295 = vadd.f32 %v1953, %v2265
        %v2296 = vadd.f32 %v1954, %v2267
        %v2297 = vadd.f32 %v1955, %v2269
        %v2298 = vadd.f32 %v1956, %v2271
        %v2299 = vadd.f32 %v1957, %v2273
        %v2300 = vadd.f32 %v1958, %v2275
        %v2301 = vadd.f32 %v1959, %v2277
        %v2302 = vstv %s1600
        %v2303 = vmul.f32 %v2302, %v1559
        %v2304 = vmul.f32 %v2302, %v1560
        %v2305 = vmul.f32 %v2302, %v1561
        %v2306 = vmul.f32 %v2302, %v1562
        %v2307 = vmul.f32 %v2302, %v1563
        %v2308 = vmul.f32 %v2302, %v1564
        %v2309 = vmul.f32 %v2302, %v1565
        %v2310 = vmul.f32 %v2302, %v1566
        %v2311 = vmul.f32 %v2302, %v1567
        %v2312 = vmul.f32 %v2302, %v1568
        %v2313 = vmul.f32 %v2302, %v1569
        %v2314 = vmul.f32 %v2302, %v1570
        %v2327 = vrot.slane %v2303, 1
        %v2328 = vrot.slane %v2304, 1
        %v2329 = vsel %vm2063, %v2327, %v2328
        %v2330 = vrot.slane %v2305, 1
        %v2331 = vsel %vm2063, %v2328, %v2330
        %v2332 = vrot.slane %v2306, 1
        %v2333 = vrot.slane %v2307, 1
        %v2334 = vsel %vm2063, %v2332, %v2333
        %v2335 = vrot.slane %v2308, 1
        %v2336 = vsel %vm2063, %v2333, %v2335
        %v2337 = vrot.slane %v2309, 1
        %v2338 = vrot.slane %v2310, 1
        %v2339 = vsel %vm2063, %v2337, %v2338
        %v2340 = vrot.slane %v2311, 1
        %v2341 = vsel %vm2063, %v2338, %v2340
        %v2342 = vrot.slane %v2312, 1
        %v2343 = vrot.slane %v2313, 1
        %v2344 = vsel %vm2063, %v2342, %v2343
        %v2345 = vrot.slane %v2314, 1
        %v2346 = vsel %vm2063, %v2343, %v2345
        %2347 = vrot.lane.b32.xlu0 %v2329, 127
        %v2348 = vpop.permute.xlu0 %2347
        %2349 = vrot.lane.b32.xlu0 %v2331, 127
        %v2350 = vpop.permute.xlu0 %2349
        %2351 = vrot.lane.b32.xlu0 %v2330, 127
        %v2352 = vpop.permute.xlu0 %2351
        %2353 = vrot.lane.b32.xlu0 %v2334, 127
        %v2354 = vpop.permute.xlu0 %2353
        %2355 = vrot.lane.b32.xlu0 %v2336, 127
        %v2356 = vpop.permute.xlu0 %2355
        %2357 = vrot.lane.b32.xlu0 %v2335, 127
        %v2358 = vpop.permute.xlu0 %2357
        %2359 = vrot.lane.b32.xlu0 %v2339, 127
        %v2360 = vpop.permute.xlu0 %2359
        %2361 = vrot.lane.b32.xlu0 %v2341, 127
        %v2362 = vpop.permute.xlu0 %2361
        %2363 = vrot.lane.b32.xlu0 %v2340, 127
        %v2364 = vpop.permute.xlu0 %2363
        %2365 = vrot.lane.b32.xlu0 %v2344, 127
        %v2366 = vpop.permute.xlu0 %2365
        %2367 = vrot.lane.b32.xlu0 %v2346, 127
        %v2368 = vpop.permute.xlu0 %2367
        %2369 = vrot.lane.b32.xlu0 %v2345, 127
        %v2370 = vpop.permute.xlu0 %2369
        %v2383 = vadd.f32 %v2026, %v2348
        %v2384 = vadd.f32 %v2027, %v2350
        %v2385 = vadd.f32 %v2028, %v2352
        %v2386 = vadd.f32 %v2029, %v2354
        %v2387 = vadd.f32 %v2030, %v2356
        %v2388 = vadd.f32 %v2031, %v2358
        %v2389 = vadd.f32 %v2032, %v2360
        %v2390 = vadd.f32 %v2033, %v2362
        %v2391 = vadd.f32 %v2034, %v2364
        %v2392 = vadd.f32 %v2035, %v2366
        %v2393 = vadd.f32 %v2036, %v2368
        %v2394 = vadd.f32 %v2037, %v2370
        %v2395 = vstv %s1607
        %v2396 = vmul.f32 %v2395, %v1559
        %v2397 = vmul.f32 %v2395, %v1560
        %v2398 = vmul.f32 %v2395, %v1561
        %v2399 = vmul.f32 %v2395, %v1562
        %v2400 = vmul.f32 %v2395, %v1563
        %v2401 = vmul.f32 %v2395, %v1564
        %v2402 = vmul.f32 %v2395, %v1565
        %v2403 = vmul.f32 %v2395, %v1566
        %v2404 = vmul.f32 %v2395, %v1567
        %v2405 = vmul.f32 %v2395, %v1568
        %v2406 = vmul.f32 %v2395, %v1569
        %v2407 = vmul.f32 %v2395, %v1570
        %v2420 = vrot.slane %v2396, 5
        %v2421 = vrot.slane %v2397, 5
        %v2422 = vsel %vm1977, %v2420, %v2421
        %v2423 = vrot.slane %v2398, 5
        %v2424 = vsel %vm1977, %v2421, %v2423
        %v2425 = vrot.slane %v2399, 5
        %v2426 = vrot.slane %v2400, 5
        %v2427 = vsel %vm1977, %v2425, %v2426
        %v2428 = vrot.slane %v2401, 5
        %v2429 = vsel %vm1977, %v2426, %v2428
        %v2430 = vrot.slane %v2402, 5
        %v2431 = vrot.slane %v2403, 5
        %v2432 = vsel %vm1977, %v2430, %v2431
        %v2433 = vrot.slane %v2404, 5
        %v2434 = vsel %vm1977, %v2431, %v2433
        %v2435 = vrot.slane %v2405, 5
        %v2436 = vrot.slane %v2406, 5
        %v2437 = vsel %vm1977, %v2435, %v2436
        %v2438 = vrot.slane %v2407, 5
        %v2439 = vsel %vm1977, %v2436, %v2438
        %2440 = vrot.lane.b32.xlu0 %v2422, 127
        %v2441 = vpop.permute.xlu0 %2440
        %2442 = vrot.lane.b32.xlu0 %v2424, 127
        %v2443 = vpop.permute.xlu0 %2442
        %2444 = vrot.lane.b32.xlu0 %v2427, 127
        %v2445 = vpop.permute.xlu0 %2444
        %2446 = vrot.lane.b32.xlu0 %v2429, 127
        %v2447 = vpop.permute.xlu0 %2446
        %2448 = vrot.lane.b32.xlu0 %v2432, 127
        %v2449 = vpop.permute.xlu0 %2448
        %2450 = vrot.lane.b32.xlu0 %v2434, 127
        %v2451 = vpop.permute.xlu0 %2450
        %2452 = vrot.lane.b32.xlu0 %v2437, 127
        %v2453 = vpop.permute.xlu0 %2452
        %2454 = vrot.lane.b32.xlu0 %v2439, 127
        %v2455 = vpop.permute.xlu0 %2454
        %v2464 = vadd.f32 %v2108, %v2441
        %v2465 = vadd.f32 %v2109, %v2443
        %v2466 = vadd.f32 %v2110, %v2445
        %v2467 = vadd.f32 %v2111, %v2447
        %v2468 = vadd.f32 %v2112, %v2449
        %v2469 = vadd.f32 %v2113, %v2451
        %v2470 = vadd.f32 %v2114, %v2453
        %v2471 = vadd.f32 %v2115, %v2455
        %v2472 = vstv %s1614
        %v2473 = vmul.f32 %v2472, %v1559
        %v2474 = vmul.f32 %v2472, %v1560
        %v2475 = vmul.f32 %v2472, %v1561
        %v2476 = vmul.f32 %v2472, %v1562
        %v2477 = vmul.f32 %v2472, %v1563
        %v2478 = vmul.f32 %v2472, %v1564
        %v2479 = vmul.f32 %v2472, %v1565
        %v2480 = vmul.f32 %v2472, %v1566
        %v2481 = vmul.f32 %v2472, %v1567
        %v2482 = vmul.f32 %v2472, %v1568
        %v2483 = vmul.f32 %v2472, %v1569
        %v2484 = vmul.f32 %v2472, %v1570
        %v2497 = vrot.slane %v2473, 5
        %v2498 = vrot.slane %v2474, 5
        %v2499 = vsel %vm1977, %v2497, %v2498
        %v2500 = vrot.slane %v2475, 5
        %v2501 = vsel %vm1977, %v2498, %v2500
        %v2502 = vrot.slane %v2476, 5
        %v2503 = vrot.slane %v2477, 5
        %v2504 = vsel %vm1977, %v2502, %v2503
        %v2505 = vrot.slane %v2478, 5
        %v2506 = vsel %vm1977, %v2503, %v2505
        %v2507 = vrot.slane %v2479, 5
        %v2508 = vrot.slane %v2480, 5
        %v2509 = vsel %vm1977, %v2507, %v2508
        %v2510 = vrot.slane %v2481, 5
        %v2511 = vsel %vm1977, %v2508, %v2510
        %v2512 = vrot.slane %v2482, 5
        %v2513 = vrot.slane %v2483, 5
        %v2514 = vsel %vm1977, %v2512, %v2513
        %v2515 = vrot.slane %v2484, 5
        %v2516 = vsel %vm1977, %v2513, %v2515
        %2517 = vrot.lane.b32.xlu0 %v2499, 127
        %v2518 = vpop.permute.xlu0 %2517
        %2519 = vrot.lane.b32.xlu0 %v2501, 127
        %v2520 = vpop.permute.xlu0 %2519
        %2521 = vrot.lane.b32.xlu0 %v2500, 127
        %v2522 = vpop.permute.xlu0 %2521
        %2523 = vrot.lane.b32.xlu0 %v2504, 127
        %v2524 = vpop.permute.xlu0 %2523
        %2525 = vrot.lane.b32.xlu0 %v2506, 127
        %v2526 = vpop.permute.xlu0 %2525
        %2527 = vrot.lane.b32.xlu0 %v2505, 127
        %v2528 = vpop.permute.xlu0 %2527
        %2529 = vrot.lane.b32.xlu0 %v2509, 127
        %v2530 = vpop.permute.xlu0 %2529
        %2531 = vrot.lane.b32.xlu0 %v2511, 127
        %v2532 = vpop.permute.xlu0 %2531
        %2533 = vrot.lane.b32.xlu0 %v2510, 127
        %v2534 = vpop.permute.xlu0 %2533
        %2535 = vrot.lane.b32.xlu0 %v2514, 127
        %v2536 = vpop.permute.xlu0 %2535
        %2537 = vrot.lane.b32.xlu0 %v2516, 127
        %v2538 = vpop.permute.xlu0 %2537
        %2539 = vrot.lane.b32.xlu0 %v2515, 127
        %v2540 = vpop.permute.xlu0 %2539
        %v2553 = vadd.f32 %v2197, %v2518
        %v2554 = vadd.f32 %v2198, %v2520
        %v2555 = vadd.f32 %v2199, %v2522
        %v2556 = vadd.f32 %v2200, %v2524
        %v2557 = vadd.f32 %v2201, %v2526
        %v2558 = vadd.f32 %v2202, %v2528
        %v2559 = vadd.f32 %v2203, %v2530
        %v2560 = vadd.f32 %v2204, %v2532
        %v2561 = vadd.f32 %v2205, %v2534
        %v2562 = vadd.f32 %v2206, %v2536
        %v2563 = vadd.f32 %v2207, %v2538
        %v2564 = vadd.f32 %v2208, %v2540
        %v2565 = vstv %s1573
        %v2566 = vmul.f32 %v2565, %v1559
        %v2567 = vmul.f32 %v2565, %v1560
        %v2568 = vmul.f32 %v2565, %v1562
        %v2569 = vmul.f32 %v2565, %v1563
        %v2570 = vmul.f32 %v2565, %v1565
        %v2571 = vmul.f32 %v2565, %v1566
        %v2572 = vmul.f32 %v2565, %v1568
        %v2573 = vmul.f32 %v2565, %v1569
        %v2582 = vrot.slane %v2566, 6
        %v2583 = vrot.slane %v2567, 6
        %v2584 = vsel %vm670, %v2582, %v2583
        %v2585 = vrot.slane %v2568, 6
        %v2586 = vrot.slane %v2569, 6
        %v2587 = vsel %vm670, %v2585, %v2586
        %v2588 = vrot.slane %v2570, 6
        %v2589 = vrot.slane %v2571, 6
        %v2590 = vsel %vm670, %v2588, %v2589
        %v2591 = vrot.slane %v2572, 6
        %v2592 = vrot.slane %v2573, 6
        %v2593 = vsel %vm670, %v2591, %v2592
        %2594 = vrot.lane.b32.xlu0 %v2582, 126
        %v2595 = vpop.permute.xlu0 %2594
        %2596 = vrot.lane.b32.xlu0 %v2584, 126
        %v2597 = vpop.permute.xlu0 %2596
        %2598 = vrot.lane.b32.xlu0 %v2583, 126
        %v2599 = vpop.permute.xlu0 %2598
        %2600 = vrot.lane.b32.xlu0 %v2585, 126
        %v2601 = vpop.permute.xlu0 %2600
        %2602 = vrot.lane.b32.xlu0 %v2587, 126
        %v2603 = vpop.permute.xlu0 %2602
        %2604 = vrot.lane.b32.xlu0 %v2586, 126
        %v2605 = vpop.permute.xlu0 %2604
        %2606 = vrot.lane.b32.xlu0 %v2588, 126
        %v2607 = vpop.permute.xlu0 %2606
        %2608 = vrot.lane.b32.xlu0 %v2590, 126
        %v2609 = vpop.permute.xlu0 %2608
        %2610 = vrot.lane.b32.xlu0 %v2589, 126
        %v2611 = vpop.permute.xlu0 %2610
        %2612 = vrot.lane.b32.xlu0 %v2591, 126
        %v2613 = vpop.permute.xlu0 %2612
        %2614 = vrot.lane.b32.xlu0 %v2593, 126
        %v2615 = vpop.permute.xlu0 %2614
        %2616 = vrot.lane.b32.xlu0 %v2592, 126
        %v2617 = vpop.permute.xlu0 %2616
        %v2630 = vadd.f32 %v2290, %v2595
        %v2631 = vadd.f32 %v2291, %v2597
        %v2632 = vadd.f32 %v2292, %v2599
        %v2633 = vadd.f32 %v2293, %v2601
        %v2634 = vadd.f32 %v2294, %v2603
        %v2635 = vadd.f32 %v2295, %v2605
        %v2636 = vadd.f32 %v2296, %v2607
        %v2637 = vadd.f32 %v2297, %v2609
        %v2638 = vadd.f32 %v2298, %v2611
        %v2639 = vadd.f32 %v2299, %v2613
        %v2640 = vadd.f32 %v2300, %v2615
        %v2641 = vadd.f32 %v2301, %v2617
        %v2642 = vstv %s1580
        %v2643 = vmul.f32 %v2642, %v1559
        %v2644 = vmul.f32 %v2642, %v1560
        %v2645 = vmul.f32 %v2642, %v1561
        %v2646 = vmul.f32 %v2642, %v1562
        %v2647 = vmul.f32 %v2642, %v1563
        %v2648 = vmul.f32 %v2642, %v1564
        %v2649 = vmul.f32 %v2642, %v1565
        %v2650 = vmul.f32 %v2642, %v1566
        %v2651 = vmul.f32 %v2642, %v1567
        %v2652 = vmul.f32 %v2642, %v1568
        %v2653 = vmul.f32 %v2642, %v1569
        %v2654 = vmul.f32 %v2642, %v1570
        %v2667 = vrot.slane %v2643, 6
        %v2668 = vrot.slane %v2644, 6
        %v2669 = vsel %vm670, %v2667, %v2668
        %v2670 = vrot.slane %v2645, 6
        %v2671 = vsel %vm670, %v2668, %v2670
        %v2672 = vrot.slane %v2646, 6
        %v2673 = vrot.slane %v2647, 6
        %v2674 = vsel %vm670, %v2672, %v2673
        %v2675 = vrot.slane %v2648, 6
        %v2676 = vsel %vm670, %v2673, %v2675
        %v2677 = vrot.slane %v2649, 6
        %v2678 = vrot.slane %v2650, 6
        %v2679 = vsel %vm670, %v2677, %v2678
        %v2680 = vrot.slane %v2651, 6
        %v2681 = vsel %vm670, %v2678, %v2680
        %v2682 = vrot.slane %v2652, 6
        %v2683 = vrot.slane %v2653, 6
        %v2684 = vsel %vm670, %v2682, %v2683
        %v2685 = vrot.slane %v2654, 6
        %v2686 = vsel %vm670, %v2683, %v2685
        %2687 = vrot.lane.b32.xlu0 %v2667, 126
        %v2688 = vpop.permute.xlu0 %2687
        %2689 = vrot.lane.b32.xlu0 %v2669, 126
        %v2690 = vpop.permute.xlu0 %2689
        %2691 = vrot.lane.b32.xlu0 %v2671, 126
        %v2692 = vpop.permute.xlu0 %2691
        %2693 = vrot.lane.b32.xlu0 %v2672, 126
        %v2694 = vpop.permute.xlu0 %2693
        %2695 = vrot.lane.b32.xlu0 %v2674, 126
        %v2696 = vpop.permute.xlu0 %2695
        %2697 = vrot.lane.b32.xlu0 %v2676, 126
        %v2698 = vpop.permute.xlu0 %2697
        %2699 = vrot.lane.b32.xlu0 %v2677, 126
        %v2700 = vpop.permute.xlu0 %2699
        %2701 = vrot.lane.b32.xlu0 %v2679, 126
        %v2702 = vpop.permute.xlu0 %2701
        %2703 = vrot.lane.b32.xlu0 %v2681, 126
        %v2704 = vpop.permute.xlu0 %2703
        %2705 = vrot.lane.b32.xlu0 %v2682, 126
        %v2706 = vpop.permute.xlu0 %2705
        %2707 = vrot.lane.b32.xlu0 %v2684, 126
        %v2708 = vpop.permute.xlu0 %2707
        %2709 = vrot.lane.b32.xlu0 %v2686, 126
        %v2710 = vpop.permute.xlu0 %2709
        %v2723 = vadd.f32 %v2383, %v2688
        %v2724 = vadd.f32 %v2384, %v2690
        %v2725 = vadd.f32 %v2385, %v2692
        %v2726 = vadd.f32 %v2386, %v2694
        %v2727 = vadd.f32 %v2387, %v2696
        %v2728 = vadd.f32 %v2388, %v2698
        %v2729 = vadd.f32 %v2389, %v2700
        %v2730 = vadd.f32 %v2390, %v2702
        %v2731 = vadd.f32 %v2391, %v2704
        %v2732 = vadd.f32 %v2392, %v2706
        %v2733 = vadd.f32 %v2393, %v2708
        %v2734 = vadd.f32 %v2394, %v2710
        %v2735 = vstv %s1587
        %v2736 = vmul.f32 %v2735, %v1559
        %v2737 = vmul.f32 %v2735, %v1560
        %v2738 = vmul.f32 %v2735, %v1561
        %v2739 = vmul.f32 %v2735, %v1562
        %v2740 = vmul.f32 %v2735, %v1563
        %v2741 = vmul.f32 %v2735, %v1564
        %v2742 = vmul.f32 %v2735, %v1565
        %v2743 = vmul.f32 %v2735, %v1566
        %v2744 = vmul.f32 %v2735, %v1567
        %v2745 = vmul.f32 %v2735, %v1568
        %v2746 = vmul.f32 %v2735, %v1569
        %v2747 = vmul.f32 %v2735, %v1570
        %vm2760 = vcmask 1045504
        %v2761 = vrot.slane %v2736, 2
        %v2762 = vrot.slane %v2737, 2
        %v2763 = vsel %vm2760, %v2761, %v2762
        %v2764 = vrot.slane %v2738, 2
        %v2765 = vsel %vm2760, %v2762, %v2764
        %v2766 = vrot.slane %v2739, 2
        %v2767 = vrot.slane %v2740, 2
        %v2768 = vsel %vm2760, %v2766, %v2767
        %v2769 = vrot.slane %v2741, 2
        %v2770 = vsel %vm2760, %v2767, %v2769
        %v2771 = vrot.slane %v2742, 2
        %v2772 = vrot.slane %v2743, 2
        %v2773 = vsel %vm2760, %v2771, %v2772
        %v2774 = vrot.slane %v2744, 2
        %v2775 = vsel %vm2760, %v2772, %v2774
        %v2776 = vrot.slane %v2745, 2
        %v2777 = vrot.slane %v2746, 2
        %v2778 = vsel %vm2760, %v2776, %v2777
        %v2779 = vrot.slane %v2747, 2
        %v2780 = vsel %vm2760, %v2777, %v2779
        %2781 = vrot.lane.b32.xlu0 %v2763, 126
        %v2782 = vpop.permute.xlu0 %2781
        %2783 = vrot.lane.b32.xlu0 %v2765, 126
        %v2784 = vpop.permute.xlu0 %2783
        %2785 = vrot.lane.b32.xlu0 %v2768, 126
        %v2786 = vpop.permute.xlu0 %2785
        %2787 = vrot.lane.b32.xlu0 %v2770, 126
        %v2788 = vpop.permute.xlu0 %2787
        %2789 = vrot.lane.b32.xlu0 %v2773, 126
        %v2790 = vpop.permute.xlu0 %2789
        %2791 = vrot.lane.b32.xlu0 %v2775, 126
        %v2792 = vpop.permute.xlu0 %2791
        %2793 = vrot.lane.b32.xlu0 %v2778, 126
        %v2794 = vpop.permute.xlu0 %2793
        %2795 = vrot.lane.b32.xlu0 %v2780, 126
        %v2796 = vpop.permute.xlu0 %2795
        %v2805 = vadd.f32 %v2464, %v2782
        %v2806 = vadd.f32 %v2465, %v2784
        %v2807 = vadd.f32 %v2466, %v2786
        %v2808 = vadd.f32 %v2467, %v2788
        %v2809 = vadd.f32 %v2468, %v2790
        %v2810 = vadd.f32 %v2469, %v2792
        %v2811 = vadd.f32 %v2470, %v2794
        %v2812 = vadd.f32 %v2471, %v2796
        %v2813 = vstv %s1594
        %v2814 = vmul.f32 %v2813, %v1559
        %v2815 = vmul.f32 %v2813, %v1560
        %v2816 = vmul.f32 %v2813, %v1561
        %v2817 = vmul.f32 %v2813, %v1562
        %v2818 = vmul.f32 %v2813, %v1563
        %v2819 = vmul.f32 %v2813, %v1564
        %v2820 = vmul.f32 %v2813, %v1565
        %v2821 = vmul.f32 %v2813, %v1566
        %v2822 = vmul.f32 %v2813, %v1567
        %v2823 = vmul.f32 %v2813, %v1568
        %v2824 = vmul.f32 %v2813, %v1569
        %v2825 = vmul.f32 %v2813, %v1570
        %v2838 = vrot.slane %v2814, 2
        %v2839 = vrot.slane %v2815, 2
        %v2840 = vsel %vm2760, %v2838, %v2839
        %v2841 = vrot.slane %v2816, 2
        %v2842 = vsel %vm2760, %v2839, %v2841
        %v2843 = vrot.slane %v2817, 2
        %v2844 = vrot.slane %v2818, 2
        %v2845 = vsel %vm2760, %v2843, %v2844
        %v2846 = vrot.slane %v2819, 2
        %v2847 = vsel %vm2760, %v2844, %v2846
        %v2848 = vrot.slane %v2820, 2
        %v2849 = vrot.slane %v2821, 2
        %v2850 = vsel %vm2760, %v2848, %v2849
        %v2851 = vrot.slane %v2822, 2
        %v2852 = vsel %vm2760, %v2849, %v2851
        %v2853 = vrot.slane %v2823, 2
        %v2854 = vrot.slane %v2824, 2
        %v2855 = vsel %vm2760, %v2853, %v2854
        %v2856 = vrot.slane %v2825, 2
        %v2857 = vsel %vm2760, %v2854, %v2856
        %2858 = vrot.lane.b32.xlu0 %v2840, 126
        %v2859 = vpop.permute.xlu0 %2858
        %2860 = vrot.lane.b32.xlu0 %v2842, 126
        %v2861 = vpop.permute.xlu0 %2860
        %2862 = vrot.lane.b32.xlu0 %v2841, 126
        %v2863 = vpop.permute.xlu0 %2862
        %2864 = vrot.lane.b32.xlu0 %v2845, 126
        %v2865 = vpop.permute.xlu0 %2864
        %2866 = vrot.lane.b32.xlu0 %v2847, 126
        %v2867 = vpop.permute.xlu0 %2866
        %2868 = vrot.lane.b32.xlu0 %v2846, 126
        %v2869 = vpop.permute.xlu0 %2868
        %2870 = vrot.lane.b32.xlu0 %v2850, 126
        %v2871 = vpop.permute.xlu0 %2870
        %2872 = vrot.lane.b32.xlu0 %v2852, 126
        %v2873 = vpop.permute.xlu0 %2872
        %2874 = vrot.lane.b32.xlu0 %v2851, 126
        %v2875 = vpop.permute.xlu0 %2874
        %2876 = vrot.lane.b32.xlu0 %v2855, 126
        %v2877 = vpop.permute.xlu0 %2876
        %2878 = vrot.lane.b32.xlu0 %v2857, 126
        %v2879 = vpop.permute.xlu0 %2878
        %2880 = vrot.lane.b32.xlu0 %v2856, 126
        %v2881 = vpop.permute.xlu0 %2880
        %v2894 = vadd.f32 %v2553, %v2859
        %v2895 = vadd.f32 %v2554, %v2861
        %v2896 = vadd.f32 %v2555, %v2863
        %v2897 = vadd.f32 %v2556, %v2865
        %v2898 = vadd.f32 %v2557, %v2867
        %v2899 = vadd.f32 %v2558, %v2869
        %v2900 = vadd.f32 %v2559, %v2871
        %v2901 = vadd.f32 %v2560, %v2873
        %v2902 = vadd.f32 %v2561, %v2875
        %v2903 = vadd.f32 %v2562, %v2877
        %v2904 = vadd.f32 %v2563, %v2879
        %v2905 = vadd.f32 %v2564, %v2881
        %v2906 = vstv %s1601
        %v2907 = vmul.f32 %v2906, %v1559
        %v2908 = vmul.f32 %v2906, %v1560
        %v2909 = vmul.f32 %v2906, %v1561
        %v2910 = vmul.f32 %v2906, %v1562
        %v2911 = vmul.f32 %v2906, %v1563
        %v2912 = vmul.f32 %v2906, %v1564
        %v2913 = vmul.f32 %v2906, %v1565
        %v2914 = vmul.f32 %v2906, %v1566
        %v2915 = vmul.f32 %v2906, %v1567
        %v2916 = vmul.f32 %v2906, %v1568
        %v2917 = vmul.f32 %v2906, %v1569
        %v2918 = vmul.f32 %v2906, %v1570
        %v2931 = vrot.slane %v2907, 2
        %v2932 = vrot.slane %v2908, 2
        %v2933 = vsel %vm2760, %v2931, %v2932
        %v2934 = vrot.slane %v2909, 2
        %v2935 = vsel %vm2760, %v2932, %v2934
        %v2936 = vrot.slane %v2910, 2
        %v2937 = vrot.slane %v2911, 2
        %v2938 = vsel %vm2760, %v2936, %v2937
        %v2939 = vrot.slane %v2912, 2
        %v2940 = vsel %vm2760, %v2937, %v2939
        %v2941 = vrot.slane %v2913, 2
        %v2942 = vrot.slane %v2914, 2
        %v2943 = vsel %vm2760, %v2941, %v2942
        %v2944 = vrot.slane %v2915, 2
        %v2945 = vsel %vm2760, %v2942, %v2944
        %v2946 = vrot.slane %v2916, 2
        %v2947 = vrot.slane %v2917, 2
        %v2948 = vsel %vm2760, %v2946, %v2947
        %v2949 = vrot.slane %v2918, 2
        %v2950 = vsel %vm2760, %v2947, %v2949
        %2951 = vrot.lane.b32.xlu0 %v2933, 126
        %v2952 = vpop.permute.xlu0 %2951
        %2953 = vrot.lane.b32.xlu0 %v2935, 126
        %v2954 = vpop.permute.xlu0 %2953
        %2955 = vrot.lane.b32.xlu0 %v2934, 126
        %v2956 = vpop.permute.xlu0 %2955
        %2957 = vrot.lane.b32.xlu0 %v2938, 126
        %v2958 = vpop.permute.xlu0 %2957
        %2959 = vrot.lane.b32.xlu0 %v2940, 126
        %v2960 = vpop.permute.xlu0 %2959
        %2961 = vrot.lane.b32.xlu0 %v2939, 126
        %v2962 = vpop.permute.xlu0 %2961
        %2963 = vrot.lane.b32.xlu0 %v2943, 126
        %v2964 = vpop.permute.xlu0 %2963
        %2965 = vrot.lane.b32.xlu0 %v2945, 126
        %v2966 = vpop.permute.xlu0 %2965
        %2967 = vrot.lane.b32.xlu0 %v2944, 126
        %v2968 = vpop.permute.xlu0 %2967
        %2969 = vrot.lane.b32.xlu0 %v2948, 126
        %v2970 = vpop.permute.xlu0 %2969
        %2971 = vrot.lane.b32.xlu0 %v2950, 126
        %v2972 = vpop.permute.xlu0 %2971
        %2973 = vrot.lane.b32.xlu0 %v2949, 126
        %v2974 = vpop.permute.xlu0 %2973
        %v2987 = vadd.f32 %v2630, %v2952
        %v2988 = vadd.f32 %v2631, %v2954
        %v2989 = vadd.f32 %v2632, %v2956
        %v2990 = vadd.f32 %v2633, %v2958
        %v2991 = vadd.f32 %v2634, %v2960
        %v2992 = vadd.f32 %v2635, %v2962
        %v2993 = vadd.f32 %v2636, %v2964
        %v2994 = vadd.f32 %v2637, %v2966
        %v2995 = vadd.f32 %v2638, %v2968
        %v2996 = vadd.f32 %v2639, %v2970
        %v2997 = vadd.f32 %v2640, %v2972
        %v2998 = vadd.f32 %v2641, %v2974
        %v2999 = vstv %s1608
        %v3000 = vmul.f32 %v2999, %v1559
        %v3001 = vmul.f32 %v2999, %v1560
        %v3002 = vmul.f32 %v2999, %v1561
        %v3003 = vmul.f32 %v2999, %v1562
        %v3004 = vmul.f32 %v2999, %v1563
        %v3005 = vmul.f32 %v2999, %v1564
        %v3006 = vmul.f32 %v2999, %v1565
        %v3007 = vmul.f32 %v2999, %v1566
        %v3008 = vmul.f32 %v2999, %v1567
        %v3009 = vmul.f32 %v2999, %v1568
        %v3010 = vmul.f32 %v2999, %v1569
        %v3011 = vmul.f32 %v2999, %v1570
        %v3024 = vrot.slane %v3000, 2
        %v3025 = vrot.slane %v3001, 2
        %v3026 = vsel %vm2760, %v3024, %v3025
        %v3027 = vrot.slane %v3002, 2
        %v3028 = vsel %vm2760, %v3025, %v3027
        %v3029 = vrot.slane %v3003, 2
        %v3030 = vrot.slane %v3004, 2
        %v3031 = vsel %vm2760, %v3029, %v3030
        %v3032 = vrot.slane %v3005, 2
        %v3033 = vsel %vm2760, %v3030, %v3032
        %v3034 = vrot.slane %v3006, 2
        %v3035 = vrot.slane %v3007, 2
        %v3036 = vsel %vm2760, %v3034, %v3035
        %v3037 = vrot.slane %v3008, 2
        %v3038 = vsel %vm2760, %v3035, %v3037
        %v3039 = vrot.slane %v3009, 2
        %v3040 = vrot.slane %v3010, 2
        %v3041 = vsel %vm2760, %v3039, %v3040
        %v3042 = vrot.slane %v3011, 2
        %v3043 = vsel %vm2760, %v3040, %v3042
        %3044 = vrot.lane.b32.xlu0 %v3026, 126
        %v3045 = vpop.permute.xlu0 %3044
        %3046 = vrot.lane.b32.xlu0 %v3028, 126
        %v3047 = vpop.permute.xlu0 %3046
        %3048 = vrot.lane.b32.xlu0 %v3027, 126
        %v3049 = vpop.permute.xlu0 %3048
        %3050 = vrot.lane.b32.xlu0 %v3031, 126
        %v3051 = vpop.permute.xlu0 %3050
        %3052 = vrot.lane.b32.xlu0 %v3033, 126
        %v3053 = vpop.permute.xlu0 %3052
        %3054 = vrot.lane.b32.xlu0 %v3032, 126
        %v3055 = vpop.permute.xlu0 %3054
        %3056 = vrot.lane.b32.xlu0 %v3036, 126
        %v3057 = vpop.permute.xlu0 %3056
        %3058 = vrot.lane.b32.xlu0 %v3038, 126
        %v3059 = vpop.permute.xlu0 %3058
        %3060 = vrot.lane.b32.xlu0 %v3037, 126
        %v3061 = vpop.permute.xlu0 %3060
        %3062 = vrot.lane.b32.xlu0 %v3041, 126
        %v3063 = vpop.permute.xlu0 %3062
        %3064 = vrot.lane.b32.xlu0 %v3043, 126
        %v3065 = vpop.permute.xlu0 %3064
        %3066 = vrot.lane.b32.xlu0 %v3042, 126
        %v3067 = vpop.permute.xlu0 %3066
        %v3080 = vadd.f32 %v2723, %v3045
        %v3081 = vadd.f32 %v2724, %v3047
        %v3082 = vadd.f32 %v2725, %v3049
        %v3083 = vadd.f32 %v2726, %v3051
        %v3084 = vadd.f32 %v2727, %v3053
        %v3085 = vadd.f32 %v2728, %v3055
        %v3086 = vadd.f32 %v2729, %v3057
        %v3087 = vadd.f32 %v2730, %v3059
        %v3088 = vadd.f32 %v2731, %v3061
        %v3089 = vadd.f32 %v2732, %v3063
        %v3090 = vadd.f32 %v2733, %v3065
        %v3091 = vadd.f32 %v2734, %v3067
        %v3092 = vstv %s1615
        %v3093 = vmul.f32 %v3092, %v1559
        %v3094 = vmul.f32 %v3092, %v1560
        %v3095 = vmul.f32 %v3092, %v1561
        %v3096 = vmul.f32 %v3092, %v1562
        %v3097 = vmul.f32 %v3092, %v1563
        %v3098 = vmul.f32 %v3092, %v1564
        %v3099 = vmul.f32 %v3092, %v1565
        %v3100 = vmul.f32 %v3092, %v1566
        %v3101 = vmul.f32 %v3092, %v1567
        %v3102 = vmul.f32 %v3092, %v1568
        %v3103 = vmul.f32 %v3092, %v1569
        %v3104 = vmul.f32 %v3092, %v1570
        %v3117 = vrot.slane %v3093, 6
        %v3118 = vrot.slane %v3094, 6
        %v3119 = vsel %vm670, %v3117, %v3118
        %v3120 = vrot.slane %v3095, 6
        %v3121 = vsel %vm670, %v3118, %v3120
        %v3122 = vrot.slane %v3096, 6
        %v3123 = vrot.slane %v3097, 6
        %v3124 = vsel %vm670, %v3122, %v3123
        %v3125 = vrot.slane %v3098, 6
        %v3126 = vsel %vm670, %v3123, %v3125
        %v3127 = vrot.slane %v3099, 6
        %v3128 = vrot.slane %v3100, 6
        %v3129 = vsel %vm670, %v3127, %v3128
        %v3130 = vrot.slane %v3101, 6
        %v3131 = vsel %vm670, %v3128, %v3130
        %v3132 = vrot.slane %v3102, 6
        %v3133 = vrot.slane %v3103, 6
        %v3134 = vsel %vm670, %v3132, %v3133
        %v3135 = vrot.slane %v3104, 6
        %v3136 = vsel %vm670, %v3133, %v3135
        %3137 = vrot.lane.b32.xlu0 %v3119, 126
        %v3138 = vpop.permute.xlu0 %3137
        %3139 = vrot.lane.b32.xlu0 %v3121, 126
        %v3140 = vpop.permute.xlu0 %3139
        %3141 = vrot.lane.b32.xlu0 %v3124, 126
        %v3142 = vpop.permute.xlu0 %3141
        %3143 = vrot.lane.b32.xlu0 %v3126, 126
        %v3144 = vpop.permute.xlu0 %3143
        %3145 = vrot.lane.b32.xlu0 %v3129, 126
        %v3146 = vpop.permute.xlu0 %3145
        %3147 = vrot.lane.b32.xlu0 %v3131, 126
        %v3148 = vpop.permute.xlu0 %3147
        %3149 = vrot.lane.b32.xlu0 %v3134, 126
        %v3150 = vpop.permute.xlu0 %3149
        %3151 = vrot.lane.b32.xlu0 %v3136, 126
        %v3152 = vpop.permute.xlu0 %3151
        %v3161 = vadd.f32 %v2805, %v3138
        %v3162 = vadd.f32 %v2806, %v3140
        %v3163 = vadd.f32 %v2807, %v3142
        %v3164 = vadd.f32 %v2808, %v3144
        %v3165 = vadd.f32 %v2809, %v3146
        %v3166 = vadd.f32 %v2810, %v3148
        %v3167 = vadd.f32 %v2811, %v3150
        %v3168 = vadd.f32 %v2812, %v3152
        %v3169 = vstv %s1574
        %v3170 = vmul.f32 %v3169, %v1559
        %v3171 = vmul.f32 %v3169, %v1560
        %v3172 = vmul.f32 %v3169, %v1562
        %v3173 = vmul.f32 %v3169, %v1563
        %v3174 = vmul.f32 %v3169, %v1565
        %v3175 = vmul.f32 %v3169, %v1566
        %v3176 = vmul.f32 %v3169, %v1568
        %v3177 = vmul.f32 %v3169, %v1569
        %vm3186 = vcmask 1040384
        %v3187 = vrot.slane %v3170, 7
        %v3188 = vrot.slane %v3171, 7
        %v3189 = vsel %vm3186, %v3187, %v3188
        %v3190 = vrot.slane %v3172, 7
        %v3191 = vrot.slane %v3173, 7
        %v3192 = vsel %vm3186, %v3190, %v3191
        %v3193 = vrot.slane %v3174, 7
        %v3194 = vrot.slane %v3175, 7
        %v3195 = vsel %vm3186, %v3193, %v3194
        %v3196 = vrot.slane %v3176, 7
        %v3197 = vrot.slane %v3177, 7
        %v3198 = vsel %vm3186, %v3196, %v3197
        %3199 = vrot.lane.b32.xlu0 %v3187, 125
        %v3200 = vpop.permute.xlu0 %3199
        %3201 = vrot.lane.b32.xlu0 %v3189, 125
        %v3202 = vpop.permute.xlu0 %3201
        %3203 = vrot.lane.b32.xlu0 %v3188, 125
        %v3204 = vpop.permute.xlu0 %3203
        %3205 = vrot.lane.b32.xlu0 %v3190, 125
        %v3206 = vpop.permute.xlu0 %3205
        %3207 = vrot.lane.b32.xlu0 %v3192, 125
        %v3208 = vpop.permute.xlu0 %3207
        %3209 = vrot.lane.b32.xlu0 %v3191, 125
        %v3210 = vpop.permute.xlu0 %3209
        %3211 = vrot.lane.b32.xlu0 %v3193, 125
        %v3212 = vpop.permute.xlu0 %3211
        %3213 = vrot.lane.b32.xlu0 %v3195, 125
        %v3214 = vpop.permute.xlu0 %3213
        %3215 = vrot.lane.b32.xlu0 %v3194, 125
        %v3216 = vpop.permute.xlu0 %3215
        %3217 = vrot.lane.b32.xlu0 %v3196, 125
        %v3218 = vpop.permute.xlu0 %3217
        %3219 = vrot.lane.b32.xlu0 %v3198, 125
        %v3220 = vpop.permute.xlu0 %3219
        %3221 = vrot.lane.b32.xlu0 %v3197, 125
        %v3222 = vpop.permute.xlu0 %3221
        %v3235 = vadd.f32 %v2894, %v3200
        %v3236 = vadd.f32 %v2895, %v3202
        %v3237 = vadd.f32 %v2896, %v3204
        %v3238 = vadd.f32 %v2897, %v3206
        %v3239 = vadd.f32 %v2898, %v3208
        %v3240 = vadd.f32 %v2899, %v3210
        %v3241 = vadd.f32 %v2900, %v3212
        %v3242 = vadd.f32 %v2901, %v3214
        %v3243 = vadd.f32 %v2902, %v3216
        %v3244 = vadd.f32 %v2903, %v3218
        %v3245 = vadd.f32 %v2904, %v3220
        %v3246 = vadd.f32 %v2905, %v3222
        %v3247 = vstv %s1581
        %v3248 = vmul.f32 %v3247, %v1559
        %v3249 = vmul.f32 %v3247, %v1560
        %v3250 = vmul.f32 %v3247, %v1561
        %v3251 = vmul.f32 %v3247, %v1562
        %v3252 = vmul.f32 %v3247, %v1563
        %v3253 = vmul.f32 %v3247, %v1564
        %v3254 = vmul.f32 %v3247, %v1565
        %v3255 = vmul.f32 %v3247, %v1566
        %v3256 = vmul.f32 %v3247, %v1567
        %v3257 = vmul.f32 %v3247, %v1568
        %v3258 = vmul.f32 %v3247, %v1569
        %v3259 = vmul.f32 %v3247, %v1570
        %v3272 = vrot.slane %v3248, 7
        %v3273 = vrot.slane %v3249, 7
        %v3274 = vsel %vm3186, %v3272, %v3273
        %v3275 = vrot.slane %v3250, 7
        %v3276 = vsel %vm3186, %v3273, %v3275
        %v3277 = vrot.slane %v3251, 7
        %v3278 = vrot.slane %v3252, 7
        %v3279 = vsel %vm3186, %v3277, %v3278
        %v3280 = vrot.slane %v3253, 7
        %v3281 = vsel %vm3186, %v3278, %v3280
        %v3282 = vrot.slane %v3254, 7
        %v3283 = vrot.slane %v3255, 7
        %v3284 = vsel %vm3186, %v3282, %v3283
        %v3285 = vrot.slane %v3256, 7
        %v3286 = vsel %vm3186, %v3283, %v3285
        %v3287 = vrot.slane %v3257, 7
        %v3288 = vrot.slane %v3258, 7
        %v3289 = vsel %vm3186, %v3287, %v3288
        %v3290 = vrot.slane %v3259, 7
        %v3291 = vsel %vm3186, %v3288, %v3290
        %3292 = vrot.lane.b32.xlu0 %v3272, 125
        %v3293 = vpop.permute.xlu0 %3292
        %3294 = vrot.lane.b32.xlu0 %v3274, 125
        %v3295 = vpop.permute.xlu0 %3294
        %3296 = vrot.lane.b32.xlu0 %v3276, 125
        %v3297 = vpop.permute.xlu0 %3296
        %3298 = vrot.lane.b32.xlu0 %v3277, 125
        %v3299 = vpop.permute.xlu0 %3298
        %3300 = vrot.lane.b32.xlu0 %v3279, 125
        %v3301 = vpop.permute.xlu0 %3300
        %3302 = vrot.lane.b32.xlu0 %v3281, 125
        %v3303 = vpop.permute.xlu0 %3302
        %3304 = vrot.lane.b32.xlu0 %v3282, 125
        %v3305 = vpop.permute.xlu0 %3304
        %3306 = vrot.lane.b32.xlu0 %v3284, 125
        %v3307 = vpop.permute.xlu0 %3306
        %3308 = vrot.lane.b32.xlu0 %v3286, 125
        %v3309 = vpop.permute.xlu0 %3308
        %3310 = vrot.lane.b32.xlu0 %v3287, 125
        %v3311 = vpop.permute.xlu0 %3310
        %3312 = vrot.lane.b32.xlu0 %v3289, 125
        %v3313 = vpop.permute.xlu0 %3312
        %3314 = vrot.lane.b32.xlu0 %v3291, 125
        %v3315 = vpop.permute.xlu0 %3314
        %v3328 = vadd.f32 %v2987, %v3293
        %v3329 = vadd.f32 %v2988, %v3295
        %v3330 = vadd.f32 %v2989, %v3297
        %v3331 = vadd.f32 %v2990, %v3299
        %v3332 = vadd.f32 %v2991, %v3301
        %v3333 = vadd.f32 %v2992, %v3303
        %v3334 = vadd.f32 %v2993, %v3305
        %v3335 = vadd.f32 %v2994, %v3307
        %v3336 = vadd.f32 %v2995, %v3309
        %v3337 = vadd.f32 %v2996, %v3311
        %v3338 = vadd.f32 %v2997, %v3313
        %v3339 = vadd.f32 %v2998, %v3315
        %v3340 = vstv %s1588
        %v3341 = vmul.f32 %v3340, %v1559
        %v3342 = vmul.f32 %v3340, %v1560
        %v3343 = vmul.f32 %v3340, %v1561
        %v3344 = vmul.f32 %v3340, %v1562
        %v3345 = vmul.f32 %v3340, %v1563
        %v3346 = vmul.f32 %v3340, %v1564
        %v3347 = vmul.f32 %v3340, %v1565
        %v3348 = vmul.f32 %v3340, %v1566
        %v3349 = vmul.f32 %v3340, %v1567
        %v3350 = vmul.f32 %v3340, %v1568
        %v3351 = vmul.f32 %v3340, %v1569
        %v3352 = vmul.f32 %v3340, %v1570
        %v3365 = vrot.slane %v3341, 7
        %v3366 = vrot.slane %v3342, 7
        %v3367 = vsel %vm3186, %v3365, %v3366
        %v3368 = vrot.slane %v3343, 7
        %v3369 = vsel %vm3186, %v3366, %v3368
        %v3370 = vrot.slane %v3344, 7
        %v3371 = vrot.slane %v3345, 7
        %v3372 = vsel %vm3186, %v3370, %v3371
        %v3373 = vrot.slane %v3346, 7
        %v3374 = vsel %vm3186, %v3371, %v3373
        %v3375 = vrot.slane %v3347, 7
        %v3376 = vrot.slane %v3348, 7
        %v3377 = vsel %vm3186, %v3375, %v3376
        %v3378 = vrot.slane %v3349, 7
        %v3379 = vsel %vm3186, %v3376, %v3378
        %v3380 = vrot.slane %v3350, 7
        %v3381 = vrot.slane %v3351, 7
        %v3382 = vsel %vm3186, %v3380, %v3381
        %v3383 = vrot.slane %v3352, 7
        %v3384 = vsel %vm3186, %v3381, %v3383
        %3385 = vrot.lane.b32.xlu0 %v3365, 125
        %v3386 = vpop.permute.xlu0 %3385
        %3387 = vrot.lane.b32.xlu0 %v3367, 125
        %v3388 = vpop.permute.xlu0 %3387
        %3389 = vrot.lane.b32.xlu0 %v3369, 125
        %v3390 = vpop.permute.xlu0 %3389
        %3391 = vrot.lane.b32.xlu0 %v3370, 125
        %v3392 = vpop.permute.xlu0 %3391
        %3393 = vrot.lane.b32.xlu0 %v3372, 125
        %v3394 = vpop.permute.xlu0 %3393
        %3395 = vrot.lane.b32.xlu0 %v3374, 125
        %v3396 = vpop.permute.xlu0 %3395
        %3397 = vrot.lane.b32.xlu0 %v3375, 125
        %v3398 = vpop.permute.xlu0 %3397
        %3399 = vrot.lane.b32.xlu0 %v3377, 125
        %v3400 = vpop.permute.xlu0 %3399
        %3401 = vrot.lane.b32.xlu0 %v3379, 125
        %v3402 = vpop.permute.xlu0 %3401
        %3403 = vrot.lane.b32.xlu0 %v3380, 125
        %v3404 = vpop.permute.xlu0 %3403
        %3405 = vrot.lane.b32.xlu0 %v3382, 125
        %v3406 = vpop.permute.xlu0 %3405
        %3407 = vrot.lane.b32.xlu0 %v3384, 125
        %v3408 = vpop.permute.xlu0 %3407
        %v3421 = vadd.f32 %v3080, %v3386
        %v3422 = vadd.f32 %v3081, %v3388
        %v3423 = vadd.f32 %v3082, %v3390
        %v3424 = vadd.f32 %v3083, %v3392
        %v3425 = vadd.f32 %v3084, %v3394
        %v3426 = vadd.f32 %v3085, %v3396
        %v3427 = vadd.f32 %v3086, %v3398
        %v3428 = vadd.f32 %v3087, %v3400
        %v3429 = vadd.f32 %v3088, %v3402
        %v3430 = vadd.f32 %v3089, %v3404
        %v3431 = vadd.f32 %v3090, %v3406
        %v3432 = vadd.f32 %v3091, %v3408
        %v3433 = vstv %s1595
        %v3434 = vmul.f32 %v3433, %v1559
        %v3435 = vmul.f32 %v3433, %v1560
        %v3436 = vmul.f32 %v3433, %v1561
        %v3437 = vmul.f32 %v3433, %v1562
        %v3438 = vmul.f32 %v3433, %v1563
        %v3439 = vmul.f32 %v3433, %v1564
        %v3440 = vmul.f32 %v3433, %v1565
        %v3441 = vmul.f32 %v3433, %v1566
        %v3442 = vmul.f32 %v3433, %v1567
        %v3443 = vmul.f32 %v3433, %v1568
        %v3444 = vmul.f32 %v3433, %v1569
        %v3445 = vmul.f32 %v3433, %v1570
        %vm3458 = vcmask 1044480
        %v3459 = vrot.slane %v3434, 3
        %v3460 = vrot.slane %v3435, 3
        %v3461 = vsel %vm3458, %v3459, %v3460
        %v3462 = vrot.slane %v3436, 3
        %v3463 = vsel %vm3458, %v3460, %v3462
        %v3464 = vrot.slane %v3437, 3
        %v3465 = vrot.slane %v3438, 3
        %v3466 = vsel %vm3458, %v3464, %v3465
        %v3467 = vrot.slane %v3439, 3
        %v3468 = vsel %vm3458, %v3465, %v3467
        %v3469 = vrot.slane %v3440, 3
        %v3470 = vrot.slane %v3441, 3
        %v3471 = vsel %vm3458, %v3469, %v3470
        %v3472 = vrot.slane %v3442, 3
        %v3473 = vsel %vm3458, %v3470, %v3472
        %v3474 = vrot.slane %v3443, 3
        %v3475 = vrot.slane %v3444, 3
        %v3476 = vsel %vm3458, %v3474, %v3475
        %v3477 = vrot.slane %v3445, 3
        %v3478 = vsel %vm3458, %v3475, %v3477
        %3479 = vrot.lane.b32.xlu0 %v3461, 125
        %v3480 = vpop.permute.xlu0 %3479
        %3481 = vrot.lane.b32.xlu0 %v3463, 125
        %v3482 = vpop.permute.xlu0 %3481
        %3483 = vrot.lane.b32.xlu0 %v3466, 125
        %v3484 = vpop.permute.xlu0 %3483
        %3485 = vrot.lane.b32.xlu0 %v3468, 125
        %v3486 = vpop.permute.xlu0 %3485
        %3487 = vrot.lane.b32.xlu0 %v3471, 125
        %v3488 = vpop.permute.xlu0 %3487
        %3489 = vrot.lane.b32.xlu0 %v3473, 125
        %v3490 = vpop.permute.xlu0 %3489
        %3491 = vrot.lane.b32.xlu0 %v3476, 125
        %v3492 = vpop.permute.xlu0 %3491
        %3493 = vrot.lane.b32.xlu0 %v3478, 125
        %v3494 = vpop.permute.xlu0 %3493
        %v3503 = vadd.f32 %v3161, %v3480
        %v3504 = vadd.f32 %v3162, %v3482
        %v3505 = vadd.f32 %v3163, %v3484
        %v3506 = vadd.f32 %v3164, %v3486
        %v3507 = vadd.f32 %v3165, %v3488
        %v3508 = vadd.f32 %v3166, %v3490
        %v3509 = vadd.f32 %v3167, %v3492
        %v3510 = vadd.f32 %v3168, %v3494
        %v3511 = vstv %s1602
        %v3512 = vmul.f32 %v3511, %v1559
        %v3513 = vmul.f32 %v3511, %v1560
        %v3514 = vmul.f32 %v3511, %v1561
        %v3515 = vmul.f32 %v3511, %v1562
        %v3516 = vmul.f32 %v3511, %v1563
        %v3517 = vmul.f32 %v3511, %v1564
        %v3518 = vmul.f32 %v3511, %v1565
        %v3519 = vmul.f32 %v3511, %v1566
        %v3520 = vmul.f32 %v3511, %v1567
        %v3521 = vmul.f32 %v3511, %v1568
        %v3522 = vmul.f32 %v3511, %v1569
        %v3523 = vmul.f32 %v3511, %v1570
        %v3536 = vrot.slane %v3512, 3
        %v3537 = vrot.slane %v3513, 3
        %v3538 = vsel %vm3458, %v3536, %v3537
        %v3539 = vrot.slane %v3514, 3
        %v3540 = vsel %vm3458, %v3537, %v3539
        %v3541 = vrot.slane %v3515, 3
        %v3542 = vrot.slane %v3516, 3
        %v3543 = vsel %vm3458, %v3541, %v3542
        %v3544 = vrot.slane %v3517, 3
        %v3545 = vsel %vm3458, %v3542, %v3544
        %v3546 = vrot.slane %v3518, 3
        %v3547 = vrot.slane %v3519, 3
        %v3548 = vsel %vm3458, %v3546, %v3547
        %v3549 = vrot.slane %v3520, 3
        %v3550 = vsel %vm3458, %v3547, %v3549
        %v3551 = vrot.slane %v3521, 3
        %v3552 = vrot.slane %v3522, 3
        %v3553 = vsel %vm3458, %v3551, %v3552
        %v3554 = vrot.slane %v3523, 3
        %v3555 = vsel %vm3458, %v3552, %v3554
        %3556 = vrot.lane.b32.xlu0 %v3538, 125
        %v3557 = vpop.permute.xlu0 %3556
        %3558 = vrot.lane.b32.xlu0 %v3540, 125
        %v3559 = vpop.permute.xlu0 %3558
        %3560 = vrot.lane.b32.xlu0 %v3539, 125
        %v3561 = vpop.permute.xlu0 %3560
        %3562 = vrot.lane.b32.xlu0 %v3543, 125
        %v3563 = vpop.permute.xlu0 %3562
        %3564 = vrot.lane.b32.xlu0 %v3545, 125
        %v3565 = vpop.permute.xlu0 %3564
        %3566 = vrot.lane.b32.xlu0 %v3544, 125
        %v3567 = vpop.permute.xlu0 %3566
        %3568 = vrot.lane.b32.xlu0 %v3548, 125
        %v3569 = vpop.permute.xlu0 %3568
        %3570 = vrot.lane.b32.xlu0 %v3550, 125
        %v3571 = vpop.permute.xlu0 %3570
        %3572 = vrot.lane.b32.xlu0 %v3549, 125
        %v3573 = vpop.permute.xlu0 %3572
        %3574 = vrot.lane.b32.xlu0 %v3553, 125
        %v3575 = vpop.permute.xlu0 %3574
        %3576 = vrot.lane.b32.xlu0 %v3555, 125
        %v3577 = vpop.permute.xlu0 %3576
        %3578 = vrot.lane.b32.xlu0 %v3554, 125
        %v3579 = vpop.permute.xlu0 %3578
        %v3592 = vadd.f32 %v3235, %v3557
        %v3593 = vadd.f32 %v3236, %v3559
        %v3594 = vadd.f32 %v3237, %v3561
        %v3595 = vadd.f32 %v3238, %v3563
        %v3596 = vadd.f32 %v3239, %v3565
        %v3597 = vadd.f32 %v3240, %v3567
        %v3598 = vadd.f32 %v3241, %v3569
        %v3599 = vadd.f32 %v3242, %v3571
        %v3600 = vadd.f32 %v3243, %v3573
        %v3601 = vadd.f32 %v3244, %v3575
        %v3602 = vadd.f32 %v3245, %v3577
        %v3603 = vadd.f32 %v3246, %v3579
        %v3604 = vstv %s1609
        %v3605 = vmul.f32 %v3604, %v1559
        %v3606 = vmul.f32 %v3604, %v1560
        %v3607 = vmul.f32 %v3604, %v1561
        %v3608 = vmul.f32 %v3604, %v1562
        %v3609 = vmul.f32 %v3604, %v1563
        %v3610 = vmul.f32 %v3604, %v1564
        %v3611 = vmul.f32 %v3604, %v1565
        %v3612 = vmul.f32 %v3604, %v1566
        %v3613 = vmul.f32 %v3604, %v1567
        %v3614 = vmul.f32 %v3604, %v1568
        %v3615 = vmul.f32 %v3604, %v1569
        %v3616 = vmul.f32 %v3604, %v1570
        %v3629 = vrot.slane %v3605, 3
        %v3630 = vrot.slane %v3606, 3
        %v3631 = vsel %vm3458, %v3629, %v3630
        %v3632 = vrot.slane %v3607, 3
        %v3633 = vsel %vm3458, %v3630, %v3632
        %v3634 = vrot.slane %v3608, 3
        %v3635 = vrot.slane %v3609, 3
        %v3636 = vsel %vm3458, %v3634, %v3635
        %v3637 = vrot.slane %v3610, 3
        %v3638 = vsel %vm3458, %v3635, %v3637
        %v3639 = vrot.slane %v3611, 3
        %v3640 = vrot.slane %v3612, 3
        %v3641 = vsel %vm3458, %v3639, %v3640
        %v3642 = vrot.slane %v3613, 3
        %v3643 = vsel %vm3458, %v3640, %v3642
        %v3644 = vrot.slane %v3614, 3
        %v3645 = vrot.slane %v3615, 3
        %v3646 = vsel %vm3458, %v3644, %v3645
        %v3647 = vrot.slane %v3616, 3
        %v3648 = vsel %vm3458, %v3645, %v3647
        %3649 = vrot.lane.b32.xlu0 %v3631, 125
        %v3650 = vpop.permute.xlu0 %3649
        %3651 = vrot.lane.b32.xlu0 %v3633, 125
        %v3652 = vpop.permute.xlu0 %3651
        %3653 = vrot.lane.b32.xlu0 %v3632, 125
        %v3654 = vpop.permute.xlu0 %3653
        %3655 = vrot.lane.b32.xlu0 %v3636, 125
        %v3656 = vpop.permute.xlu0 %3655
        %3657 = vrot.lane.b32.xlu0 %v3638, 125
        %v3658 = vpop.permute.xlu0 %3657
        %3659 = vrot.lane.b32.xlu0 %v3637, 125
        %v3660 = vpop.permute.xlu0 %3659
        %3661 = vrot.lane.b32.xlu0 %v3641, 125
        %v3662 = vpop.permute.xlu0 %3661
        %3663 = vrot.lane.b32.xlu0 %v3643, 125
        %v3664 = vpop.permute.xlu0 %3663
        %3665 = vrot.lane.b32.xlu0 %v3642, 125
        %v3666 = vpop.permute.xlu0 %3665
        %3667 = vrot.lane.b32.xlu0 %v3646, 125
        %v3668 = vpop.permute.xlu0 %3667
        %3669 = vrot.lane.b32.xlu0 %v3648, 125
        %v3670 = vpop.permute.xlu0 %3669
        %3671 = vrot.lane.b32.xlu0 %v3647, 125
        %v3672 = vpop.permute.xlu0 %3671
        %v3685 = vadd.f32 %v3328, %v3650
        %v3686 = vadd.f32 %v3329, %v3652
        %v3687 = vadd.f32 %v3330, %v3654
        %v3688 = vadd.f32 %v3331, %v3656
        %v3689 = vadd.f32 %v3332, %v3658
        %v3690 = vadd.f32 %v3333, %v3660
        %v3691 = vadd.f32 %v3334, %v3662
        %v3692 = vadd.f32 %v3335, %v3664
        %v3693 = vadd.f32 %v3336, %v3666
        %v3694 = vadd.f32 %v3337, %v3668
        %v3695 = vadd.f32 %v3338, %v3670
        %v3696 = vadd.f32 %v3339, %v3672
        %v3697 = vstv %s1616
        %v3698 = vmul.f32 %v3697, %v1559
        %v3699 = vmul.f32 %v3697, %v1560
        %v3700 = vmul.f32 %v3697, %v1561
        %v3701 = vmul.f32 %v3697, %v1562
        %v3702 = vmul.f32 %v3697, %v1563
        %v3703 = vmul.f32 %v3697, %v1564
        %v3704 = vmul.f32 %v3697, %v1565
        %v3705 = vmul.f32 %v3697, %v1566
        %v3706 = vmul.f32 %v3697, %v1567
        %v3707 = vmul.f32 %v3697, %v1568
        %v3708 = vmul.f32 %v3697, %v1569
        %v3709 = vmul.f32 %v3697, %v1570
        %v3722 = vrot.slane %v3698, 3
        %v3723 = vrot.slane %v3699, 3
        %v3724 = vsel %vm3458, %v3722, %v3723
        %v3725 = vrot.slane %v3700, 3
        %v3726 = vsel %vm3458, %v3723, %v3725
        %v3727 = vrot.slane %v3701, 3
        %v3728 = vrot.slane %v3702, 3
        %v3729 = vsel %vm3458, %v3727, %v3728
        %v3730 = vrot.slane %v3703, 3
        %v3731 = vsel %vm3458, %v3728, %v3730
        %v3732 = vrot.slane %v3704, 3
        %v3733 = vrot.slane %v3705, 3
        %v3734 = vsel %vm3458, %v3732, %v3733
        %v3735 = vrot.slane %v3706, 3
        %v3736 = vsel %vm3458, %v3733, %v3735
        %v3737 = vrot.slane %v3707, 3
        %v3738 = vrot.slane %v3708, 3
        %v3739 = vsel %vm3458, %v3737, %v3738
        %v3740 = vrot.slane %v3709, 3
        %v3741 = vsel %vm3458, %v3738, %v3740
        %3742 = vrot.lane.b32.xlu0 %v3724, 125
        %v3743 = vpop.permute.xlu0 %3742
        %3744 = vrot.lane.b32.xlu0 %v3726, 125
        %v3745 = vpop.permute.xlu0 %3744
        %3746 = vrot.lane.b32.xlu0 %v3725, 125
        %v3747 = vpop.permute.xlu0 %3746
        %3748 = vrot.lane.b32.xlu0 %v3729, 125
        %v3749 = vpop.permute.xlu0 %3748
        %3750 = vrot.lane.b32.xlu0 %v3731, 125
        %v3751 = vpop.permute.xlu0 %3750
        %3752 = vrot.lane.b32.xlu0 %v3730, 125
        %v3753 = vpop.permute.xlu0 %3752
        %3754 = vrot.lane.b32.xlu0 %v3734, 125
        %v3755 = vpop.permute.xlu0 %3754
        %3756 = vrot.lane.b32.xlu0 %v3736, 125
        %v3757 = vpop.permute.xlu0 %3756
        %3758 = vrot.lane.b32.xlu0 %v3735, 125
        %v3759 = vpop.permute.xlu0 %3758
        %3760 = vrot.lane.b32.xlu0 %v3739, 125
        %v3761 = vpop.permute.xlu0 %3760
        %3762 = vrot.lane.b32.xlu0 %v3741, 125
        %v3763 = vpop.permute.xlu0 %3762
        %3764 = vrot.lane.b32.xlu0 %v3740, 125
        %v3765 = vpop.permute.xlu0 %3764
        %v3778 = vadd.f32 %v3421, %v3743
        %v3779 = vadd.f32 %v3422, %v3745
        %v3780 = vadd.f32 %v3423, %v3747
        %v3781 = vadd.f32 %v3424, %v3749
        %v3782 = vadd.f32 %v3425, %v3751
        %v3783 = vadd.f32 %v3426, %v3753
        %v3784 = vadd.f32 %v3427, %v3755
        %v3785 = vadd.f32 %v3428, %v3757
        %v3786 = vadd.f32 %v3429, %v3759
        %v3787 = vadd.f32 %v3430, %v3761
        %v3788 = vadd.f32 %v3431, %v3763
        %v3789 = vadd.f32 %v3432, %v3765
        %v3790 = vstv %s1575
        %v3791 = vmul.f32 %v3790, %v1559
        %v3792 = vmul.f32 %v3790, %v1560
        %v3793 = vmul.f32 %v3790, %v1562
        %v3794 = vmul.f32 %v3790, %v1563
        %v3795 = vmul.f32 %v3790, %v1565
        %v3796 = vmul.f32 %v3790, %v1566
        %v3797 = vmul.f32 %v3790, %v1568
        %v3798 = vmul.f32 %v3790, %v1569
        %3807 = vrot.lane.b32.xlu0 %v3791, 124
        %v3808 = vpop.permute.xlu0 %3807
        %3809 = vrot.lane.b32.xlu0 %v3792, 124
        %v3810 = vpop.permute.xlu0 %3809
        %3811 = vrot.lane.b32.xlu0 %v3793, 124
        %v3812 = vpop.permute.xlu0 %3811
        %3813 = vrot.lane.b32.xlu0 %v3794, 124
        %v3814 = vpop.permute.xlu0 %3813
        %3815 = vrot.lane.b32.xlu0 %v3795, 124
        %v3816 = vpop.permute.xlu0 %3815
        %3817 = vrot.lane.b32.xlu0 %v3796, 124
        %v3818 = vpop.permute.xlu0 %3817
        %3819 = vrot.lane.b32.xlu0 %v3797, 124
        %v3820 = vpop.permute.xlu0 %3819
        %3821 = vrot.lane.b32.xlu0 %v3798, 124
        %v3822 = vpop.permute.xlu0 %3821
        %v3831 = vadd.f32 %v3503, %v3808
        %v3832 = vadd.f32 %v3504, %v3810
        %v3833 = vadd.f32 %v3505, %v3812
        %v3834 = vadd.f32 %v3506, %v3814
        %v3835 = vadd.f32 %v3507, %v3816
        %v3836 = vadd.f32 %v3508, %v3818
        %v3837 = vadd.f32 %v3509, %v3820
        %v3838 = vadd.f32 %v3510, %v3822
        %v3839 = vstv %s1582
        %v3840 = vmul.f32 %v3839, %v1559
        %v3841 = vmul.f32 %v3839, %v1560
        %v3842 = vmul.f32 %v3839, %v1561
        %v3843 = vmul.f32 %v3839, %v1562
        %v3844 = vmul.f32 %v3839, %v1563
        %v3845 = vmul.f32 %v3839, %v1564
        %v3846 = vmul.f32 %v3839, %v1565
        %v3847 = vmul.f32 %v3839, %v1566
        %v3848 = vmul.f32 %v3839, %v1567
        %v3849 = vmul.f32 %v3839, %v1568
        %v3850 = vmul.f32 %v3839, %v1569
        %v3851 = vmul.f32 %v3839, %v1570
        %3864 = vrot.lane.b32.xlu0 %v3840, 124
        %v3865 = vpop.permute.xlu0 %3864
        %3866 = vrot.lane.b32.xlu0 %v3841, 124
        %v3867 = vpop.permute.xlu0 %3866
        %3868 = vrot.lane.b32.xlu0 %v3842, 124
        %v3869 = vpop.permute.xlu0 %3868
        %3870 = vrot.lane.b32.xlu0 %v3843, 124
        %v3871 = vpop.permute.xlu0 %3870
        %3872 = vrot.lane.b32.xlu0 %v3844, 124
        %v3873 = vpop.permute.xlu0 %3872
        %3874 = vrot.lane.b32.xlu0 %v3845, 124
        %v3875 = vpop.permute.xlu0 %3874
        %3876 = vrot.lane.b32.xlu0 %v3846, 124
        %v3877 = vpop.permute.xlu0 %3876
        %3878 = vrot.lane.b32.xlu0 %v3847, 124
        %v3879 = vpop.permute.xlu0 %3878
        %3880 = vrot.lane.b32.xlu0 %v3848, 124
        %v3881 = vpop.permute.xlu0 %3880
        %3882 = vrot.lane.b32.xlu0 %v3849, 124
        %v3883 = vpop.permute.xlu0 %3882
        %3884 = vrot.lane.b32.xlu0 %v3850, 124
        %v3885 = vpop.permute.xlu0 %3884
        %3886 = vrot.lane.b32.xlu0 %v3851, 124
        %v3887 = vpop.permute.xlu0 %3886
        %v3900 = vadd.f32 %v3592, %v3865
        %v3901 = vadd.f32 %v3593, %v3867
        %v3902 = vadd.f32 %v3594, %v3869
        %v3903 = vadd.f32 %v3595, %v3871
        %v3904 = vadd.f32 %v3596, %v3873
        %v3905 = vadd.f32 %v3597, %v3875
        %v3906 = vadd.f32 %v3598, %v3877
        %v3907 = vadd.f32 %v3599, %v3879
        %v3908 = vadd.f32 %v3600, %v3881
        %v3909 = vadd.f32 %v3601, %v3883
        %v3910 = vadd.f32 %v3602, %v3885
        %v3911 = vadd.f32 %v3603, %v3887
        %v3912 = vstv %s1589
        %v3913 = vmul.f32 %v3912, %v1559
        %v3914 = vmul.f32 %v3912, %v1560
        %v3915 = vmul.f32 %v3912, %v1561
        %v3916 = vmul.f32 %v3912, %v1562
        %v3917 = vmul.f32 %v3912, %v1563
        %v3918 = vmul.f32 %v3912, %v1564
        %v3919 = vmul.f32 %v3912, %v1565
        %v3920 = vmul.f32 %v3912, %v1566
        %v3921 = vmul.f32 %v3912, %v1567
        %v3922 = vmul.f32 %v3912, %v1568
        %v3923 = vmul.f32 %v3912, %v1569
        %v3924 = vmul.f32 %v3912, %v1570
        %3937 = vrot.lane.b32.xlu0 %v3913, 124
        %v3938 = vpop.permute.xlu0 %3937
        %3939 = vrot.lane.b32.xlu0 %v3914, 124
        %v3940 = vpop.permute.xlu0 %3939
        %3941 = vrot.lane.b32.xlu0 %v3915, 124
        %v3942 = vpop.permute.xlu0 %3941
        %3943 = vrot.lane.b32.xlu0 %v3916, 124
        %v3944 = vpop.permute.xlu0 %3943
        %3945 = vrot.lane.b32.xlu0 %v3917, 124
        %v3946 = vpop.permute.xlu0 %3945
        %3947 = vrot.lane.b32.xlu0 %v3918, 124
        %v3948 = vpop.permute.xlu0 %3947
        %3949 = vrot.lane.b32.xlu0 %v3919, 124
        %v3950 = vpop.permute.xlu0 %3949
        %3951 = vrot.lane.b32.xlu0 %v3920, 124
        %v3952 = vpop.permute.xlu0 %3951
        %3953 = vrot.lane.b32.xlu0 %v3921, 124
        %v3954 = vpop.permute.xlu0 %3953
        %3955 = vrot.lane.b32.xlu0 %v3922, 124
        %v3956 = vpop.permute.xlu0 %3955
        %3957 = vrot.lane.b32.xlu0 %v3923, 124
        %v3958 = vpop.permute.xlu0 %3957
        %3959 = vrot.lane.b32.xlu0 %v3924, 124
        %v3960 = vpop.permute.xlu0 %3959
        %v3973 = vadd.f32 %v3685, %v3938
        %v3974 = vadd.f32 %v3686, %v3940
        %v3975 = vadd.f32 %v3687, %v3942
        %v3976 = vadd.f32 %v3688, %v3944
        %v3977 = vadd.f32 %v3689, %v3946
        %v3978 = vadd.f32 %v3690, %v3948
        %v3979 = vadd.f32 %v3691, %v3950
        %v3980 = vadd.f32 %v3692, %v3952
        %v3981 = vadd.f32 %v3693, %v3954
        %v3982 = vadd.f32 %v3694, %v3956
        %v3983 = vadd.f32 %v3695, %v3958
        %v3984 = vadd.f32 %v3696, %v3960
        %v3985 = vstv %s1596
        %v3986 = vmul.f32 %v3985, %v1559
        %v3987 = vmul.f32 %v3985, %v1560
        %v3988 = vmul.f32 %v3985, %v1561
        %v3989 = vmul.f32 %v3985, %v1562
        %v3990 = vmul.f32 %v3985, %v1563
        %v3991 = vmul.f32 %v3985, %v1564
        %v3992 = vmul.f32 %v3985, %v1565
        %v3993 = vmul.f32 %v3985, %v1566
        %v3994 = vmul.f32 %v3985, %v1567
        %v3995 = vmul.f32 %v3985, %v1568
        %v3996 = vmul.f32 %v3985, %v1569
        %v3997 = vmul.f32 %v3985, %v1570
        %4010 = vrot.lane.b32.xlu0 %v3986, 124
        %v4011 = vpop.permute.xlu0 %4010
        %4012 = vrot.lane.b32.xlu0 %v3987, 124
        %v4013 = vpop.permute.xlu0 %4012
        %4014 = vrot.lane.b32.xlu0 %v3988, 124
        %v4015 = vpop.permute.xlu0 %4014
        %4016 = vrot.lane.b32.xlu0 %v3989, 124
        %v4017 = vpop.permute.xlu0 %4016
        %4018 = vrot.lane.b32.xlu0 %v3990, 124
        %v4019 = vpop.permute.xlu0 %4018
        %4020 = vrot.lane.b32.xlu0 %v3991, 124
        %v4021 = vpop.permute.xlu0 %4020
        %4022 = vrot.lane.b32.xlu0 %v3992, 124
        %v4023 = vpop.permute.xlu0 %4022
        %4024 = vrot.lane.b32.xlu0 %v3993, 124
        %v4025 = vpop.permute.xlu0 %4024
        %4026 = vrot.lane.b32.xlu0 %v3994, 124
        %v4027 = vpop.permute.xlu0 %4026
        %4028 = vrot.lane.b32.xlu0 %v3995, 124
        %v4029 = vpop.permute.xlu0 %4028
        %4030 = vrot.lane.b32.xlu0 %v3996, 124
        %v4031 = vpop.permute.xlu0 %4030
        %4032 = vrot.lane.b32.xlu0 %v3997, 124
        %v4033 = vpop.permute.xlu0 %4032
        %v4046 = vadd.f32 %v3778, %v4011
        %v4047 = vadd.f32 %v3779, %v4013
        %v4048 = vadd.f32 %v3780, %v4015
        %v4049 = vadd.f32 %v3781, %v4017
        %v4050 = vadd.f32 %v3782, %v4019
        %v4051 = vadd.f32 %v3783, %v4021
        %v4052 = vadd.f32 %v3784, %v4023
        %v4053 = vadd.f32 %v3785, %v4025
        %v4054 = vadd.f32 %v3786, %v4027
        %v4055 = vadd.f32 %v3787, %v4029
        %v4056 = vadd.f32 %v3788, %v4031
        %v4057 = vadd.f32 %v3789, %v4033
        %v4058 = vstv %s1603
        %v4059 = vmul.f32 %v4058, %v1559
        %v4060 = vmul.f32 %v4058, %v1560
        %v4061 = vmul.f32 %v4058, %v1561
        %v4062 = vmul.f32 %v4058, %v1562
        %v4063 = vmul.f32 %v4058, %v1563
        %v4064 = vmul.f32 %v4058, %v1564
        %v4065 = vmul.f32 %v4058, %v1565
        %v4066 = vmul.f32 %v4058, %v1566
        %v4067 = vmul.f32 %v4058, %v1567
        %v4068 = vmul.f32 %v4058, %v1568
        %v4069 = vmul.f32 %v4058, %v1569
        %v4070 = vmul.f32 %v4058, %v1570
        %v4083 = vrot.slane %v4059, 4
        %v4084 = vrot.slane %v4060, 4
        %v4085 = vsel %vm584, %v4083, %v4084
        %v4086 = vrot.slane %v4061, 4
        %v4087 = vsel %vm584, %v4084, %v4086
        %v4088 = vrot.slane %v4062, 4
        %v4089 = vrot.slane %v4063, 4
        %v4090 = vsel %vm584, %v4088, %v4089
        %v4091 = vrot.slane %v4064, 4
        %v4092 = vsel %vm584, %v4089, %v4091
        %v4093 = vrot.slane %v4065, 4
        %v4094 = vrot.slane %v4066, 4
        %v4095 = vsel %vm584, %v4093, %v4094
        %v4096 = vrot.slane %v4067, 4
        %v4097 = vsel %vm584, %v4094, %v4096
        %v4098 = vrot.slane %v4068, 4
        %v4099 = vrot.slane %v4069, 4
        %v4100 = vsel %vm584, %v4098, %v4099
        %v4101 = vrot.slane %v4070, 4
        %v4102 = vsel %vm584, %v4099, %v4101
        %4103 = vrot.lane.b32.xlu0 %v4085, 124
        %v4104 = vpop.permute.xlu0 %4103
        %4105 = vrot.lane.b32.xlu0 %v4087, 124
        %v4106 = vpop.permute.xlu0 %4105
        %4107 = vrot.lane.b32.xlu0 %v4090, 124
        %v4108 = vpop.permute.xlu0 %4107
        %4109 = vrot.lane.b32.xlu0 %v4092, 124
        %v4110 = vpop.permute.xlu0 %4109
        %4111 = vrot.lane.b32.xlu0 %v4095, 124
        %v4112 = vpop.permute.xlu0 %4111
        %4113 = vrot.lane.b32.xlu0 %v4097, 124
        %v4114 = vpop.permute.xlu0 %4113
        %4115 = vrot.lane.b32.xlu0 %v4100, 124
        %v4116 = vpop.permute.xlu0 %4115
        %4117 = vrot.lane.b32.xlu0 %v4102, 124
        %v4118 = vpop.permute.xlu0 %4117
        %v4127 = vadd.f32 %v3831, %v4104
        %v4128 = vadd.f32 %v3832, %v4106
        %v4129 = vadd.f32 %v3833, %v4108
        %v4130 = vadd.f32 %v3834, %v4110
        %v4131 = vadd.f32 %v3835, %v4112
        %v4132 = vadd.f32 %v3836, %v4114
        %v4133 = vadd.f32 %v3837, %v4116
        %v4134 = vadd.f32 %v3838, %v4118
        %v4135 = vstv %s1610
        %v4136 = vmul.f32 %v4135, %v1559
        %v4137 = vmul.f32 %v4135, %v1560
        %v4138 = vmul.f32 %v4135, %v1561
        %v4139 = vmul.f32 %v4135, %v1562
        %v4140 = vmul.f32 %v4135, %v1563
        %v4141 = vmul.f32 %v4135, %v1564
        %v4142 = vmul.f32 %v4135, %v1565
        %v4143 = vmul.f32 %v4135, %v1566
        %v4144 = vmul.f32 %v4135, %v1567
        %v4145 = vmul.f32 %v4135, %v1568
        %v4146 = vmul.f32 %v4135, %v1569
        %v4147 = vmul.f32 %v4135, %v1570
        %v4160 = vrot.slane %v4136, 4
        %v4161 = vrot.slane %v4137, 4
        %v4162 = vsel %vm584, %v4160, %v4161
        %v4163 = vrot.slane %v4138, 4
        %v4164 = vsel %vm584, %v4161, %v4163
        %v4165 = vrot.slane %v4139, 4
        %v4166 = vrot.slane %v4140, 4
        %v4167 = vsel %vm584, %v4165, %v4166
        %v4168 = vrot.slane %v4141, 4
        %v4169 = vsel %vm584, %v4166, %v4168
        %v4170 = vrot.slane %v4142, 4
        %v4171 = vrot.slane %v4143, 4
        %v4172 = vsel %vm584, %v4170, %v4171
        %v4173 = vrot.slane %v4144, 4
        %v4174 = vsel %vm584, %v4171, %v4173
        %v4175 = vrot.slane %v4145, 4
        %v4176 = vrot.slane %v4146, 4
        %v4177 = vsel %vm584, %v4175, %v4176
        %v4178 = vrot.slane %v4147, 4
        %v4179 = vsel %vm584, %v4176, %v4178
        %4180 = vrot.lane.b32.xlu0 %v4162, 124
        %v4181 = vpop.permute.xlu0 %4180
        %4182 = vrot.lane.b32.xlu0 %v4164, 124
        %v4183 = vpop.permute.xlu0 %4182
        %4184 = vrot.lane.b32.xlu0 %v4163, 124
        %v4185 = vpop.permute.xlu0 %4184
        %4186 = vrot.lane.b32.xlu0 %v4167, 124
        %v4187 = vpop.permute.xlu0 %4186
        %4188 = vrot.lane.b32.xlu0 %v4169, 124
        %v4189 = vpop.permute.xlu0 %4188
        %4190 = vrot.lane.b32.xlu0 %v4168, 124
        %v4191 = vpop.permute.xlu0 %4190
        %4192 = vrot.lane.b32.xlu0 %v4172, 124
        %v4193 = vpop.permute.xlu0 %4192
        %4194 = vrot.lane.b32.xlu0 %v4174, 124
        %v4195 = vpop.permute.xlu0 %4194
        %4196 = vrot.lane.b32.xlu0 %v4173, 124
        %v4197 = vpop.permute.xlu0 %4196
        %4198 = vrot.lane.b32.xlu0 %v4177, 124
        %v4199 = vpop.permute.xlu0 %4198
        %4200 = vrot.lane.b32.xlu0 %v4179, 124
        %v4201 = vpop.permute.xlu0 %4200
        %4202 = vrot.lane.b32.xlu0 %v4178, 124
        %v4203 = vpop.permute.xlu0 %4202
        %v4216 = vadd.f32 %v3900, %v4181
        %v4217 = vadd.f32 %v3901, %v4183
        %v4218 = vadd.f32 %v3902, %v4185
        %v4219 = vadd.f32 %v3903, %v4187
        %v4220 = vadd.f32 %v3904, %v4189
        %v4221 = vadd.f32 %v3905, %v4191
        %v4222 = vadd.f32 %v3906, %v4193
        %v4223 = vadd.f32 %v3907, %v4195
        %v4224 = vadd.f32 %v3908, %v4197
        %v4225 = vadd.f32 %v3909, %v4199
        %v4226 = vadd.f32 %v3910, %v4201
        %v4227 = vadd.f32 %v3911, %v4203
        %v4228 = vstv %s1617
        %v4229 = vmul.f32 %v4228, %v1559
        %v4230 = vmul.f32 %v4228, %v1560
        %v4231 = vmul.f32 %v4228, %v1561
        %v4232 = vmul.f32 %v4228, %v1562
        %v4233 = vmul.f32 %v4228, %v1563
        %v4234 = vmul.f32 %v4228, %v1564
        %v4235 = vmul.f32 %v4228, %v1565
        %v4236 = vmul.f32 %v4228, %v1566
        %v4237 = vmul.f32 %v4228, %v1567
        %v4238 = vmul.f32 %v4228, %v1568
        %v4239 = vmul.f32 %v4228, %v1569
        %v4240 = vmul.f32 %v4228, %v1570
        %v4253 = vrot.slane %v4229, 4
        %v4254 = vrot.slane %v4230, 4
        %v4255 = vsel %vm584, %v4253, %v4254
        %v4256 = vrot.slane %v4231, 4
        %v4257 = vsel %vm584, %v4254, %v4256
        %v4258 = vrot.slane %v4232, 4
        %v4259 = vrot.slane %v4233, 4
        %v4260 = vsel %vm584, %v4258, %v4259
        %v4261 = vrot.slane %v4234, 4
        %v4262 = vsel %vm584, %v4259, %v4261
        %v4263 = vrot.slane %v4235, 4
        %v4264 = vrot.slane %v4236, 4
        %v4265 = vsel %vm584, %v4263, %v4264
        %v4266 = vrot.slane %v4237, 4
        %v4267 = vsel %vm584, %v4264, %v4266
        %v4268 = vrot.slane %v4238, 4
        %v4269 = vrot.slane %v4239, 4
        %v4270 = vsel %vm584, %v4268, %v4269
        %v4271 = vrot.slane %v4240, 4
        %v4272 = vsel %vm584, %v4269, %v4271
        %4273 = vrot.lane.b32.xlu0 %v4255, 124
        %v4274 = vpop.permute.xlu0 %4273
        %4275 = vrot.lane.b32.xlu0 %v4257, 124
        %v4276 = vpop.permute.xlu0 %4275
        %4277 = vrot.lane.b32.xlu0 %v4256, 124
        %v4278 = vpop.permute.xlu0 %4277
        %4279 = vrot.lane.b32.xlu0 %v4260, 124
        %v4280 = vpop.permute.xlu0 %4279
        %4281 = vrot.lane.b32.xlu0 %v4262, 124
        %v4282 = vpop.permute.xlu0 %4281
        %4283 = vrot.lane.b32.xlu0 %v4261, 124
        %v4284 = vpop.permute.xlu0 %4283
        %4285 = vrot.lane.b32.xlu0 %v4265, 124
        %v4286 = vpop.permute.xlu0 %4285
        %4287 = vrot.lane.b32.xlu0 %v4267, 124
        %v4288 = vpop.permute.xlu0 %4287
        %4289 = vrot.lane.b32.xlu0 %v4266, 124
        %v4290 = vpop.permute.xlu0 %4289
        %4291 = vrot.lane.b32.xlu0 %v4270, 124
        %v4292 = vpop.permute.xlu0 %4291
        %4293 = vrot.lane.b32.xlu0 %v4272, 124
        %v4294 = vpop.permute.xlu0 %4293
        %4295 = vrot.lane.b32.xlu0 %v4271, 124
        %v4296 = vpop.permute.xlu0 %4295
        %v4309 = vadd.f32 %v3973, %v4274
        %v4310 = vadd.f32 %v3974, %v4276
        %v4311 = vadd.f32 %v3975, %v4278
        %v4312 = vadd.f32 %v3976, %v4280
        %v4313 = vadd.f32 %v3977, %v4282
        %v4314 = vadd.f32 %v3978, %v4284
        %v4315 = vadd.f32 %v3979, %v4286
        %v4316 = vadd.f32 %v3980, %v4288
        %v4317 = vadd.f32 %v3981, %v4290
        %v4318 = vadd.f32 %v3982, %v4292
        %v4319 = vadd.f32 %v3983, %v4294
        %v4320 = vadd.f32 %v3984, %v4296
        %v4321 = vstv %s1576
        %v4322 = vmul.f32 %v4321, %v1559
        %v4323 = vmul.f32 %v4321, %v1560
        %v4324 = vmul.f32 %v4321, %v1562
        %v4325 = vmul.f32 %v4321, %v1563
        %v4326 = vmul.f32 %v4321, %v1565
        %v4327 = vmul.f32 %v4321, %v1566
        %v4328 = vmul.f32 %v4321, %v1568
        %v4329 = vmul.f32 %v4321, %v1569
        %v4338 = vrot.slane %v4322, 5
        %v4339 = vrot.slane %v4323, 5
        %v4340 = vsel %vm1977, %v4338, %v4339
        %v4341 = vrot.slane %v4324, 5
        %v4342 = vrot.slane %v4325, 5
        %v4343 = vsel %vm1977, %v4341, %v4342
        %v4344 = vrot.slane %v4326, 5
        %v4345 = vrot.slane %v4327, 5
        %v4346 = vsel %vm1977, %v4344, %v4345
        %v4347 = vrot.slane %v4328, 5
        %v4348 = vrot.slane %v4329, 5
        %v4349 = vsel %vm1977, %v4347, %v4348
        %4350 = vrot.lane.b32.xlu0 %v4338, 123
        %v4351 = vpop.permute.xlu0 %4350
        %4352 = vrot.lane.b32.xlu0 %v4340, 123
        %v4353 = vpop.permute.xlu0 %4352
        %4354 = vrot.lane.b32.xlu0 %v4339, 123
        %v4355 = vpop.permute.xlu0 %4354
        %4356 = vrot.lane.b32.xlu0 %v4341, 123
        %v4357 = vpop.permute.xlu0 %4356
        %4358 = vrot.lane.b32.xlu0 %v4343, 123
        %v4359 = vpop.permute.xlu0 %4358
        %4360 = vrot.lane.b32.xlu0 %v4342, 123
        %v4361 = vpop.permute.xlu0 %4360
        %4362 = vrot.lane.b32.xlu0 %v4344, 123
        %v4363 = vpop.permute.xlu0 %4362
        %4364 = vrot.lane.b32.xlu0 %v4346, 123
        %v4365 = vpop.permute.xlu0 %4364
        %4366 = vrot.lane.b32.xlu0 %v4345, 123
        %v4367 = vpop.permute.xlu0 %4366
        %4368 = vrot.lane.b32.xlu0 %v4347, 123
        %v4369 = vpop.permute.xlu0 %4368
        %4370 = vrot.lane.b32.xlu0 %v4349, 123
        %v4371 = vpop.permute.xlu0 %4370
        %4372 = vrot.lane.b32.xlu0 %v4348, 123
        %v4373 = vpop.permute.xlu0 %4372
        %v4386 = vadd.f32 %v4046, %v4351
        %v4387 = vadd.f32 %v4047, %v4353
        %v4388 = vadd.f32 %v4048, %v4355
        %v4389 = vadd.f32 %v4049, %v4357
        %v4390 = vadd.f32 %v4050, %v4359
        %v4391 = vadd.f32 %v4051, %v4361
        %v4392 = vadd.f32 %v4052, %v4363
        %v4393 = vadd.f32 %v4053, %v4365
        %v4394 = vadd.f32 %v4054, %v4367
        %v4395 = vadd.f32 %v4055, %v4369
        %v4396 = vadd.f32 %v4056, %v4371
        %v4397 = vadd.f32 %v4057, %v4373
        %v4398 = vstv %s1583
        %v4399 = vmul.f32 %v4398, %v1559
        %v4400 = vmul.f32 %v4398, %v1560
        %v4401 = vmul.f32 %v4398, %v1561
        %v4402 = vmul.f32 %v4398, %v1562
        %v4403 = vmul.f32 %v4398, %v1563
        %v4404 = vmul.f32 %v4398, %v1564
        %v4405 = vmul.f32 %v4398, %v1565
        %v4406 = vmul.f32 %v4398, %v1566
        %v4407 = vmul.f32 %v4398, %v1567
        %v4408 = vmul.f32 %v4398, %v1568
        %v4409 = vmul.f32 %v4398, %v1569
        %v4410 = vmul.f32 %v4398, %v1570
        %v4423 = vrot.slane %v4399, 1
        %v4424 = vrot.slane %v4400, 1
        %v4425 = vsel %vm2063, %v4423, %v4424
        %v4426 = vrot.slane %v4401, 1
        %v4427 = vsel %vm2063, %v4424, %v4426
        %v4428 = vrot.slane %v4402, 1
        %v4429 = vrot.slane %v4403, 1
        %v4430 = vsel %vm2063, %v4428, %v4429
        %v4431 = vrot.slane %v4404, 1
        %v4432 = vsel %vm2063, %v4429, %v4431
        %v4433 = vrot.slane %v4405, 1
        %v4434 = vrot.slane %v4406, 1
        %v4435 = vsel %vm2063, %v4433, %v4434
        %v4436 = vrot.slane %v4407, 1
        %v4437 = vsel %vm2063, %v4434, %v4436
        %v4438 = vrot.slane %v4408, 1
        %v4439 = vrot.slane %v4409, 1
        %v4440 = vsel %vm2063, %v4438, %v4439
        %v4441 = vrot.slane %v4410, 1
        %v4442 = vsel %vm2063, %v4439, %v4441
        %4443 = vrot.lane.b32.xlu0 %v4425, 123
        %v4444 = vpop.permute.xlu0 %4443
        %4445 = vrot.lane.b32.xlu0 %v4427, 123
        %v4446 = vpop.permute.xlu0 %4445
        %4447 = vrot.lane.b32.xlu0 %v4430, 123
        %v4448 = vpop.permute.xlu0 %4447
        %4449 = vrot.lane.b32.xlu0 %v4432, 123
        %v4450 = vpop.permute.xlu0 %4449
        %4451 = vrot.lane.b32.xlu0 %v4435, 123
        %v4452 = vpop.permute.xlu0 %4451
        %4453 = vrot.lane.b32.xlu0 %v4437, 123
        %v4454 = vpop.permute.xlu0 %4453
        %4455 = vrot.lane.b32.xlu0 %v4440, 123
        %v4456 = vpop.permute.xlu0 %4455
        %4457 = vrot.lane.b32.xlu0 %v4442, 123
        %v4458 = vpop.permute.xlu0 %4457
        %v4467 = vadd.f32 %v4127, %v4444
        %v4468 = vadd.f32 %v4128, %v4446
        %v4469 = vadd.f32 %v4129, %v4448
        %v4470 = vadd.f32 %v4130, %v4450
        %v4471 = vadd.f32 %v4131, %v4452
        %v4472 = vadd.f32 %v4132, %v4454
        %v4473 = vadd.f32 %v4133, %v4456
        %v4474 = vadd.f32 %v4134, %v4458
        %v4475 = vstv %s1590
        %v4476 = vmul.f32 %v4475, %v1559
        %v4477 = vmul.f32 %v4475, %v1560
        %v4478 = vmul.f32 %v4475, %v1561
        %v4479 = vmul.f32 %v4475, %v1562
        %v4480 = vmul.f32 %v4475, %v1563
        %v4481 = vmul.f32 %v4475, %v1564
        %v4482 = vmul.f32 %v4475, %v1565
        %v4483 = vmul.f32 %v4475, %v1566
        %v4484 = vmul.f32 %v4475, %v1567
        %v4485 = vmul.f32 %v4475, %v1568
        %v4486 = vmul.f32 %v4475, %v1569
        %v4487 = vmul.f32 %v4475, %v1570
        %v4500 = vrot.slane %v4476, 1
        %v4501 = vrot.slane %v4477, 1
        %v4502 = vsel %vm2063, %v4500, %v4501
        %v4503 = vrot.slane %v4478, 1
        %v4504 = vsel %vm2063, %v4501, %v4503
        %v4505 = vrot.slane %v4479, 1
        %v4506 = vrot.slane %v4480, 1
        %v4507 = vsel %vm2063, %v4505, %v4506
        %v4508 = vrot.slane %v4481, 1
        %v4509 = vsel %vm2063, %v4506, %v4508
        %v4510 = vrot.slane %v4482, 1
        %v4511 = vrot.slane %v4483, 1
        %v4512 = vsel %vm2063, %v4510, %v4511
        %v4513 = vrot.slane %v4484, 1
        %v4514 = vsel %vm2063, %v4511, %v4513
        %v4515 = vrot.slane %v4485, 1
        %v4516 = vrot.slane %v4486, 1
        %v4517 = vsel %vm2063, %v4515, %v4516
        %v4518 = vrot.slane %v4487, 1
        %v4519 = vsel %vm2063, %v4516, %v4518
        %4520 = vrot.lane.b32.xlu0 %v4502, 123
        %v4521 = vpop.permute.xlu0 %4520
        %4522 = vrot.lane.b32.xlu0 %v4504, 123
        %v4523 = vpop.permute.xlu0 %4522
        %4524 = vrot.lane.b32.xlu0 %v4503, 123
        %v4525 = vpop.permute.xlu0 %4524
        %4526 = vrot.lane.b32.xlu0 %v4507, 123
        %v4527 = vpop.permute.xlu0 %4526
        %4528 = vrot.lane.b32.xlu0 %v4509, 123
        %v4529 = vpop.permute.xlu0 %4528
        %4530 = vrot.lane.b32.xlu0 %v4508, 123
        %v4531 = vpop.permute.xlu0 %4530
        %4532 = vrot.lane.b32.xlu0 %v4512, 123
        %v4533 = vpop.permute.xlu0 %4532
        %4534 = vrot.lane.b32.xlu0 %v4514, 123
        %v4535 = vpop.permute.xlu0 %4534
        %4536 = vrot.lane.b32.xlu0 %v4513, 123
        %v4537 = vpop.permute.xlu0 %4536
        %4538 = vrot.lane.b32.xlu0 %v4517, 123
        %v4539 = vpop.permute.xlu0 %4538
        %4540 = vrot.lane.b32.xlu0 %v4519, 123
        %v4541 = vpop.permute.xlu0 %4540
        %4542 = vrot.lane.b32.xlu0 %v4518, 123
        %v4543 = vpop.permute.xlu0 %4542
        %v4556 = vadd.f32 %v4216, %v4521
        %v4557 = vadd.f32 %v4217, %v4523
        %v4558 = vadd.f32 %v4218, %v4525
        %v4559 = vadd.f32 %v4219, %v4527
        %v4560 = vadd.f32 %v4220, %v4529
        %v4561 = vadd.f32 %v4221, %v4531
        %v4562 = vadd.f32 %v4222, %v4533
        %v4563 = vadd.f32 %v4223, %v4535
        %v4564 = vadd.f32 %v4224, %v4537
        %v4565 = vadd.f32 %v4225, %v4539
        %v4566 = vadd.f32 %v4226, %v4541
        %v4567 = vadd.f32 %v4227, %v4543
        %v4568 = vstv %s1597
        %v4569 = vmul.f32 %v4568, %v1559
        %v4570 = vmul.f32 %v4568, %v1560
        %v4571 = vmul.f32 %v4568, %v1561
        %v4572 = vmul.f32 %v4568, %v1562
        %v4573 = vmul.f32 %v4568, %v1563
        %v4574 = vmul.f32 %v4568, %v1564
        %v4575 = vmul.f32 %v4568, %v1565
        %v4576 = vmul.f32 %v4568, %v1566
        %v4577 = vmul.f32 %v4568, %v1567
        %v4578 = vmul.f32 %v4568, %v1568
        %v4579 = vmul.f32 %v4568, %v1569
        %v4580 = vmul.f32 %v4568, %v1570
        %v4593 = vrot.slane %v4569, 1
        %v4594 = vrot.slane %v4570, 1
        %v4595 = vsel %vm2063, %v4593, %v4594
        %v4596 = vrot.slane %v4571, 1
        %v4597 = vsel %vm2063, %v4594, %v4596
        %v4598 = vrot.slane %v4572, 1
        %v4599 = vrot.slane %v4573, 1
        %v4600 = vsel %vm2063, %v4598, %v4599
        %v4601 = vrot.slane %v4574, 1
        %v4602 = vsel %vm2063, %v4599, %v4601
        %v4603 = vrot.slane %v4575, 1
        %v4604 = vrot.slane %v4576, 1
        %v4605 = vsel %vm2063, %v4603, %v4604
        %v4606 = vrot.slane %v4577, 1
        %v4607 = vsel %vm2063, %v4604, %v4606
        %v4608 = vrot.slane %v4578, 1
        %v4609 = vrot.slane %v4579, 1
        %v4610 = vsel %vm2063, %v4608, %v4609
        %v4611 = vrot.slane %v4580, 1
        %v4612 = vsel %vm2063, %v4609, %v4611
        %4613 = vrot.lane.b32.xlu0 %v4595, 123
        %v4614 = vpop.permute.xlu0 %4613
        %4615 = vrot.lane.b32.xlu0 %v4597, 123
        %v4616 = vpop.permute.xlu0 %4615
        %4617 = vrot.lane.b32.xlu0 %v4596, 123
        %v4618 = vpop.permute.xlu0 %4617
        %4619 = vrot.lane.b32.xlu0 %v4600, 123
        %v4620 = vpop.permute.xlu0 %4619
        %4621 = vrot.lane.b32.xlu0 %v4602, 123
        %v4622 = vpop.permute.xlu0 %4621
        %4623 = vrot.lane.b32.xlu0 %v4601, 123
        %v4624 = vpop.permute.xlu0 %4623
        %4625 = vrot.lane.b32.xlu0 %v4605, 123
        %v4626 = vpop.permute.xlu0 %4625
        %4627 = vrot.lane.b32.xlu0 %v4607, 123
        %v4628 = vpop.permute.xlu0 %4627
        %4629 = vrot.lane.b32.xlu0 %v4606, 123
        %v4630 = vpop.permute.xlu0 %4629
        %4631 = vrot.lane.b32.xlu0 %v4610, 123
        %v4632 = vpop.permute.xlu0 %4631
        %4633 = vrot.lane.b32.xlu0 %v4612, 123
        %v4634 = vpop.permute.xlu0 %4633
        %4635 = vrot.lane.b32.xlu0 %v4611, 123
        %v4636 = vpop.permute.xlu0 %4635
        %v4649 = vadd.f32 %v4309, %v4614
        %v4650 = vadd.f32 %v4310, %v4616
        %v4651 = vadd.f32 %v4311, %v4618
        %v4652 = vadd.f32 %v4312, %v4620
        %v4653 = vadd.f32 %v4313, %v4622
        %v4654 = vadd.f32 %v4314, %v4624
        %v4655 = vadd.f32 %v4315, %v4626
        %v4656 = vadd.f32 %v4316, %v4628
        %v4657 = vadd.f32 %v4317, %v4630
        %v4658 = vadd.f32 %v4318, %v4632
        %v4659 = vadd.f32 %v4319, %v4634
        %v4660 = vadd.f32 %v4320, %v4636
        %v4661 = vstv %s1604
        %v4662 = vmul.f32 %v4661, %v1559
        %v4663 = vmul.f32 %v4661, %v1560
        %v4664 = vmul.f32 %v4661, %v1561
        %v4665 = vmul.f32 %v4661, %v1562
        %v4666 = vmul.f32 %v4661, %v1563
        %v4667 = vmul.f32 %v4661, %v1564
        %v4668 = vmul.f32 %v4661, %v1565
        %v4669 = vmul.f32 %v4661, %v1566
        %v4670 = vmul.f32 %v4661, %v1567
        %v4671 = vmul.f32 %v4661, %v1568
        %v4672 = vmul.f32 %v4661, %v1569
        %v4673 = vmul.f32 %v4661, %v1570
        %v4686 = vrot.slane %v4662, 1
        %v4687 = vrot.slane %v4663, 1
        %v4688 = vsel %vm2063, %v4686, %v4687
        %v4689 = vrot.slane %v4664, 1
        %v4690 = vsel %vm2063, %v4687, %v4689
        %v4691 = vrot.slane %v4665, 1
        %v4692 = vrot.slane %v4666, 1
        %v4693 = vsel %vm2063, %v4691, %v4692
        %v4694 = vrot.slane %v4667, 1
        %v4695 = vsel %vm2063, %v4692, %v4694
        %v4696 = vrot.slane %v4668, 1
        %v4697 = vrot.slane %v4669, 1
        %v4698 = vsel %vm2063, %v4696, %v4697
        %v4699 = vrot.slane %v4670, 1
        %v4700 = vsel %vm2063, %v4697, %v4699
        %v4701 = vrot.slane %v4671, 1
        %v4702 = vrot.slane %v4672, 1
        %v4703 = vsel %vm2063, %v4701, %v4702
        %v4704 = vrot.slane %v4673, 1
        %v4705 = vsel %vm2063, %v4702, %v4704
        %4706 = vrot.lane.b32.xlu0 %v4688, 123
        %v4707 = vpop.permute.xlu0 %4706
        %4708 = vrot.lane.b32.xlu0 %v4690, 123
        %v4709 = vpop.permute.xlu0 %4708
        %4710 = vrot.lane.b32.xlu0 %v4689, 123
        %v4711 = vpop.permute.xlu0 %4710
        %4712 = vrot.lane.b32.xlu0 %v4693, 123
        %v4713 = vpop.permute.xlu0 %4712
        %4714 = vrot.lane.b32.xlu0 %v4695, 123
        %v4715 = vpop.permute.xlu0 %4714
        %4716 = vrot.lane.b32.xlu0 %v4694, 123
        %v4717 = vpop.permute.xlu0 %4716
        %4718 = vrot.lane.b32.xlu0 %v4698, 123
        %v4719 = vpop.permute.xlu0 %4718
        %4720 = vrot.lane.b32.xlu0 %v4700, 123
        %v4721 = vpop.permute.xlu0 %4720
        %4722 = vrot.lane.b32.xlu0 %v4699, 123
        %v4723 = vpop.permute.xlu0 %4722
        %4724 = vrot.lane.b32.xlu0 %v4703, 123
        %v4725 = vpop.permute.xlu0 %4724
        %4726 = vrot.lane.b32.xlu0 %v4705, 123
        %v4727 = vpop.permute.xlu0 %4726
        %4728 = vrot.lane.b32.xlu0 %v4704, 123
        %v4729 = vpop.permute.xlu0 %4728
        %v4742 = vadd.f32 %v4386, %v4707
        %v4743 = vadd.f32 %v4387, %v4709
        %v4744 = vadd.f32 %v4388, %v4711
        %v4745 = vadd.f32 %v4389, %v4713
        %v4746 = vadd.f32 %v4390, %v4715
        %v4747 = vadd.f32 %v4391, %v4717
        %v4748 = vadd.f32 %v4392, %v4719
        %v4749 = vadd.f32 %v4393, %v4721
        %v4750 = vadd.f32 %v4394, %v4723
        %v4751 = vadd.f32 %v4395, %v4725
        %v4752 = vadd.f32 %v4396, %v4727
        %v4753 = vadd.f32 %v4397, %v4729
        %v4754 = vstv %s1611
        %v4755 = vmul.f32 %v4754, %v1559
        %v4756 = vmul.f32 %v4754, %v1560
        %v4757 = vmul.f32 %v4754, %v1561
        %v4758 = vmul.f32 %v4754, %v1562
        %v4759 = vmul.f32 %v4754, %v1563
        %v4760 = vmul.f32 %v4754, %v1564
        %v4761 = vmul.f32 %v4754, %v1565
        %v4762 = vmul.f32 %v4754, %v1566
        %v4763 = vmul.f32 %v4754, %v1567
        %v4764 = vmul.f32 %v4754, %v1568
        %v4765 = vmul.f32 %v4754, %v1569
        %v4766 = vmul.f32 %v4754, %v1570
        %v4779 = vrot.slane %v4755, 5
        %v4780 = vrot.slane %v4756, 5
        %v4781 = vsel %vm1977, %v4779, %v4780
        %v4782 = vrot.slane %v4757, 5
        %v4783 = vsel %vm1977, %v4780, %v4782
        %v4784 = vrot.slane %v4758, 5
        %v4785 = vrot.slane %v4759, 5
        %v4786 = vsel %vm1977, %v4784, %v4785
        %v4787 = vrot.slane %v4760, 5
        %v4788 = vsel %vm1977, %v4785, %v4787
        %v4789 = vrot.slane %v4761, 5
        %v4790 = vrot.slane %v4762, 5
        %v4791 = vsel %vm1977, %v4789, %v4790
        %v4792 = vrot.slane %v4763, 5
        %v4793 = vsel %vm1977, %v4790, %v4792
        %v4794 = vrot.slane %v4764, 5
        %v4795 = vrot.slane %v4765, 5
        %v4796 = vsel %vm1977, %v4794, %v4795
        %v4797 = vrot.slane %v4766, 5
        %v4798 = vsel %vm1977, %v4795, %v4797
        %4799 = vrot.lane.b32.xlu0 %v4781, 123
        %v4800 = vpop.permute.xlu0 %4799
        %4801 = vrot.lane.b32.xlu0 %v4783, 123
        %v4802 = vpop.permute.xlu0 %4801
        %4803 = vrot.lane.b32.xlu0 %v4786, 123
        %v4804 = vpop.permute.xlu0 %4803
        %4805 = vrot.lane.b32.xlu0 %v4788, 123
        %v4806 = vpop.permute.xlu0 %4805
        %4807 = vrot.lane.b32.xlu0 %v4791, 123
        %v4808 = vpop.permute.xlu0 %4807
        %4809 = vrot.lane.b32.xlu0 %v4793, 123
        %v4810 = vpop.permute.xlu0 %4809
        %4811 = vrot.lane.b32.xlu0 %v4796, 123
        %v4812 = vpop.permute.xlu0 %4811
        %4813 = vrot.lane.b32.xlu0 %v4798, 123
        %v4814 = vpop.permute.xlu0 %4813
        %v4823 = vadd.f32 %v4467, %v4800
        %v4824 = vadd.f32 %v4468, %v4802
        %v4825 = vadd.f32 %v4469, %v4804
        %v4826 = vadd.f32 %v4470, %v4806
        %v4827 = vadd.f32 %v4471, %v4808
        %v4828 = vadd.f32 %v4472, %v4810
        %v4829 = vadd.f32 %v4473, %v4812
        %v4830 = vadd.f32 %v4474, %v4814
        %v4831 = vstv %s1618
        %v4832 = vmul.f32 %v4831, %v1559
        %v4833 = vmul.f32 %v4831, %v1560
        %v4834 = vmul.f32 %v4831, %v1561
        %v4835 = vmul.f32 %v4831, %v1562
        %v4836 = vmul.f32 %v4831, %v1563
        %v4837 = vmul.f32 %v4831, %v1564
        %v4838 = vmul.f32 %v4831, %v1565
        %v4839 = vmul.f32 %v4831, %v1566
        %v4840 = vmul.f32 %v4831, %v1567
        %v4841 = vmul.f32 %v4831, %v1568
        %v4842 = vmul.f32 %v4831, %v1569
        %v4843 = vmul.f32 %v4831, %v1570
        %v4856 = vrot.slane %v4832, 5
        %v4857 = vrot.slane %v4833, 5
        %v4858 = vsel %vm1977, %v4856, %v4857
        %v4859 = vrot.slane %v4834, 5
        %v4860 = vsel %vm1977, %v4857, %v4859
        %v4861 = vrot.slane %v4835, 5
        %v4862 = vrot.slane %v4836, 5
        %v4863 = vsel %vm1977, %v4861, %v4862
        %v4864 = vrot.slane %v4837, 5
        %v4865 = vsel %vm1977, %v4862, %v4864
        %v4866 = vrot.slane %v4838, 5
        %v4867 = vrot.slane %v4839, 5
        %v4868 = vsel %vm1977, %v4866, %v4867
        %v4869 = vrot.slane %v4840, 5
        %v4870 = vsel %vm1977, %v4867, %v4869
        %v4871 = vrot.slane %v4841, 5
        %v4872 = vrot.slane %v4842, 5
        %v4873 = vsel %vm1977, %v4871, %v4872
        %v4874 = vrot.slane %v4843, 5
        %v4875 = vsel %vm1977, %v4872, %v4874
        %4876 = vrot.lane.b32.xlu0 %v4858, 123
        %v4877 = vpop.permute.xlu0 %4876
        %4878 = vrot.lane.b32.xlu0 %v4860, 123
        %v4879 = vpop.permute.xlu0 %4878
        %4880 = vrot.lane.b32.xlu0 %v4859, 123
        %v4881 = vpop.permute.xlu0 %4880
        %4882 = vrot.lane.b32.xlu0 %v4863, 123
        %v4883 = vpop.permute.xlu0 %4882
        %4884 = vrot.lane.b32.xlu0 %v4865, 123
        %v4885 = vpop.permute.xlu0 %4884
        %4886 = vrot.lane.b32.xlu0 %v4864, 123
        %v4887 = vpop.permute.xlu0 %4886
        %4888 = vrot.lane.b32.xlu0 %v4868, 123
        %v4889 = vpop.permute.xlu0 %4888
        %4890 = vrot.lane.b32.xlu0 %v4870, 123
        %v4891 = vpop.permute.xlu0 %4890
        %4892 = vrot.lane.b32.xlu0 %v4869, 123
        %v4893 = vpop.permute.xlu0 %4892
        %4894 = vrot.lane.b32.xlu0 %v4873, 123
        %v4895 = vpop.permute.xlu0 %4894
        %4896 = vrot.lane.b32.xlu0 %v4875, 123
        %v4897 = vpop.permute.xlu0 %4896
        %4898 = vrot.lane.b32.xlu0 %v4874, 123
        %v4899 = vpop.permute.xlu0 %4898
        %v4912 = vadd.f32 %v4556, %v4877
        %v4913 = vadd.f32 %v4557, %v4879
        %v4914 = vadd.f32 %v4558, %v4881
        %v4915 = vadd.f32 %v4559, %v4883
        %v4916 = vadd.f32 %v4560, %v4885
        %v4917 = vadd.f32 %v4561, %v4887
        %v4918 = vadd.f32 %v4562, %v4889
        %v4919 = vadd.f32 %v4563, %v4891
        %v4920 = vadd.f32 %v4564, %v4893
        %v4921 = vadd.f32 %v4565, %v4895
        %v4922 = vadd.f32 %v4566, %v4897
        %v4923 = vadd.f32 %v4567, %v4899
        %v4924 = vstv %s1577
        %v4925 = vmul.f32 %v4924, %v1559
        %v4926 = vmul.f32 %v4924, %v1560
        %v4927 = vmul.f32 %v4924, %v1562
        %v4928 = vmul.f32 %v4924, %v1563
        %v4929 = vmul.f32 %v4924, %v1565
        %v4930 = vmul.f32 %v4924, %v1566
        %v4931 = vmul.f32 %v4924, %v1568
        %v4932 = vmul.f32 %v4924, %v1569
        %v4941 = vrot.slane %v4925, 6
        %v4942 = vrot.slane %v4926, 6
        %v4943 = vsel %vm670, %v4941, %v4942
        %v4944 = vrot.slane %v4927, 6
        %v4945 = vrot.slane %v4928, 6
        %v4946 = vsel %vm670, %v4944, %v4945
        %v4947 = vrot.slane %v4929, 6
        %v4948 = vrot.slane %v4930, 6
        %v4949 = vsel %vm670, %v4947, %v4948
        %v4950 = vrot.slane %v4931, 6
        %v4951 = vrot.slane %v4932, 6
        %v4952 = vsel %vm670, %v4950, %v4951
        %4953 = vrot.lane.b32.xlu0 %v4941, 122
        %v4954 = vpop.permute.xlu0 %4953
        %4955 = vrot.lane.b32.xlu0 %v4943, 122
        %v4956 = vpop.permute.xlu0 %4955
        %4957 = vrot.lane.b32.xlu0 %v4942, 122
        %v4958 = vpop.permute.xlu0 %4957
        %4959 = vrot.lane.b32.xlu0 %v4944, 122
        %v4960 = vpop.permute.xlu0 %4959
        %4961 = vrot.lane.b32.xlu0 %v4946, 122
        %v4962 = vpop.permute.xlu0 %4961
        %4963 = vrot.lane.b32.xlu0 %v4945, 122
        %v4964 = vpop.permute.xlu0 %4963
        %4965 = vrot.lane.b32.xlu0 %v4947, 122
        %v4966 = vpop.permute.xlu0 %4965
        %4967 = vrot.lane.b32.xlu0 %v4949, 122
        %v4968 = vpop.permute.xlu0 %4967
        %4969 = vrot.lane.b32.xlu0 %v4948, 122
        %v4970 = vpop.permute.xlu0 %4969
        %4971 = vrot.lane.b32.xlu0 %v4950, 122
        %v4972 = vpop.permute.xlu0 %4971
        %4973 = vrot.lane.b32.xlu0 %v4952, 122
        %v4974 = vpop.permute.xlu0 %4973
        %4975 = vrot.lane.b32.xlu0 %v4951, 122
        %v4976 = vpop.permute.xlu0 %4975
        %v4989 = vadd.f32 %v4649, %v4954
        %v4990 = vadd.f32 %v4650, %v4956
        %v4991 = vadd.f32 %v4651, %v4958
        %v4992 = vadd.f32 %v4652, %v4960
        %v4993 = vadd.f32 %v4653, %v4962
        %v4994 = vadd.f32 %v4654, %v4964
        %v4995 = vadd.f32 %v4655, %v4966
        %v4996 = vadd.f32 %v4656, %v4968
        %v4997 = vadd.f32 %v4657, %v4970
        %v4998 = vadd.f32 %v4658, %v4972
        %v4999 = vadd.f32 %v4659, %v4974
        %v5000 = vadd.f32 %v4660, %v4976
        %v5001 = vstv %s1584
        %v5002 = vmul.f32 %v5001, %v1559
        %v5003 = vmul.f32 %v5001, %v1560
        %v5004 = vmul.f32 %v5001, %v1561
        %v5005 = vmul.f32 %v5001, %v1562
        %v5006 = vmul.f32 %v5001, %v1563
        %v5007 = vmul.f32 %v5001, %v1564
        %v5008 = vmul.f32 %v5001, %v1565
        %v5009 = vmul.f32 %v5001, %v1566
        %v5010 = vmul.f32 %v5001, %v1567
        %v5011 = vmul.f32 %v5001, %v1568
        %v5012 = vmul.f32 %v5001, %v1569
        %v5013 = vmul.f32 %v5001, %v1570
        %v5026 = vrot.slane %v5002, 6
        %v5027 = vrot.slane %v5003, 6
        %v5028 = vsel %vm670, %v5026, %v5027
        %v5029 = vrot.slane %v5004, 6
        %v5030 = vsel %vm670, %v5027, %v5029
        %v5031 = vrot.slane %v5005, 6
        %v5032 = vrot.slane %v5006, 6
        %v5033 = vsel %vm670, %v5031, %v5032
        %v5034 = vrot.slane %v5007, 6
        %v5035 = vsel %vm670, %v5032, %v5034
        %v5036 = vrot.slane %v5008, 6
        %v5037 = vrot.slane %v5009, 6
        %v5038 = vsel %vm670, %v5036, %v5037
        %v5039 = vrot.slane %v5010, 6
        %v5040 = vsel %vm670, %v5037, %v5039
        %v5041 = vrot.slane %v5011, 6
        %v5042 = vrot.slane %v5012, 6
        %v5043 = vsel %vm670, %v5041, %v5042
        %v5044 = vrot.slane %v5013, 6
        %v5045 = vsel %vm670, %v5042, %v5044
        %5046 = vrot.lane.b32.xlu0 %v5026, 122
        %v5047 = vpop.permute.xlu0 %5046
        %5048 = vrot.lane.b32.xlu0 %v5028, 122
        %v5049 = vpop.permute.xlu0 %5048
        %5050 = vrot.lane.b32.xlu0 %v5030, 122
        %v5051 = vpop.permute.xlu0 %5050
        %5052 = vrot.lane.b32.xlu0 %v5031, 122
        %v5053 = vpop.permute.xlu0 %5052
        %5054 = vrot.lane.b32.xlu0 %v5033, 122
        %v5055 = vpop.permute.xlu0 %5054
        %5056 = vrot.lane.b32.xlu0 %v5035, 122
        %v5057 = vpop.permute.xlu0 %5056
        %5058 = vrot.lane.b32.xlu0 %v5036, 122
        %v5059 = vpop.permute.xlu0 %5058
        %5060 = vrot.lane.b32.xlu0 %v5038, 122
        %v5061 = vpop.permute.xlu0 %5060
        %5062 = vrot.lane.b32.xlu0 %v5040, 122
        %v5063 = vpop.permute.xlu0 %5062
        %5064 = vrot.lane.b32.xlu0 %v5041, 122
        %v5065 = vpop.permute.xlu0 %5064
        %5066 = vrot.lane.b32.xlu0 %v5043, 122
        %v5067 = vpop.permute.xlu0 %5066
        %5068 = vrot.lane.b32.xlu0 %v5045, 122
        %v5069 = vpop.permute.xlu0 %5068
        %v5082 = vadd.f32 %v4742, %v5047
        %v5083 = vadd.f32 %v4743, %v5049
        %v5084 = vadd.f32 %v4744, %v5051
        %v5085 = vadd.f32 %v4745, %v5053
        %v5086 = vadd.f32 %v4746, %v5055
        %v5087 = vadd.f32 %v4747, %v5057
        %v5088 = vadd.f32 %v4748, %v5059
        %v5089 = vadd.f32 %v4749, %v5061
        %v5090 = vadd.f32 %v4750, %v5063
        %v5091 = vadd.f32 %v4751, %v5065
        %v5092 = vadd.f32 %v4752, %v5067
        %v5093 = vadd.f32 %v4753, %v5069
        %v5094 = vstv %s1591
        %v5095 = vmul.f32 %v5094, %v1559
        %v5096 = vmul.f32 %v5094, %v1560
        %v5097 = vmul.f32 %v5094, %v1561
        %v5098 = vmul.f32 %v5094, %v1562
        %v5099 = vmul.f32 %v5094, %v1563
        %v5100 = vmul.f32 %v5094, %v1564
        %v5101 = vmul.f32 %v5094, %v1565
        %v5102 = vmul.f32 %v5094, %v1566
        %v5103 = vmul.f32 %v5094, %v1567
        %v5104 = vmul.f32 %v5094, %v1568
        %v5105 = vmul.f32 %v5094, %v1569
        %v5106 = vmul.f32 %v5094, %v1570
        %v5119 = vrot.slane %v5095, 2
        %v5120 = vrot.slane %v5096, 2
        %v5121 = vsel %vm2760, %v5119, %v5120
        %v5122 = vrot.slane %v5097, 2
        %v5123 = vsel %vm2760, %v5120, %v5122
        %v5124 = vrot.slane %v5098, 2
        %v5125 = vrot.slane %v5099, 2
        %v5126 = vsel %vm2760, %v5124, %v5125
        %v5127 = vrot.slane %v5100, 2
        %v5128 = vsel %vm2760, %v5125, %v5127
        %v5129 = vrot.slane %v5101, 2
        %v5130 = vrot.slane %v5102, 2
        %v5131 = vsel %vm2760, %v5129, %v5130
        %v5132 = vrot.slane %v5103, 2
        %v5133 = vsel %vm2760, %v5130, %v5132
        %v5134 = vrot.slane %v5104, 2
        %v5135 = vrot.slane %v5105, 2
        %v5136 = vsel %vm2760, %v5134, %v5135
        %v5137 = vrot.slane %v5106, 2
        %v5138 = vsel %vm2760, %v5135, %v5137
        %5139 = vrot.lane.b32.xlu0 %v5121, 122
        %v5140 = vpop.permute.xlu0 %5139
        %5141 = vrot.lane.b32.xlu0 %v5123, 122
        %v5142 = vpop.permute.xlu0 %5141
        %5143 = vrot.lane.b32.xlu0 %v5126, 122
        %v5144 = vpop.permute.xlu0 %5143
        %5145 = vrot.lane.b32.xlu0 %v5128, 122
        %v5146 = vpop.permute.xlu0 %5145
        %5147 = vrot.lane.b32.xlu0 %v5131, 122
        %v5148 = vpop.permute.xlu0 %5147
        %5149 = vrot.lane.b32.xlu0 %v5133, 122
        %v5150 = vpop.permute.xlu0 %5149
        %5151 = vrot.lane.b32.xlu0 %v5136, 122
        %v5152 = vpop.permute.xlu0 %5151
        %5153 = vrot.lane.b32.xlu0 %v5138, 122
        %v5154 = vpop.permute.xlu0 %5153
        %v5163 = vadd.f32 %v4823, %v5140
        %v5164 = vadd.f32 %v4824, %v5142
        %v5165 = vadd.f32 %v4825, %v5144
        %v5166 = vadd.f32 %v4826, %v5146
        %v5167 = vadd.f32 %v4827, %v5148
        %v5168 = vadd.f32 %v4828, %v5150
        %v5169 = vadd.f32 %v4829, %v5152
        %v5170 = vadd.f32 %v4830, %v5154
        %v5171 = vstv %s1598
        %v5172 = vmul.f32 %v5171, %v1559
        %v5173 = vmul.f32 %v5171, %v1560
        %v5174 = vmul.f32 %v5171, %v1561
        %v5175 = vmul.f32 %v5171, %v1562
        %v5176 = vmul.f32 %v5171, %v1563
        %v5177 = vmul.f32 %v5171, %v1564
        %v5178 = vmul.f32 %v5171, %v1565
        %v5179 = vmul.f32 %v5171, %v1566
        %v5180 = vmul.f32 %v5171, %v1567
        %v5181 = vmul.f32 %v5171, %v1568
        %v5182 = vmul.f32 %v5171, %v1569
        %v5183 = vmul.f32 %v5171, %v1570
        %v5196 = vrot.slane %v5172, 2
        %v5197 = vrot.slane %v5173, 2
        %v5198 = vsel %vm2760, %v5196, %v5197
        %v5199 = vrot.slane %v5174, 2
        %v5200 = vsel %vm2760, %v5197, %v5199
        %v5201 = vrot.slane %v5175, 2
        %v5202 = vrot.slane %v5176, 2
        %v5203 = vsel %vm2760, %v5201, %v5202
        %v5204 = vrot.slane %v5177, 2
        %v5205 = vsel %vm2760, %v5202, %v5204
        %v5206 = vrot.slane %v5178, 2
        %v5207 = vrot.slane %v5179, 2
        %v5208 = vsel %vm2760, %v5206, %v5207
        %v5209 = vrot.slane %v5180, 2
        %v5210 = vsel %vm2760, %v5207, %v5209
        %v5211 = vrot.slane %v5181, 2
        %v5212 = vrot.slane %v5182, 2
        %v5213 = vsel %vm2760, %v5211, %v5212
        %v5214 = vrot.slane %v5183, 2
        %v5215 = vsel %vm2760, %v5212, %v5214
        %5216 = vrot.lane.b32.xlu0 %v5198, 122
        %v5217 = vpop.permute.xlu0 %5216
        %5218 = vrot.lane.b32.xlu0 %v5200, 122
        %v5219 = vpop.permute.xlu0 %5218
        %5220 = vrot.lane.b32.xlu0 %v5199, 122
        %v5221 = vpop.permute.xlu0 %5220
        %5222 = vrot.lane.b32.xlu0 %v5203, 122
        %v5223 = vpop.permute.xlu0 %5222
        %5224 = vrot.lane.b32.xlu0 %v5205, 122
        %v5225 = vpop.permute.xlu0 %5224
        %5226 = vrot.lane.b32.xlu0 %v5204, 122
        %v5227 = vpop.permute.xlu0 %5226
        %5228 = vrot.lane.b32.xlu0 %v5208, 122
        %v5229 = vpop.permute.xlu0 %5228
        %5230 = vrot.lane.b32.xlu0 %v5210, 122
        %v5231 = vpop.permute.xlu0 %5230
        %5232 = vrot.lane.b32.xlu0 %v5209, 122
        %v5233 = vpop.permute.xlu0 %5232
        %5234 = vrot.lane.b32.xlu0 %v5213, 122
        %v5235 = vpop.permute.xlu0 %5234
        %5236 = vrot.lane.b32.xlu0 %v5215, 122
        %v5237 = vpop.permute.xlu0 %5236
        %5238 = vrot.lane.b32.xlu0 %v5214, 122
        %v5239 = vpop.permute.xlu0 %5238
        %v5252 = vadd.f32 %v4912, %v5217
        %v5253 = vadd.f32 %v4913, %v5219
        %v5254 = vadd.f32 %v4914, %v5221
        %v5255 = vadd.f32 %v4915, %v5223
        %v5256 = vadd.f32 %v4916, %v5225
        %v5257 = vadd.f32 %v4917, %v5227
        %v5258 = vadd.f32 %v4918, %v5229
        %v5259 = vadd.f32 %v4919, %v5231
        %v5260 = vadd.f32 %v4920, %v5233
        %v5261 = vadd.f32 %v4921, %v5235
        %v5262 = vadd.f32 %v4922, %v5237
        %v5263 = vadd.f32 %v4923, %v5239
        %v5264 = vstv %s1605
        %v5265 = vmul.f32 %v5264, %v1559
        %v5266 = vmul.f32 %v5264, %v1560
        %v5267 = vmul.f32 %v5264, %v1561
        %v5268 = vmul.f32 %v5264, %v1562
        %v5269 = vmul.f32 %v5264, %v1563
        %v5270 = vmul.f32 %v5264, %v1564
        %v5271 = vmul.f32 %v5264, %v1565
        %v5272 = vmul.f32 %v5264, %v1566
        %v5273 = vmul.f32 %v5264, %v1567
        %v5274 = vmul.f32 %v5264, %v1568
        %v5275 = vmul.f32 %v5264, %v1569
        %v5276 = vmul.f32 %v5264, %v1570
        %v5289 = vrot.slane %v5265, 2
        %v5290 = vrot.slane %v5266, 2
        %v5291 = vsel %vm2760, %v5289, %v5290
        %v5292 = vrot.slane %v5267, 2
        %v5293 = vsel %vm2760, %v5290, %v5292
        %v5294 = vrot.slane %v5268, 2
        %v5295 = vrot.slane %v5269, 2
        %v5296 = vsel %vm2760, %v5294, %v5295
        %v5297 = vrot.slane %v5270, 2
        %v5298 = vsel %vm2760, %v5295, %v5297
        %v5299 = vrot.slane %v5271, 2
        %v5300 = vrot.slane %v5272, 2
        %v5301 = vsel %vm2760, %v5299, %v5300
        %v5302 = vrot.slane %v5273, 2
        %v5303 = vsel %vm2760, %v5300, %v5302
        %v5304 = vrot.slane %v5274, 2
        %v5305 = vrot.slane %v5275, 2
        %v5306 = vsel %vm2760, %v5304, %v5305
        %v5307 = vrot.slane %v5276, 2
        %v5308 = vsel %vm2760, %v5305, %v5307
        %5309 = vrot.lane.b32.xlu0 %v5291, 122
        %v5310 = vpop.permute.xlu0 %5309
        %5311 = vrot.lane.b32.xlu0 %v5293, 122
        %v5312 = vpop.permute.xlu0 %5311
        %5313 = vrot.lane.b32.xlu0 %v5292, 122
        %v5314 = vpop.permute.xlu0 %5313
        %5315 = vrot.lane.b32.xlu0 %v5296, 122
        %v5316 = vpop.permute.xlu0 %5315
        %5317 = vrot.lane.b32.xlu0 %v5298, 122
        %v5318 = vpop.permute.xlu0 %5317
        %5319 = vrot.lane.b32.xlu0 %v5297, 122
        %v5320 = vpop.permute.xlu0 %5319
        %5321 = vrot.lane.b32.xlu0 %v5301, 122
        %v5322 = vpop.permute.xlu0 %5321
        %5323 = vrot.lane.b32.xlu0 %v5303, 122
        %v5324 = vpop.permute.xlu0 %5323
        %5325 = vrot.lane.b32.xlu0 %v5302, 122
        %v5326 = vpop.permute.xlu0 %5325
        %5327 = vrot.lane.b32.xlu0 %v5306, 122
        %v5328 = vpop.permute.xlu0 %5327
        %5329 = vrot.lane.b32.xlu0 %v5308, 122
        %v5330 = vpop.permute.xlu0 %5329
        %5331 = vrot.lane.b32.xlu0 %v5307, 122
        %v5332 = vpop.permute.xlu0 %5331
        %v5345 = vadd.f32 %v4989, %v5310
        %v5346 = vadd.f32 %v4990, %v5312
        %v5347 = vadd.f32 %v4991, %v5314
        %v5348 = vadd.f32 %v4992, %v5316
        %v5349 = vadd.f32 %v4993, %v5318
        %v5350 = vadd.f32 %v4994, %v5320
        %v5351 = vadd.f32 %v4995, %v5322
        %v5352 = vadd.f32 %v4996, %v5324
        %v5353 = vadd.f32 %v4997, %v5326
        %v5354 = vadd.f32 %v4998, %v5328
        %v5355 = vadd.f32 %v4999, %v5330
        %v5356 = vadd.f32 %v5000, %v5332
        %v5357 = vstv %s1612
        %v5358 = vmul.f32 %v5357, %v1559
        %v5359 = vmul.f32 %v5357, %v1560
        %v5360 = vmul.f32 %v5357, %v1561
        %v5361 = vmul.f32 %v5357, %v1562
        %v5362 = vmul.f32 %v5357, %v1563
        %v5363 = vmul.f32 %v5357, %v1564
        %v5364 = vmul.f32 %v5357, %v1565
        %v5365 = vmul.f32 %v5357, %v1566
        %v5366 = vmul.f32 %v5357, %v1567
        %v5367 = vmul.f32 %v5357, %v1568
        %v5368 = vmul.f32 %v5357, %v1569
        %v5369 = vmul.f32 %v5357, %v1570
        %v5382 = vrot.slane %v5358, 2
        %v5383 = vrot.slane %v5359, 2
        %v5384 = vsel %vm2760, %v5382, %v5383
        %v5385 = vrot.slane %v5360, 2
        %v5386 = vsel %vm2760, %v5383, %v5385
        %v5387 = vrot.slane %v5361, 2
        %v5388 = vrot.slane %v5362, 2
        %v5389 = vsel %vm2760, %v5387, %v5388
        %v5390 = vrot.slane %v5363, 2
        %v5391 = vsel %vm2760, %v5388, %v5390
        %v5392 = vrot.slane %v5364, 2
        %v5393 = vrot.slane %v5365, 2
        %v5394 = vsel %vm2760, %v5392, %v5393
        %v5395 = vrot.slane %v5366, 2
        %v5396 = vsel %vm2760, %v5393, %v5395
        %v5397 = vrot.slane %v5367, 2
        %v5398 = vrot.slane %v5368, 2
        %v5399 = vsel %vm2760, %v5397, %v5398
        %v5400 = vrot.slane %v5369, 2
        %v5401 = vsel %vm2760, %v5398, %v5400
        %5402 = vrot.lane.b32.xlu0 %v5384, 122
        %v5403 = vpop.permute.xlu0 %5402
        %5404 = vrot.lane.b32.xlu0 %v5386, 122
        %v5405 = vpop.permute.xlu0 %5404
        %5406 = vrot.lane.b32.xlu0 %v5385, 122
        %v5407 = vpop.permute.xlu0 %5406
        %5408 = vrot.lane.b32.xlu0 %v5389, 122
        %v5409 = vpop.permute.xlu0 %5408
        %5410 = vrot.lane.b32.xlu0 %v5391, 122
        %v5411 = vpop.permute.xlu0 %5410
        %5412 = vrot.lane.b32.xlu0 %v5390, 122
        %v5413 = vpop.permute.xlu0 %5412
        %5414 = vrot.lane.b32.xlu0 %v5394, 122
        %v5415 = vpop.permute.xlu0 %5414
        %5416 = vrot.lane.b32.xlu0 %v5396, 122
        %v5417 = vpop.permute.xlu0 %5416
        %5418 = vrot.lane.b32.xlu0 %v5395, 122
        %v5419 = vpop.permute.xlu0 %5418
        %5420 = vrot.lane.b32.xlu0 %v5399, 122
        %v5421 = vpop.permute.xlu0 %5420
        %5422 = vrot.lane.b32.xlu0 %v5401, 122
        %v5423 = vpop.permute.xlu0 %5422
        %5424 = vrot.lane.b32.xlu0 %v5400, 122
        %v5425 = vpop.permute.xlu0 %5424
        %v5438 = vadd.f32 %v5082, %v5403
        %v5439 = vadd.f32 %v5083, %v5405
        %v5440 = vadd.f32 %v5084, %v5407
        %v5441 = vadd.f32 %v5085, %v5409
        %v5442 = vadd.f32 %v5086, %v5411
        %v5443 = vadd.f32 %v5087, %v5413
        %v5444 = vadd.f32 %v5088, %v5415
        %v5445 = vadd.f32 %v5089, %v5417
        %v5446 = vadd.f32 %v5090, %v5419
        %v5447 = vadd.f32 %v5091, %v5421
        %v5448 = vadd.f32 %v5092, %v5423
        %v5449 = vadd.f32 %v5093, %v5425
        %v5450 = vstv %s1619
        %v5451 = vmul.f32 %v5450, %v1559
        %v5452 = vmul.f32 %v5450, %v1560
        %v5453 = vmul.f32 %v5450, %v1561
        %v5454 = vmul.f32 %v5450, %v1562
        %v5455 = vmul.f32 %v5450, %v1563
        %v5456 = vmul.f32 %v5450, %v1564
        %v5457 = vmul.f32 %v5450, %v1565
        %v5458 = vmul.f32 %v5450, %v1566
        %v5459 = vmul.f32 %v5450, %v1567
        %v5460 = vmul.f32 %v5450, %v1568
        %v5461 = vmul.f32 %v5450, %v1569
        %v5462 = vmul.f32 %v5450, %v1570
        %v5475 = vrot.slane %v5451, 6
        %v5476 = vrot.slane %v5452, 6
        %v5477 = vsel %vm670, %v5475, %v5476
        %v5478 = vrot.slane %v5453, 6
        %v5479 = vsel %vm670, %v5476, %v5478
        %v5480 = vrot.slane %v5454, 6
        %v5481 = vrot.slane %v5455, 6
        %v5482 = vsel %vm670, %v5480, %v5481
        %v5483 = vrot.slane %v5456, 6
        %v5484 = vsel %vm670, %v5481, %v5483
        %v5485 = vrot.slane %v5457, 6
        %v5486 = vrot.slane %v5458, 6
        %v5487 = vsel %vm670, %v5485, %v5486
        %v5488 = vrot.slane %v5459, 6
        %v5489 = vsel %vm670, %v5486, %v5488
        %v5490 = vrot.slane %v5460, 6
        %v5491 = vrot.slane %v5461, 6
        %v5492 = vsel %vm670, %v5490, %v5491
        %v5493 = vrot.slane %v5462, 6
        %v5494 = vsel %vm670, %v5491, %v5493
        %5495 = vrot.lane.b32.xlu0 %v5477, 122
        %v5496 = vpop.permute.xlu0 %5495
        %5497 = vrot.lane.b32.xlu0 %v5479, 122
        %v5498 = vpop.permute.xlu0 %5497
        %5499 = vrot.lane.b32.xlu0 %v5482, 122
        %v5500 = vpop.permute.xlu0 %5499
        %5501 = vrot.lane.b32.xlu0 %v5484, 122
        %v5502 = vpop.permute.xlu0 %5501
        %5503 = vrot.lane.b32.xlu0 %v5487, 122
        %v5504 = vpop.permute.xlu0 %5503
        %5505 = vrot.lane.b32.xlu0 %v5489, 122
        %v5506 = vpop.permute.xlu0 %5505
        %5507 = vrot.lane.b32.xlu0 %v5492, 122
        %v5508 = vpop.permute.xlu0 %5507
        %5509 = vrot.lane.b32.xlu0 %v5494, 122
        %v5510 = vpop.permute.xlu0 %5509
        %v5519 = vadd.f32 %v5163, %v5496
        %v5520 = vadd.f32 %v5164, %v5498
        %v5521 = vadd.f32 %v5165, %v5500
        %v5522 = vadd.f32 %v5166, %v5502
        %v5523 = vadd.f32 %v5167, %v5504
        %v5524 = vadd.f32 %v5168, %v5506
        %v5525 = vadd.f32 %v5169, %v5508
        %v5526 = vadd.f32 %v5170, %v5510
        %v5527 = vstv %s1620
        %v5528 = vmul.f32 %v5527, %v1559
        %v5529 = vmul.f32 %v5527, %v1560
        %v5530 = vmul.f32 %v5527, %v1562
        %v5531 = vmul.f32 %v5527, %v1563
        %v5532 = vmul.f32 %v5527, %v1565
        %v5533 = vmul.f32 %v5527, %v1566
        %v5534 = vmul.f32 %v5527, %v1568
        %v5535 = vmul.f32 %v5527, %v1569
        %v5544 = vrot.slane %v5528, 7
        %v5545 = vrot.slane %v5529, 7
        %v5546 = vsel %vm3186, %v5544, %v5545
        %v5547 = vrot.slane %v5530, 7
        %v5548 = vrot.slane %v5531, 7
        %v5549 = vsel %vm3186, %v5547, %v5548
        %v5550 = vrot.slane %v5532, 7
        %v5551 = vrot.slane %v5533, 7
        %v5552 = vsel %vm3186, %v5550, %v5551
        %v5553 = vrot.slane %v5534, 7
        %v5554 = vrot.slane %v5535, 7
        %v5555 = vsel %vm3186, %v5553, %v5554
        %5556 = vrot.lane.b32.xlu0 %v5544, 106
        %v5557 = vpop.permute.xlu0 %5556
        %5558 = vrot.lane.b32.xlu0 %v5546, 106
        %v5559 = vpop.permute.xlu0 %5558
        %5560 = vrot.lane.b32.xlu0 %v5545, 106
        %v5561 = vpop.permute.xlu0 %5560
        %5562 = vrot.lane.b32.xlu0 %v5547, 106
        %v5563 = vpop.permute.xlu0 %5562
        %5564 = vrot.lane.b32.xlu0 %v5549, 106
        %v5565 = vpop.permute.xlu0 %5564
        %5566 = vrot.lane.b32.xlu0 %v5548, 106
        %v5567 = vpop.permute.xlu0 %5566
        %5568 = vrot.lane.b32.xlu0 %v5550, 106
        %v5569 = vpop.permute.xlu0 %5568
        %5570 = vrot.lane.b32.xlu0 %v5552, 106
        %v5571 = vpop.permute.xlu0 %5570
        %5572 = vrot.lane.b32.xlu0 %v5551, 106
        %v5573 = vpop.permute.xlu0 %5572
        %5574 = vrot.lane.b32.xlu0 %v5553, 106
        %v5575 = vpop.permute.xlu0 %5574
        %5576 = vrot.lane.b32.xlu0 %v5555, 106
        %v5577 = vpop.permute.xlu0 %5576
        %5578 = vrot.lane.b32.xlu0 %v5554, 106
        %v5579 = vpop.permute.xlu0 %5578
        %v5592 = vadd.f32 %v5252, %v5557
        %v5593 = vadd.f32 %v5253, %v5559
        %v5594 = vadd.f32 %v5254, %v5561
        %v5595 = vadd.f32 %v5255, %v5563
        %v5596 = vadd.f32 %v5256, %v5565
        %v5597 = vadd.f32 %v5257, %v5567
        %v5598 = vadd.f32 %v5258, %v5569
        %v5599 = vadd.f32 %v5259, %v5571
        %v5600 = vadd.f32 %v5260, %v5573
        %v5601 = vadd.f32 %v5261, %v5575
        %v5602 = vadd.f32 %v5262, %v5577
        %v5603 = vadd.f32 %v5263, %v5579
        %v5604 = vstv %s1627
        %v5605 = vmul.f32 %v5604, %v1559
        %v5606 = vmul.f32 %v5604, %v1560
        %v5607 = vmul.f32 %v5604, %v1561
        %v5608 = vmul.f32 %v5604, %v1562
        %v5609 = vmul.f32 %v5604, %v1563
        %v5610 = vmul.f32 %v5604, %v1564
        %v5611 = vmul.f32 %v5604, %v1565
        %v5612 = vmul.f32 %v5604, %v1566
        %v5613 = vmul.f32 %v5604, %v1567
        %v5614 = vmul.f32 %v5604, %v1568
        %v5615 = vmul.f32 %v5604, %v1569
        %v5616 = vmul.f32 %v5604, %v1570
        %v5629 = vrot.slane %v5605, 7
        %v5630 = vrot.slane %v5606, 7
        %v5631 = vsel %vm3186, %v5629, %v5630
        %v5632 = vrot.slane %v5607, 7
        %v5633 = vsel %vm3186, %v5630, %v5632
        %v5634 = vrot.slane %v5608, 7
        %v5635 = vrot.slane %v5609, 7
        %v5636 = vsel %vm3186, %v5634, %v5635
        %v5637 = vrot.slane %v5610, 7
        %v5638 = vsel %vm3186, %v5635, %v5637
        %v5639 = vrot.slane %v5611, 7
        %v5640 = vrot.slane %v5612, 7
        %v5641 = vsel %vm3186, %v5639, %v5640
        %v5642 = vrot.slane %v5613, 7
        %v5643 = vsel %vm3186, %v5640, %v5642
        %v5644 = vrot.slane %v5614, 7
        %v5645 = vrot.slane %v5615, 7
        %v5646 = vsel %vm3186, %v5644, %v5645
        %v5647 = vrot.slane %v5616, 7
        %v5648 = vsel %vm3186, %v5645, %v5647
        %5649 = vrot.lane.b32.xlu0 %v5629, 106
        %v5650 = vpop.permute.xlu0 %5649
        %5651 = vrot.lane.b32.xlu0 %v5631, 106
        %v5652 = vpop.permute.xlu0 %5651
        %5653 = vrot.lane.b32.xlu0 %v5633, 106
        %v5654 = vpop.permute.xlu0 %5653
        %5655 = vrot.lane.b32.xlu0 %v5634, 106
        %v5656 = vpop.permute.xlu0 %5655
        %5657 = vrot.lane.b32.xlu0 %v5636, 106
        %v5658 = vpop.permute.xlu0 %5657
        %5659 = vrot.lane.b32.xlu0 %v5638, 106
        %v5660 = vpop.permute.xlu0 %5659
        %5661 = vrot.lane.b32.xlu0 %v5639, 106
        %v5662 = vpop.permute.xlu0 %5661
        %5663 = vrot.lane.b32.xlu0 %v5641, 106
        %v5664 = vpop.permute.xlu0 %5663
        %5665 = vrot.lane.b32.xlu0 %v5643, 106
        %v5666 = vpop.permute.xlu0 %5665
        %5667 = vrot.lane.b32.xlu0 %v5644, 106
        %v5668 = vpop.permute.xlu0 %5667
        %5669 = vrot.lane.b32.xlu0 %v5646, 106
        %v5670 = vpop.permute.xlu0 %5669
        %5671 = vrot.lane.b32.xlu0 %v5648, 106
        %v5672 = vpop.permute.xlu0 %5671
        %v5685 = vadd.f32 %v5345, %v5650
        %v5686 = vadd.f32 %v5346, %v5652
        %v5687 = vadd.f32 %v5347, %v5654
        %v5688 = vadd.f32 %v5348, %v5656
        %v5689 = vadd.f32 %v5349, %v5658
        %v5690 = vadd.f32 %v5350, %v5660
        %v5691 = vadd.f32 %v5351, %v5662
        %v5692 = vadd.f32 %v5352, %v5664
        %v5693 = vadd.f32 %v5353, %v5666
        %v5694 = vadd.f32 %v5354, %v5668
        %v5695 = vadd.f32 %v5355, %v5670
        %v5696 = vadd.f32 %v5356, %v5672
        %v5697 = vstv %s1634
        %v5698 = vmul.f32 %v5697, %v1559
        %v5699 = vmul.f32 %v5697, %v1560
        %v5700 = vmul.f32 %v5697, %v1561
        %v5701 = vmul.f32 %v5697, %v1562
        %v5702 = vmul.f32 %v5697, %v1563
        %v5703 = vmul.f32 %v5697, %v1564
        %v5704 = vmul.f32 %v5697, %v1565
        %v5705 = vmul.f32 %v5697, %v1566
        %v5706 = vmul.f32 %v5697, %v1567
        %v5707 = vmul.f32 %v5697, %v1568
        %v5708 = vmul.f32 %v5697, %v1569
        %v5709 = vmul.f32 %v5697, %v1570
        %v5722 = vrot.slane %v5698, 7
        %v5723 = vrot.slane %v5699, 7
        %v5724 = vsel %vm3186, %v5722, %v5723
        %v5725 = vrot.slane %v5700, 7
        %v5726 = vsel %vm3186, %v5723, %v5725
        %v5727 = vrot.slane %v5701, 7
        %v5728 = vrot.slane %v5702, 7
        %v5729 = vsel %vm3186, %v5727, %v5728
        %v5730 = vrot.slane %v5703, 7
        %v5731 = vsel %vm3186, %v5728, %v5730
        %v5732 = vrot.slane %v5704, 7
        %v5733 = vrot.slane %v5705, 7
        %v5734 = vsel %vm3186, %v5732, %v5733
        %v5735 = vrot.slane %v5706, 7
        %v5736 = vsel %vm3186, %v5733, %v5735
        %v5737 = vrot.slane %v5707, 7
        %v5738 = vrot.slane %v5708, 7
        %v5739 = vsel %vm3186, %v5737, %v5738
        %v5740 = vrot.slane %v5709, 7
        %v5741 = vsel %vm3186, %v5738, %v5740
        %5742 = vrot.lane.b32.xlu0 %v5722, 106
        %v5743 = vpop.permute.xlu0 %5742
        %5744 = vrot.lane.b32.xlu0 %v5724, 106
        %v5745 = vpop.permute.xlu0 %5744
        %5746 = vrot.lane.b32.xlu0 %v5726, 106
        %v5747 = vpop.permute.xlu0 %5746
        %5748 = vrot.lane.b32.xlu0 %v5727, 106
        %v5749 = vpop.permute.xlu0 %5748
        %5750 = vrot.lane.b32.xlu0 %v5729, 106
        %v5751 = vpop.permute.xlu0 %5750
        %5752 = vrot.lane.b32.xlu0 %v5731, 106
        %v5753 = vpop.permute.xlu0 %5752
        %5754 = vrot.lane.b32.xlu0 %v5732, 106
        %v5755 = vpop.permute.xlu0 %5754
        %5756 = vrot.lane.b32.xlu0 %v5734, 106
        %v5757 = vpop.permute.xlu0 %5756
        %5758 = vrot.lane.b32.xlu0 %v5736, 106
        %v5759 = vpop.permute.xlu0 %5758
        %5760 = vrot.lane.b32.xlu0 %v5737, 106
        %v5761 = vpop.permute.xlu0 %5760
        %5762 = vrot.lane.b32.xlu0 %v5739, 106
        %v5763 = vpop.permute.xlu0 %5762
        %5764 = vrot.lane.b32.xlu0 %v5741, 106
        %v5765 = vpop.permute.xlu0 %5764
        %v5778 = vadd.f32 %v5438, %v5743
        %v5779 = vadd.f32 %v5439, %v5745
        %v5780 = vadd.f32 %v5440, %v5747
        %v5781 = vadd.f32 %v5441, %v5749
        %v5782 = vadd.f32 %v5442, %v5751
        %v5783 = vadd.f32 %v5443, %v5753
        %v5784 = vadd.f32 %v5444, %v5755
        %v5785 = vadd.f32 %v5445, %v5757
        %v5786 = vadd.f32 %v5446, %v5759
        %v5787 = vadd.f32 %v5447, %v5761
        %v5788 = vadd.f32 %v5448, %v5763
        %v5789 = vadd.f32 %v5449, %v5765
        %v5790 = vstv %s1641
        %v5791 = vmul.f32 %v5790, %v1559
        %v5792 = vmul.f32 %v5790, %v1560
        %v5793 = vmul.f32 %v5790, %v1561
        %v5794 = vmul.f32 %v5790, %v1562
        %v5795 = vmul.f32 %v5790, %v1563
        %v5796 = vmul.f32 %v5790, %v1564
        %v5797 = vmul.f32 %v5790, %v1565
        %v5798 = vmul.f32 %v5790, %v1566
        %v5799 = vmul.f32 %v5790, %v1567
        %v5800 = vmul.f32 %v5790, %v1568
        %v5801 = vmul.f32 %v5790, %v1569
        %v5802 = vmul.f32 %v5790, %v1570
        %v5815 = vrot.slane %v5791, 3
        %v5816 = vrot.slane %v5792, 3
        %v5817 = vsel %vm3458, %v5815, %v5816
        %v5818 = vrot.slane %v5793, 3
        %v5819 = vsel %vm3458, %v5816, %v5818
        %v5820 = vrot.slane %v5794, 3
        %v5821 = vrot.slane %v5795, 3
        %v5822 = vsel %vm3458, %v5820, %v5821
        %v5823 = vrot.slane %v5796, 3
        %v5824 = vsel %vm3458, %v5821, %v5823
        %v5825 = vrot.slane %v5797, 3
        %v5826 = vrot.slane %v5798, 3
        %v5827 = vsel %vm3458, %v5825, %v5826
        %v5828 = vrot.slane %v5799, 3
        %v5829 = vsel %vm3458, %v5826, %v5828
        %v5830 = vrot.slane %v5800, 3
        %v5831 = vrot.slane %v5801, 3
        %v5832 = vsel %vm3458, %v5830, %v5831
        %v5833 = vrot.slane %v5802, 3
        %v5834 = vsel %vm3458, %v5831, %v5833
        %5835 = vrot.lane.b32.xlu0 %v5817, 106
        %v5836 = vpop.permute.xlu0 %5835
        %5837 = vrot.lane.b32.xlu0 %v5819, 106
        %v5838 = vpop.permute.xlu0 %5837
        %5839 = vrot.lane.b32.xlu0 %v5822, 106
        %v5840 = vpop.permute.xlu0 %5839
        %5841 = vrot.lane.b32.xlu0 %v5824, 106
        %v5842 = vpop.permute.xlu0 %5841
        %5843 = vrot.lane.b32.xlu0 %v5827, 106
        %v5844 = vpop.permute.xlu0 %5843
        %5845 = vrot.lane.b32.xlu0 %v5829, 106
        %v5846 = vpop.permute.xlu0 %5845
        %5847 = vrot.lane.b32.xlu0 %v5832, 106
        %v5848 = vpop.permute.xlu0 %5847
        %5849 = vrot.lane.b32.xlu0 %v5834, 106
        %v5850 = vpop.permute.xlu0 %5849
        %v5859 = vadd.f32 %v5519, %v5836
        %v5860 = vadd.f32 %v5520, %v5838
        %v5861 = vadd.f32 %v5521, %v5840
        %v5862 = vadd.f32 %v5522, %v5842
        %v5863 = vadd.f32 %v5523, %v5844
        %v5864 = vadd.f32 %v5524, %v5846
        %v5865 = vadd.f32 %v5525, %v5848
        %v5866 = vadd.f32 %v5526, %v5850
        %v5867 = vstv %s1648
        %v5868 = vmul.f32 %v5867, %v1559
        %v5869 = vmul.f32 %v5867, %v1560
        %v5870 = vmul.f32 %v5867, %v1561
        %v5871 = vmul.f32 %v5867, %v1562
        %v5872 = vmul.f32 %v5867, %v1563
        %v5873 = vmul.f32 %v5867, %v1564
        %v5874 = vmul.f32 %v5867, %v1565
        %v5875 = vmul.f32 %v5867, %v1566
        %v5876 = vmul.f32 %v5867, %v1567
        %v5877 = vmul.f32 %v5867, %v1568
        %v5878 = vmul.f32 %v5867, %v1569
        %v5879 = vmul.f32 %v5867, %v1570
        %v5892 = vrot.slane %v5868, 3
        %v5893 = vrot.slane %v5869, 3
        %v5894 = vsel %vm3458, %v5892, %v5893
        %v5895 = vrot.slane %v5870, 3
        %v5896 = vsel %vm3458, %v5893, %v5895
        %v5897 = vrot.slane %v5871, 3
        %v5898 = vrot.slane %v5872, 3
        %v5899 = vsel %vm3458, %v5897, %v5898
        %v5900 = vrot.slane %v5873, 3
        %v5901 = vsel %vm3458, %v5898, %v5900
        %v5902 = vrot.slane %v5874, 3
        %v5903 = vrot.slane %v5875, 3
        %v5904 = vsel %vm3458, %v5902, %v5903
        %v5905 = vrot.slane %v5876, 3
        %v5906 = vsel %vm3458, %v5903, %v5905
        %v5907 = vrot.slane %v5877, 3
        %v5908 = vrot.slane %v5878, 3
        %v5909 = vsel %vm3458, %v5907, %v5908
        %v5910 = vrot.slane %v5879, 3
        %v5911 = vsel %vm3458, %v5908, %v5910
        %5912 = vrot.lane.b32.xlu0 %v5894, 106
        %v5913 = vpop.permute.xlu0 %5912
        %5914 = vrot.lane.b32.xlu0 %v5896, 106
        %v5915 = vpop.permute.xlu0 %5914
        %5916 = vrot.lane.b32.xlu0 %v5895, 106
        %v5917 = vpop.permute.xlu0 %5916
        %5918 = vrot.lane.b32.xlu0 %v5899, 106
        %v5919 = vpop.permute.xlu0 %5918
        %5920 = vrot.lane.b32.xlu0 %v5901, 106
        %v5921 = vpop.permute.xlu0 %5920
        %5922 = vrot.lane.b32.xlu0 %v5900, 106
        %v5923 = vpop.permute.xlu0 %5922
        %5924 = vrot.lane.b32.xlu0 %v5904, 106
        %v5925 = vpop.permute.xlu0 %5924
        %5926 = vrot.lane.b32.xlu0 %v5906, 106
        %v5927 = vpop.permute.xlu0 %5926
        %5928 = vrot.lane.b32.xlu0 %v5905, 106
        %v5929 = vpop.permute.xlu0 %5928
        %5930 = vrot.lane.b32.xlu0 %v5909, 106
        %v5931 = vpop.permute.xlu0 %5930
        %5932 = vrot.lane.b32.xlu0 %v5911, 106
        %v5933 = vpop.permute.xlu0 %5932
        %5934 = vrot.lane.b32.xlu0 %v5910, 106
        %v5935 = vpop.permute.xlu0 %5934
        %v5948 = vadd.f32 %v5592, %v5913
        %v5949 = vadd.f32 %v5593, %v5915
        %v5950 = vadd.f32 %v5594, %v5917
        %v5951 = vadd.f32 %v5595, %v5919
        %v5952 = vadd.f32 %v5596, %v5921
        %v5953 = vadd.f32 %v5597, %v5923
        %v5954 = vadd.f32 %v5598, %v5925
        %v5955 = vadd.f32 %v5599, %v5927
        %v5956 = vadd.f32 %v5600, %v5929
        %v5957 = vadd.f32 %v5601, %v5931
        %v5958 = vadd.f32 %v5602, %v5933
        %v5959 = vadd.f32 %v5603, %v5935
        %v5960 = vstv %s1655
        %v5961 = vmul.f32 %v5960, %v1559
        %v5962 = vmul.f32 %v5960, %v1560
        %v5963 = vmul.f32 %v5960, %v1561
        %v5964 = vmul.f32 %v5960, %v1562
        %v5965 = vmul.f32 %v5960, %v1563
        %v5966 = vmul.f32 %v5960, %v1564
        %v5967 = vmul.f32 %v5960, %v1565
        %v5968 = vmul.f32 %v5960, %v1566
        %v5969 = vmul.f32 %v5960, %v1567
        %v5970 = vmul.f32 %v5960, %v1568
        %v5971 = vmul.f32 %v5960, %v1569
        %v5972 = vmul.f32 %v5960, %v1570
        %v5985 = vrot.slane %v5961, 3
        %v5986 = vrot.slane %v5962, 3
        %v5987 = vsel %vm3458, %v5985, %v5986
        %v5988 = vrot.slane %v5963, 3
        %v5989 = vsel %vm3458, %v5986, %v5988
        %v5990 = vrot.slane %v5964, 3
        %v5991 = vrot.slane %v5965, 3
        %v5992 = vsel %vm3458, %v5990, %v5991
        %v5993 = vrot.slane %v5966, 3
        %v5994 = vsel %vm3458, %v5991, %v5993
        %v5995 = vrot.slane %v5967, 3
        %v5996 = vrot.slane %v5968, 3
        %v5997 = vsel %vm3458, %v5995, %v5996
        %v5998 = vrot.slane %v5969, 3
        %v5999 = vsel %vm3458, %v5996, %v5998
        %v6000 = vrot.slane %v5970, 3
        %v6001 = vrot.slane %v5971, 3
        %v6002 = vsel %vm3458, %v6000, %v6001
        %v6003 = vrot.slane %v5972, 3
        %v6004 = vsel %vm3458, %v6001, %v6003
        %6005 = vrot.lane.b32.xlu0 %v5987, 106
        %v6006 = vpop.permute.xlu0 %6005
        %6007 = vrot.lane.b32.xlu0 %v5989, 106
        %v6008 = vpop.permute.xlu0 %6007
        %6009 = vrot.lane.b32.xlu0 %v5988, 106
        %v6010 = vpop.permute.xlu0 %6009
        %6011 = vrot.lane.b32.xlu0 %v5992, 106
        %v6012 = vpop.permute.xlu0 %6011
        %6013 = vrot.lane.b32.xlu0 %v5994, 106
        %v6014 = vpop.permute.xlu0 %6013
        %6015 = vrot.lane.b32.xlu0 %v5993, 106
        %v6016 = vpop.permute.xlu0 %6015
        %6017 = vrot.lane.b32.xlu0 %v5997, 106
        %v6018 = vpop.permute.xlu0 %6017
        %6019 = vrot.lane.b32.xlu0 %v5999, 106
        %v6020 = vpop.permute.xlu0 %6019
        %6021 = vrot.lane.b32.xlu0 %v5998, 106
        %v6022 = vpop.permute.xlu0 %6021
        %6023 = vrot.lane.b32.xlu0 %v6002, 106
        %v6024 = vpop.permute.xlu0 %6023
        %6025 = vrot.lane.b32.xlu0 %v6004, 106
        %v6026 = vpop.permute.xlu0 %6025
        %6027 = vrot.lane.b32.xlu0 %v6003, 106
        %v6028 = vpop.permute.xlu0 %6027
        %v6041 = vadd.f32 %v5685, %v6006
        %v6042 = vadd.f32 %v5686, %v6008
        %v6043 = vadd.f32 %v5687, %v6010
        %v6044 = vadd.f32 %v5688, %v6012
        %v6045 = vadd.f32 %v5689, %v6014
        %v6046 = vadd.f32 %v5690, %v6016
        %v6047 = vadd.f32 %v5691, %v6018
        %v6048 = vadd.f32 %v5692, %v6020
        %v6049 = vadd.f32 %v5693, %v6022
        %v6050 = vadd.f32 %v5694, %v6024
        %v6051 = vadd.f32 %v5695, %v6026
        %v6052 = vadd.f32 %v5696, %v6028
        %v6053 = vstv %s1662
        %v6054 = vmul.f32 %v6053, %v1559
        %v6055 = vmul.f32 %v6053, %v1560
        %v6056 = vmul.f32 %v6053, %v1561
        %v6057 = vmul.f32 %v6053, %v1562
        %v6058 = vmul.f32 %v6053, %v1563
        %v6059 = vmul.f32 %v6053, %v1564
        %v6060 = vmul.f32 %v6053, %v1565
        %v6061 = vmul.f32 %v6053, %v1566
        %v6062 = vmul.f32 %v6053, %v1567
        %v6063 = vmul.f32 %v6053, %v1568
        %v6064 = vmul.f32 %v6053, %v1569
        %v6065 = vmul.f32 %v6053, %v1570
        %v6078 = vrot.slane %v6054, 3
        %v6079 = vrot.slane %v6055, 3
        %v6080 = vsel %vm3458, %v6078, %v6079
        %v6081 = vrot.slane %v6056, 3
        %v6082 = vsel %vm3458, %v6079, %v6081
        %v6083 = vrot.slane %v6057, 3
        %v6084 = vrot.slane %v6058, 3
        %v6085 = vsel %vm3458, %v6083, %v6084
        %v6086 = vrot.slane %v6059, 3
        %v6087 = vsel %vm3458, %v6084, %v6086
        %v6088 = vrot.slane %v6060, 3
        %v6089 = vrot.slane %v6061, 3
        %v6090 = vsel %vm3458, %v6088, %v6089
        %v6091 = vrot.slane %v6062, 3
        %v6092 = vsel %vm3458, %v6089, %v6091
        %v6093 = vrot.slane %v6063, 3
        %v6094 = vrot.slane %v6064, 3
        %v6095 = vsel %vm3458, %v6093, %v6094
        %v6096 = vrot.slane %v6065, 3
        %v6097 = vsel %vm3458, %v6094, %v6096
        %6098 = vrot.lane.b32.xlu0 %v6080, 106
        %v6099 = vpop.permute.xlu0 %6098
        %6100 = vrot.lane.b32.xlu0 %v6082, 106
        %v6101 = vpop.permute.xlu0 %6100
        %6102 = vrot.lane.b32.xlu0 %v6081, 106
        %v6103 = vpop.permute.xlu0 %6102
        %6104 = vrot.lane.b32.xlu0 %v6085, 106
        %v6105 = vpop.permute.xlu0 %6104
        %6106 = vrot.lane.b32.xlu0 %v6087, 106
        %v6107 = vpop.permute.xlu0 %6106
        %6108 = vrot.lane.b32.xlu0 %v6086, 106
        %v6109 = vpop.permute.xlu0 %6108
        %6110 = vrot.lane.b32.xlu0 %v6090, 106
        %v6111 = vpop.permute.xlu0 %6110
        %6112 = vrot.lane.b32.xlu0 %v6092, 106
        %v6113 = vpop.permute.xlu0 %6112
        %6114 = vrot.lane.b32.xlu0 %v6091, 106
        %v6115 = vpop.permute.xlu0 %6114
        %6116 = vrot.lane.b32.xlu0 %v6095, 106
        %v6117 = vpop.permute.xlu0 %6116
        %6118 = vrot.lane.b32.xlu0 %v6097, 106
        %v6119 = vpop.permute.xlu0 %6118
        %6120 = vrot.lane.b32.xlu0 %v6096, 106
        %v6121 = vpop.permute.xlu0 %6120
        %v6134 = vadd.f32 %v5778, %v6099
        %v6135 = vadd.f32 %v5779, %v6101
        %v6136 = vadd.f32 %v5780, %v6103
        %v6137 = vadd.f32 %v5781, %v6105
        %v6138 = vadd.f32 %v5782, %v6107
        %v6139 = vadd.f32 %v5783, %v6109
        %v6140 = vadd.f32 %v5784, %v6111
        %v6141 = vadd.f32 %v5785, %v6113
        %v6142 = vadd.f32 %v5786, %v6115
        %v6143 = vadd.f32 %v5787, %v6117
        %v6144 = vadd.f32 %v5788, %v6119
        %v6145 = vadd.f32 %v5789, %v6121
        %v6146 = vstv %s1621
        %v6147 = vmul.f32 %v6146, %v1559
        %v6148 = vmul.f32 %v6146, %v1560
        %v6149 = vmul.f32 %v6146, %v1562
        %v6150 = vmul.f32 %v6146, %v1563
        %v6151 = vmul.f32 %v6146, %v1565
        %v6152 = vmul.f32 %v6146, %v1566
        %v6153 = vmul.f32 %v6146, %v1568
        %v6154 = vmul.f32 %v6146, %v1569
        %6163 = vrot.lane.b32.xlu0 %v6147, 105
        %v6164 = vpop.permute.xlu0 %6163
        %6165 = vrot.lane.b32.xlu0 %v6148, 105
        %v6166 = vpop.permute.xlu0 %6165
        %6167 = vrot.lane.b32.xlu0 %v6149, 105
        %v6168 = vpop.permute.xlu0 %6167
        %6169 = vrot.lane.b32.xlu0 %v6150, 105
        %v6170 = vpop.permute.xlu0 %6169
        %6171 = vrot.lane.b32.xlu0 %v6151, 105
        %v6172 = vpop.permute.xlu0 %6171
        %6173 = vrot.lane.b32.xlu0 %v6152, 105
        %v6174 = vpop.permute.xlu0 %6173
        %6175 = vrot.lane.b32.xlu0 %v6153, 105
        %v6176 = vpop.permute.xlu0 %6175
        %6177 = vrot.lane.b32.xlu0 %v6154, 105
        %v6178 = vpop.permute.xlu0 %6177
        %v6187 = vadd.f32 %v5859, %v6164
        %v6188 = vadd.f32 %v5860, %v6166
        %v6189 = vadd.f32 %v5861, %v6168
        %v6190 = vadd.f32 %v5862, %v6170
        %v6191 = vadd.f32 %v5863, %v6172
        %v6192 = vadd.f32 %v5864, %v6174
        %v6193 = vadd.f32 %v5865, %v6176
        %v6194 = vadd.f32 %v5866, %v6178
        %v6195 = vstv %s1628
        %v6196 = vmul.f32 %v6195, %v1559
        %v6197 = vmul.f32 %v6195, %v1560
        %v6198 = vmul.f32 %v6195, %v1561
        %v6199 = vmul.f32 %v6195, %v1562
        %v6200 = vmul.f32 %v6195, %v1563
        %v6201 = vmul.f32 %v6195, %v1564
        %v6202 = vmul.f32 %v6195, %v1565
        %v6203 = vmul.f32 %v6195, %v1566
        %v6204 = vmul.f32 %v6195, %v1567
        %v6205 = vmul.f32 %v6195, %v1568
        %v6206 = vmul.f32 %v6195, %v1569
        %v6207 = vmul.f32 %v6195, %v1570
        %6220 = vrot.lane.b32.xlu0 %v6196, 105
        %v6221 = vpop.permute.xlu0 %6220
        %6222 = vrot.lane.b32.xlu0 %v6197, 105
        %v6223 = vpop.permute.xlu0 %6222
        %6224 = vrot.lane.b32.xlu0 %v6198, 105
        %v6225 = vpop.permute.xlu0 %6224
        %6226 = vrot.lane.b32.xlu0 %v6199, 105
        %v6227 = vpop.permute.xlu0 %6226
        %6228 = vrot.lane.b32.xlu0 %v6200, 105
        %v6229 = vpop.permute.xlu0 %6228
        %6230 = vrot.lane.b32.xlu0 %v6201, 105
        %v6231 = vpop.permute.xlu0 %6230
        %6232 = vrot.lane.b32.xlu0 %v6202, 105
        %v6233 = vpop.permute.xlu0 %6232
        %6234 = vrot.lane.b32.xlu0 %v6203, 105
        %v6235 = vpop.permute.xlu0 %6234
        %6236 = vrot.lane.b32.xlu0 %v6204, 105
        %v6237 = vpop.permute.xlu0 %6236
        %6238 = vrot.lane.b32.xlu0 %v6205, 105
        %v6239 = vpop.permute.xlu0 %6238
        %6240 = vrot.lane.b32.xlu0 %v6206, 105
        %v6241 = vpop.permute.xlu0 %6240
        %6242 = vrot.lane.b32.xlu0 %v6207, 105
        %v6243 = vpop.permute.xlu0 %6242
        %v6256 = vadd.f32 %v5948, %v6221
        %v6257 = vadd.f32 %v5949, %v6223
        %v6258 = vadd.f32 %v5950, %v6225
        %v6259 = vadd.f32 %v5951, %v6227
        %v6260 = vadd.f32 %v5952, %v6229
        %v6261 = vadd.f32 %v5953, %v6231
        %v6262 = vadd.f32 %v5954, %v6233
        %v6263 = vadd.f32 %v5955, %v6235
        %v6264 = vadd.f32 %v5956, %v6237
        %v6265 = vadd.f32 %v5957, %v6239
        %v6266 = vadd.f32 %v5958, %v6241
        %v6267 = vadd.f32 %v5959, %v6243
        %v6268 = vstv %s1635
        %v6269 = vmul.f32 %v6268, %v1559
        %v6270 = vmul.f32 %v6268, %v1560
        %v6271 = vmul.f32 %v6268, %v1561
        %v6272 = vmul.f32 %v6268, %v1562
        %v6273 = vmul.f32 %v6268, %v1563
        %v6274 = vmul.f32 %v6268, %v1564
        %v6275 = vmul.f32 %v6268, %v1565
        %v6276 = vmul.f32 %v6268, %v1566
        %v6277 = vmul.f32 %v6268, %v1567
        %v6278 = vmul.f32 %v6268, %v1568
        %v6279 = vmul.f32 %v6268, %v1569
        %v6280 = vmul.f32 %v6268, %v1570
        %6293 = vrot.lane.b32.xlu0 %v6269, 105
        %v6294 = vpop.permute.xlu0 %6293
        %6295 = vrot.lane.b32.xlu0 %v6270, 105
        %v6296 = vpop.permute.xlu0 %6295
        %6297 = vrot.lane.b32.xlu0 %v6271, 105
        %v6298 = vpop.permute.xlu0 %6297
        %6299 = vrot.lane.b32.xlu0 %v6272, 105
        %v6300 = vpop.permute.xlu0 %6299
        %6301 = vrot.lane.b32.xlu0 %v6273, 105
        %v6302 = vpop.permute.xlu0 %6301
        %6303 = vrot.lane.b32.xlu0 %v6274, 105
        %v6304 = vpop.permute.xlu0 %6303
        %6305 = vrot.lane.b32.xlu0 %v6275, 105
        %v6306 = vpop.permute.xlu0 %6305
        %6307 = vrot.lane.b32.xlu0 %v6276, 105
        %v6308 = vpop.permute.xlu0 %6307
        %6309 = vrot.lane.b32.xlu0 %v6277, 105
        %v6310 = vpop.permute.xlu0 %6309
        %6311 = vrot.lane.b32.xlu0 %v6278, 105
        %v6312 = vpop.permute.xlu0 %6311
        %6313 = vrot.lane.b32.xlu0 %v6279, 105
        %v6314 = vpop.permute.xlu0 %6313
        %6315 = vrot.lane.b32.xlu0 %v6280, 105
        %v6316 = vpop.permute.xlu0 %6315
        %v6329 = vadd.f32 %v6041, %v6294
        %v6330 = vadd.f32 %v6042, %v6296
        %v6331 = vadd.f32 %v6043, %v6298
        %v6332 = vadd.f32 %v6044, %v6300
        %v6333 = vadd.f32 %v6045, %v6302
        %v6334 = vadd.f32 %v6046, %v6304
        %v6335 = vadd.f32 %v6047, %v6306
        %v6336 = vadd.f32 %v6048, %v6308
        %v6337 = vadd.f32 %v6049, %v6310
        %v6338 = vadd.f32 %v6050, %v6312
        %v6339 = vadd.f32 %v6051, %v6314
        %v6340 = vadd.f32 %v6052, %v6316
        %v6341 = vstv %s1642
        %v6342 = vmul.f32 %v6341, %v1559
        %v6343 = vmul.f32 %v6341, %v1560
        %v6344 = vmul.f32 %v6341, %v1561
        %v6345 = vmul.f32 %v6341, %v1562
        %v6346 = vmul.f32 %v6341, %v1563
        %v6347 = vmul.f32 %v6341, %v1564
        %v6348 = vmul.f32 %v6341, %v1565
        %v6349 = vmul.f32 %v6341, %v1566
        %v6350 = vmul.f32 %v6341, %v1567
        %v6351 = vmul.f32 %v6341, %v1568
        %v6352 = vmul.f32 %v6341, %v1569
        %v6353 = vmul.f32 %v6341, %v1570
        %6366 = vrot.lane.b32.xlu0 %v6342, 105
        %v6367 = vpop.permute.xlu0 %6366
        %6368 = vrot.lane.b32.xlu0 %v6343, 105
        %v6369 = vpop.permute.xlu0 %6368
        %6370 = vrot.lane.b32.xlu0 %v6344, 105
        %v6371 = vpop.permute.xlu0 %6370
        %6372 = vrot.lane.b32.xlu0 %v6345, 105
        %v6373 = vpop.permute.xlu0 %6372
        %6374 = vrot.lane.b32.xlu0 %v6346, 105
        %v6375 = vpop.permute.xlu0 %6374
        %6376 = vrot.lane.b32.xlu0 %v6347, 105
        %v6377 = vpop.permute.xlu0 %6376
        %6378 = vrot.lane.b32.xlu0 %v6348, 105
        %v6379 = vpop.permute.xlu0 %6378
        %6380 = vrot.lane.b32.xlu0 %v6349, 105
        %v6381 = vpop.permute.xlu0 %6380
        %6382 = vrot.lane.b32.xlu0 %v6350, 105
        %v6383 = vpop.permute.xlu0 %6382
        %6384 = vrot.lane.b32.xlu0 %v6351, 105
        %v6385 = vpop.permute.xlu0 %6384
        %6386 = vrot.lane.b32.xlu0 %v6352, 105
        %v6387 = vpop.permute.xlu0 %6386
        %6388 = vrot.lane.b32.xlu0 %v6353, 105
        %v6389 = vpop.permute.xlu0 %6388
        %v6402 = vadd.f32 %v6134, %v6367
        %v6403 = vadd.f32 %v6135, %v6369
        %v6404 = vadd.f32 %v6136, %v6371
        %v6405 = vadd.f32 %v6137, %v6373
        %v6406 = vadd.f32 %v6138, %v6375
        %v6407 = vadd.f32 %v6139, %v6377
        %v6408 = vadd.f32 %v6140, %v6379
        %v6409 = vadd.f32 %v6141, %v6381
        %v6410 = vadd.f32 %v6142, %v6383
        %v6411 = vadd.f32 %v6143, %v6385
        %v6412 = vadd.f32 %v6144, %v6387
        %v6413 = vadd.f32 %v6145, %v6389
        %v6414 = vstv %s1649
        %v6415 = vmul.f32 %v6414, %v1559
        %v6416 = vmul.f32 %v6414, %v1560
        %v6417 = vmul.f32 %v6414, %v1561
        %v6418 = vmul.f32 %v6414, %v1562
        %v6419 = vmul.f32 %v6414, %v1563
        %v6420 = vmul.f32 %v6414, %v1564
        %v6421 = vmul.f32 %v6414, %v1565
        %v6422 = vmul.f32 %v6414, %v1566
        %v6423 = vmul.f32 %v6414, %v1567
        %v6424 = vmul.f32 %v6414, %v1568
        %v6425 = vmul.f32 %v6414, %v1569
        %v6426 = vmul.f32 %v6414, %v1570
        %v6439 = vrot.slane %v6415, 4
        %v6440 = vrot.slane %v6416, 4
        %v6441 = vsel %vm584, %v6439, %v6440
        %v6442 = vrot.slane %v6417, 4
        %v6443 = vsel %vm584, %v6440, %v6442
        %v6444 = vrot.slane %v6418, 4
        %v6445 = vrot.slane %v6419, 4
        %v6446 = vsel %vm584, %v6444, %v6445
        %v6447 = vrot.slane %v6420, 4
        %v6448 = vsel %vm584, %v6445, %v6447
        %v6449 = vrot.slane %v6421, 4
        %v6450 = vrot.slane %v6422, 4
        %v6451 = vsel %vm584, %v6449, %v6450
        %v6452 = vrot.slane %v6423, 4
        %v6453 = vsel %vm584, %v6450, %v6452
        %v6454 = vrot.slane %v6424, 4
        %v6455 = vrot.slane %v6425, 4
        %v6456 = vsel %vm584, %v6454, %v6455
        %v6457 = vrot.slane %v6426, 4
        %v6458 = vsel %vm584, %v6455, %v6457
        %6459 = vrot.lane.b32.xlu0 %v6441, 105
        %v6460 = vpop.permute.xlu0 %6459
        %6461 = vrot.lane.b32.xlu0 %v6443, 105
        %v6462 = vpop.permute.xlu0 %6461
        %6463 = vrot.lane.b32.xlu0 %v6446, 105
        %v6464 = vpop.permute.xlu0 %6463
        %6465 = vrot.lane.b32.xlu0 %v6448, 105
        %v6466 = vpop.permute.xlu0 %6465
        %6467 = vrot.lane.b32.xlu0 %v6451, 105
        %v6468 = vpop.permute.xlu0 %6467
        %6469 = vrot.lane.b32.xlu0 %v6453, 105
        %v6470 = vpop.permute.xlu0 %6469
        %6471 = vrot.lane.b32.xlu0 %v6456, 105
        %v6472 = vpop.permute.xlu0 %6471
        %6473 = vrot.lane.b32.xlu0 %v6458, 105
        %v6474 = vpop.permute.xlu0 %6473
        %v6483 = vadd.f32 %v6187, %v6460
        %v6484 = vadd.f32 %v6188, %v6462
        %v6485 = vadd.f32 %v6189, %v6464
        %v6486 = vadd.f32 %v6190, %v6466
        %v6487 = vadd.f32 %v6191, %v6468
        %v6488 = vadd.f32 %v6192, %v6470
        %v6489 = vadd.f32 %v6193, %v6472
        %v6490 = vadd.f32 %v6194, %v6474
        %v6491 = vstv %s1656
        %v6492 = vmul.f32 %v6491, %v1559
        %v6493 = vmul.f32 %v6491, %v1560
        %v6494 = vmul.f32 %v6491, %v1561
        %v6495 = vmul.f32 %v6491, %v1562
        %v6496 = vmul.f32 %v6491, %v1563
        %v6497 = vmul.f32 %v6491, %v1564
        %v6498 = vmul.f32 %v6491, %v1565
        %v6499 = vmul.f32 %v6491, %v1566
        %v6500 = vmul.f32 %v6491, %v1567
        %v6501 = vmul.f32 %v6491, %v1568
        %v6502 = vmul.f32 %v6491, %v1569
        %v6503 = vmul.f32 %v6491, %v1570
        %v6516 = vrot.slane %v6492, 4
        %v6517 = vrot.slane %v6493, 4
        %v6518 = vsel %vm584, %v6516, %v6517
        %v6519 = vrot.slane %v6494, 4
        %v6520 = vsel %vm584, %v6517, %v6519
        %v6521 = vrot.slane %v6495, 4
        %v6522 = vrot.slane %v6496, 4
        %v6523 = vsel %vm584, %v6521, %v6522
        %v6524 = vrot.slane %v6497, 4
        %v6525 = vsel %vm584, %v6522, %v6524
        %v6526 = vrot.slane %v6498, 4
        %v6527 = vrot.slane %v6499, 4
        %v6528 = vsel %vm584, %v6526, %v6527
        %v6529 = vrot.slane %v6500, 4
        %v6530 = vsel %vm584, %v6527, %v6529
        %v6531 = vrot.slane %v6501, 4
        %v6532 = vrot.slane %v6502, 4
        %v6533 = vsel %vm584, %v6531, %v6532
        %v6534 = vrot.slane %v6503, 4
        %v6535 = vsel %vm584, %v6532, %v6534
        %6536 = vrot.lane.b32.xlu0 %v6518, 105
        %v6537 = vpop.permute.xlu0 %6536
        %6538 = vrot.lane.b32.xlu0 %v6520, 105
        %v6539 = vpop.permute.xlu0 %6538
        %6540 = vrot.lane.b32.xlu0 %v6519, 105
        %v6541 = vpop.permute.xlu0 %6540
        %6542 = vrot.lane.b32.xlu0 %v6523, 105
        %v6543 = vpop.permute.xlu0 %6542
        %6544 = vrot.lane.b32.xlu0 %v6525, 105
        %v6545 = vpop.permute.xlu0 %6544
        %6546 = vrot.lane.b32.xlu0 %v6524, 105
        %v6547 = vpop.permute.xlu0 %6546
        %6548 = vrot.lane.b32.xlu0 %v6528, 105
        %v6549 = vpop.permute.xlu0 %6548
        %6550 = vrot.lane.b32.xlu0 %v6530, 105
        %v6551 = vpop.permute.xlu0 %6550
        %6552 = vrot.lane.b32.xlu0 %v6529, 105
        %v6553 = vpop.permute.xlu0 %6552
        %6554 = vrot.lane.b32.xlu0 %v6533, 105
        %v6555 = vpop.permute.xlu0 %6554
        %6556 = vrot.lane.b32.xlu0 %v6535, 105
        %v6557 = vpop.permute.xlu0 %6556
        %6558 = vrot.lane.b32.xlu0 %v6534, 105
        %v6559 = vpop.permute.xlu0 %6558
        %v6572 = vadd.f32 %v6256, %v6537
        %v6573 = vadd.f32 %v6257, %v6539
        %v6574 = vadd.f32 %v6258, %v6541
        %v6575 = vadd.f32 %v6259, %v6543
        %v6576 = vadd.f32 %v6260, %v6545
        %v6577 = vadd.f32 %v6261, %v6547
        %v6578 = vadd.f32 %v6262, %v6549
        %v6579 = vadd.f32 %v6263, %v6551
        %v6580 = vadd.f32 %v6264, %v6553
        %v6581 = vadd.f32 %v6265, %v6555
        %v6582 = vadd.f32 %v6266, %v6557
        %v6583 = vadd.f32 %v6267, %v6559
        %v6584 = vstv %s1663
        %v6585 = vmul.f32 %v6584, %v1559
        %v6586 = vmul.f32 %v6584, %v1560
        %v6587 = vmul.f32 %v6584, %v1561
        %v6588 = vmul.f32 %v6584, %v1562
        %v6589 = vmul.f32 %v6584, %v1563
        %v6590 = vmul.f32 %v6584, %v1564
        %v6591 = vmul.f32 %v6584, %v1565
        %v6592 = vmul.f32 %v6584, %v1566
        %v6593 = vmul.f32 %v6584, %v1567
        %v6594 = vmul.f32 %v6584, %v1568
        %v6595 = vmul.f32 %v6584, %v1569
        %v6596 = vmul.f32 %v6584, %v1570
        %v6609 = vrot.slane %v6585, 4
        %v6610 = vrot.slane %v6586, 4
        %v6611 = vsel %vm584, %v6609, %v6610
        %v6612 = vrot.slane %v6587, 4
        %v6613 = vsel %vm584, %v6610, %v6612
        %v6614 = vrot.slane %v6588, 4
        %v6615 = vrot.slane %v6589, 4
        %v6616 = vsel %vm584, %v6614, %v6615
        %v6617 = vrot.slane %v6590, 4
        %v6618 = vsel %vm584, %v6615, %v6617
        %v6619 = vrot.slane %v6591, 4
        %v6620 = vrot.slane %v6592, 4
        %v6621 = vsel %vm584, %v6619, %v6620
        %v6622 = vrot.slane %v6593, 4
        %v6623 = vsel %vm584, %v6620, %v6622
        %v6624 = vrot.slane %v6594, 4
        %v6625 = vrot.slane %v6595, 4
        %v6626 = vsel %vm584, %v6624, %v6625
        %v6627 = vrot.slane %v6596, 4
        %v6628 = vsel %vm584, %v6625, %v6627
        %6629 = vrot.lane.b32.xlu0 %v6611, 105
        %v6630 = vpop.permute.xlu0 %6629
        %6631 = vrot.lane.b32.xlu0 %v6613, 105
        %v6632 = vpop.permute.xlu0 %6631
        %6633 = vrot.lane.b32.xlu0 %v6612, 105
        %v6634 = vpop.permute.xlu0 %6633
        %6635 = vrot.lane.b32.xlu0 %v6616, 105
        %v6636 = vpop.permute.xlu0 %6635
        %6637 = vrot.lane.b32.xlu0 %v6618, 105
        %v6638 = vpop.permute.xlu0 %6637
        %6639 = vrot.lane.b32.xlu0 %v6617, 105
        %v6640 = vpop.permute.xlu0 %6639
        %6641 = vrot.lane.b32.xlu0 %v6621, 105
        %v6642 = vpop.permute.xlu0 %6641
        %6643 = vrot.lane.b32.xlu0 %v6623, 105
        %v6644 = vpop.permute.xlu0 %6643
        %6645 = vrot.lane.b32.xlu0 %v6622, 105
        %v6646 = vpop.permute.xlu0 %6645
        %6647 = vrot.lane.b32.xlu0 %v6626, 105
        %v6648 = vpop.permute.xlu0 %6647
        %6649 = vrot.lane.b32.xlu0 %v6628, 105
        %v6650 = vpop.permute.xlu0 %6649
        %6651 = vrot.lane.b32.xlu0 %v6627, 105
        %v6652 = vpop.permute.xlu0 %6651
        %v6665 = vadd.f32 %v6329, %v6630
        %v6666 = vadd.f32 %v6330, %v6632
        %v6667 = vadd.f32 %v6331, %v6634
        %v6668 = vadd.f32 %v6332, %v6636
        %v6669 = vadd.f32 %v6333, %v6638
        %v6670 = vadd.f32 %v6334, %v6640
        %v6671 = vadd.f32 %v6335, %v6642
        %v6672 = vadd.f32 %v6336, %v6644
        %v6673 = vadd.f32 %v6337, %v6646
        %v6674 = vadd.f32 %v6338, %v6648
        %v6675 = vadd.f32 %v6339, %v6650
        %v6676 = vadd.f32 %v6340, %v6652
        %v6677 = vstv %s1622
        %v6678 = vmul.f32 %v6677, %v1559
        %v6679 = vmul.f32 %v6677, %v1560
        %v6680 = vmul.f32 %v6677, %v1562
        %v6681 = vmul.f32 %v6677, %v1563
        %v6682 = vmul.f32 %v6677, %v1565
        %v6683 = vmul.f32 %v6677, %v1566
        %v6684 = vmul.f32 %v6677, %v1568
        %v6685 = vmul.f32 %v6677, %v1569
        %v6694 = vrot.slane %v6678, 5
        %v6695 = vrot.slane %v6679, 5
        %v6696 = vsel %vm1977, %v6694, %v6695
        %v6697 = vrot.slane %v6680, 5
        %v6698 = vrot.slane %v6681, 5
        %v6699 = vsel %vm1977, %v6697, %v6698
        %v6700 = vrot.slane %v6682, 5
        %v6701 = vrot.slane %v6683, 5
        %v6702 = vsel %vm1977, %v6700, %v6701
        %v6703 = vrot.slane %v6684, 5
        %v6704 = vrot.slane %v6685, 5
        %v6705 = vsel %vm1977, %v6703, %v6704
        %6706 = vrot.lane.b32.xlu0 %v6694, 104
        %v6707 = vpop.permute.xlu0 %6706
        %6708 = vrot.lane.b32.xlu0 %v6696, 104
        %v6709 = vpop.permute.xlu0 %6708
        %6710 = vrot.lane.b32.xlu0 %v6695, 104
        %v6711 = vpop.permute.xlu0 %6710
        %6712 = vrot.lane.b32.xlu0 %v6697, 104
        %v6713 = vpop.permute.xlu0 %6712
        %6714 = vrot.lane.b32.xlu0 %v6699, 104
        %v6715 = vpop.permute.xlu0 %6714
        %6716 = vrot.lane.b32.xlu0 %v6698, 104
        %v6717 = vpop.permute.xlu0 %6716
        %6718 = vrot.lane.b32.xlu0 %v6700, 104
        %v6719 = vpop.permute.xlu0 %6718
        %6720 = vrot.lane.b32.xlu0 %v6702, 104
        %v6721 = vpop.permute.xlu0 %6720
        %6722 = vrot.lane.b32.xlu0 %v6701, 104
        %v6723 = vpop.permute.xlu0 %6722
        %6724 = vrot.lane.b32.xlu0 %v6703, 104
        %v6725 = vpop.permute.xlu0 %6724
        %6726 = vrot.lane.b32.xlu0 %v6705, 104
        %v6727 = vpop.permute.xlu0 %6726
        %6728 = vrot.lane.b32.xlu0 %v6704, 104
        %v6729 = vpop.permute.xlu0 %6728
        %v6742 = vadd.f32 %v6402, %v6707
        %v6743 = vadd.f32 %v6403, %v6709
        %v6744 = vadd.f32 %v6404, %v6711
        %v6745 = vadd.f32 %v6405, %v6713
        %v6746 = vadd.f32 %v6406, %v6715
        %v6747 = vadd.f32 %v6407, %v6717
        %v6748 = vadd.f32 %v6408, %v6719
        %v6749 = vadd.f32 %v6409, %v6721
        %v6750 = vadd.f32 %v6410, %v6723
        %v6751 = vadd.f32 %v6411, %v6725
        %v6752 = vadd.f32 %v6412, %v6727
        %v6753 = vadd.f32 %v6413, %v6729
        %v6754 = vstv %s1629
        %v6755 = vmul.f32 %v6754, %v1559
        %v6756 = vmul.f32 %v6754, %v1560
        %v6757 = vmul.f32 %v6754, %v1561
        %v6758 = vmul.f32 %v6754, %v1562
        %v6759 = vmul.f32 %v6754, %v1563
        %v6760 = vmul.f32 %v6754, %v1564
        %v6761 = vmul.f32 %v6754, %v1565
        %v6762 = vmul.f32 %v6754, %v1566
        %v6763 = vmul.f32 %v6754, %v1567
        %v6764 = vmul.f32 %v6754, %v1568
        %v6765 = vmul.f32 %v6754, %v1569
        %v6766 = vmul.f32 %v6754, %v1570
        %v6779 = vrot.slane %v6755, 1
        %v6780 = vrot.slane %v6756, 1
        %v6781 = vsel %vm2063, %v6779, %v6780
        %v6782 = vrot.slane %v6757, 1
        %v6783 = vsel %vm2063, %v6780, %v6782
        %v6784 = vrot.slane %v6758, 1
        %v6785 = vrot.slane %v6759, 1
        %v6786 = vsel %vm2063, %v6784, %v6785
        %v6787 = vrot.slane %v6760, 1
        %v6788 = vsel %vm2063, %v6785, %v6787
        %v6789 = vrot.slane %v6761, 1
        %v6790 = vrot.slane %v6762, 1
        %v6791 = vsel %vm2063, %v6789, %v6790
        %v6792 = vrot.slane %v6763, 1
        %v6793 = vsel %vm2063, %v6790, %v6792
        %v6794 = vrot.slane %v6764, 1
        %v6795 = vrot.slane %v6765, 1
        %v6796 = vsel %vm2063, %v6794, %v6795
        %v6797 = vrot.slane %v6766, 1
        %v6798 = vsel %vm2063, %v6795, %v6797
        %6799 = vrot.lane.b32.xlu0 %v6781, 104
        %v6800 = vpop.permute.xlu0 %6799
        %6801 = vrot.lane.b32.xlu0 %v6783, 104
        %v6802 = vpop.permute.xlu0 %6801
        %6803 = vrot.lane.b32.xlu0 %v6786, 104
        %v6804 = vpop.permute.xlu0 %6803
        %6805 = vrot.lane.b32.xlu0 %v6788, 104
        %v6806 = vpop.permute.xlu0 %6805
        %6807 = vrot.lane.b32.xlu0 %v6791, 104
        %v6808 = vpop.permute.xlu0 %6807
        %6809 = vrot.lane.b32.xlu0 %v6793, 104
        %v6810 = vpop.permute.xlu0 %6809
        %6811 = vrot.lane.b32.xlu0 %v6796, 104
        %v6812 = vpop.permute.xlu0 %6811
        %6813 = vrot.lane.b32.xlu0 %v6798, 104
        %v6814 = vpop.permute.xlu0 %6813
        %v6823 = vadd.f32 %v6483, %v6800
        %v6824 = vadd.f32 %v6484, %v6802
        %v6825 = vadd.f32 %v6485, %v6804
        %v6826 = vadd.f32 %v6486, %v6806
        %v6827 = vadd.f32 %v6487, %v6808
        %v6828 = vadd.f32 %v6488, %v6810
        %v6829 = vadd.f32 %v6489, %v6812
        %v6830 = vadd.f32 %v6490, %v6814
        %v6831 = vstv %s1636
        %v6832 = vmul.f32 %v6831, %v1559
        %v6833 = vmul.f32 %v6831, %v1560
        %v6834 = vmul.f32 %v6831, %v1561
        %v6835 = vmul.f32 %v6831, %v1562
        %v6836 = vmul.f32 %v6831, %v1563
        %v6837 = vmul.f32 %v6831, %v1564
        %v6838 = vmul.f32 %v6831, %v1565
        %v6839 = vmul.f32 %v6831, %v1566
        %v6840 = vmul.f32 %v6831, %v1567
        %v6841 = vmul.f32 %v6831, %v1568
        %v6842 = vmul.f32 %v6831, %v1569
        %v6843 = vmul.f32 %v6831, %v1570
        %v6856 = vrot.slane %v6832, 1
        %v6857 = vrot.slane %v6833, 1
        %v6858 = vsel %vm2063, %v6856, %v6857
        %v6859 = vrot.slane %v6834, 1
        %v6860 = vsel %vm2063, %v6857, %v6859
        %v6861 = vrot.slane %v6835, 1
        %v6862 = vrot.slane %v6836, 1
        %v6863 = vsel %vm2063, %v6861, %v6862
        %v6864 = vrot.slane %v6837, 1
        %v6865 = vsel %vm2063, %v6862, %v6864
        %v6866 = vrot.slane %v6838, 1
        %v6867 = vrot.slane %v6839, 1
        %v6868 = vsel %vm2063, %v6866, %v6867
        %v6869 = vrot.slane %v6840, 1
        %v6870 = vsel %vm2063, %v6867, %v6869
        %v6871 = vrot.slane %v6841, 1
        %v6872 = vrot.slane %v6842, 1
        %v6873 = vsel %vm2063, %v6871, %v6872
        %v6874 = vrot.slane %v6843, 1
        %v6875 = vsel %vm2063, %v6872, %v6874
        %6876 = vrot.lane.b32.xlu0 %v6858, 104
        %v6877 = vpop.permute.xlu0 %6876
        %6878 = vrot.lane.b32.xlu0 %v6860, 104
        %v6879 = vpop.permute.xlu0 %6878
        %6880 = vrot.lane.b32.xlu0 %v6859, 104
        %v6881 = vpop.permute.xlu0 %6880
        %6882 = vrot.lane.b32.xlu0 %v6863, 104
        %v6883 = vpop.permute.xlu0 %6882
        %6884 = vrot.lane.b32.xlu0 %v6865, 104
        %v6885 = vpop.permute.xlu0 %6884
        %6886 = vrot.lane.b32.xlu0 %v6864, 104
        %v6887 = vpop.permute.xlu0 %6886
        %6888 = vrot.lane.b32.xlu0 %v6868, 104
        %v6889 = vpop.permute.xlu0 %6888
        %6890 = vrot.lane.b32.xlu0 %v6870, 104
        %v6891 = vpop.permute.xlu0 %6890
        %6892 = vrot.lane.b32.xlu0 %v6869, 104
        %v6893 = vpop.permute.xlu0 %6892
        %6894 = vrot.lane.b32.xlu0 %v6873, 104
        %v6895 = vpop.permute.xlu0 %6894
        %6896 = vrot.lane.b32.xlu0 %v6875, 104
        %v6897 = vpop.permute.xlu0 %6896
        %6898 = vrot.lane.b32.xlu0 %v6874, 104
        %v6899 = vpop.permute.xlu0 %6898
        %v6912 = vadd.f32 %v6572, %v6877
        %v6913 = vadd.f32 %v6573, %v6879
        %v6914 = vadd.f32 %v6574, %v6881
        %v6915 = vadd.f32 %v6575, %v6883
        %v6916 = vadd.f32 %v6576, %v6885
        %v6917 = vadd.f32 %v6577, %v6887
        %v6918 = vadd.f32 %v6578, %v6889
        %v6919 = vadd.f32 %v6579, %v6891
        %v6920 = vadd.f32 %v6580, %v6893
        %v6921 = vadd.f32 %v6581, %v6895
        %v6922 = vadd.f32 %v6582, %v6897
        %v6923 = vadd.f32 %v6583, %v6899
        %v6924 = vstv %s1643
        %v6925 = vmul.f32 %v6924, %v1559
        %v6926 = vmul.f32 %v6924, %v1560
        %v6927 = vmul.f32 %v6924, %v1561
        %v6928 = vmul.f32 %v6924, %v1562
        %v6929 = vmul.f32 %v6924, %v1563
        %v6930 = vmul.f32 %v6924, %v1564
        %v6931 = vmul.f32 %v6924, %v1565
        %v6932 = vmul.f32 %v6924, %v1566
        %v6933 = vmul.f32 %v6924, %v1567
        %v6934 = vmul.f32 %v6924, %v1568
        %v6935 = vmul.f32 %v6924, %v1569
        %v6936 = vmul.f32 %v6924, %v1570
        %v6949 = vrot.slane %v6925, 1
        %v6950 = vrot.slane %v6926, 1
        %v6951 = vsel %vm2063, %v6949, %v6950
        %v6952 = vrot.slane %v6927, 1
        %v6953 = vsel %vm2063, %v6950, %v6952
        %v6954 = vrot.slane %v6928, 1
        %v6955 = vrot.slane %v6929, 1
        %v6956 = vsel %vm2063, %v6954, %v6955
        %v6957 = vrot.slane %v6930, 1
        %v6958 = vsel %vm2063, %v6955, %v6957
        %v6959 = vrot.slane %v6931, 1
        %v6960 = vrot.slane %v6932, 1
        %v6961 = vsel %vm2063, %v6959, %v6960
        %v6962 = vrot.slane %v6933, 1
        %v6963 = vsel %vm2063, %v6960, %v6962
        %v6964 = vrot.slane %v6934, 1
        %v6965 = vrot.slane %v6935, 1
        %v6966 = vsel %vm2063, %v6964, %v6965
        %v6967 = vrot.slane %v6936, 1
        %v6968 = vsel %vm2063, %v6965, %v6967
        %6969 = vrot.lane.b32.xlu0 %v6951, 104
        %v6970 = vpop.permute.xlu0 %6969
        %6971 = vrot.lane.b32.xlu0 %v6953, 104
        %v6972 = vpop.permute.xlu0 %6971
        %6973 = vrot.lane.b32.xlu0 %v6952, 104
        %v6974 = vpop.permute.xlu0 %6973
        %6975 = vrot.lane.b32.xlu0 %v6956, 104
        %v6976 = vpop.permute.xlu0 %6975
        %6977 = vrot.lane.b32.xlu0 %v6958, 104
        %v6978 = vpop.permute.xlu0 %6977
        %6979 = vrot.lane.b32.xlu0 %v6957, 104
        %v6980 = vpop.permute.xlu0 %6979
        %6981 = vrot.lane.b32.xlu0 %v6961, 104
        %v6982 = vpop.permute.xlu0 %6981
        %6983 = vrot.lane.b32.xlu0 %v6963, 104
        %v6984 = vpop.permute.xlu0 %6983
        %6985 = vrot.lane.b32.xlu0 %v6962, 104
        %v6986 = vpop.permute.xlu0 %6985
        %6987 = vrot.lane.b32.xlu0 %v6966, 104
        %v6988 = vpop.permute.xlu0 %6987
        %6989 = vrot.lane.b32.xlu0 %v6968, 104
        %v6990 = vpop.permute.xlu0 %6989
        %6991 = vrot.lane.b32.xlu0 %v6967, 104
        %v6992 = vpop.permute.xlu0 %6991
        %v7005 = vadd.f32 %v6665, %v6970
        %v7006 = vadd.f32 %v6666, %v6972
        %v7007 = vadd.f32 %v6667, %v6974
        %v7008 = vadd.f32 %v6668, %v6976
        %v7009 = vadd.f32 %v6669, %v6978
        %v7010 = vadd.f32 %v6670, %v6980
        %v7011 = vadd.f32 %v6671, %v6982
        %v7012 = vadd.f32 %v6672, %v6984
        %v7013 = vadd.f32 %v6673, %v6986
        %v7014 = vadd.f32 %v6674, %v6988
        %v7015 = vadd.f32 %v6675, %v6990
        %v7016 = vadd.f32 %v6676, %v6992
        %v7017 = vstv %s1650
        %v7018 = vmul.f32 %v7017, %v1559
        %v7019 = vmul.f32 %v7017, %v1560
        %v7020 = vmul.f32 %v7017, %v1561
        %v7021 = vmul.f32 %v7017, %v1562
        %v7022 = vmul.f32 %v7017, %v1563
        %v7023 = vmul.f32 %v7017, %v1564
        %v7024 = vmul.f32 %v7017, %v1565
        %v7025 = vmul.f32 %v7017, %v1566
        %v7026 = vmul.f32 %v7017, %v1567
        %v7027 = vmul.f32 %v7017, %v1568
        %v7028 = vmul.f32 %v7017, %v1569
        %v7029 = vmul.f32 %v7017, %v1570
        %v7042 = vrot.slane %v7018, 1
        %v7043 = vrot.slane %v7019, 1
        %v7044 = vsel %vm2063, %v7042, %v7043
        %v7045 = vrot.slane %v7020, 1
        %v7046 = vsel %vm2063, %v7043, %v7045
        %v7047 = vrot.slane %v7021, 1
        %v7048 = vrot.slane %v7022, 1
        %v7049 = vsel %vm2063, %v7047, %v7048
        %v7050 = vrot.slane %v7023, 1
        %v7051 = vsel %vm2063, %v7048, %v7050
        %v7052 = vrot.slane %v7024, 1
        %v7053 = vrot.slane %v7025, 1
        %v7054 = vsel %vm2063, %v7052, %v7053
        %v7055 = vrot.slane %v7026, 1
        %v7056 = vsel %vm2063, %v7053, %v7055
        %v7057 = vrot.slane %v7027, 1
        %v7058 = vrot.slane %v7028, 1
        %v7059 = vsel %vm2063, %v7057, %v7058
        %v7060 = vrot.slane %v7029, 1
        %v7061 = vsel %vm2063, %v7058, %v7060
        %7062 = vrot.lane.b32.xlu0 %v7044, 104
        %v7063 = vpop.permute.xlu0 %7062
        %7064 = vrot.lane.b32.xlu0 %v7046, 104
        %v7065 = vpop.permute.xlu0 %7064
        %7066 = vrot.lane.b32.xlu0 %v7045, 104
        %v7067 = vpop.permute.xlu0 %7066
        %7068 = vrot.lane.b32.xlu0 %v7049, 104
        %v7069 = vpop.permute.xlu0 %7068
        %7070 = vrot.lane.b32.xlu0 %v7051, 104
        %v7071 = vpop.permute.xlu0 %7070
        %7072 = vrot.lane.b32.xlu0 %v7050, 104
        %v7073 = vpop.permute.xlu0 %7072
        %7074 = vrot.lane.b32.xlu0 %v7054, 104
        %v7075 = vpop.permute.xlu0 %7074
        %7076 = vrot.lane.b32.xlu0 %v7056, 104
        %v7077 = vpop.permute.xlu0 %7076
        %7078 = vrot.lane.b32.xlu0 %v7055, 104
        %v7079 = vpop.permute.xlu0 %7078
        %7080 = vrot.lane.b32.xlu0 %v7059, 104
        %v7081 = vpop.permute.xlu0 %7080
        %7082 = vrot.lane.b32.xlu0 %v7061, 104
        %v7083 = vpop.permute.xlu0 %7082
        %7084 = vrot.lane.b32.xlu0 %v7060, 104
        %v7085 = vpop.permute.xlu0 %7084
        %v7098 = vadd.f32 %v6742, %v7063
        %v7099 = vadd.f32 %v6743, %v7065
        %v7100 = vadd.f32 %v6744, %v7067
        %v7101 = vadd.f32 %v6745, %v7069
        %v7102 = vadd.f32 %v6746, %v7071
        %v7103 = vadd.f32 %v6747, %v7073
        %v7104 = vadd.f32 %v6748, %v7075
        %v7105 = vadd.f32 %v6749, %v7077
        %v7106 = vadd.f32 %v6750, %v7079
        %v7107 = vadd.f32 %v6751, %v7081
        %v7108 = vadd.f32 %v6752, %v7083
        %v7109 = vadd.f32 %v6753, %v7085
        %v7110 = vstv %s1657
        %v7111 = vmul.f32 %v7110, %v1559
        %v7112 = vmul.f32 %v7110, %v1560
        %v7113 = vmul.f32 %v7110, %v1561
        %v7114 = vmul.f32 %v7110, %v1562
        %v7115 = vmul.f32 %v7110, %v1563
        %v7116 = vmul.f32 %v7110, %v1564
        %v7117 = vmul.f32 %v7110, %v1565
        %v7118 = vmul.f32 %v7110, %v1566
        %v7119 = vmul.f32 %v7110, %v1567
        %v7120 = vmul.f32 %v7110, %v1568
        %v7121 = vmul.f32 %v7110, %v1569
        %v7122 = vmul.f32 %v7110, %v1570
        %v7135 = vrot.slane %v7111, 5
        %v7136 = vrot.slane %v7112, 5
        %v7137 = vsel %vm1977, %v7135, %v7136
        %v7138 = vrot.slane %v7113, 5
        %v7139 = vsel %vm1977, %v7136, %v7138
        %v7140 = vrot.slane %v7114, 5
        %v7141 = vrot.slane %v7115, 5
        %v7142 = vsel %vm1977, %v7140, %v7141
        %v7143 = vrot.slane %v7116, 5
        %v7144 = vsel %vm1977, %v7141, %v7143
        %v7145 = vrot.slane %v7117, 5
        %v7146 = vrot.slane %v7118, 5
        %v7147 = vsel %vm1977, %v7145, %v7146
        %v7148 = vrot.slane %v7119, 5
        %v7149 = vsel %vm1977, %v7146, %v7148
        %v7150 = vrot.slane %v7120, 5
        %v7151 = vrot.slane %v7121, 5
        %v7152 = vsel %vm1977, %v7150, %v7151
        %v7153 = vrot.slane %v7122, 5
        %v7154 = vsel %vm1977, %v7151, %v7153
        %7155 = vrot.lane.b32.xlu0 %v7137, 104
        %v7156 = vpop.permute.xlu0 %7155
        %7157 = vrot.lane.b32.xlu0 %v7139, 104
        %v7158 = vpop.permute.xlu0 %7157
        %7159 = vrot.lane.b32.xlu0 %v7142, 104
        %v7160 = vpop.permute.xlu0 %7159
        %7161 = vrot.lane.b32.xlu0 %v7144, 104
        %v7162 = vpop.permute.xlu0 %7161
        %7163 = vrot.lane.b32.xlu0 %v7147, 104
        %v7164 = vpop.permute.xlu0 %7163
        %7165 = vrot.lane.b32.xlu0 %v7149, 104
        %v7166 = vpop.permute.xlu0 %7165
        %7167 = vrot.lane.b32.xlu0 %v7152, 104
        %v7168 = vpop.permute.xlu0 %7167
        %7169 = vrot.lane.b32.xlu0 %v7154, 104
        %v7170 = vpop.permute.xlu0 %7169
        %v7179 = vadd.f32 %v6823, %v7156
        %v7180 = vadd.f32 %v6824, %v7158
        %v7181 = vadd.f32 %v6825, %v7160
        %v7182 = vadd.f32 %v6826, %v7162
        %v7183 = vadd.f32 %v6827, %v7164
        %v7184 = vadd.f32 %v6828, %v7166
        %v7185 = vadd.f32 %v6829, %v7168
        %v7186 = vadd.f32 %v6830, %v7170
        %v7187 = vstv %s1664
        %v7188 = vmul.f32 %v7187, %v1559
        %v7189 = vmul.f32 %v7187, %v1560
        %v7190 = vmul.f32 %v7187, %v1561
        %v7191 = vmul.f32 %v7187, %v1562
        %v7192 = vmul.f32 %v7187, %v1563
        %v7193 = vmul.f32 %v7187, %v1564
        %v7194 = vmul.f32 %v7187, %v1565
        %v7195 = vmul.f32 %v7187, %v1566
        %v7196 = vmul.f32 %v7187, %v1567
        %v7197 = vmul.f32 %v7187, %v1568
        %v7198 = vmul.f32 %v7187, %v1569
        %v7199 = vmul.f32 %v7187, %v1570
        %v7212 = vrot.slane %v7188, 5
        %v7213 = vrot.slane %v7189, 5
        %v7214 = vsel %vm1977, %v7212, %v7213
        %v7215 = vrot.slane %v7190, 5
        %v7216 = vsel %vm1977, %v7213, %v7215
        %v7217 = vrot.slane %v7191, 5
        %v7218 = vrot.slane %v7192, 5
        %v7219 = vsel %vm1977, %v7217, %v7218
        %v7220 = vrot.slane %v7193, 5
        %v7221 = vsel %vm1977, %v7218, %v7220
        %v7222 = vrot.slane %v7194, 5
        %v7223 = vrot.slane %v7195, 5
        %v7224 = vsel %vm1977, %v7222, %v7223
        %v7225 = vrot.slane %v7196, 5
        %v7226 = vsel %vm1977, %v7223, %v7225
        %v7227 = vrot.slane %v7197, 5
        %v7228 = vrot.slane %v7198, 5
        %v7229 = vsel %vm1977, %v7227, %v7228
        %v7230 = vrot.slane %v7199, 5
        %v7231 = vsel %vm1977, %v7228, %v7230
        %7232 = vrot.lane.b32.xlu0 %v7214, 104
        %v7233 = vpop.permute.xlu0 %7232
        %7234 = vrot.lane.b32.xlu0 %v7216, 104
        %v7235 = vpop.permute.xlu0 %7234
        %7236 = vrot.lane.b32.xlu0 %v7215, 104
        %v7237 = vpop.permute.xlu0 %7236
        %7238 = vrot.lane.b32.xlu0 %v7219, 104
        %v7239 = vpop.permute.xlu0 %7238
        %7240 = vrot.lane.b32.xlu0 %v7221, 104
        %v7241 = vpop.permute.xlu0 %7240
        %7242 = vrot.lane.b32.xlu0 %v7220, 104
        %v7243 = vpop.permute.xlu0 %7242
        %7244 = vrot.lane.b32.xlu0 %v7224, 104
        %v7245 = vpop.permute.xlu0 %7244
        %7246 = vrot.lane.b32.xlu0 %v7226, 104
        %v7247 = vpop.permute.xlu0 %7246
        %7248 = vrot.lane.b32.xlu0 %v7225, 104
        %v7249 = vpop.permute.xlu0 %7248
        %7250 = vrot.lane.b32.xlu0 %v7229, 104
        %v7251 = vpop.permute.xlu0 %7250
        %7252 = vrot.lane.b32.xlu0 %v7231, 104
        %v7253 = vpop.permute.xlu0 %7252
        %7254 = vrot.lane.b32.xlu0 %v7230, 104
        %v7255 = vpop.permute.xlu0 %7254
        %v7268 = vadd.f32 %v6912, %v7233
        %v7269 = vadd.f32 %v6913, %v7235
        %v7270 = vadd.f32 %v6914, %v7237
        %v7271 = vadd.f32 %v6915, %v7239
        %v7272 = vadd.f32 %v6916, %v7241
        %v7273 = vadd.f32 %v6917, %v7243
        %v7274 = vadd.f32 %v6918, %v7245
        %v7275 = vadd.f32 %v6919, %v7247
        %v7276 = vadd.f32 %v6920, %v7249
        %v7277 = vadd.f32 %v6921, %v7251
        %v7278 = vadd.f32 %v6922, %v7253
        %v7279 = vadd.f32 %v6923, %v7255
        %v7280 = vstv %s1623
        %v7281 = vmul.f32 %v7280, %v1559
        %v7282 = vmul.f32 %v7280, %v1560
        %v7283 = vmul.f32 %v7280, %v1562
        %v7284 = vmul.f32 %v7280, %v1563
        %v7285 = vmul.f32 %v7280, %v1565
        %v7286 = vmul.f32 %v7280, %v1566
        %v7287 = vmul.f32 %v7280, %v1568
        %v7288 = vmul.f32 %v7280, %v1569
        %v7297 = vrot.slane %v7281, 6
        %v7298 = vrot.slane %v7282, 6
        %v7299 = vsel %vm670, %v7297, %v7298
        %v7300 = vrot.slane %v7283, 6
        %v7301 = vrot.slane %v7284, 6
        %v7302 = vsel %vm670, %v7300, %v7301
        %v7303 = vrot.slane %v7285, 6
        %v7304 = vrot.slane %v7286, 6
        %v7305 = vsel %vm670, %v7303, %v7304
        %v7306 = vrot.slane %v7287, 6
        %v7307 = vrot.slane %v7288, 6
        %v7308 = vsel %vm670, %v7306, %v7307
        %7309 = vrot.lane.b32.xlu0 %v7297, 103
        %v7310 = vpop.permute.xlu0 %7309
        %7311 = vrot.lane.b32.xlu0 %v7299, 103
        %v7312 = vpop.permute.xlu0 %7311
        %7313 = vrot.lane.b32.xlu0 %v7298, 103
        %v7314 = vpop.permute.xlu0 %7313
        %7315 = vrot.lane.b32.xlu0 %v7300, 103
        %v7316 = vpop.permute.xlu0 %7315
        %7317 = vrot.lane.b32.xlu0 %v7302, 103
        %v7318 = vpop.permute.xlu0 %7317
        %7319 = vrot.lane.b32.xlu0 %v7301, 103
        %v7320 = vpop.permute.xlu0 %7319
        %7321 = vrot.lane.b32.xlu0 %v7303, 103
        %v7322 = vpop.permute.xlu0 %7321
        %7323 = vrot.lane.b32.xlu0 %v7305, 103
        %v7324 = vpop.permute.xlu0 %7323
        %7325 = vrot.lane.b32.xlu0 %v7304, 103
        %v7326 = vpop.permute.xlu0 %7325
        %7327 = vrot.lane.b32.xlu0 %v7306, 103
        %v7328 = vpop.permute.xlu0 %7327
        %7329 = vrot.lane.b32.xlu0 %v7308, 103
        %v7330 = vpop.permute.xlu0 %7329
        %7331 = vrot.lane.b32.xlu0 %v7307, 103
        %v7332 = vpop.permute.xlu0 %7331
        %v7345 = vadd.f32 %v7005, %v7310
        %v7346 = vadd.f32 %v7006, %v7312
        %v7347 = vadd.f32 %v7007, %v7314
        %v7348 = vadd.f32 %v7008, %v7316
        %v7349 = vadd.f32 %v7009, %v7318
        %v7350 = vadd.f32 %v7010, %v7320
        %v7351 = vadd.f32 %v7011, %v7322
        %v7352 = vadd.f32 %v7012, %v7324
        %v7353 = vadd.f32 %v7013, %v7326
        %v7354 = vadd.f32 %v7014, %v7328
        %v7355 = vadd.f32 %v7015, %v7330
        %v7356 = vadd.f32 %v7016, %v7332
        %v7357 = vstv %s1630
        %v7358 = vmul.f32 %v7357, %v1559
        %v7359 = vmul.f32 %v7357, %v1560
        %v7360 = vmul.f32 %v7357, %v1561
        %v7361 = vmul.f32 %v7357, %v1562
        %v7362 = vmul.f32 %v7357, %v1563
        %v7363 = vmul.f32 %v7357, %v1564
        %v7364 = vmul.f32 %v7357, %v1565
        %v7365 = vmul.f32 %v7357, %v1566
        %v7366 = vmul.f32 %v7357, %v1567
        %v7367 = vmul.f32 %v7357, %v1568
        %v7368 = vmul.f32 %v7357, %v1569
        %v7369 = vmul.f32 %v7357, %v1570
        %v7382 = vrot.slane %v7358, 6
        %v7383 = vrot.slane %v7359, 6
        %v7384 = vsel %vm670, %v7382, %v7383
        %v7385 = vrot.slane %v7360, 6
        %v7386 = vsel %vm670, %v7383, %v7385
        %v7387 = vrot.slane %v7361, 6
        %v7388 = vrot.slane %v7362, 6
        %v7389 = vsel %vm670, %v7387, %v7388
        %v7390 = vrot.slane %v7363, 6
        %v7391 = vsel %vm670, %v7388, %v7390
        %v7392 = vrot.slane %v7364, 6
        %v7393 = vrot.slane %v7365, 6
        %v7394 = vsel %vm670, %v7392, %v7393
        %v7395 = vrot.slane %v7366, 6
        %v7396 = vsel %vm670, %v7393, %v7395
        %v7397 = vrot.slane %v7367, 6
        %v7398 = vrot.slane %v7368, 6
        %v7399 = vsel %vm670, %v7397, %v7398
        %v7400 = vrot.slane %v7369, 6
        %v7401 = vsel %vm670, %v7398, %v7400
        %7402 = vrot.lane.b32.xlu0 %v7382, 103
        %v7403 = vpop.permute.xlu0 %7402
        %7404 = vrot.lane.b32.xlu0 %v7384, 103
        %v7405 = vpop.permute.xlu0 %7404
        %7406 = vrot.lane.b32.xlu0 %v7386, 103
        %v7407 = vpop.permute.xlu0 %7406
        %7408 = vrot.lane.b32.xlu0 %v7387, 103
        %v7409 = vpop.permute.xlu0 %7408
        %7410 = vrot.lane.b32.xlu0 %v7389, 103
        %v7411 = vpop.permute.xlu0 %7410
        %7412 = vrot.lane.b32.xlu0 %v7391, 103
        %v7413 = vpop.permute.xlu0 %7412
        %7414 = vrot.lane.b32.xlu0 %v7392, 103
        %v7415 = vpop.permute.xlu0 %7414
        %7416 = vrot.lane.b32.xlu0 %v7394, 103
        %v7417 = vpop.permute.xlu0 %7416
        %7418 = vrot.lane.b32.xlu0 %v7396, 103
        %v7419 = vpop.permute.xlu0 %7418
        %7420 = vrot.lane.b32.xlu0 %v7397, 103
        %v7421 = vpop.permute.xlu0 %7420
        %7422 = vrot.lane.b32.xlu0 %v7399, 103
        %v7423 = vpop.permute.xlu0 %7422
        %7424 = vrot.lane.b32.xlu0 %v7401, 103
        %v7425 = vpop.permute.xlu0 %7424
        %v7438 = vadd.f32 %v7098, %v7403
        %v7439 = vadd.f32 %v7099, %v7405
        %v7440 = vadd.f32 %v7100, %v7407
        %v7441 = vadd.f32 %v7101, %v7409
        %v7442 = vadd.f32 %v7102, %v7411
        %v7443 = vadd.f32 %v7103, %v7413
        %v7444 = vadd.f32 %v7104, %v7415
        %v7445 = vadd.f32 %v7105, %v7417
        %v7446 = vadd.f32 %v7106, %v7419
        %v7447 = vadd.f32 %v7107, %v7421
        %v7448 = vadd.f32 %v7108, %v7423
        %v7449 = vadd.f32 %v7109, %v7425
        %v7450 = vstv %s1637
        %v7451 = vmul.f32 %v7450, %v1559
        %v7452 = vmul.f32 %v7450, %v1560
        %v7453 = vmul.f32 %v7450, %v1561
        %v7454 = vmul.f32 %v7450, %v1562
        %v7455 = vmul.f32 %v7450, %v1563
        %v7456 = vmul.f32 %v7450, %v1564
        %v7457 = vmul.f32 %v7450, %v1565
        %v7458 = vmul.f32 %v7450, %v1566
        %v7459 = vmul.f32 %v7450, %v1567
        %v7460 = vmul.f32 %v7450, %v1568
        %v7461 = vmul.f32 %v7450, %v1569
        %v7462 = vmul.f32 %v7450, %v1570
        %v7475 = vrot.slane %v7451, 2
        %v7476 = vrot.slane %v7452, 2
        %v7477 = vsel %vm2760, %v7475, %v7476
        %v7478 = vrot.slane %v7453, 2
        %v7479 = vsel %vm2760, %v7476, %v7478
        %v7480 = vrot.slane %v7454, 2
        %v7481 = vrot.slane %v7455, 2
        %v7482 = vsel %vm2760, %v7480, %v7481
        %v7483 = vrot.slane %v7456, 2
        %v7484 = vsel %vm2760, %v7481, %v7483
        %v7485 = vrot.slane %v7457, 2
        %v7486 = vrot.slane %v7458, 2
        %v7487 = vsel %vm2760, %v7485, %v7486
        %v7488 = vrot.slane %v7459, 2
        %v7489 = vsel %vm2760, %v7486, %v7488
        %v7490 = vrot.slane %v7460, 2
        %v7491 = vrot.slane %v7461, 2
        %v7492 = vsel %vm2760, %v7490, %v7491
        %v7493 = vrot.slane %v7462, 2
        %v7494 = vsel %vm2760, %v7491, %v7493
        %7495 = vrot.lane.b32.xlu0 %v7477, 103
        %v7496 = vpop.permute.xlu0 %7495
        %7497 = vrot.lane.b32.xlu0 %v7479, 103
        %v7498 = vpop.permute.xlu0 %7497
        %7499 = vrot.lane.b32.xlu0 %v7482, 103
        %v7500 = vpop.permute.xlu0 %7499
        %7501 = vrot.lane.b32.xlu0 %v7484, 103
        %v7502 = vpop.permute.xlu0 %7501
        %7503 = vrot.lane.b32.xlu0 %v7487, 103
        %v7504 = vpop.permute.xlu0 %7503
        %7505 = vrot.lane.b32.xlu0 %v7489, 103
        %v7506 = vpop.permute.xlu0 %7505
        %7507 = vrot.lane.b32.xlu0 %v7492, 103
        %v7508 = vpop.permute.xlu0 %7507
        %7509 = vrot.lane.b32.xlu0 %v7494, 103
        %v7510 = vpop.permute.xlu0 %7509
        %v7519 = vadd.f32 %v7179, %v7496
        %v7520 = vadd.f32 %v7180, %v7498
        %v7521 = vadd.f32 %v7181, %v7500
        %v7522 = vadd.f32 %v7182, %v7502
        %v7523 = vadd.f32 %v7183, %v7504
        %v7524 = vadd.f32 %v7184, %v7506
        %v7525 = vadd.f32 %v7185, %v7508
        %v7526 = vadd.f32 %v7186, %v7510
        %v7527 = vstv %s1644
        %v7528 = vmul.f32 %v7527, %v1559
        %v7529 = vmul.f32 %v7527, %v1560
        %v7530 = vmul.f32 %v7527, %v1561
        %v7531 = vmul.f32 %v7527, %v1562
        %v7532 = vmul.f32 %v7527, %v1563
        %v7533 = vmul.f32 %v7527, %v1564
        %v7534 = vmul.f32 %v7527, %v1565
        %v7535 = vmul.f32 %v7527, %v1566
        %v7536 = vmul.f32 %v7527, %v1567
        %v7537 = vmul.f32 %v7527, %v1568
        %v7538 = vmul.f32 %v7527, %v1569
        %v7539 = vmul.f32 %v7527, %v1570
        %v7552 = vrot.slane %v7528, 2
        %v7553 = vrot.slane %v7529, 2
        %v7554 = vsel %vm2760, %v7552, %v7553
        %v7555 = vrot.slane %v7530, 2
        %v7556 = vsel %vm2760, %v7553, %v7555
        %v7557 = vrot.slane %v7531, 2
        %v7558 = vrot.slane %v7532, 2
        %v7559 = vsel %vm2760, %v7557, %v7558
        %v7560 = vrot.slane %v7533, 2
        %v7561 = vsel %vm2760, %v7558, %v7560
        %v7562 = vrot.slane %v7534, 2
        %v7563 = vrot.slane %v7535, 2
        %v7564 = vsel %vm2760, %v7562, %v7563
        %v7565 = vrot.slane %v7536, 2
        %v7566 = vsel %vm2760, %v7563, %v7565
        %v7567 = vrot.slane %v7537, 2
        %v7568 = vrot.slane %v7538, 2
        %v7569 = vsel %vm2760, %v7567, %v7568
        %v7570 = vrot.slane %v7539, 2
        %v7571 = vsel %vm2760, %v7568, %v7570
        %7572 = vrot.lane.b32.xlu0 %v7554, 103
        %v7573 = vpop.permute.xlu0 %7572
        %7574 = vrot.lane.b32.xlu0 %v7556, 103
        %v7575 = vpop.permute.xlu0 %7574
        %7576 = vrot.lane.b32.xlu0 %v7555, 103
        %v7577 = vpop.permute.xlu0 %7576
        %7578 = vrot.lane.b32.xlu0 %v7559, 103
        %v7579 = vpop.permute.xlu0 %7578
        %7580 = vrot.lane.b32.xlu0 %v7561, 103
        %v7581 = vpop.permute.xlu0 %7580
        %7582 = vrot.lane.b32.xlu0 %v7560, 103
        %v7583 = vpop.permute.xlu0 %7582
        %7584 = vrot.lane.b32.xlu0 %v7564, 103
        %v7585 = vpop.permute.xlu0 %7584
        %7586 = vrot.lane.b32.xlu0 %v7566, 103
        %v7587 = vpop.permute.xlu0 %7586
        %7588 = vrot.lane.b32.xlu0 %v7565, 103
        %v7589 = vpop.permute.xlu0 %7588
        %7590 = vrot.lane.b32.xlu0 %v7569, 103
        %v7591 = vpop.permute.xlu0 %7590
        %7592 = vrot.lane.b32.xlu0 %v7571, 103
        %v7593 = vpop.permute.xlu0 %7592
        %7594 = vrot.lane.b32.xlu0 %v7570, 103
        %v7595 = vpop.permute.xlu0 %7594
        %v7608 = vadd.f32 %v7268, %v7573
        %v7609 = vadd.f32 %v7269, %v7575
        %v7610 = vadd.f32 %v7270, %v7577
        %v7611 = vadd.f32 %v7271, %v7579
        %v7612 = vadd.f32 %v7272, %v7581
        %v7613 = vadd.f32 %v7273, %v7583
        %v7614 = vadd.f32 %v7274, %v7585
        %v7615 = vadd.f32 %v7275, %v7587
        %v7616 = vadd.f32 %v7276, %v7589
        %v7617 = vadd.f32 %v7277, %v7591
        %v7618 = vadd.f32 %v7278, %v7593
        %v7619 = vadd.f32 %v7279, %v7595
        %v7620 = vstv %s1651
        %v7621 = vmul.f32 %v7620, %v1559
        %v7622 = vmul.f32 %v7620, %v1560
        %v7623 = vmul.f32 %v7620, %v1561
        %v7624 = vmul.f32 %v7620, %v1562
        %v7625 = vmul.f32 %v7620, %v1563
        %v7626 = vmul.f32 %v7620, %v1564
        %v7627 = vmul.f32 %v7620, %v1565
        %v7628 = vmul.f32 %v7620, %v1566
        %v7629 = vmul.f32 %v7620, %v1567
        %v7630 = vmul.f32 %v7620, %v1568
        %v7631 = vmul.f32 %v7620, %v1569
        %v7632 = vmul.f32 %v7620, %v1570
        %v7645 = vrot.slane %v7621, 2
        %v7646 = vrot.slane %v7622, 2
        %v7647 = vsel %vm2760, %v7645, %v7646
        %v7648 = vrot.slane %v7623, 2
        %v7649 = vsel %vm2760, %v7646, %v7648
        %v7650 = vrot.slane %v7624, 2
        %v7651 = vrot.slane %v7625, 2
        %v7652 = vsel %vm2760, %v7650, %v7651
        %v7653 = vrot.slane %v7626, 2
        %v7654 = vsel %vm2760, %v7651, %v7653
        %v7655 = vrot.slane %v7627, 2
        %v7656 = vrot.slane %v7628, 2
        %v7657 = vsel %vm2760, %v7655, %v7656
        %v7658 = vrot.slane %v7629, 2
        %v7659 = vsel %vm2760, %v7656, %v7658
        %v7660 = vrot.slane %v7630, 2
        %v7661 = vrot.slane %v7631, 2
        %v7662 = vsel %vm2760, %v7660, %v7661
        %v7663 = vrot.slane %v7632, 2
        %v7664 = vsel %vm2760, %v7661, %v7663
        %7665 = vrot.lane.b32.xlu0 %v7647, 103
        %v7666 = vpop.permute.xlu0 %7665
        %7667 = vrot.lane.b32.xlu0 %v7649, 103
        %v7668 = vpop.permute.xlu0 %7667
        %7669 = vrot.lane.b32.xlu0 %v7648, 103
        %v7670 = vpop.permute.xlu0 %7669
        %7671 = vrot.lane.b32.xlu0 %v7652, 103
        %v7672 = vpop.permute.xlu0 %7671
        %7673 = vrot.lane.b32.xlu0 %v7654, 103
        %v7674 = vpop.permute.xlu0 %7673
        %7675 = vrot.lane.b32.xlu0 %v7653, 103
        %v7676 = vpop.permute.xlu0 %7675
        %7677 = vrot.lane.b32.xlu0 %v7657, 103
        %v7678 = vpop.permute.xlu0 %7677
        %7679 = vrot.lane.b32.xlu0 %v7659, 103
        %v7680 = vpop.permute.xlu0 %7679
        %7681 = vrot.lane.b32.xlu0 %v7658, 103
        %v7682 = vpop.permute.xlu0 %7681
        %7683 = vrot.lane.b32.xlu0 %v7662, 103
        %v7684 = vpop.permute.xlu0 %7683
        %7685 = vrot.lane.b32.xlu0 %v7664, 103
        %v7686 = vpop.permute.xlu0 %7685
        %7687 = vrot.lane.b32.xlu0 %v7663, 103
        %v7688 = vpop.permute.xlu0 %7687
        %v7701 = vadd.f32 %v7345, %v7666
        %v7702 = vadd.f32 %v7346, %v7668
        %v7703 = vadd.f32 %v7347, %v7670
        %v7704 = vadd.f32 %v7348, %v7672
        %v7705 = vadd.f32 %v7349, %v7674
        %v7706 = vadd.f32 %v7350, %v7676
        %v7707 = vadd.f32 %v7351, %v7678
        %v7708 = vadd.f32 %v7352, %v7680
        %v7709 = vadd.f32 %v7353, %v7682
        %v7710 = vadd.f32 %v7354, %v7684
        %v7711 = vadd.f32 %v7355, %v7686
        %v7712 = vadd.f32 %v7356, %v7688
        %v7713 = vstv %s1658
        %v7714 = vmul.f32 %v7713, %v1559
        %v7715 = vmul.f32 %v7713, %v1560
        %v7716 = vmul.f32 %v7713, %v1561
        %v7717 = vmul.f32 %v7713, %v1562
        %v7718 = vmul.f32 %v7713, %v1563
        %v7719 = vmul.f32 %v7713, %v1564
        %v7720 = vmul.f32 %v7713, %v1565
        %v7721 = vmul.f32 %v7713, %v1566
        %v7722 = vmul.f32 %v7713, %v1567
        %v7723 = vmul.f32 %v7713, %v1568
        %v7724 = vmul.f32 %v7713, %v1569
        %v7725 = vmul.f32 %v7713, %v1570
        %v7738 = vrot.slane %v7714, 2
        %v7739 = vrot.slane %v7715, 2
        %v7740 = vsel %vm2760, %v7738, %v7739
        %v7741 = vrot.slane %v7716, 2
        %v7742 = vsel %vm2760, %v7739, %v7741
        %v7743 = vrot.slane %v7717, 2
        %v7744 = vrot.slane %v7718, 2
        %v7745 = vsel %vm2760, %v7743, %v7744
        %v7746 = vrot.slane %v7719, 2
        %v7747 = vsel %vm2760, %v7744, %v7746
        %v7748 = vrot.slane %v7720, 2
        %v7749 = vrot.slane %v7721, 2
        %v7750 = vsel %vm2760, %v7748, %v7749
        %v7751 = vrot.slane %v7722, 2
        %v7752 = vsel %vm2760, %v7749, %v7751
        %v7753 = vrot.slane %v7723, 2
        %v7754 = vrot.slane %v7724, 2
        %v7755 = vsel %vm2760, %v7753, %v7754
        %v7756 = vrot.slane %v7725, 2
        %v7757 = vsel %vm2760, %v7754, %v7756
        %7758 = vrot.lane.b32.xlu0 %v7740, 103
        %v7759 = vpop.permute.xlu0 %7758
        %7760 = vrot.lane.b32.xlu0 %v7742, 103
        %v7761 = vpop.permute.xlu0 %7760
        %7762 = vrot.lane.b32.xlu0 %v7741, 103
        %v7763 = vpop.permute.xlu0 %7762
        %7764 = vrot.lane.b32.xlu0 %v7745, 103
        %v7765 = vpop.permute.xlu0 %7764
        %7766 = vrot.lane.b32.xlu0 %v7747, 103
        %v7767 = vpop.permute.xlu0 %7766
        %7768 = vrot.lane.b32.xlu0 %v7746, 103
        %v7769 = vpop.permute.xlu0 %7768
        %7770 = vrot.lane.b32.xlu0 %v7750, 103
        %v7771 = vpop.permute.xlu0 %7770
        %7772 = vrot.lane.b32.xlu0 %v7752, 103
        %v7773 = vpop.permute.xlu0 %7772
        %7774 = vrot.lane.b32.xlu0 %v7751, 103
        %v7775 = vpop.permute.xlu0 %7774
        %7776 = vrot.lane.b32.xlu0 %v7755, 103
        %v7777 = vpop.permute.xlu0 %7776
        %7778 = vrot.lane.b32.xlu0 %v7757, 103
        %v7779 = vpop.permute.xlu0 %7778
        %7780 = vrot.lane.b32.xlu0 %v7756, 103
        %v7781 = vpop.permute.xlu0 %7780
        %v7794 = vadd.f32 %v7438, %v7759
        %v7795 = vadd.f32 %v7439, %v7761
        %v7796 = vadd.f32 %v7440, %v7763
        %v7797 = vadd.f32 %v7441, %v7765
        %v7798 = vadd.f32 %v7442, %v7767
        %v7799 = vadd.f32 %v7443, %v7769
        %v7800 = vadd.f32 %v7444, %v7771
        %v7801 = vadd.f32 %v7445, %v7773
        %v7802 = vadd.f32 %v7446, %v7775
        %v7803 = vadd.f32 %v7447, %v7777
        %v7804 = vadd.f32 %v7448, %v7779
        %v7805 = vadd.f32 %v7449, %v7781
        %v7806 = vstv %s1665
        %v7807 = vmul.f32 %v7806, %v1559
        %v7808 = vmul.f32 %v7806, %v1560
        %v7809 = vmul.f32 %v7806, %v1561
        %v7810 = vmul.f32 %v7806, %v1562
        %v7811 = vmul.f32 %v7806, %v1563
        %v7812 = vmul.f32 %v7806, %v1564
        %v7813 = vmul.f32 %v7806, %v1565
        %v7814 = vmul.f32 %v7806, %v1566
        %v7815 = vmul.f32 %v7806, %v1567
        %v7816 = vmul.f32 %v7806, %v1568
        %v7817 = vmul.f32 %v7806, %v1569
        %v7818 = vmul.f32 %v7806, %v1570
        %v7831 = vrot.slane %v7807, 6
        %v7832 = vrot.slane %v7808, 6
        %v7833 = vsel %vm670, %v7831, %v7832
        %v7834 = vrot.slane %v7809, 6
        %v7835 = vsel %vm670, %v7832, %v7834
        %v7836 = vrot.slane %v7810, 6
        %v7837 = vrot.slane %v7811, 6
        %v7838 = vsel %vm670, %v7836, %v7837
        %v7839 = vrot.slane %v7812, 6
        %v7840 = vsel %vm670, %v7837, %v7839
        %v7841 = vrot.slane %v7813, 6
        %v7842 = vrot.slane %v7814, 6
        %v7843 = vsel %vm670, %v7841, %v7842
        %v7844 = vrot.slane %v7815, 6
        %v7845 = vsel %vm670, %v7842, %v7844
        %v7846 = vrot.slane %v7816, 6
        %v7847 = vrot.slane %v7817, 6
        %v7848 = vsel %vm670, %v7846, %v7847
        %v7849 = vrot.slane %v7818, 6
        %v7850 = vsel %vm670, %v7847, %v7849
        %7851 = vrot.lane.b32.xlu0 %v7833, 103
        %v7852 = vpop.permute.xlu0 %7851
        %7853 = vrot.lane.b32.xlu0 %v7835, 103
        %v7854 = vpop.permute.xlu0 %7853
        %7855 = vrot.lane.b32.xlu0 %v7838, 103
        %v7856 = vpop.permute.xlu0 %7855
        %7857 = vrot.lane.b32.xlu0 %v7840, 103
        %v7858 = vpop.permute.xlu0 %7857
        %7859 = vrot.lane.b32.xlu0 %v7843, 103
        %v7860 = vpop.permute.xlu0 %7859
        %7861 = vrot.lane.b32.xlu0 %v7845, 103
        %v7862 = vpop.permute.xlu0 %7861
        %7863 = vrot.lane.b32.xlu0 %v7848, 103
        %v7864 = vpop.permute.xlu0 %7863
        %7865 = vrot.lane.b32.xlu0 %v7850, 103
        %v7866 = vpop.permute.xlu0 %7865
        %v7875 = vadd.f32 %v7519, %v7852
        %v7876 = vadd.f32 %v7520, %v7854
        %v7877 = vadd.f32 %v7521, %v7856
        %v7878 = vadd.f32 %v7522, %v7858
        %v7879 = vadd.f32 %v7523, %v7860
        %v7880 = vadd.f32 %v7524, %v7862
        %v7881 = vadd.f32 %v7525, %v7864
        %v7882 = vadd.f32 %v7526, %v7866
        %v7883 = vstv %s1624
        %v7884 = vmul.f32 %v7883, %v1559
        %v7885 = vmul.f32 %v7883, %v1560
        %v7886 = vmul.f32 %v7883, %v1562
        %v7887 = vmul.f32 %v7883, %v1563
        %v7888 = vmul.f32 %v7883, %v1565
        %v7889 = vmul.f32 %v7883, %v1566
        %v7890 = vmul.f32 %v7883, %v1568
        %v7891 = vmul.f32 %v7883, %v1569
        %v7900 = vrot.slane %v7884, 7
        %v7901 = vrot.slane %v7885, 7
        %v7902 = vsel %vm3186, %v7900, %v7901
        %v7903 = vrot.slane %v7886, 7
        %v7904 = vrot.slane %v7887, 7
        %v7905 = vsel %vm3186, %v7903, %v7904
        %v7906 = vrot.slane %v7888, 7
        %v7907 = vrot.slane %v7889, 7
        %v7908 = vsel %vm3186, %v7906, %v7907
        %v7909 = vrot.slane %v7890, 7
        %v7910 = vrot.slane %v7891, 7
        %v7911 = vsel %vm3186, %v7909, %v7910
        %7912 = vrot.lane.b32.xlu0 %v7900, 102
        %v7913 = vpop.permute.xlu0 %7912
        %7914 = vrot.lane.b32.xlu0 %v7902, 102
        %v7915 = vpop.permute.xlu0 %7914
        %7916 = vrot.lane.b32.xlu0 %v7901, 102
        %v7917 = vpop.permute.xlu0 %7916
        %7918 = vrot.lane.b32.xlu0 %v7903, 102
        %v7919 = vpop.permute.xlu0 %7918
        %7920 = vrot.lane.b32.xlu0 %v7905, 102
        %v7921 = vpop.permute.xlu0 %7920
        %7922 = vrot.lane.b32.xlu0 %v7904, 102
        %v7923 = vpop.permute.xlu0 %7922
        %7924 = vrot.lane.b32.xlu0 %v7906, 102
        %v7925 = vpop.permute.xlu0 %7924
        %7926 = vrot.lane.b32.xlu0 %v7908, 102
        %v7927 = vpop.permute.xlu0 %7926
        %7928 = vrot.lane.b32.xlu0 %v7907, 102
        %v7929 = vpop.permute.xlu0 %7928
        %7930 = vrot.lane.b32.xlu0 %v7909, 102
        %v7931 = vpop.permute.xlu0 %7930
        %7932 = vrot.lane.b32.xlu0 %v7911, 102
        %v7933 = vpop.permute.xlu0 %7932
        %7934 = vrot.lane.b32.xlu0 %v7910, 102
        %v7935 = vpop.permute.xlu0 %7934
        %v7948 = vadd.f32 %v7608, %v7913
        %v7949 = vadd.f32 %v7609, %v7915
        %v7950 = vadd.f32 %v7610, %v7917
        %v7951 = vadd.f32 %v7611, %v7919
        %v7952 = vadd.f32 %v7612, %v7921
        %v7953 = vadd.f32 %v7613, %v7923
        %v7954 = vadd.f32 %v7614, %v7925
        %v7955 = vadd.f32 %v7615, %v7927
        %v7956 = vadd.f32 %v7616, %v7929
        %v7957 = vadd.f32 %v7617, %v7931
        %v7958 = vadd.f32 %v7618, %v7933
        %v7959 = vadd.f32 %v7619, %v7935
        %v7960 = vstv %s1631
        %v7961 = vmul.f32 %v7960, %v1559
        %v7962 = vmul.f32 %v7960, %v1560
        %v7963 = vmul.f32 %v7960, %v1561
        %v7964 = vmul.f32 %v7960, %v1562
        %v7965 = vmul.f32 %v7960, %v1563
        %v7966 = vmul.f32 %v7960, %v1564
        %v7967 = vmul.f32 %v7960, %v1565
        %v7968 = vmul.f32 %v7960, %v1566
        %v7969 = vmul.f32 %v7960, %v1567
        %v7970 = vmul.f32 %v7960, %v1568
        %v7971 = vmul.f32 %v7960, %v1569
        %v7972 = vmul.f32 %v7960, %v1570
        %v7985 = vrot.slane %v7961, 7
        %v7986 = vrot.slane %v7962, 7
        %v7987 = vsel %vm3186, %v7985, %v7986
        %v7988 = vrot.slane %v7963, 7
        %v7989 = vsel %vm3186, %v7986, %v7988
        %v7990 = vrot.slane %v7964, 7
        %v7991 = vrot.slane %v7965, 7
        %v7992 = vsel %vm3186, %v7990, %v7991
        %v7993 = vrot.slane %v7966, 7
        %v7994 = vsel %vm3186, %v7991, %v7993
        %v7995 = vrot.slane %v7967, 7
        %v7996 = vrot.slane %v7968, 7
        %v7997 = vsel %vm3186, %v7995, %v7996
        %v7998 = vrot.slane %v7969, 7
        %v7999 = vsel %vm3186, %v7996, %v7998
        %v8000 = vrot.slane %v7970, 7
        %v8001 = vrot.slane %v7971, 7
        %v8002 = vsel %vm3186, %v8000, %v8001
        %v8003 = vrot.slane %v7972, 7
        %v8004 = vsel %vm3186, %v8001, %v8003
        %8005 = vrot.lane.b32.xlu0 %v7985, 102
        %v8006 = vpop.permute.xlu0 %8005
        %8007 = vrot.lane.b32.xlu0 %v7987, 102
        %v8008 = vpop.permute.xlu0 %8007
        %8009 = vrot.lane.b32.xlu0 %v7989, 102
        %v8010 = vpop.permute.xlu0 %8009
        %8011 = vrot.lane.b32.xlu0 %v7990, 102
        %v8012 = vpop.permute.xlu0 %8011
        %8013 = vrot.lane.b32.xlu0 %v7992, 102
        %v8014 = vpop.permute.xlu0 %8013
        %8015 = vrot.lane.b32.xlu0 %v7994, 102
        %v8016 = vpop.permute.xlu0 %8015
        %8017 = vrot.lane.b32.xlu0 %v7995, 102
        %v8018 = vpop.permute.xlu0 %8017
        %8019 = vrot.lane.b32.xlu0 %v7997, 102
        %v8020 = vpop.permute.xlu0 %8019
        %8021 = vrot.lane.b32.xlu0 %v7999, 102
        %v8022 = vpop.permute.xlu0 %8021
        %8023 = vrot.lane.b32.xlu0 %v8000, 102
        %v8024 = vpop.permute.xlu0 %8023
        %8025 = vrot.lane.b32.xlu0 %v8002, 102
        %v8026 = vpop.permute.xlu0 %8025
        %8027 = vrot.lane.b32.xlu0 %v8004, 102
        %v8028 = vpop.permute.xlu0 %8027
        %v8041 = vadd.f32 %v7701, %v8006
        %v8042 = vadd.f32 %v7702, %v8008
        %v8043 = vadd.f32 %v7703, %v8010
        %v8044 = vadd.f32 %v7704, %v8012
        %v8045 = vadd.f32 %v7705, %v8014
        %v8046 = vadd.f32 %v7706, %v8016
        %v8047 = vadd.f32 %v7707, %v8018
        %v8048 = vadd.f32 %v7708, %v8020
        %v8049 = vadd.f32 %v7709, %v8022
        %v8050 = vadd.f32 %v7710, %v8024
        %v8051 = vadd.f32 %v7711, %v8026
        %v8052 = vadd.f32 %v7712, %v8028
        %v8053 = vstv %s1638
        %v8054 = vmul.f32 %v8053, %v1559
        %v8055 = vmul.f32 %v8053, %v1560
        %v8056 = vmul.f32 %v8053, %v1561
        %v8057 = vmul.f32 %v8053, %v1562
        %v8058 = vmul.f32 %v8053, %v1563
        %v8059 = vmul.f32 %v8053, %v1564
        %v8060 = vmul.f32 %v8053, %v1565
        %v8061 = vmul.f32 %v8053, %v1566
        %v8062 = vmul.f32 %v8053, %v1567
        %v8063 = vmul.f32 %v8053, %v1568
        %v8064 = vmul.f32 %v8053, %v1569
        %v8065 = vmul.f32 %v8053, %v1570
        %v8078 = vrot.slane %v8054, 7
        %v8079 = vrot.slane %v8055, 7
        %v8080 = vsel %vm3186, %v8078, %v8079
        %v8081 = vrot.slane %v8056, 7
        %v8082 = vsel %vm3186, %v8079, %v8081
        %v8083 = vrot.slane %v8057, 7
        %v8084 = vrot.slane %v8058, 7
        %v8085 = vsel %vm3186, %v8083, %v8084
        %v8086 = vrot.slane %v8059, 7
        %v8087 = vsel %vm3186, %v8084, %v8086
        %v8088 = vrot.slane %v8060, 7
        %v8089 = vrot.slane %v8061, 7
        %v8090 = vsel %vm3186, %v8088, %v8089
        %v8091 = vrot.slane %v8062, 7
        %v8092 = vsel %vm3186, %v8089, %v8091
        %v8093 = vrot.slane %v8063, 7
        %v8094 = vrot.slane %v8064, 7
        %v8095 = vsel %vm3186, %v8093, %v8094
        %v8096 = vrot.slane %v8065, 7
        %v8097 = vsel %vm3186, %v8094, %v8096
        %8098 = vrot.lane.b32.xlu0 %v8078, 102
        %v8099 = vpop.permute.xlu0 %8098
        %8100 = vrot.lane.b32.xlu0 %v8080, 102
        %v8101 = vpop.permute.xlu0 %8100
        %8102 = vrot.lane.b32.xlu0 %v8082, 102
        %v8103 = vpop.permute.xlu0 %8102
        %8104 = vrot.lane.b32.xlu0 %v8083, 102
        %v8105 = vpop.permute.xlu0 %8104
        %8106 = vrot.lane.b32.xlu0 %v8085, 102
        %v8107 = vpop.permute.xlu0 %8106
        %8108 = vrot.lane.b32.xlu0 %v8087, 102
        %v8109 = vpop.permute.xlu0 %8108
        %8110 = vrot.lane.b32.xlu0 %v8088, 102
        %v8111 = vpop.permute.xlu0 %8110
        %8112 = vrot.lane.b32.xlu0 %v8090, 102
        %v8113 = vpop.permute.xlu0 %8112
        %8114 = vrot.lane.b32.xlu0 %v8092, 102
        %v8115 = vpop.permute.xlu0 %8114
        %8116 = vrot.lane.b32.xlu0 %v8093, 102
        %v8117 = vpop.permute.xlu0 %8116
        %8118 = vrot.lane.b32.xlu0 %v8095, 102
        %v8119 = vpop.permute.xlu0 %8118
        %8120 = vrot.lane.b32.xlu0 %v8097, 102
        %v8121 = vpop.permute.xlu0 %8120
        %v8134 = vadd.f32 %v7794, %v8099
        %v8135 = vadd.f32 %v7795, %v8101
        %v8136 = vadd.f32 %v7796, %v8103
        %v8137 = vadd.f32 %v7797, %v8105
        %v8138 = vadd.f32 %v7798, %v8107
        %v8139 = vadd.f32 %v7799, %v8109
        %v8140 = vadd.f32 %v7800, %v8111
        %v8141 = vadd.f32 %v7801, %v8113
        %v8142 = vadd.f32 %v7802, %v8115
        %v8143 = vadd.f32 %v7803, %v8117
        %v8144 = vadd.f32 %v7804, %v8119
        %v8145 = vadd.f32 %v7805, %v8121
        %v8146 = vstv %s1645
        %v8147 = vmul.f32 %v8146, %v1559
        %v8148 = vmul.f32 %v8146, %v1560
        %v8149 = vmul.f32 %v8146, %v1561
        %v8150 = vmul.f32 %v8146, %v1562
        %v8151 = vmul.f32 %v8146, %v1563
        %v8152 = vmul.f32 %v8146, %v1564
        %v8153 = vmul.f32 %v8146, %v1565
        %v8154 = vmul.f32 %v8146, %v1566
        %v8155 = vmul.f32 %v8146, %v1567
        %v8156 = vmul.f32 %v8146, %v1568
        %v8157 = vmul.f32 %v8146, %v1569
        %v8158 = vmul.f32 %v8146, %v1570
        %v8171 = vrot.slane %v8147, 3
        %v8172 = vrot.slane %v8148, 3
        %v8173 = vsel %vm3458, %v8171, %v8172
        %v8174 = vrot.slane %v8149, 3
        %v8175 = vsel %vm3458, %v8172, %v8174
        %v8176 = vrot.slane %v8150, 3
        %v8177 = vrot.slane %v8151, 3
        %v8178 = vsel %vm3458, %v8176, %v8177
        %v8179 = vrot.slane %v8152, 3
        %v8180 = vsel %vm3458, %v8177, %v8179
        %v8181 = vrot.slane %v8153, 3
        %v8182 = vrot.slane %v8154, 3
        %v8183 = vsel %vm3458, %v8181, %v8182
        %v8184 = vrot.slane %v8155, 3
        %v8185 = vsel %vm3458, %v8182, %v8184
        %v8186 = vrot.slane %v8156, 3
        %v8187 = vrot.slane %v8157, 3
        %v8188 = vsel %vm3458, %v8186, %v8187
        %v8189 = vrot.slane %v8158, 3
        %v8190 = vsel %vm3458, %v8187, %v8189
        %8191 = vrot.lane.b32.xlu0 %v8173, 102
        %v8192 = vpop.permute.xlu0 %8191
        %8193 = vrot.lane.b32.xlu0 %v8175, 102
        %v8194 = vpop.permute.xlu0 %8193
        %8195 = vrot.lane.b32.xlu0 %v8178, 102
        %v8196 = vpop.permute.xlu0 %8195
        %8197 = vrot.lane.b32.xlu0 %v8180, 102
        %v8198 = vpop.permute.xlu0 %8197
        %8199 = vrot.lane.b32.xlu0 %v8183, 102
        %v8200 = vpop.permute.xlu0 %8199
        %8201 = vrot.lane.b32.xlu0 %v8185, 102
        %v8202 = vpop.permute.xlu0 %8201
        %8203 = vrot.lane.b32.xlu0 %v8188, 102
        %v8204 = vpop.permute.xlu0 %8203
        %8205 = vrot.lane.b32.xlu0 %v8190, 102
        %v8206 = vpop.permute.xlu0 %8205
        %v8215 = vadd.f32 %v7875, %v8192
        %v8216 = vadd.f32 %v7876, %v8194
        %v8217 = vadd.f32 %v7877, %v8196
        %v8218 = vadd.f32 %v7878, %v8198
        %v8219 = vadd.f32 %v7879, %v8200
        %v8220 = vadd.f32 %v7880, %v8202
        %v8221 = vadd.f32 %v7881, %v8204
        %v8222 = vadd.f32 %v7882, %v8206
        %v8223 = vstv %s1652
        %v8224 = vmul.f32 %v8223, %v1559
        %v8225 = vmul.f32 %v8223, %v1560
        %v8226 = vmul.f32 %v8223, %v1561
        %v8227 = vmul.f32 %v8223, %v1562
        %v8228 = vmul.f32 %v8223, %v1563
        %v8229 = vmul.f32 %v8223, %v1564
        %v8230 = vmul.f32 %v8223, %v1565
        %v8231 = vmul.f32 %v8223, %v1566
        %v8232 = vmul.f32 %v8223, %v1567
        %v8233 = vmul.f32 %v8223, %v1568
        %v8234 = vmul.f32 %v8223, %v1569
        %v8235 = vmul.f32 %v8223, %v1570
        %v8248 = vrot.slane %v8224, 3
        %v8249 = vrot.slane %v8225, 3
        %v8250 = vsel %vm3458, %v8248, %v8249
        %v8251 = vrot.slane %v8226, 3
        %v8252 = vsel %vm3458, %v8249, %v8251
        %v8253 = vrot.slane %v8227, 3
        %v8254 = vrot.slane %v8228, 3
        %v8255 = vsel %vm3458, %v8253, %v8254
        %v8256 = vrot.slane %v8229, 3
        %v8257 = vsel %vm3458, %v8254, %v8256
        %v8258 = vrot.slane %v8230, 3
        %v8259 = vrot.slane %v8231, 3
        %v8260 = vsel %vm3458, %v8258, %v8259
        %v8261 = vrot.slane %v8232, 3
        %v8262 = vsel %vm3458, %v8259, %v8261
        %v8263 = vrot.slane %v8233, 3
        %v8264 = vrot.slane %v8234, 3
        %v8265 = vsel %vm3458, %v8263, %v8264
        %v8266 = vrot.slane %v8235, 3
        %v8267 = vsel %vm3458, %v8264, %v8266
        %8268 = vrot.lane.b32.xlu0 %v8250, 102
        %v8269 = vpop.permute.xlu0 %8268
        %8270 = vrot.lane.b32.xlu0 %v8252, 102
        %v8271 = vpop.permute.xlu0 %8270
        %8272 = vrot.lane.b32.xlu0 %v8251, 102
        %v8273 = vpop.permute.xlu0 %8272
        %8274 = vrot.lane.b32.xlu0 %v8255, 102
        %v8275 = vpop.permute.xlu0 %8274
        %8276 = vrot.lane.b32.xlu0 %v8257, 102
        %v8277 = vpop.permute.xlu0 %8276
        %8278 = vrot.lane.b32.xlu0 %v8256, 102
        %v8279 = vpop.permute.xlu0 %8278
        %8280 = vrot.lane.b32.xlu0 %v8260, 102
        %v8281 = vpop.permute.xlu0 %8280
        %8282 = vrot.lane.b32.xlu0 %v8262, 102
        %v8283 = vpop.permute.xlu0 %8282
        %8284 = vrot.lane.b32.xlu0 %v8261, 102
        %v8285 = vpop.permute.xlu0 %8284
        %8286 = vrot.lane.b32.xlu0 %v8265, 102
        %v8287 = vpop.permute.xlu0 %8286
        %8288 = vrot.lane.b32.xlu0 %v8267, 102
        %v8289 = vpop.permute.xlu0 %8288
        %8290 = vrot.lane.b32.xlu0 %v8266, 102
        %v8291 = vpop.permute.xlu0 %8290
        %v8304 = vadd.f32 %v7948, %v8269
        %v8305 = vadd.f32 %v7949, %v8271
        %v8306 = vadd.f32 %v7950, %v8273
        %v8307 = vadd.f32 %v7951, %v8275
        %v8308 = vadd.f32 %v7952, %v8277
        %v8309 = vadd.f32 %v7953, %v8279
        %v8310 = vadd.f32 %v7954, %v8281
        %v8311 = vadd.f32 %v7955, %v8283
        %v8312 = vadd.f32 %v7956, %v8285
        %v8313 = vadd.f32 %v7957, %v8287
        %v8314 = vadd.f32 %v7958, %v8289
        %v8315 = vadd.f32 %v7959, %v8291
        %v8316 = vstv %s1659
        %v8317 = vmul.f32 %v8316, %v1559
        %v8318 = vmul.f32 %v8316, %v1560
        %v8319 = vmul.f32 %v8316, %v1561
        %v8320 = vmul.f32 %v8316, %v1562
        %v8321 = vmul.f32 %v8316, %v1563
        %v8322 = vmul.f32 %v8316, %v1564
        %v8323 = vmul.f32 %v8316, %v1565
        %v8324 = vmul.f32 %v8316, %v1566
        %v8325 = vmul.f32 %v8316, %v1567
        %v8326 = vmul.f32 %v8316, %v1568
        %v8327 = vmul.f32 %v8316, %v1569
        %v8328 = vmul.f32 %v8316, %v1570
        %v8341 = vrot.slane %v8317, 3
        %v8342 = vrot.slane %v8318, 3
        %v8343 = vsel %vm3458, %v8341, %v8342
        %v8344 = vrot.slane %v8319, 3
        %v8345 = vsel %vm3458, %v8342, %v8344
        %v8346 = vrot.slane %v8320, 3
        %v8347 = vrot.slane %v8321, 3
        %v8348 = vsel %vm3458, %v8346, %v8347
        %v8349 = vrot.slane %v8322, 3
        %v8350 = vsel %vm3458, %v8347, %v8349
        %v8351 = vrot.slane %v8323, 3
        %v8352 = vrot.slane %v8324, 3
        %v8353 = vsel %vm3458, %v8351, %v8352
        %v8354 = vrot.slane %v8325, 3
        %v8355 = vsel %vm3458, %v8352, %v8354
        %v8356 = vrot.slane %v8326, 3
        %v8357 = vrot.slane %v8327, 3
        %v8358 = vsel %vm3458, %v8356, %v8357
        %v8359 = vrot.slane %v8328, 3
        %v8360 = vsel %vm3458, %v8357, %v8359
        %8361 = vrot.lane.b32.xlu0 %v8343, 102
        %v8362 = vpop.permute.xlu0 %8361
        %8363 = vrot.lane.b32.xlu0 %v8345, 102
        %v8364 = vpop.permute.xlu0 %8363
        %8365 = vrot.lane.b32.xlu0 %v8344, 102
        %v8366 = vpop.permute.xlu0 %8365
        %8367 = vrot.lane.b32.xlu0 %v8348, 102
        %v8368 = vpop.permute.xlu0 %8367
        %8369 = vrot.lane.b32.xlu0 %v8350, 102
        %v8370 = vpop.permute.xlu0 %8369
        %8371 = vrot.lane.b32.xlu0 %v8349, 102
        %v8372 = vpop.permute.xlu0 %8371
        %8373 = vrot.lane.b32.xlu0 %v8353, 102
        %v8374 = vpop.permute.xlu0 %8373
        %8375 = vrot.lane.b32.xlu0 %v8355, 102
        %v8376 = vpop.permute.xlu0 %8375
        %8377 = vrot.lane.b32.xlu0 %v8354, 102
        %v8378 = vpop.permute.xlu0 %8377
        %8379 = vrot.lane.b32.xlu0 %v8358, 102
        %v8380 = vpop.permute.xlu0 %8379
        %8381 = vrot.lane.b32.xlu0 %v8360, 102
        %v8382 = vpop.permute.xlu0 %8381
        %8383 = vrot.lane.b32.xlu0 %v8359, 102
        %v8384 = vpop.permute.xlu0 %8383
        %v8397 = vadd.f32 %v8041, %v8362
        %v8398 = vadd.f32 %v8042, %v8364
        %v8399 = vadd.f32 %v8043, %v8366
        %v8400 = vadd.f32 %v8044, %v8368
        %v8401 = vadd.f32 %v8045, %v8370
        %v8402 = vadd.f32 %v8046, %v8372
        %v8403 = vadd.f32 %v8047, %v8374
        %v8404 = vadd.f32 %v8048, %v8376
        %v8405 = vadd.f32 %v8049, %v8378
        %v8406 = vadd.f32 %v8050, %v8380
        %v8407 = vadd.f32 %v8051, %v8382
        %v8408 = vadd.f32 %v8052, %v8384
        %v8409 = vstv %s1666
        %v8410 = vmul.f32 %v8409, %v1559
        %v8411 = vmul.f32 %v8409, %v1560
        %v8412 = vmul.f32 %v8409, %v1561
        %v8413 = vmul.f32 %v8409, %v1562
        %v8414 = vmul.f32 %v8409, %v1563
        %v8415 = vmul.f32 %v8409, %v1564
        %v8416 = vmul.f32 %v8409, %v1565
        %v8417 = vmul.f32 %v8409, %v1566
        %v8418 = vmul.f32 %v8409, %v1567
        %v8419 = vmul.f32 %v8409, %v1568
        %v8420 = vmul.f32 %v8409, %v1569
        %v8421 = vmul.f32 %v8409, %v1570
        %v8434 = vrot.slane %v8410, 3
        %v8435 = vrot.slane %v8411, 3
        %v8436 = vsel %vm3458, %v8434, %v8435
        %v8437 = vrot.slane %v8412, 3
        %v8438 = vsel %vm3458, %v8435, %v8437
        %v8439 = vrot.slane %v8413, 3
        %v8440 = vrot.slane %v8414, 3
        %v8441 = vsel %vm3458, %v8439, %v8440
        %v8442 = vrot.slane %v8415, 3
        %v8443 = vsel %vm3458, %v8440, %v8442
        %v8444 = vrot.slane %v8416, 3
        %v8445 = vrot.slane %v8417, 3
        %v8446 = vsel %vm3458, %v8444, %v8445
        %v8447 = vrot.slane %v8418, 3
        %v8448 = vsel %vm3458, %v8445, %v8447
        %v8449 = vrot.slane %v8419, 3
        %v8450 = vrot.slane %v8420, 3
        %v8451 = vsel %vm3458, %v8449, %v8450
        %v8452 = vrot.slane %v8421, 3
        %v8453 = vsel %vm3458, %v8450, %v8452
        %8454 = vrot.lane.b32.xlu0 %v8436, 102
        %v8455 = vpop.permute.xlu0 %8454
        %8456 = vrot.lane.b32.xlu0 %v8438, 102
        %v8457 = vpop.permute.xlu0 %8456
        %8458 = vrot.lane.b32.xlu0 %v8437, 102
        %v8459 = vpop.permute.xlu0 %8458
        %8460 = vrot.lane.b32.xlu0 %v8441, 102
        %v8461 = vpop.permute.xlu0 %8460
        %8462 = vrot.lane.b32.xlu0 %v8443, 102
        %v8463 = vpop.permute.xlu0 %8462
        %8464 = vrot.lane.b32.xlu0 %v8442, 102
        %v8465 = vpop.permute.xlu0 %8464
        %8466 = vrot.lane.b32.xlu0 %v8446, 102
        %v8467 = vpop.permute.xlu0 %8466
        %8468 = vrot.lane.b32.xlu0 %v8448, 102
        %v8469 = vpop.permute.xlu0 %8468
        %8470 = vrot.lane.b32.xlu0 %v8447, 102
        %v8471 = vpop.permute.xlu0 %8470
        %8472 = vrot.lane.b32.xlu0 %v8451, 102
        %v8473 = vpop.permute.xlu0 %8472
        %8474 = vrot.lane.b32.xlu0 %v8453, 102
        %v8475 = vpop.permute.xlu0 %8474
        %8476 = vrot.lane.b32.xlu0 %v8452, 102
        %v8477 = vpop.permute.xlu0 %8476
        %v8490 = vadd.f32 %v8134, %v8455
        %v8491 = vadd.f32 %v8135, %v8457
        %v8492 = vadd.f32 %v8136, %v8459
        %v8493 = vadd.f32 %v8137, %v8461
        %v8494 = vadd.f32 %v8138, %v8463
        %v8495 = vadd.f32 %v8139, %v8465
        %v8496 = vadd.f32 %v8140, %v8467
        %v8497 = vadd.f32 %v8141, %v8469
        %v8498 = vadd.f32 %v8142, %v8471
        %v8499 = vadd.f32 %v8143, %v8473
        %v8500 = vadd.f32 %v8144, %v8475
        %v8501 = vadd.f32 %v8145, %v8477
        %v8502 = vstv %s1625
        %v8503 = vmul.f32 %v8502, %v1559
        %v8504 = vmul.f32 %v8502, %v1560
        %v8505 = vmul.f32 %v8502, %v1562
        %v8506 = vmul.f32 %v8502, %v1563
        %v8507 = vmul.f32 %v8502, %v1565
        %v8508 = vmul.f32 %v8502, %v1566
        %v8509 = vmul.f32 %v8502, %v1568
        %v8510 = vmul.f32 %v8502, %v1569
        %8519 = vrot.lane.b32.xlu0 %v8503, 101
        %v8520 = vpop.permute.xlu0 %8519
        %8521 = vrot.lane.b32.xlu0 %v8504, 101
        %v8522 = vpop.permute.xlu0 %8521
        %8523 = vrot.lane.b32.xlu0 %v8505, 101
        %v8524 = vpop.permute.xlu0 %8523
        %8525 = vrot.lane.b32.xlu0 %v8506, 101
        %v8526 = vpop.permute.xlu0 %8525
        %8527 = vrot.lane.b32.xlu0 %v8507, 101
        %v8528 = vpop.permute.xlu0 %8527
        %8529 = vrot.lane.b32.xlu0 %v8508, 101
        %v8530 = vpop.permute.xlu0 %8529
        %8531 = vrot.lane.b32.xlu0 %v8509, 101
        %v8532 = vpop.permute.xlu0 %8531
        %8533 = vrot.lane.b32.xlu0 %v8510, 101
        %v8534 = vpop.permute.xlu0 %8533
        %v8543 = vadd.f32 %v8215, %v8520
        %v8544 = vadd.f32 %v8216, %v8522
        %v8545 = vadd.f32 %v8217, %v8524
        %v8546 = vadd.f32 %v8218, %v8526
        %v8547 = vadd.f32 %v8219, %v8528
        %v8548 = vadd.f32 %v8220, %v8530
        %v8549 = vadd.f32 %v8221, %v8532
        %v8550 = vadd.f32 %v8222, %v8534
        %v8551 = vstv %s1632
        %v8552 = vmul.f32 %v8551, %v1559
        %v8553 = vmul.f32 %v8551, %v1560
        %v8554 = vmul.f32 %v8551, %v1561
        %v8555 = vmul.f32 %v8551, %v1562
        %v8556 = vmul.f32 %v8551, %v1563
        %v8557 = vmul.f32 %v8551, %v1564
        %v8558 = vmul.f32 %v8551, %v1565
        %v8559 = vmul.f32 %v8551, %v1566
        %v8560 = vmul.f32 %v8551, %v1567
        %v8561 = vmul.f32 %v8551, %v1568
        %v8562 = vmul.f32 %v8551, %v1569
        %v8563 = vmul.f32 %v8551, %v1570
        %8576 = vrot.lane.b32.xlu0 %v8552, 101
        %v8577 = vpop.permute.xlu0 %8576
        %8578 = vrot.lane.b32.xlu0 %v8553, 101
        %v8579 = vpop.permute.xlu0 %8578
        %8580 = vrot.lane.b32.xlu0 %v8554, 101
        %v8581 = vpop.permute.xlu0 %8580
        %8582 = vrot.lane.b32.xlu0 %v8555, 101
        %v8583 = vpop.permute.xlu0 %8582
        %8584 = vrot.lane.b32.xlu0 %v8556, 101
        %v8585 = vpop.permute.xlu0 %8584
        %8586 = vrot.lane.b32.xlu0 %v8557, 101
        %v8587 = vpop.permute.xlu0 %8586
        %8588 = vrot.lane.b32.xlu0 %v8558, 101
        %v8589 = vpop.permute.xlu0 %8588
        %8590 = vrot.lane.b32.xlu0 %v8559, 101
        %v8591 = vpop.permute.xlu0 %8590
        %8592 = vrot.lane.b32.xlu0 %v8560, 101
        %v8593 = vpop.permute.xlu0 %8592
        %8594 = vrot.lane.b32.xlu0 %v8561, 101
        %v8595 = vpop.permute.xlu0 %8594
        %8596 = vrot.lane.b32.xlu0 %v8562, 101
        %v8597 = vpop.permute.xlu0 %8596
        %8598 = vrot.lane.b32.xlu0 %v8563, 101
        %v8599 = vpop.permute.xlu0 %8598
        %v8612 = vadd.f32 %v8304, %v8577
        %v8613 = vadd.f32 %v8305, %v8579
        %v8614 = vadd.f32 %v8306, %v8581
        %v8615 = vadd.f32 %v8307, %v8583
        %v8616 = vadd.f32 %v8308, %v8585
        %v8617 = vadd.f32 %v8309, %v8587
        %v8618 = vadd.f32 %v8310, %v8589
        %v8619 = vadd.f32 %v8311, %v8591
        %v8620 = vadd.f32 %v8312, %v8593
        %v8621 = vadd.f32 %v8313, %v8595
        %v8622 = vadd.f32 %v8314, %v8597
        %v8623 = vadd.f32 %v8315, %v8599
        %v8624 = vstv %s1639
        %v8625 = vmul.f32 %v8624, %v1559
        %v8626 = vmul.f32 %v8624, %v1560
        %v8627 = vmul.f32 %v8624, %v1561
        %v8628 = vmul.f32 %v8624, %v1562
        %v8629 = vmul.f32 %v8624, %v1563
        %v8630 = vmul.f32 %v8624, %v1564
        %v8631 = vmul.f32 %v8624, %v1565
        %v8632 = vmul.f32 %v8624, %v1566
        %v8633 = vmul.f32 %v8624, %v1567
        %v8634 = vmul.f32 %v8624, %v1568
        %v8635 = vmul.f32 %v8624, %v1569
        %v8636 = vmul.f32 %v8624, %v1570
        %8649 = vrot.lane.b32.xlu0 %v8625, 101
        %v8650 = vpop.permute.xlu0 %8649
        %8651 = vrot.lane.b32.xlu0 %v8626, 101
        %v8652 = vpop.permute.xlu0 %8651
        %8653 = vrot.lane.b32.xlu0 %v8627, 101
        %v8654 = vpop.permute.xlu0 %8653
        %8655 = vrot.lane.b32.xlu0 %v8628, 101
        %v8656 = vpop.permute.xlu0 %8655
        %8657 = vrot.lane.b32.xlu0 %v8629, 101
        %v8658 = vpop.permute.xlu0 %8657
        %8659 = vrot.lane.b32.xlu0 %v8630, 101
        %v8660 = vpop.permute.xlu0 %8659
        %8661 = vrot.lane.b32.xlu0 %v8631, 101
        %v8662 = vpop.permute.xlu0 %8661
        %8663 = vrot.lane.b32.xlu0 %v8632, 101
        %v8664 = vpop.permute.xlu0 %8663
        %8665 = vrot.lane.b32.xlu0 %v8633, 101
        %v8666 = vpop.permute.xlu0 %8665
        %8667 = vrot.lane.b32.xlu0 %v8634, 101
        %v8668 = vpop.permute.xlu0 %8667
        %8669 = vrot.lane.b32.xlu0 %v8635, 101
        %v8670 = vpop.permute.xlu0 %8669
        %8671 = vrot.lane.b32.xlu0 %v8636, 101
        %v8672 = vpop.permute.xlu0 %8671
        %v8685 = vadd.f32 %v8397, %v8650
        %v8686 = vadd.f32 %v8398, %v8652
        %v8687 = vadd.f32 %v8399, %v8654
        %v8688 = vadd.f32 %v8400, %v8656
        %v8689 = vadd.f32 %v8401, %v8658
        %v8690 = vadd.f32 %v8402, %v8660
        %v8691 = vadd.f32 %v8403, %v8662
        %v8692 = vadd.f32 %v8404, %v8664
        %v8693 = vadd.f32 %v8405, %v8666
        %v8694 = vadd.f32 %v8406, %v8668
        %v8695 = vadd.f32 %v8407, %v8670
        %v8696 = vadd.f32 %v8408, %v8672
        %v8697 = vstv %s1646
        %v8698 = vmul.f32 %v8697, %v1559
        %v8699 = vmul.f32 %v8697, %v1560
        %v8700 = vmul.f32 %v8697, %v1561
        %v8701 = vmul.f32 %v8697, %v1562
        %v8702 = vmul.f32 %v8697, %v1563
        %v8703 = vmul.f32 %v8697, %v1564
        %v8704 = vmul.f32 %v8697, %v1565
        %v8705 = vmul.f32 %v8697, %v1566
        %v8706 = vmul.f32 %v8697, %v1567
        %v8707 = vmul.f32 %v8697, %v1568
        %v8708 = vmul.f32 %v8697, %v1569
        %v8709 = vmul.f32 %v8697, %v1570
        %8722 = vrot.lane.b32.xlu0 %v8698, 101
        %v8723 = vpop.permute.xlu0 %8722
        %8724 = vrot.lane.b32.xlu0 %v8699, 101
        %v8725 = vpop.permute.xlu0 %8724
        %8726 = vrot.lane.b32.xlu0 %v8700, 101
        %v8727 = vpop.permute.xlu0 %8726
        %8728 = vrot.lane.b32.xlu0 %v8701, 101
        %v8729 = vpop.permute.xlu0 %8728
        %8730 = vrot.lane.b32.xlu0 %v8702, 101
        %v8731 = vpop.permute.xlu0 %8730
        %8732 = vrot.lane.b32.xlu0 %v8703, 101
        %v8733 = vpop.permute.xlu0 %8732
        %8734 = vrot.lane.b32.xlu0 %v8704, 101
        %v8735 = vpop.permute.xlu0 %8734
        %8736 = vrot.lane.b32.xlu0 %v8705, 101
        %v8737 = vpop.permute.xlu0 %8736
        %8738 = vrot.lane.b32.xlu0 %v8706, 101
        %v8739 = vpop.permute.xlu0 %8738
        %8740 = vrot.lane.b32.xlu0 %v8707, 101
        %v8741 = vpop.permute.xlu0 %8740
        %8742 = vrot.lane.b32.xlu0 %v8708, 101
        %v8743 = vpop.permute.xlu0 %8742
        %8744 = vrot.lane.b32.xlu0 %v8709, 101
        %v8745 = vpop.permute.xlu0 %8744
        %v8758 = vadd.f32 %v8490, %v8723
        %v8759 = vadd.f32 %v8491, %v8725
        %v8760 = vadd.f32 %v8492, %v8727
        %v8761 = vadd.f32 %v8493, %v8729
        %v8762 = vadd.f32 %v8494, %v8731
        %v8763 = vadd.f32 %v8495, %v8733
        %v8764 = vadd.f32 %v8496, %v8735
        %v8765 = vadd.f32 %v8497, %v8737
        %v8766 = vadd.f32 %v8498, %v8739
        %v8767 = vadd.f32 %v8499, %v8741
        %v8768 = vadd.f32 %v8500, %v8743
        %v8769 = vadd.f32 %v8501, %v8745
        %v8770 = vstv %s1653
        %v8771 = vmul.f32 %v8770, %v1559
        %v8772 = vmul.f32 %v8770, %v1560
        %v8773 = vmul.f32 %v8770, %v1561
        %v8774 = vmul.f32 %v8770, %v1562
        %v8775 = vmul.f32 %v8770, %v1563
        %v8776 = vmul.f32 %v8770, %v1564
        %v8777 = vmul.f32 %v8770, %v1565
        %v8778 = vmul.f32 %v8770, %v1566
        %v8779 = vmul.f32 %v8770, %v1567
        %v8780 = vmul.f32 %v8770, %v1568
        %v8781 = vmul.f32 %v8770, %v1569
        %v8782 = vmul.f32 %v8770, %v1570
        %v8795 = vrot.slane %v8771, 4
        %v8796 = vrot.slane %v8772, 4
        %v8797 = vsel %vm584, %v8795, %v8796
        %v8798 = vrot.slane %v8773, 4
        %v8799 = vsel %vm584, %v8796, %v8798
        %v8800 = vrot.slane %v8774, 4
        %v8801 = vrot.slane %v8775, 4
        %v8802 = vsel %vm584, %v8800, %v8801
        %v8803 = vrot.slane %v8776, 4
        %v8804 = vsel %vm584, %v8801, %v8803
        %v8805 = vrot.slane %v8777, 4
        %v8806 = vrot.slane %v8778, 4
        %v8807 = vsel %vm584, %v8805, %v8806
        %v8808 = vrot.slane %v8779, 4
        %v8809 = vsel %vm584, %v8806, %v8808
        %v8810 = vrot.slane %v8780, 4
        %v8811 = vrot.slane %v8781, 4
        %v8812 = vsel %vm584, %v8810, %v8811
        %v8813 = vrot.slane %v8782, 4
        %v8814 = vsel %vm584, %v8811, %v8813
        %8815 = vrot.lane.b32.xlu0 %v8797, 101
        %v8816 = vpop.permute.xlu0 %8815
        %8817 = vrot.lane.b32.xlu0 %v8799, 101
        %v8818 = vpop.permute.xlu0 %8817
        %8819 = vrot.lane.b32.xlu0 %v8802, 101
        %v8820 = vpop.permute.xlu0 %8819
        %8821 = vrot.lane.b32.xlu0 %v8804, 101
        %v8822 = vpop.permute.xlu0 %8821
        %8823 = vrot.lane.b32.xlu0 %v8807, 101
        %v8824 = vpop.permute.xlu0 %8823
        %8825 = vrot.lane.b32.xlu0 %v8809, 101
        %v8826 = vpop.permute.xlu0 %8825
        %8827 = vrot.lane.b32.xlu0 %v8812, 101
        %v8828 = vpop.permute.xlu0 %8827
        %8829 = vrot.lane.b32.xlu0 %v8814, 101
        %v8830 = vpop.permute.xlu0 %8829
        %v8839 = vadd.f32 %v8543, %v8816
        %v8840 = vadd.f32 %v8544, %v8818
        %v8841 = vadd.f32 %v8545, %v8820
        %v8842 = vadd.f32 %v8546, %v8822
        %v8843 = vadd.f32 %v8547, %v8824
        %v8844 = vadd.f32 %v8548, %v8826
        %v8845 = vadd.f32 %v8549, %v8828
        %v8846 = vadd.f32 %v8550, %v8830
        %v8847 = vstv %s1660
        %v8848 = vmul.f32 %v8847, %v1559
        %v8849 = vmul.f32 %v8847, %v1560
        %v8850 = vmul.f32 %v8847, %v1561
        %v8851 = vmul.f32 %v8847, %v1562
        %v8852 = vmul.f32 %v8847, %v1563
        %v8853 = vmul.f32 %v8847, %v1564
        %v8854 = vmul.f32 %v8847, %v1565
        %v8855 = vmul.f32 %v8847, %v1566
        %v8856 = vmul.f32 %v8847, %v1567
        %v8857 = vmul.f32 %v8847, %v1568
        %v8858 = vmul.f32 %v8847, %v1569
        %v8859 = vmul.f32 %v8847, %v1570
        %v8872 = vrot.slane %v8848, 4
        %v8873 = vrot.slane %v8849, 4
        %v8874 = vsel %vm584, %v8872, %v8873
        %v8875 = vrot.slane %v8850, 4
        %v8876 = vsel %vm584, %v8873, %v8875
        %v8877 = vrot.slane %v8851, 4
        %v8878 = vrot.slane %v8852, 4
        %v8879 = vsel %vm584, %v8877, %v8878
        %v8880 = vrot.slane %v8853, 4
        %v8881 = vsel %vm584, %v8878, %v8880
        %v8882 = vrot.slane %v8854, 4
        %v8883 = vrot.slane %v8855, 4
        %v8884 = vsel %vm584, %v8882, %v8883
        %v8885 = vrot.slane %v8856, 4
        %v8886 = vsel %vm584, %v8883, %v8885
        %v8887 = vrot.slane %v8857, 4
        %v8888 = vrot.slane %v8858, 4
        %v8889 = vsel %vm584, %v8887, %v8888
        %v8890 = vrot.slane %v8859, 4
        %v8891 = vsel %vm584, %v8888, %v8890
        %8892 = vrot.lane.b32.xlu0 %v8874, 101
        %v8893 = vpop.permute.xlu0 %8892
        %8894 = vrot.lane.b32.xlu0 %v8876, 101
        %v8895 = vpop.permute.xlu0 %8894
        %8896 = vrot.lane.b32.xlu0 %v8875, 101
        %v8897 = vpop.permute.xlu0 %8896
        %8898 = vrot.lane.b32.xlu0 %v8879, 101
        %v8899 = vpop.permute.xlu0 %8898
        %8900 = vrot.lane.b32.xlu0 %v8881, 101
        %v8901 = vpop.permute.xlu0 %8900
        %8902 = vrot.lane.b32.xlu0 %v8880, 101
        %v8903 = vpop.permute.xlu0 %8902
        %8904 = vrot.lane.b32.xlu0 %v8884, 101
        %v8905 = vpop.permute.xlu0 %8904
        %8906 = vrot.lane.b32.xlu0 %v8886, 101
        %v8907 = vpop.permute.xlu0 %8906
        %8908 = vrot.lane.b32.xlu0 %v8885, 101
        %v8909 = vpop.permute.xlu0 %8908
        %8910 = vrot.lane.b32.xlu0 %v8889, 101
        %v8911 = vpop.permute.xlu0 %8910
        %8912 = vrot.lane.b32.xlu0 %v8891, 101
        %v8913 = vpop.permute.xlu0 %8912
        %8914 = vrot.lane.b32.xlu0 %v8890, 101
        %v8915 = vpop.permute.xlu0 %8914
        %v8928 = vadd.f32 %v8612, %v8893
        %v8929 = vadd.f32 %v8613, %v8895
        %v8930 = vadd.f32 %v8614, %v8897
        %v8931 = vadd.f32 %v8615, %v8899
        %v8932 = vadd.f32 %v8616, %v8901
        %v8933 = vadd.f32 %v8617, %v8903
        %v8934 = vadd.f32 %v8618, %v8905
        %v8935 = vadd.f32 %v8619, %v8907
        %v8936 = vadd.f32 %v8620, %v8909
        %v8937 = vadd.f32 %v8621, %v8911
        %v8938 = vadd.f32 %v8622, %v8913
        %v8939 = vadd.f32 %v8623, %v8915
        %v8940 = vstv %s1667
        %v8941 = vmul.f32 %v8940, %v1559
        %v8942 = vmul.f32 %v8940, %v1560
        %v8943 = vmul.f32 %v8940, %v1561
        %v8944 = vmul.f32 %v8940, %v1562
        %v8945 = vmul.f32 %v8940, %v1563
        %v8946 = vmul.f32 %v8940, %v1564
        %v8947 = vmul.f32 %v8940, %v1565
        %v8948 = vmul.f32 %v8940, %v1566
        %v8949 = vmul.f32 %v8940, %v1567
        %v8950 = vmul.f32 %v8940, %v1568
        %v8951 = vmul.f32 %v8940, %v1569
        %v8952 = vmul.f32 %v8940, %v1570
        %v8965 = vrot.slane %v8941, 4
        %v8966 = vrot.slane %v8942, 4
        %v8967 = vsel %vm584, %v8965, %v8966
        %v8968 = vrot.slane %v8943, 4
        %v8969 = vsel %vm584, %v8966, %v8968
        %v8970 = vrot.slane %v8944, 4
        %v8971 = vrot.slane %v8945, 4
        %v8972 = vsel %vm584, %v8970, %v8971
        %v8973 = vrot.slane %v8946, 4
        %v8974 = vsel %vm584, %v8971, %v8973
        %v8975 = vrot.slane %v8947, 4
        %v8976 = vrot.slane %v8948, 4
        %v8977 = vsel %vm584, %v8975, %v8976
        %v8978 = vrot.slane %v8949, 4
        %v8979 = vsel %vm584, %v8976, %v8978
        %v8980 = vrot.slane %v8950, 4
        %v8981 = vrot.slane %v8951, 4
        %v8982 = vsel %vm584, %v8980, %v8981
        %v8983 = vrot.slane %v8952, 4
        %v8984 = vsel %vm584, %v8981, %v8983
        %8985 = vrot.lane.b32.xlu0 %v8967, 101
        %v8986 = vpop.permute.xlu0 %8985
        %8987 = vrot.lane.b32.xlu0 %v8969, 101
        %v8988 = vpop.permute.xlu0 %8987
        %8989 = vrot.lane.b32.xlu0 %v8968, 101
        %v8990 = vpop.permute.xlu0 %8989
        %8991 = vrot.lane.b32.xlu0 %v8972, 101
        %v8992 = vpop.permute.xlu0 %8991
        %8993 = vrot.lane.b32.xlu0 %v8974, 101
        %v8994 = vpop.permute.xlu0 %8993
        %8995 = vrot.lane.b32.xlu0 %v8973, 101
        %v8996 = vpop.permute.xlu0 %8995
        %8997 = vrot.lane.b32.xlu0 %v8977, 101
        %v8998 = vpop.permute.xlu0 %8997
        %8999 = vrot.lane.b32.xlu0 %v8979, 101
        %v9000 = vpop.permute.xlu0 %8999
        %9001 = vrot.lane.b32.xlu0 %v8978, 101
        %v9002 = vpop.permute.xlu0 %9001
        %9003 = vrot.lane.b32.xlu0 %v8982, 101
        %v9004 = vpop.permute.xlu0 %9003
        %9005 = vrot.lane.b32.xlu0 %v8984, 101
        %v9006 = vpop.permute.xlu0 %9005
        %9007 = vrot.lane.b32.xlu0 %v8983, 101
        %v9008 = vpop.permute.xlu0 %9007
        %v9021 = vadd.f32 %v8685, %v8986
        %v9022 = vadd.f32 %v8686, %v8988
        %v9023 = vadd.f32 %v8687, %v8990
        %v9024 = vadd.f32 %v8688, %v8992
        %v9025 = vadd.f32 %v8689, %v8994
        %v9026 = vadd.f32 %v8690, %v8996
        %v9027 = vadd.f32 %v8691, %v8998
        %v9028 = vadd.f32 %v8692, %v9000
        %v9029 = vadd.f32 %v8693, %v9002
        %v9030 = vadd.f32 %v8694, %v9004
        %v9031 = vadd.f32 %v8695, %v9006
        %v9032 = vadd.f32 %v8696, %v9008
        %v9033 = vstv %s1626
        %v9034 = vmul.f32 %v9033, %v1559
        %v9035 = vmul.f32 %v9033, %v1560
        %v9036 = vmul.f32 %v9033, %v1562
        %v9037 = vmul.f32 %v9033, %v1563
        %v9038 = vmul.f32 %v9033, %v1565
        %v9039 = vmul.f32 %v9033, %v1566
        %v9040 = vmul.f32 %v9033, %v1568
        %v9041 = vmul.f32 %v9033, %v1569
        %v9050 = vrot.slane %v9034, 5
        %v9051 = vrot.slane %v9035, 5
        %v9052 = vsel %vm1977, %v9050, %v9051
        %v9053 = vrot.slane %v9036, 5
        %v9054 = vrot.slane %v9037, 5
        %v9055 = vsel %vm1977, %v9053, %v9054
        %v9056 = vrot.slane %v9038, 5
        %v9057 = vrot.slane %v9039, 5
        %v9058 = vsel %vm1977, %v9056, %v9057
        %v9059 = vrot.slane %v9040, 5
        %v9060 = vrot.slane %v9041, 5
        %v9061 = vsel %vm1977, %v9059, %v9060
        %9062 = vrot.lane.b32.xlu0 %v9050, 100
        %v9063 = vpop.permute.xlu0 %9062
        %9064 = vrot.lane.b32.xlu0 %v9052, 100
        %v9065 = vpop.permute.xlu0 %9064
        %9066 = vrot.lane.b32.xlu0 %v9051, 100
        %v9067 = vpop.permute.xlu0 %9066
        %9068 = vrot.lane.b32.xlu0 %v9053, 100
        %v9069 = vpop.permute.xlu0 %9068
        %9070 = vrot.lane.b32.xlu0 %v9055, 100
        %v9071 = vpop.permute.xlu0 %9070
        %9072 = vrot.lane.b32.xlu0 %v9054, 100
        %v9073 = vpop.permute.xlu0 %9072
        %9074 = vrot.lane.b32.xlu0 %v9056, 100
        %v9075 = vpop.permute.xlu0 %9074
        %9076 = vrot.lane.b32.xlu0 %v9058, 100
        %v9077 = vpop.permute.xlu0 %9076
        %9078 = vrot.lane.b32.xlu0 %v9057, 100
        %v9079 = vpop.permute.xlu0 %9078
        %9080 = vrot.lane.b32.xlu0 %v9059, 100
        %v9081 = vpop.permute.xlu0 %9080
        %9082 = vrot.lane.b32.xlu0 %v9061, 100
        %v9083 = vpop.permute.xlu0 %9082
        %9084 = vrot.lane.b32.xlu0 %v9060, 100
        %v9085 = vpop.permute.xlu0 %9084
        %v9098 = vadd.f32 %v8758, %v9063
        %v9099 = vadd.f32 %v8759, %v9065
        %v9100 = vadd.f32 %v8760, %v9067
        %v9101 = vadd.f32 %v8761, %v9069
        %v9102 = vadd.f32 %v8762, %v9071
        %v9103 = vadd.f32 %v8763, %v9073
        %v9104 = vadd.f32 %v8764, %v9075
        %v9105 = vadd.f32 %v8765, %v9077
        %v9106 = vadd.f32 %v8766, %v9079
        %v9107 = vadd.f32 %v8767, %v9081
        %v9108 = vadd.f32 %v8768, %v9083
        %v9109 = vadd.f32 %v8769, %v9085
        %v9110 = vstv %s1633
        %v9111 = vmul.f32 %v9110, %v1559
        %v9112 = vmul.f32 %v9110, %v1560
        %v9113 = vmul.f32 %v9110, %v1561
        %v9114 = vmul.f32 %v9110, %v1562
        %v9115 = vmul.f32 %v9110, %v1563
        %v9116 = vmul.f32 %v9110, %v1564
        %v9117 = vmul.f32 %v9110, %v1565
        %v9118 = vmul.f32 %v9110, %v1566
        %v9119 = vmul.f32 %v9110, %v1567
        %v9120 = vmul.f32 %v9110, %v1568
        %v9121 = vmul.f32 %v9110, %v1569
        %v9122 = vmul.f32 %v9110, %v1570
        %v9135 = vrot.slane %v9111, 1
        %v9136 = vrot.slane %v9112, 1
        %v9137 = vsel %vm2063, %v9135, %v9136
        %v9138 = vrot.slane %v9113, 1
        %v9139 = vsel %vm2063, %v9136, %v9138
        %v9140 = vrot.slane %v9114, 1
        %v9141 = vrot.slane %v9115, 1
        %v9142 = vsel %vm2063, %v9140, %v9141
        %v9143 = vrot.slane %v9116, 1
        %v9144 = vsel %vm2063, %v9141, %v9143
        %v9145 = vrot.slane %v9117, 1
        %v9146 = vrot.slane %v9118, 1
        %v9147 = vsel %vm2063, %v9145, %v9146
        %v9148 = vrot.slane %v9119, 1
        %v9149 = vsel %vm2063, %v9146, %v9148
        %v9150 = vrot.slane %v9120, 1
        %v9151 = vrot.slane %v9121, 1
        %v9152 = vsel %vm2063, %v9150, %v9151
        %v9153 = vrot.slane %v9122, 1
        %v9154 = vsel %vm2063, %v9151, %v9153
        %9155 = vrot.lane.b32.xlu0 %v9137, 100
        %v9156 = vpop.permute.xlu0 %9155
        %9157 = vrot.lane.b32.xlu0 %v9139, 100
        %v9158 = vpop.permute.xlu0 %9157
        %9159 = vrot.lane.b32.xlu0 %v9142, 100
        %v9160 = vpop.permute.xlu0 %9159
        %9161 = vrot.lane.b32.xlu0 %v9144, 100
        %v9162 = vpop.permute.xlu0 %9161
        %9163 = vrot.lane.b32.xlu0 %v9147, 100
        %v9164 = vpop.permute.xlu0 %9163
        %9165 = vrot.lane.b32.xlu0 %v9149, 100
        %v9166 = vpop.permute.xlu0 %9165
        %9167 = vrot.lane.b32.xlu0 %v9152, 100
        %v9168 = vpop.permute.xlu0 %9167
        %9169 = vrot.lane.b32.xlu0 %v9154, 100
        %v9170 = vpop.permute.xlu0 %9169
        %v9179 = vadd.f32 %v8839, %v9156
        %v9180 = vadd.f32 %v8840, %v9158
        %v9181 = vadd.f32 %v8841, %v9160
        %v9182 = vadd.f32 %v8842, %v9162
        %v9183 = vadd.f32 %v8843, %v9164
        %v9184 = vadd.f32 %v8844, %v9166
        %v9185 = vadd.f32 %v8845, %v9168
        %v9186 = vadd.f32 %v8846, %v9170
        %v9187 = vstv %s1640
        %v9188 = vmul.f32 %v9187, %v1559
        %v9189 = vmul.f32 %v9187, %v1560
        %v9190 = vmul.f32 %v9187, %v1561
        %v9191 = vmul.f32 %v9187, %v1562
        %v9192 = vmul.f32 %v9187, %v1563
        %v9193 = vmul.f32 %v9187, %v1564
        %v9194 = vmul.f32 %v9187, %v1565
        %v9195 = vmul.f32 %v9187, %v1566
        %v9196 = vmul.f32 %v9187, %v1567
        %v9197 = vmul.f32 %v9187, %v1568
        %v9198 = vmul.f32 %v9187, %v1569
        %v9199 = vmul.f32 %v9187, %v1570
        %v9212 = vrot.slane %v9188, 1
        %v9213 = vrot.slane %v9189, 1
        %v9214 = vsel %vm2063, %v9212, %v9213
        %v9215 = vrot.slane %v9190, 1
        %v9216 = vsel %vm2063, %v9213, %v9215
        %v9217 = vrot.slane %v9191, 1
        %v9218 = vrot.slane %v9192, 1
        %v9219 = vsel %vm2063, %v9217, %v9218
        %v9220 = vrot.slane %v9193, 1
        %v9221 = vsel %vm2063, %v9218, %v9220
        %v9222 = vrot.slane %v9194, 1
        %v9223 = vrot.slane %v9195, 1
        %v9224 = vsel %vm2063, %v9222, %v9223
        %v9225 = vrot.slane %v9196, 1
        %v9226 = vsel %vm2063, %v9223, %v9225
        %v9227 = vrot.slane %v9197, 1
        %v9228 = vrot.slane %v9198, 1
        %v9229 = vsel %vm2063, %v9227, %v9228
        %v9230 = vrot.slane %v9199, 1
        %v9231 = vsel %vm2063, %v9228, %v9230
        %9232 = vrot.lane.b32.xlu0 %v9214, 100
        %v9233 = vpop.permute.xlu0 %9232
        %9234 = vrot.lane.b32.xlu0 %v9216, 100
        %v9235 = vpop.permute.xlu0 %9234
        %9236 = vrot.lane.b32.xlu0 %v9215, 100
        %v9237 = vpop.permute.xlu0 %9236
        %9238 = vrot.lane.b32.xlu0 %v9219, 100
        %v9239 = vpop.permute.xlu0 %9238
        %9240 = vrot.lane.b32.xlu0 %v9221, 100
        %v9241 = vpop.permute.xlu0 %9240
        %9242 = vrot.lane.b32.xlu0 %v9220, 100
        %v9243 = vpop.permute.xlu0 %9242
        %9244 = vrot.lane.b32.xlu0 %v9224, 100
        %v9245 = vpop.permute.xlu0 %9244
        %9246 = vrot.lane.b32.xlu0 %v9226, 100
        %v9247 = vpop.permute.xlu0 %9246
        %9248 = vrot.lane.b32.xlu0 %v9225, 100
        %v9249 = vpop.permute.xlu0 %9248
        %9250 = vrot.lane.b32.xlu0 %v9229, 100
        %v9251 = vpop.permute.xlu0 %9250
        %9252 = vrot.lane.b32.xlu0 %v9231, 100
        %v9253 = vpop.permute.xlu0 %9252
        %9254 = vrot.lane.b32.xlu0 %v9230, 100
        %v9255 = vpop.permute.xlu0 %9254
        %v9268 = vadd.f32 %v8928, %v9233
        %v9269 = vadd.f32 %v8929, %v9235
        %v9270 = vadd.f32 %v8930, %v9237
        %v9271 = vadd.f32 %v8931, %v9239
        %v9272 = vadd.f32 %v8932, %v9241
        %v9273 = vadd.f32 %v8933, %v9243
        %v9274 = vadd.f32 %v8934, %v9245
        %v9275 = vadd.f32 %v8935, %v9247
        %v9276 = vadd.f32 %v8936, %v9249
        %v9277 = vadd.f32 %v8937, %v9251
        %v9278 = vadd.f32 %v8938, %v9253
        %v9279 = vadd.f32 %v8939, %v9255
        %v9280 = vstv %s1647
        %v9281 = vmul.f32 %v9280, %v1559
        %v9282 = vmul.f32 %v9280, %v1560
        %v9283 = vmul.f32 %v9280, %v1561
        %v9284 = vmul.f32 %v9280, %v1562
        %v9285 = vmul.f32 %v9280, %v1563
        %v9286 = vmul.f32 %v9280, %v1564
        %v9287 = vmul.f32 %v9280, %v1565
        %v9288 = vmul.f32 %v9280, %v1566
        %v9289 = vmul.f32 %v9280, %v1567
        %v9290 = vmul.f32 %v9280, %v1568
        %v9291 = vmul.f32 %v9280, %v1569
        %v9292 = vmul.f32 %v9280, %v1570
        %v9305 = vrot.slane %v9281, 1
        %v9306 = vrot.slane %v9282, 1
        %v9307 = vsel %vm2063, %v9305, %v9306
        %v9308 = vrot.slane %v9283, 1
        %v9309 = vsel %vm2063, %v9306, %v9308
        %v9310 = vrot.slane %v9284, 1
        %v9311 = vrot.slane %v9285, 1
        %v9312 = vsel %vm2063, %v9310, %v9311
        %v9313 = vrot.slane %v9286, 1
        %v9314 = vsel %vm2063, %v9311, %v9313
        %v9315 = vrot.slane %v9287, 1
        %v9316 = vrot.slane %v9288, 1
        %v9317 = vsel %vm2063, %v9315, %v9316
        %v9318 = vrot.slane %v9289, 1
        %v9319 = vsel %vm2063, %v9316, %v9318
        %v9320 = vrot.slane %v9290, 1
        %v9321 = vrot.slane %v9291, 1
        %v9322 = vsel %vm2063, %v9320, %v9321
        %v9323 = vrot.slane %v9292, 1
        %v9324 = vsel %vm2063, %v9321, %v9323
        %9325 = vrot.lane.b32.xlu0 %v9307, 100
        %v9326 = vpop.permute.xlu0 %9325
        %9327 = vrot.lane.b32.xlu0 %v9309, 100
        %v9328 = vpop.permute.xlu0 %9327
        %9329 = vrot.lane.b32.xlu0 %v9308, 100
        %v9330 = vpop.permute.xlu0 %9329
        %9331 = vrot.lane.b32.xlu0 %v9312, 100
        %v9332 = vpop.permute.xlu0 %9331
        %9333 = vrot.lane.b32.xlu0 %v9314, 100
        %v9334 = vpop.permute.xlu0 %9333
        %9335 = vrot.lane.b32.xlu0 %v9313, 100
        %v9336 = vpop.permute.xlu0 %9335
        %9337 = vrot.lane.b32.xlu0 %v9317, 100
        %v9338 = vpop.permute.xlu0 %9337
        %9339 = vrot.lane.b32.xlu0 %v9319, 100
        %v9340 = vpop.permute.xlu0 %9339
        %9341 = vrot.lane.b32.xlu0 %v9318, 100
        %v9342 = vpop.permute.xlu0 %9341
        %9343 = vrot.lane.b32.xlu0 %v9322, 100
        %v9344 = vpop.permute.xlu0 %9343
        %9345 = vrot.lane.b32.xlu0 %v9324, 100
        %v9346 = vpop.permute.xlu0 %9345
        %9347 = vrot.lane.b32.xlu0 %v9323, 100
        %v9348 = vpop.permute.xlu0 %9347
        %v9361 = vadd.f32 %v9021, %v9326
        %v9362 = vadd.f32 %v9022, %v9328
        %v9363 = vadd.f32 %v9023, %v9330
        %v9364 = vadd.f32 %v9024, %v9332
        %v9365 = vadd.f32 %v9025, %v9334
        %v9366 = vadd.f32 %v9026, %v9336
        %v9367 = vadd.f32 %v9027, %v9338
        %v9368 = vadd.f32 %v9028, %v9340
        %v9369 = vadd.f32 %v9029, %v9342
        %v9370 = vadd.f32 %v9030, %v9344
        %v9371 = vadd.f32 %v9031, %v9346
        %v9372 = vadd.f32 %v9032, %v9348
        %v9373 = vstv %s1654
        %v9374 = vmul.f32 %v9373, %v1559
        %v9375 = vmul.f32 %v9373, %v1560
        %v9376 = vmul.f32 %v9373, %v1561
        %v9377 = vmul.f32 %v9373, %v1562
        %v9378 = vmul.f32 %v9373, %v1563
        %v9379 = vmul.f32 %v9373, %v1564
        %v9380 = vmul.f32 %v9373, %v1565
        %v9381 = vmul.f32 %v9373, %v1566
        %v9382 = vmul.f32 %v9373, %v1567
        %v9383 = vmul.f32 %v9373, %v1568
        %v9384 = vmul.f32 %v9373, %v1569
        %v9385 = vmul.f32 %v9373, %v1570
        %v9398 = vrot.slane %v9374, 1
        %v9399 = vrot.slane %v9375, 1
        %v9400 = vsel %vm2063, %v9398, %v9399
        %v9401 = vrot.slane %v9376, 1
        %v9402 = vsel %vm2063, %v9399, %v9401
        %v9403 = vrot.slane %v9377, 1
        %v9404 = vrot.slane %v9378, 1
        %v9405 = vsel %vm2063, %v9403, %v9404
        %v9406 = vrot.slane %v9379, 1
        %v9407 = vsel %vm2063, %v9404, %v9406
        %v9408 = vrot.slane %v9380, 1
        %v9409 = vrot.slane %v9381, 1
        %v9410 = vsel %vm2063, %v9408, %v9409
        %v9411 = vrot.slane %v9382, 1
        %v9412 = vsel %vm2063, %v9409, %v9411
        %v9413 = vrot.slane %v9383, 1
        %v9414 = vrot.slane %v9384, 1
        %v9415 = vsel %vm2063, %v9413, %v9414
        %v9416 = vrot.slane %v9385, 1
        %v9417 = vsel %vm2063, %v9414, %v9416
        %9418 = vrot.lane.b32.xlu0 %v9400, 100
        %v9419 = vpop.permute.xlu0 %9418
        %9420 = vrot.lane.b32.xlu0 %v9402, 100
        %v9421 = vpop.permute.xlu0 %9420
        %9422 = vrot.lane.b32.xlu0 %v9401, 100
        %v9423 = vpop.permute.xlu0 %9422
        %9424 = vrot.lane.b32.xlu0 %v9405, 100
        %v9425 = vpop.permute.xlu0 %9424
        %9426 = vrot.lane.b32.xlu0 %v9407, 100
        %v9427 = vpop.permute.xlu0 %9426
        %9428 = vrot.lane.b32.xlu0 %v9406, 100
        %v9429 = vpop.permute.xlu0 %9428
        %9430 = vrot.lane.b32.xlu0 %v9410, 100
        %v9431 = vpop.permute.xlu0 %9430
        %9432 = vrot.lane.b32.xlu0 %v9412, 100
        %v9433 = vpop.permute.xlu0 %9432
        %9434 = vrot.lane.b32.xlu0 %v9411, 100
        %v9435 = vpop.permute.xlu0 %9434
        %9436 = vrot.lane.b32.xlu0 %v9415, 100
        %v9437 = vpop.permute.xlu0 %9436
        %9438 = vrot.lane.b32.xlu0 %v9417, 100
        %v9439 = vpop.permute.xlu0 %9438
        %9440 = vrot.lane.b32.xlu0 %v9416, 100
        %v9441 = vpop.permute.xlu0 %9440
        %v9454 = vadd.f32 %v9098, %v9419
        %v9455 = vadd.f32 %v9099, %v9421
        %v9456 = vadd.f32 %v9100, %v9423
        %v9457 = vadd.f32 %v9101, %v9425
        %v9458 = vadd.f32 %v9102, %v9427
        %v9459 = vadd.f32 %v9103, %v9429
        %v9460 = vadd.f32 %v9104, %v9431
        %v9461 = vadd.f32 %v9105, %v9433
        %v9462 = vadd.f32 %v9106, %v9435
        %v9463 = vadd.f32 %v9107, %v9437
        %v9464 = vadd.f32 %v9108, %v9439
        %v9465 = vadd.f32 %v9109, %v9441
        %v9466 = vstv %s1661
        %v9467 = vmul.f32 %v9466, %v1559
        %v9468 = vmul.f32 %v9466, %v1560
        %v9469 = vmul.f32 %v9466, %v1561
        %v9470 = vmul.f32 %v9466, %v1562
        %v9471 = vmul.f32 %v9466, %v1563
        %v9472 = vmul.f32 %v9466, %v1564
        %v9473 = vmul.f32 %v9466, %v1565
        %v9474 = vmul.f32 %v9466, %v1566
        %v9475 = vmul.f32 %v9466, %v1567
        %v9476 = vmul.f32 %v9466, %v1568
        %v9477 = vmul.f32 %v9466, %v1569
        %v9478 = vmul.f32 %v9466, %v1570
        %v9491 = vrot.slane %v9467, 5
        %v9492 = vrot.slane %v9468, 5
        %v9493 = vsel %vm1977, %v9491, %v9492
        %v9494 = vrot.slane %v9469, 5
        %v9495 = vsel %vm1977, %v9492, %v9494
        %v9496 = vrot.slane %v9470, 5
        %v9497 = vrot.slane %v9471, 5
        %v9498 = vsel %vm1977, %v9496, %v9497
        %v9499 = vrot.slane %v9472, 5
        %v9500 = vsel %vm1977, %v9497, %v9499
        %v9501 = vrot.slane %v9473, 5
        %v9502 = vrot.slane %v9474, 5
        %v9503 = vsel %vm1977, %v9501, %v9502
        %v9504 = vrot.slane %v9475, 5
        %v9505 = vsel %vm1977, %v9502, %v9504
        %v9506 = vrot.slane %v9476, 5
        %v9507 = vrot.slane %v9477, 5
        %v9508 = vsel %vm1977, %v9506, %v9507
        %v9509 = vrot.slane %v9478, 5
        %v9510 = vsel %vm1977, %v9507, %v9509
        %9511 = vrot.lane.b32.xlu0 %v9493, 100
        %v9512 = vpop.permute.xlu0 %9511
        %9513 = vrot.lane.b32.xlu0 %v9495, 100
        %v9514 = vpop.permute.xlu0 %9513
        %9515 = vrot.lane.b32.xlu0 %v9498, 100
        %v9516 = vpop.permute.xlu0 %9515
        %9517 = vrot.lane.b32.xlu0 %v9500, 100
        %v9518 = vpop.permute.xlu0 %9517
        %9519 = vrot.lane.b32.xlu0 %v9503, 100
        %v9520 = vpop.permute.xlu0 %9519
        %9521 = vrot.lane.b32.xlu0 %v9505, 100
        %v9522 = vpop.permute.xlu0 %9521
        %9523 = vrot.lane.b32.xlu0 %v9508, 100
        %v9524 = vpop.permute.xlu0 %9523
        %9525 = vrot.lane.b32.xlu0 %v9510, 100
        %v9526 = vpop.permute.xlu0 %9525
        %v9535 = vadd.f32 %v9179, %v9512
        %v9536 = vadd.f32 %v9180, %v9514
        %v9537 = vadd.f32 %v9181, %v9516
        %v9538 = vadd.f32 %v9182, %v9518
        %v9539 = vadd.f32 %v9183, %v9520
        %v9540 = vadd.f32 %v9184, %v9522
        %v9541 = vadd.f32 %v9185, %v9524
        %v9542 = vadd.f32 %v9186, %v9526
        %v9543 = vstv %s1668
        %v9544 = vmul.f32 %v9543, %v1559
        %v9545 = vmul.f32 %v9543, %v1560
        %v9546 = vmul.f32 %v9543, %v1561
        %v9547 = vmul.f32 %v9543, %v1562
        %v9548 = vmul.f32 %v9543, %v1563
        %v9549 = vmul.f32 %v9543, %v1564
        %v9550 = vmul.f32 %v9543, %v1565
        %v9551 = vmul.f32 %v9543, %v1566
        %v9552 = vmul.f32 %v9543, %v1567
        %v9553 = vmul.f32 %v9543, %v1568
        %v9554 = vmul.f32 %v9543, %v1569
        %v9555 = vmul.f32 %v9543, %v1570
        %v9568 = vrot.slane %v9544, 5
        %v9569 = vrot.slane %v9545, 5
        %v9570 = vsel %vm1977, %v9568, %v9569
        %v9571 = vrot.slane %v9546, 5
        %v9572 = vsel %vm1977, %v9569, %v9571
        %v9573 = vrot.slane %v9547, 5
        %v9574 = vrot.slane %v9548, 5
        %v9575 = vsel %vm1977, %v9573, %v9574
        %v9576 = vrot.slane %v9549, 5
        %v9577 = vsel %vm1977, %v9574, %v9576
        %v9578 = vrot.slane %v9550, 5
        %v9579 = vrot.slane %v9551, 5
        %v9580 = vsel %vm1977, %v9578, %v9579
        %v9581 = vrot.slane %v9552, 5
        %v9582 = vsel %vm1977, %v9579, %v9581
        %v9583 = vrot.slane %v9553, 5
        %v9584 = vrot.slane %v9554, 5
        %v9585 = vsel %vm1977, %v9583, %v9584
        %v9586 = vrot.slane %v9555, 5
        %v9587 = vsel %vm1977, %v9584, %v9586
        %9588 = vrot.lane.b32.xlu0 %v9570, 100
        %v9589 = vpop.permute.xlu0 %9588
        %9590 = vrot.lane.b32.xlu0 %v9572, 100
        %v9591 = vpop.permute.xlu0 %9590
        %9592 = vrot.lane.b32.xlu0 %v9571, 100
        %v9593 = vpop.permute.xlu0 %9592
        %9594 = vrot.lane.b32.xlu0 %v9575, 100
        %v9595 = vpop.permute.xlu0 %9594
        %9596 = vrot.lane.b32.xlu0 %v9577, 100
        %v9597 = vpop.permute.xlu0 %9596
        %9598 = vrot.lane.b32.xlu0 %v9576, 100
        %v9599 = vpop.permute.xlu0 %9598
        %9600 = vrot.lane.b32.xlu0 %v9580, 100
        %v9601 = vpop.permute.xlu0 %9600
        %9602 = vrot.lane.b32.xlu0 %v9582, 100
        %v9603 = vpop.permute.xlu0 %9602
        %9604 = vrot.lane.b32.xlu0 %v9581, 100
        %v9605 = vpop.permute.xlu0 %9604
        %9606 = vrot.lane.b32.xlu0 %v9585, 100
        %v9607 = vpop.permute.xlu0 %9606
        %9608 = vrot.lane.b32.xlu0 %v9587, 100
        %v9609 = vpop.permute.xlu0 %9608
        %9610 = vrot.lane.b32.xlu0 %v9586, 100
        %v9611 = vpop.permute.xlu0 %9610
        %v9624 = vadd.f32 %v9268, %v9589
        %v9625 = vadd.f32 %v9269, %v9591
        %v9626 = vadd.f32 %v9270, %v9593
        %v9627 = vadd.f32 %v9271, %v9595
        %v9628 = vadd.f32 %v9272, %v9597
        %v9629 = vadd.f32 %v9273, %v9599
        %v9630 = vadd.f32 %v9274, %v9601
        %v9631 = vadd.f32 %v9275, %v9603
        %v9632 = vadd.f32 %v9276, %v9605
        %v9633 = vadd.f32 %v9277, %v9607
        %v9634 = vadd.f32 %v9278, %v9609
        %v9635 = vadd.f32 %v9279, %v9611
        %v9648 = vrot.slane %v9624, 1
        %v9649 = vrot.slane %v9625, 1
        %v9650 = vsel %vm2063, %v9648, %v9649
        %v9651 = vrot.slane %v9626, 1
        %v9652 = vsel %vm2063, %v9649, %v9651
        %v9653 = vrot.slane %v9627, 1
        %v9654 = vrot.slane %v9628, 1
        %v9655 = vsel %vm2063, %v9653, %v9654
        %v9656 = vrot.slane %v9629, 1
        %v9657 = vsel %vm2063, %v9654, %v9656
        %v9658 = vrot.slane %v9630, 1
        %v9659 = vrot.slane %v9631, 1
        %v9660 = vsel %vm2063, %v9658, %v9659
        %v9661 = vrot.slane %v9632, 1
        %v9662 = vsel %vm2063, %v9659, %v9661
        %v9663 = vrot.slane %v9633, 1
        %v9664 = vrot.slane %v9634, 1
        %v9665 = vsel %vm2063, %v9663, %v9664
        %v9666 = vrot.slane %v9635, 1
        %v9667 = vsel %vm2063, %v9664, %v9666
        %v9676 = vadd.f32 %v9535, %v9650
        %v9677 = vadd.f32 %v9536, %v9652
        %v9678 = vadd.f32 %v9537, %v9655
        %v9679 = vadd.f32 %v9538, %v9657
        %v9680 = vadd.f32 %v9539, %v9660
        %v9681 = vadd.f32 %v9540, %v9662
        %v9682 = vadd.f32 %v9541, %v9665
        %v9683 = vadd.f32 %v9542, %v9667
        %v9696 = vrot.slane %v9454, 1
        %v9697 = vrot.slane %v9455, 1
        %v9698 = vsel %vm2063, %v9696, %v9697
        %v9699 = vrot.slane %v9456, 1
        %v9700 = vsel %vm2063, %v9697, %v9699
        %v9701 = vrot.slane %v9457, 1
        %v9702 = vrot.slane %v9458, 1
        %v9703 = vsel %vm2063, %v9701, %v9702
        %v9704 = vrot.slane %v9459, 1
        %v9705 = vsel %vm2063, %v9702, %v9704
        %v9706 = vrot.slane %v9460, 1
        %v9707 = vrot.slane %v9461, 1
        %v9708 = vsel %vm2063, %v9706, %v9707
        %v9709 = vrot.slane %v9462, 1
        %v9710 = vsel %vm2063, %v9707, %v9709
        %v9711 = vrot.slane %v9463, 1
        %v9712 = vrot.slane %v9464, 1
        %v9713 = vsel %vm2063, %v9711, %v9712
        %v9714 = vrot.slane %v9465, 1
        %v9715 = vsel %vm2063, %v9712, %v9714
        %v9728 = vadd.f32 %v9361, %v9698
        %v9729 = vadd.f32 %v9362, %v9700
        %v9730 = vadd.f32 %v9363, %v9699
        %v9731 = vadd.f32 %v9364, %v9703
        %v9732 = vadd.f32 %v9365, %v9705
        %v9733 = vadd.f32 %v9366, %v9704
        %v9734 = vadd.f32 %v9367, %v9708
        %v9735 = vadd.f32 %v9368, %v9710
        %v9736 = vadd.f32 %v9369, %v9709
        %v9737 = vadd.f32 %v9370, %v9713
        %v9738 = vadd.f32 %v9371, %v9715
        %v9739 = vadd.f32 %v9372, %v9714
        %v9752 = vrot.slane %v9728, 2
        %v9753 = vrot.slane %v9729, 2
        %v9754 = vsel %vm2760, %v9752, %v9753
        %v9755 = vrot.slane %v9730, 2
        %v9756 = vsel %vm2760, %v9753, %v9755
        %v9757 = vrot.slane %v9731, 2
        %v9758 = vrot.slane %v9732, 2
        %v9759 = vsel %vm2760, %v9757, %v9758
        %v9760 = vrot.slane %v9733, 2
        %v9761 = vsel %vm2760, %v9758, %v9760
        %v9762 = vrot.slane %v9734, 2
        %v9763 = vrot.slane %v9735, 2
        %v9764 = vsel %vm2760, %v9762, %v9763
        %v9765 = vrot.slane %v9736, 2
        %v9766 = vsel %vm2760, %v9763, %v9765
        %v9767 = vrot.slane %v9737, 2
        %v9768 = vrot.slane %v9738, 2
        %v9769 = vsel %vm2760, %v9767, %v9768
        %v9770 = vrot.slane %v9739, 2
        %v9771 = vsel %vm2760, %v9768, %v9770
        %v9780 = vadd.f32 %v9676, %v9754
        %v9781 = vadd.f32 %v9677, %v9756
        %v9782 = vadd.f32 %v9678, %v9759
        %v9783 = vadd.f32 %v9679, %v9761
        %v9784 = vadd.f32 %v9680, %v9764
        %v9785 = vadd.f32 %v9681, %v9766
        %v9786 = vadd.f32 %v9682, %v9769
        %v9787 = vadd.f32 %v9683, %v9771
        %v9788 = vxor.u32 %v9780, 2147483648
        %v9789 = vxor.u32 %v9781, 2147483648
        %v9790 = vxor.u32 %v9782, 2147483648
        %v9791 = vxor.u32 %v9783, 2147483648
        %v9792 = vxor.u32 %v9784, 2147483648
        %v9793 = vxor.u32 %v9785, 2147483648
        %v9794 = vxor.u32 %v9786, 2147483648
        %v9795 = vxor.u32 %v9787, 2147483648
        %v9796 = vmul.f32 %v9788, 1.442695
        %v9797 = vpow.pop %v9796
        %v9798 = vmul.f32 %v9789, 1.442695
        %v9799 = vpow.pop %v9798
        %v9800 = vmul.f32 %v9790, 1.442695
        %v9801 = vpow.pop %v9800
        %v9802 = vmul.f32 %v9791, 1.442695
        %v9803 = vpow.pop %v9802
        %v9804 = vmul.f32 %v9792, 1.442695
        %v9805 = vpow.pop %v9804
        %v9806 = vmul.f32 %v9793, 1.442695
        %v9807 = vpow.pop %v9806
        %v9808 = vmul.f32 %v9794, 1.442695
        %v9809 = vpow.pop %v9808
        %v9810 = vmul.f32 %v9795, 1.442695
        %v9811 = vpow.pop %v9810
        %v9812 = vadd.f32 %v9797, 1.0
        %v9813 = vadd.f32 %v9799, 1.0
        %v9814 = vadd.f32 %v9801, 1.0
        %v9815 = vadd.f32 %v9803, 1.0
        %v9816 = vadd.f32 %v9805, 1.0
        %v9817 = vadd.f32 %v9807, 1.0
        %v9818 = vadd.f32 %v9809, 1.0
        %v9819 = vadd.f32 %v9811, 1.0
        %v9820 = vrcp.pop %v9812
        %v9821 = vmul.f32 1.0, %v9820
        %v9822 = vrcp.pop %v9813
        %v9823 = vmul.f32 1.0, %v9822
        %v9824 = vrcp.pop %v9814
        %v9825 = vmul.f32 1.0, %v9824
        %v9826 = vrcp.pop %v9815
        %v9827 = vmul.f32 1.0, %v9826
        %v9828 = vrcp.pop %v9816
        %v9829 = vmul.f32 1.0, %v9828
        %v9830 = vrcp.pop %v9817
        %v9831 = vmul.f32 1.0, %v9830
        %v9832 = vrcp.pop %v9818
        %v9833 = vmul.f32 1.0, %v9832
        %v9834 = vrcp.pop %v9819
        %v9835 = vmul.f32 1.0, %v9834
        %v9840 = vrot.slane %v9825, 7
        %v9841 = vsel %vm478, %v9840, %v9821
        %v9842 = vsel %vm577, %v9840, %v9841
        %v9843 = vrot.slane %v9829, 6
        %v9844 = vsel %vm480, %v9843, %v9842
        %v9845 = vsel %vm579, %v9843, %v9844
        %v9846 = vrot.slane %v9833, 5
        %v9847 = vsel %vm482, %v9846, %v9845
        %v9848 = vsel %vm581, %v9846, %v9847
        %vm9850 = vcmask 125952
        %9851 = vst.msk [vmem:[#allocation3] sm:$0xf] %vm9850, %v9848
        %v9852 = vrot.slane %v9821, 1
        %v9853 = vsel %vm478, %v9825, %v9852
        %v9854 = vsel %vm577, %v9825, %v9853
        %v9855 = vrot.slane %v9829, 7
        %v9856 = vsel %vm480, %v9855, %v9854
        %v9857 = vsel %vm579, %v9855, %v9856
        %v9858 = vrot.slane %v9833, 6
        %v9859 = vsel %vm482, %v9858, %v9857
        %v9860 = vsel %vm581, %v9858, %v9859
        %9861 = vrot.lane.b32.xlu0 %v9860, 16
        %v9862 = vpop.permute.xlu0 %9861
        %vm9864 = vcmask 257152
        %9865 = vst.msk [vmem:[#allocation3] sm:$0xf] %vm9864, %v9862
        %v9866 = vrot.slane %v9821, 2
        %v9867 = vrot.slane %v9825, 1
        %v9868 = vsel %vm478, %v9867, %v9866
        %v9869 = vsel %vm577, %v9867, %v9868
        %v9870 = vsel %vm480, %v9829, %v9869
        %v9871 = vsel %vm579, %v9829, %v9870
        %v9872 = vrot.slane %v9833, 7
        %v9873 = vsel %vm482, %v9872, %v9871
        %v9874 = vsel %vm581, %v9872, %v9873
        %9875 = vrot.lane.b32.xlu0 %v9874, 32
        %v9876 = vpop.permute.xlu0 %9875
        %vm9878 = vcmask 388352
        %9879 = vst.msk [vmem:[#allocation3] sm:$0xf] %vm9878, %v9876
        %v9880 = vrot.slane %v9821, 3
        %v9881 = vrot.slane %v9825, 2
        %v9882 = vsel %vm478, %v9881, %v9880
        %v9883 = vsel %vm577, %v9881, %v9882
        %v9884 = vrot.slane %v9829, 1
        %v9885 = vsel %vm480, %v9884, %v9883
        %v9886 = vsel %vm579, %v9884, %v9885
        %v9887 = vsel %vm482, %v9833, %v9886
        %v9888 = vsel %vm581, %v9833, %v9887
        %9889 = vrot.lane.b32.xlu0 %v9888, 48
        %v9890 = vpop.permute.xlu0 %9889
        %vm9892 = vcmask 519552
        %9893 = vst.msk [vmem:[#allocation3] sm:$0xf] %vm9892, %v9890
        %v9894 = vcombine.high %v9821, %v9821
        %v9895 = vcombine.high %v9825, %v9825
        %v9896 = vcombine.high %v9829, %v9829
        %v9897 = vcombine.high %v9833, %v9833
        %v9898 = vrot.slane %v9895, 7
        %v9899 = vsel %vm478, %v9898, %v9894
        %v9900 = vsel %vm577, %v9898, %v9899
        %v9901 = vrot.slane %v9896, 6
        %v9902 = vsel %vm480, %v9901, %v9900
        %v9903 = vsel %vm579, %v9901, %v9902
        %v9904 = vrot.slane %v9897, 5
        %v9905 = vsel %vm482, %v9904, %v9903
        %v9906 = vsel %vm581, %v9904, %v9905
        %9907 = vrot.lane.b32.xlu0 %v9906, 64
        %v9908 = vpop.permute.xlu0 %9907
        %vm9910 = vcmask 650752
        %9911 = vst.msk [vmem:[#allocation3] sm:$0xf] %vm9910, %v9908
        %v9912 = vrot.slane %v9894, 1
        %v9913 = vsel %vm478, %v9895, %v9912
        %v9914 = vsel %vm577, %v9895, %v9913
        %v9915 = vrot.slane %v9896, 7
        %v9916 = vsel %vm480, %v9915, %v9914
        %v9917 = vsel %vm579, %v9915, %v9916
        %v9918 = vrot.slane %v9897, 6
        %v9919 = vsel %vm482, %v9918, %v9917
        %v9920 = vsel %vm581, %v9918, %v9919
        %9921 = vrot.lane.b32.xlu0 %v9920, 80
        %v9922 = vpop.permute.xlu0 %9921
        %vm9924 = vcmask 781952
        %9925 = vst.msk [vmem:[#allocation3] sm:$0xf] %vm9924, %v9922
        %v9926 = vrot.slane %v9894, 2
        %v9927 = vrot.slane %v9895, 1
        %v9928 = vsel %vm478, %v9927, %v9926
        %v9929 = vsel %vm577, %v9927, %v9928
        %v9930 = vsel %vm480, %v9896, %v9929
        %v9931 = vsel %vm579, %v9896, %v9930
        %v9932 = vrot.slane %v9897, 7
        %v9933 = vsel %vm482, %v9932, %v9931
        %v9934 = vsel %vm581, %v9932, %v9933
        %9935 = vrot.lane.b32.xlu0 %v9934, 96
        %v9936 = vpop.permute.xlu0 %9935
        %vm9938 = vcmask 913152
        %9939 = vst.msk [vmem:[#allocation3] sm:$0xf] %vm9938, %v9936
        %v9940 = vrot.slane %v9894, 3
        %v9941 = vrot.slane %v9895, 2
        %v9942 = vsel %vm478, %v9941, %v9940
        %v9943 = vsel %vm577, %v9941, %v9942
        %v9944 = vrot.slane %v9896, 1
        %v9945 = vsel %vm480, %v9944, %v9943
        %v9946 = vsel %vm579, %v9944, %v9945
        %v9947 = vsel %vm482, %v9897, %v9946
        %v9948 = vsel %vm581, %v9897, %v9947
        %9949 = vrot.lane.b32.xlu0 %v9948, 112
        %v9950 = vpop.permute.xlu0 %9949
        %vm9952 = vcmask 1044352
        %9953 = vst.msk [vmem:[#allocation3] sm:$0xf] %vm9952, %v9950
        %v9958 = vrot.slane %v9827, 7
        %v9959 = vsel %vm478, %v9958, %v9823
        %v9960 = vsel %vm577, %v9958, %v9959
        %v9961 = vrot.slane %v9831, 6
        %v9962 = vsel %vm480, %v9961, %v9960
        %v9963 = vsel %vm579, %v9961, %v9962
        %v9964 = vrot.slane %v9835, 5
        %v9965 = vsel %vm482, %v9964, %v9963
        %v9966 = vsel %vm581, %v9964, %v9965
        %9968 = vst.msk [vmem:[#allocation3 + $0x4] sm:$0xf] %vm9850, %v9966
        %v9969 = vrot.slane %v9823, 1
        %v9970 = vsel %vm478, %v9827, %v9969
        %v9971 = vsel %vm577, %v9827, %v9970
        %v9972 = vrot.slane %v9831, 7
        %v9973 = vsel %vm480, %v9972, %v9971
        %v9974 = vsel %vm579, %v9972, %v9973
        %v9975 = vrot.slane %v9835, 6
        %v9976 = vsel %vm482, %v9975, %v9974
        %v9977 = vsel %vm581, %v9975, %v9976
        %9978 = vrot.lane.b32.xlu0 %v9977, 16
        %v9979 = vpop.permute.xlu0 %9978
        %9981 = vst.msk [vmem:[#allocation3 + $0x4] sm:$0xf] %vm9864, %v9979
        %v9982 = vrot.slane %v9823, 2
        %v9983 = vrot.slane %v9827, 1
        %v9984 = vsel %vm478, %v9983, %v9982
        %v9985 = vsel %vm577, %v9983, %v9984
        %v9986 = vsel %vm480, %v9831, %v9985
        %v9987 = vsel %vm579, %v9831, %v9986
        %v9988 = vrot.slane %v9835, 7
        %v9989 = vsel %vm482, %v9988, %v9987
        %v9990 = vsel %vm581, %v9988, %v9989
        %9991 = vrot.lane.b32.xlu0 %v9990, 32
        %v9992 = vpop.permute.xlu0 %9991
        %9994 = vst.msk [vmem:[#allocation3 + $0x4] sm:$0xf] %vm9878, %v9992
        %v9995 = vrot.slane %v9823, 3
        %v9996 = vrot.slane %v9827, 2
        %v9997 = vsel %vm478, %v9996, %v9995
        %v9998 = vsel %vm577, %v9996, %v9997
        %v9999 = vrot.slane %v9831, 1
        %v10000 = vsel %vm480, %v9999, %v9998
        %v10001 = vsel %vm579, %v9999, %v10000
        %v10002 = vsel %vm482, %v9835, %v10001
        %v10003 = vsel %vm581, %v9835, %v10002
        %10004 = vrot.lane.b32.xlu0 %v10003, 48
        %v10005 = vpop.permute.xlu0 %10004
        %10007 = vst.msk [vmem:[#allocation3 + $0x4] sm:$0xf] %vm9892, %v10005
        %v10008 = vcombine.high %v9823, %v9823
        %v10009 = vcombine.high %v9827, %v9827
        %v10010 = vcombine.high %v9831, %v9831
        %v10011 = vcombine.high %v9835, %v9835
        %v10012 = vrot.slane %v10009, 7
        %v10013 = vsel %vm478, %v10012, %v10008
        %v10014 = vsel %vm577, %v10012, %v10013
        %v10015 = vrot.slane %v10010, 6
        %v10016 = vsel %vm480, %v10015, %v10014
        %v10017 = vsel %vm579, %v10015, %v10016
        %v10018 = vrot.slane %v10011, 5
        %v10019 = vsel %vm482, %v10018, %v10017
        %v10020 = vsel %vm581, %v10018, %v10019
        %10021 = vrot.lane.b32.xlu0 %v10020, 64
        %v10022 = vpop.permute.xlu0 %10021
        %10024 = vst.msk [vmem:[#allocation3 + $0x4] sm:$0xf] %vm9910, %v10022
        %v10025 = vrot.slane %v10008, 1
        %v10026 = vsel %vm478, %v10009, %v10025
        %v10027 = vsel %vm577, %v10009, %v10026
        %v10028 = vrot.slane %v10010, 7
        %v10029 = vsel %vm480, %v10028, %v10027
        %v10030 = vsel %vm579, %v10028, %v10029
        %v10031 = vrot.slane %v10011, 6
        %v10032 = vsel %vm482, %v10031, %v10030
        %v10033 = vsel %vm581, %v10031, %v10032
        %10034 = vrot.lane.b32.xlu0 %v10033, 80
        %v10035 = vpop.permute.xlu0 %10034
        %10037 = vst.msk [vmem:[#allocation3 + $0x4] sm:$0xf] %vm9924, %v10035
        %v10038 = vrot.slane %v10008, 2
        %v10039 = vrot.slane %v10009, 1
        %v10040 = vsel %vm478, %v10039, %v10038
        %v10041 = vsel %vm577, %v10039, %v10040
        %v10042 = vsel %vm480, %v10010, %v10041
        %v10043 = vsel %vm579, %v10010, %v10042
        %v10044 = vrot.slane %v10011, 7
        %v10045 = vsel %vm482, %v10044, %v10043
        %v10046 = vsel %vm581, %v10044, %v10045
        %10047 = vrot.lane.b32.xlu0 %v10046, 96
        %v10048 = vpop.permute.xlu0 %10047
        %10050 = vst.msk [vmem:[#allocation3 + $0x4] sm:$0xf] %vm9938, %v10048
        %v10051 = vrot.slane %v10008, 3
        %v10052 = vrot.slane %v10009, 2
        %v10053 = vsel %vm478, %v10052, %v10051
        %v10054 = vsel %vm577, %v10052, %v10053
        %v10055 = vrot.slane %v10010, 1
        %v10056 = vsel %vm480, %v10055, %v10054
        %v10057 = vsel %vm579, %v10055, %v10056
        %v10058 = vsel %vm482, %v10011, %v10057
        %v10059 = vsel %vm581, %v10011, %v10058
        %10060 = vrot.lane.b32.xlu0 %v10059, 112
        %v10061 = vpop.permute.xlu0 %10060
        %10063 = vst.msk [vmem:[#allocation3 + $0x4] sm:$0xf] %vm9952, %v10061
        %v10064 = vld [vmem:[#allocation3] sm:$0xff]
        %v10067 = vunpack.c.l.s4 1966171168
        %v10068 = vunpack.c.0.s8 %v10067
        %v10069 = vlaneseq
        %v10070 = vshrl.u32 %v10069, 7
        %v10071 = vsub.s32 %v10068, %v10070
        %v10072 = vrot.slane %v10064, %v10071
        %v10073 = vcombine.high %v10072, %v10072
        %v10075 = vunpack.c.l.s4 1966171168
        %v10076 = vunpack.c.0.s8 %v10075
        %v10077 = vlaneseq
        %v10078 = vshrl.u32 %v10077, 7
        %v10079 = vsub.s32 %v10076, %v10078
        %v10080 = vrot.slane %v10072, %v10079
        %v10082 = vunpack.c.l.s4 1966171168
        %v10083 = vunpack.c.0.s8 %v10082
        %v10084 = vlaneseq
        %v10085 = vshrl.u32 %v10084, 7
        %v10086 = vsub.s32 %v10083, %v10085
        %v10087 = vrot.slane %v10073, %v10086
        %v10088 = vcombine.high %v10080, %v10080
        %v10089 = vcombine.high %v10087, %v10087
        %v10090 = vlaneseq
        %v10091 = vshrl.u32 %v10090, 7
        %v10092 = vsub.s32 0, %v10091
        %v10093 = vrot.slane %v10080, %v10092
        %v10094 = vlaneseq
        %v10095 = vshrl.u32 %v10094, 7
        %v10096 = vsub.s32 1, %v10095
        %v10097 = vrot.slane %v10080, %v10096
        %v10098 = vlaneseq
        %v10099 = vshrl.u32 %v10098, 7
        %v10100 = vsub.s32 0, %v10099
        %v10101 = vrot.slane %v10087, %v10100
        %v10102 = vlaneseq
        %v10103 = vshrl.u32 %v10102, 7
        %v10104 = vsub.s32 1, %v10103
        %v10105 = vrot.slane %v10087, %v10104
        %v10106 = vlaneseq
        %v10107 = vshrl.u32 %v10106, 7
        %v10108 = vsub.s32 0, %v10107
        %v10109 = vrot.slane %v10088, %v10108
        %v10110 = vlaneseq
        %v10111 = vshrl.u32 %v10110, 7
        %v10112 = vsub.s32 1, %v10111
        %v10113 = vrot.slane %v10088, %v10112
        %v10114 = vlaneseq
        %v10115 = vshrl.u32 %v10114, 7
        %v10116 = vsub.s32 0, %v10115
        %v10117 = vrot.slane %v10089, %v10116
        %v10118 = vlaneseq
        %v10119 = vshrl.u32 %v10118, 7
        %v10120 = vsub.s32 1, %v10119
        %v10121 = vrot.slane %v10089, %v10120
        %v10130 = vmul.f32 %v830, %v10093
        %v10131 = vmul.f32 %v831, %v10097
        %v10132 = vmul.f32 %v832, %v10093
        %v10133 = vmul.f32 %v833, %v10097
        %v10134 = vmul.f32 %v834, %v10093
        %v10135 = vmul.f32 %v835, %v10097
        %v10136 = vmul.f32 %v836, %v10093
        %v10137 = vmul.f32 %v837, %v10097
        %v10138 = vmul.f32 %v838, %v10101
        %v10139 = vmul.f32 %v839, %v10105
        %v10140 = vmul.f32 %v840, %v10101
        %v10141 = vmul.f32 %v841, %v10105
        %v10142 = vmul.f32 %v842, %v10101
        %v10143 = vmul.f32 %v843, %v10105
        %v10144 = vmul.f32 %v844, %v10101
        %v10145 = vmul.f32 %v845, %v10105
        %v10146 = vmul.f32 %v846, %v10109
        %v10147 = vmul.f32 %v847, %v10113
        %v10148 = vmul.f32 %v848, %v10109
        %v10149 = vmul.f32 %v849, %v10113
        %v10150 = vmul.f32 %v850, %v10109
        %v10151 = vmul.f32 %v851, %v10113
        %v10152 = vmul.f32 %v852, %v10109
        %v10153 = vmul.f32 %v853, %v10113
        %v10154 = vmul.f32 %v854, %v10117
        %v10155 = vmul.f32 %v855, %v10121
        %v10156 = vmul.f32 %v856, %v10117
        %v10157 = vmul.f32 %v857, %v10121
        %v10158 = vmul.f32 %v858, %v10117
        %v10159 = vmul.f32 %v859, %v10121
        %v10160 = vmul.f32 %v860, %v10117
        %v10161 = vmul.f32 %v861, %v10121
        %10162 = vst [vmem:[%s230] sm:$0xff] %v10130
        %10163 = vst [vmem:[%s230 + $0x8] sm:$0xff] %v10131
        %10164 = vst [vmem:[%s230 + $0x10] sm:$0xff] %v10132
        %10165 = vst [vmem:[%s230 + $0x18] sm:$0xff] %v10133
        %10166 = vst [vmem:[%s230 + $0x20] sm:$0xff] %v10134
        %10167 = vst [vmem:[%s230 + $0x28] sm:$0xff] %v10135
        %10168 = vst [vmem:[%s230 + $0x30] sm:$0xff] %v10136
        %10169 = vst [vmem:[%s230 + $0x38] sm:$0xff] %v10137
        %10170 = vst [vmem:[%s230 + $0x40] sm:$0xff] %v10138
        %10171 = vst [vmem:[%s230 + $0x48] sm:$0xff] %v10139
        %10172 = vst [vmem:[%s230 + $0x50] sm:$0xff] %v10140
        %10173 = vst [vmem:[%s230 + $0x58] sm:$0xff] %v10141
        %10174 = vst [vmem:[%s230 + $0x60] sm:$0xff] %v10142
        %10175 = vst [vmem:[%s230 + $0x68] sm:$0xff] %v10143
        %10176 = vst [vmem:[%s230 + $0x70] sm:$0xff] %v10144
        %10177 = vst [vmem:[%s230 + $0x78] sm:$0xff] %v10145
        %10178 = vst [vmem:[%s230 + $0x80] sm:$0xff] %v10146
        %10179 = vst [vmem:[%s230 + $0x88] sm:$0xff] %v10147
        %10180 = vst [vmem:[%s230 + $0x90] sm:$0xff] %v10148
        %10181 = vst [vmem:[%s230 + $0x98] sm:$0xff] %v10149
        %10182 = vst [vmem:[%s230 + $0xa0] sm:$0xff] %v10150
        %10183 = vst [vmem:[%s230 + $0xa8] sm:$0xff] %v10151
        %10184 = vst [vmem:[%s230 + $0xb0] sm:$0xff] %v10152
        %10185 = vst [vmem:[%s230 + $0xb8] sm:$0xff] %v10153
        %10186 = vst [vmem:[%s230 + $0xc0] sm:$0xff] %v10154
        %10187 = vst [vmem:[%s230 + $0xc8] sm:$0xff] %v10155
        %10188 = vst [vmem:[%s230 + $0xd0] sm:$0xff] %v10156
        %10189 = vst [vmem:[%s230 + $0xd8] sm:$0xff] %v10157
        %10190 = vst [vmem:[%s230 + $0xe0] sm:$0xff] %v10158
        %10191 = vst [vmem:[%s230 + $0xe8] sm:$0xff] %v10159
        %10192 = vst [vmem:[%s230 + $0xf0] sm:$0xff] %v10160
        %10193 = vst [vmem:[%s230 + $0xf8] sm:$0xff] %v10161
        %s10194 = sand.u32 %s119, 1
        %s10195 = scalar_lea.sflag [#allocation6], %s10194
        %s10196 = sand.u32 %s119, 1
        %s10197 = smul.addr %s10196, 256
        %s10198 = scalar_lea.vmem [#allocation9], %s10197
        // Predicated region
        $region45: #{tpu_custom_call.1} parent=35 // pred_check
          %p10199 = pneg %p129
        $region46: #{tpu_custom_call.1} parent=35 // pred_check_branch
          %10201 = sbr.rel (%p10199) target = $region48
        $region47: #{tpu_custom_call.1} parent=35 // pred_region
          %s10202 = smul.u32 4, %s22
          %s10204 = ssub.s32 4096, 4096
          %10205 = vsyncadd %s10195, %s10204
          %s10206 = smul.addr %s10202, 8
          %s10207 = smul.addr %s10206, 128
          %s10208 = scalar_lea.hbm %s4, %s10207
          %s10209 = sshll.u32 %s10198, 4
          %s10210 = int_to_ptr.vmem [resolvable:$true] %s10209
          %10215 = dma.vmem_to_hbm [thread:$0]  %s10210, 4096, %s10208, %s10195, 256, 256, 16
        $region48: #{tpu_custom_call.1} parent=35 // pred_fallthru
          _
      $region36: #{tpu_custom_call.1} parent=5 // pred_fallthru
        _
      %p10216 = scmp.le.s32.totalorder 2, %s17
      // Predicated region
      $region49: #{tpu_custom_call.1} parent=5 // pred_check
        %p10217 = pneg %p10216
      $region50: #{tpu_custom_call.1} parent=5 // pred_check_branch
        %10219 = sbr.rel (%p10217) target = $region52
      $region51: #{tpu_custom_call.1} parent=5 // pred_region
        %s10220 = ssub.s32 %s17, 2
        // Predicated region
        $region53: #{tpu_custom_call.1} parent=51 // pred_check
          %p10221 = pneg %p135
        $region54: #{tpu_custom_call.1} parent=51 // pred_check_branch
          %10223 = sbr.rel (%p10221) target = $region56
        $region55: #{tpu_custom_call.1} parent=51 // pred_region
          %s10224 = sand.u32 %s120, 1
          %s10225 = scalar_lea.sflag [#allocation6], %s10224
          %s10226 = sand.u32 %s120, 1
          %s10227 = smul.addr %s10226, 256
          %s10228 = scalar_lea.vmem [#allocation9], %s10227
          %10229 = dma.done %s10225, 4096
        $region56: #{tpu_custom_call.1} parent=51 // pred_fallthru
          _
      $region52: #{tpu_custom_call.1} parent=5 // pred_fallthru
        _
    $region6: #{tpu_custom_call.1} parent=1 // loop_footer
      %s21 = sadd.s32 1, %s17
    $region7: #{tpu_custom_call.1} parent=1 // loop_footer_branch
      %16 = sbr.rel target = $region3
    $region8: #{tpu_custom_call.1} parent=1 // loop_exit
      _
    %10230 = vsyncpa [#allocation5], 1
    %s10231 = scalar_lea.sflag [#allocation5], 1
    %10232 = vsyncpa %s10231, 1
    %10233 = vsyncpa [#allocation6], 1
    %s10234 = scalar_lea.sflag [#allocation6], 1
    %10235 = vsyncpa %s10234, 1
    %10236 = vsyncpa [#allocation7], 1
    %s10237 = scalar_lea.sflag [#allocation7], 1
    %10238 = vsyncpa %s10237, 1

</llo_original>
